<compile_context>
chip_gen: v7x
topology: tpu7x:2x2x1
jax: 0.10.0
libtpu: 0.0.40
codegen_flags: <defaults>
</compile_context>

<pallas_src>
import functools
import math

import jax
import jax.numpy as jnp
from jax.experimental import pallas as pl
from jax.experimental.pallas import tpu as pltpu

EPS = 1e-6
NEG_INF = -1e30          # finite additive mask value (avoids exp(-inf) NaN)
LANE = 128


def _round_up(n, m):
    return ((n + m - 1) // m) * m


def _default_vmem_limit():
    try:
        cap = int(getattr(pltpu.get_tpu_info(), "vmem_capacity_bytes"))
    except Exception:
        return 48 * 1024 * 1024
    if cap <= 64 * 1024 * 1024:        # v7x-class: leave room for Mosaic scratch
        return min(cap * 3 // 4, 48 * 1024 * 1024)
    return min(cap * 7 // 8, 100 * 1024 * 1024)


_VMEM_LIMIT = _default_vmem_limit()


# --------------------------------------------------------------------------
# In-kernel math helpers (traced inside the Pallas kernels).
# --------------------------------------------------------------------------

def _layernorm(x, g, b, d_true):
    # x: (S, Dp) f32 with pad columns exactly zero; normalize over the TRUE D.
    inv_d = 1.0 / float(d_true)
    mu = jnp.sum(x, axis=-1, keepdims=True) * inv_d
    msq = jnp.sum(x * x, axis=-1, keepdims=True) * inv_d
    var = jnp.maximum(msq - mu * mu, 0.0)
    # gamma/beta are zero in pad columns, so the output pad columns stay zero.
    return (x - mu) * jax.lax.rsqrt(var + EPS) * g + b


# f32 rational approximation of erf (same polynomial family XLA uses) so exact
# (erf-based) GELU semantics are preserved with supported element-wise ops only.
_ERF_ALPHA = (0.00022905065861350646, 0.0034082910107109506,
              0.050955695062380861, 0.18520832239976145, 1.128379143519084)
_ERF_BETA = (-1.1791602954361697e-7, 2.3547966471313185e-5,
             0.0010179625278914885, 0.014070470171167667,
             0.11098505178285362, 0.49746925110067538, 1.0)


def _polyval(coeffs, x):
    acc = jnp.full_like(x, coeffs[0])
    for c in coeffs[1:]:
        acc = acc * x + c
    return acc


def _erf(x):
    x = jnp.clip(x, -4.0, 4.0)
    x2 = x * x
    num = x * _polyval(_ERF_ALPHA, x2)
    den = _polyval(_ERF_BETA, x2)
    # approx reciprocal -> EUP slot (v5e VALU relief); ~1e-4 relative error.
    return num * pl.reciprocal(den, approx=True)


def _gelu(x):
    # erf-based GELU, matching torch.nn.GELU() default (modulo approx recip).
    return 0.5 * x * (1.0 + _erf(x * 0.7071067811865476))


def _split_heads(x2d, n_heads, dhp, base):
    # x2d: (S, n*dhp) with head h occupying 128-aligned columns [base+h*dhp, ...).
    # Aligned full-lane-tile slices stacked along a NEW major axis (no masked
    # relayouts, no lane-axis concat).
    return jnp.stack([x2d[:, base + h * dhp: base + (h + 1) * dhp]
                      for h in range(n_heads)], axis=0)


def _mha(q, k, v, wo, bo, mask):
    """q:(H,Sq,dhp) k/v:(H,Sk,dhp) bf16; wo:(H*dhp,Dp) bf16; bo:(1,Dp) f32."""
    n_heads = q.shape[0]
    # 1/sqrt(dh) is folded into Wq/bq at pack time.
    s = jnp.einsum('hqe,hke->hqk', q, k,
                   preferred_element_type=jnp.float32)            # (H, Sq, Sk) f32
    if mask is not None:
        s = s + mask
    s = s - jnp.max(s, axis=-1, keepdims=True)
    p = jnp.exp(s)
    p = p * pl.reciprocal(jnp.sum(p, axis=-1, keepdims=True), approx=True)
    ctx = jnp.einsum('hqk,hke->hqe', p.astype(jnp.bfloat16), v,
                     preferred_element_type=jnp.float32)          # (H, Sq, dhp)
    ctx = ctx.astype(jnp.bfloat16)
    # Concatenate heads along lanes (128-aligned tiles) and do ONE 2-D output
    # projection: the head reduction is accumulated inside the MXU contraction.
    ctx_cat = jnp.concatenate([ctx[h] for h in range(n_heads)], axis=-1)
    return jnp.dot(ctx_cat, wo, preferred_element_type=jnp.float32) + bo


def _self_attn(x, wqkv, bqkv, wo, bo, n_heads, dhp, mask):
    qkv = (jnp.dot(x.astype(jnp.bfloat16), wqkv,
                   preferred_element_type=jnp.float32) + bqkv).astype(jnp.bfloat16)
    hd = n_heads * dhp
    q = _split_heads(qkv, n_heads, dhp, 0)
    k = _split_heads(qkv, n_heads, dhp, hd)
    v = _split_heads(qkv, n_heads, dhp, 2 * hd)
    return _mha(q, k, v, wo, bo, mask)


def _cross_attn(x, enc, wq, bq, wkv, bkv, wo, bo, n_heads, dhp):
    q2 = (jnp.dot(x.astype(jnp.bfloat16), wq,
                  preferred_element_type=jnp.float32) + bq).astype(jnp.bfloat16)
    kv = (jnp.dot(enc, wkv, preferred_element_type=jnp.float32)
          + bkv).astype(jnp.bfloat16)
    hd = n_heads * dhp
    q = _split_heads(q2, n_heads, dhp, 0)
    k = _split_heads(kv, n_heads, dhp, 0)
    v = _split_heads(kv, n_heads, dhp, hd)
    return _mha(q, k, v, wo, bo, None)


def _mlp(x, w1, b1, w2, b2):
    h = _gelu(jnp.dot(x.astype(jnp.bfloat16), w1,
                      preferred_element_type=jnp.float32) + b1)
    return jnp.dot(h.astype(jnp.bfloat16), w2,
                   preferred_element_type=jnp.float32) + b2


# --------------------------------------------------------------------------
# Fused whole-stack Pallas kernels.  grid = (batch, depth); the residual
# stream is carried in a VMEM scratch across the (arbitrary) layer axis.
# --------------------------------------------------------------------------

def _encoder_stack_kernel(x_ref,
                          ln1g, ln1b, wqkv, bqkv, wo, bo,
                          ln2g, ln2b, w1, b1, w2, b2,
                          fng, fnb,
                          out_ref, resid,
                          *, n_heads, dhp, d_true):
    l = pl.program_id(1)

    @pl.when(l == 0)
    def _():
        resid[...] = x_ref[0]

    x = resid[...]                                            # (S, Dp) f32
    h = _layernorm(x, ln1g[0], ln1b[0], d_true)
    x = x + _self_attn(h, wqkv[0], bqkv[0], wo[0], bo[0], n_heads, dhp, None)
    h = _layernorm(x, ln2g[0], ln2b[0], d_true)
    x = x + _mlp(h, w1[0], b1[0], w2[0], b2[0])
    resid[...] = x

    @pl.when(l == pl.num_programs(1) - 1)
    def _():
        out_ref[0] = _layernorm(x, fng[...], fnb[...], d_true)


def _decoder_stack_kernel(y_ref, enc_ref,
                          ln1g, ln1b, s_wqkv, s_bqkv, s_wo, s_bo,
                          ln2g, ln2b, c_wq, c_bq, c_wkv, c_bkv, c_wo, c_bo,
                          ln3g, ln3b, w1, b1, w2, b2,
                          fng, fnb, hw, hb,
                          out_ref, resid,
                          *, n_heads, dhp, d_true):
    l = pl.program_id(1)

    @pl.when(l == 0)
    def _():
        resid[...] = y_ref[0]

    x = resid[...]                                            # (T, Dp) f32
    enc = enc_ref[0]                                          # (S, Dp) bf16
    t = x.shape[0]

    # Causal additive mask (finite, no NaN risk), built once per layer step.
    row = jax.lax.broadcasted_iota(jnp.int32, (t, t), 0)
    col = jax.lax.broadcasted_iota(jnp.int32, (t, t), 1)
    causal = jnp.where(col <= row, 0.0, NEG_INF).astype(jnp.float32)

    h = _layernorm(x, ln1g[0], ln1b[0], d_true)
    x = x + _self_attn(h, s_wqkv[0], s_bqkv[0], s_wo[0], s_bo[0],
                       n_heads, dhp, causal)
    h = _layernorm(x, ln2g[0], ln2b[0], d_true)
    x = x + _cross_attn(h, enc, c_wq[0], c_bq[0], c_wkv[0], c_bkv[0],
                        c_wo[0], c_bo[0], n_heads, dhp)
    h = _layernorm(x, ln3g[0], ln3b[0], d_true)
    x = x + _mlp(h, w1[0], b1[0], w2[0], b2[0])
    resid[...] = x

    @pl.when(l == pl.num_programs(1) - 1)
    def _():
        hn = _layernorm(x, fng[...], fnb[...], d_true)
        out_ref[0] = jnp.dot(hn.astype(jnp.bfloat16), hw[...],
                             preferred_element_type=jnp.float32) + hb[...]


# --------------------------------------------------------------------------
# pallas_call plumbing.
# --------------------------------------------------------------------------

def _batch_spec(a):
    tail = a.shape[1:]
    nz = len(tail)
    return pl.BlockSpec((1,) + tail, lambda b, l, _nz=nz: (b,) + (0,) * _nz)


def _layer_spec(a):
    tail = a.shape[1:]
    nz = len(tail)
    return pl.BlockSpec((1,) + tail, lambda b, l, _nz=nz: (l,) + (0,) * _nz)


def _const_spec(a, single_buffer):
    nd = a.ndim
    kwargs = {}
    if single_buffer:
        # Constant-index inputs: no need for double buffering (halves their VMEM).
        kwargs["pipeline_mode"] = pl.Buffered(1)
    return pl.BlockSpec(a.shape, lambda b, l, _nd=nd: (0,) * _nd, **kwargs)


def _stack_call(kernel, batch_args, layer_args, const_args, out_tail, scratch_shape):
    B = batch_args[0].shape[0]
    depth = layer_args[0].shape[0]
    nzo = len(out_tail)

    def build(single_buffer):
        in_specs = ([_batch_spec(a) for a in batch_args] +
                    [_layer_spec(a) for a in layer_args] +
                    [_const_spec(a, single_buffer) for a in const_args])
        return pl.pallas_call(
            kernel,
            out_shape=jax.ShapeDtypeStruct((B,) + out_tail, jnp.float32),
            grid=(B, depth),
            in_specs=in_specs,
            out_specs=pl.BlockSpec((1,) + out_tail,
                                   lambda b, l, _n=nzo: (b,) + (0,) * _n),
            scratch_shapes=[pltpu.VMEM(scratch_shape, jnp.float32)],
            compiler_params=pltpu.CompilerParams(
                dimension_semantics=("parallel", "arbitrary"),
                vmem_limit_bytes=_VMEM_LIMIT),
        )

    args = (*batch_args, *layer_args, *const_args)
    try:
        return build(True)(*args)
    except Exception:
        # Fallback if pipeline_mode=pl.Buffered(1) is unavailable on this jax.
        return build(False)(*args)


def encoder_stack(x, params):
    cfg = params["cfg"]
    _, S, Dp = x.shape
    kern = functools.partial(_encoder_stack_kernel, n_heads=cfg["n_heads"],
                             dhp=cfg["dh_pad"], d_true=cfg["d_true"])
    return _stack_call(kern, [x], list(params["enc_layers"]),
                       list(params["enc_final"]), (S, Dp), (S, Dp))


def decoder_stack(y, enc, params):
    cfg = params["cfg"]
    _, T, Dp = y.shape
    kern = functools.partial(_decoder_stack_kernel, n_heads=cfg["n_heads"],
                             dhp=cfg["dh_pad"], d_true=cfg["d_true"])
    return _stack_call(kern, [y, enc], list(params["dec_layers"]),
                       list(params["dec_final"]), (T, cfg["out_pad"]), (T, Dp))


# --------------------------------------------------------------------------
# Parameter setup (lane-padded, head-major packed) & full forward.
# --------------------------------------------------------------------------

def _init_linear(key, fan_in, fan_out):
    kw, kb = jax.random.split(key)
    bound = 1.0 / math.sqrt(fan_in)
    w = jax.random.uniform(kw, (fan_in, fan_out), jnp.float32, -bound, bound)
    b = jax.random.uniform(kb, (1, fan_out), jnp.float32, -bound, bound)
    return w, b


def _init_attn(key, dim):
    ks = jax.random.split(key, 4)
    wq, bq = _init_linear(ks[0], dim, dim)
    wk, bk = _init_linear(ks[1], dim, dim)
    wv, bv = _init_linear(ks[2], dim, dim)
    wo, bo = _init_linear(ks[3], dim, dim)
    return dict(wq=wq, bq=bq, wk=wk, bk=bk, wv=wv, bv=bv, wo=wo, bo=bo)


def _pad_to(w, shape):
    out = jnp.zeros(shape, w.dtype)
    return out.at[tuple(slice(0, s) for s in w.shape)].set(w)


def _pack_head_cols(w, n_heads, dh, dhp, rows_pad):
    # (rows, H*dh) -> (rows_pad, H*dhp); head h's dh true columns at h*dhp.
    parts = [_pad_to(w[:, h * dh:(h + 1) * dh], (rows_pad, dhp))
             for h in range(n_heads)]
    return jnp.concatenate(parts, axis=1)


def _pack_head_rows(w, n_heads, dh, dhp, cols_pad):
    # (H*dh, cols) -> (H*dhp, cols_pad); head h's dh true rows at h*dhp.
    parts = [_pad_to(w[h * dh:(h + 1) * dh, :], (dhp, cols_pad))
             for h in range(n_heads)]
    return jnp.concatenate(parts, axis=0)


ENC_LAYER_KEYS = ("ln1_g", "ln1_b", "wqkv", "bqkv", "wo", "bo",
                  "ln2_g", "ln2_b", "w1", "b1", "w2", "b2")
DEC_LAYER_KEYS = ("ln1_g", "ln1_b", "sa_wqkv", "sa_bqkv", "sa_wo", "sa_bo",
                  "ln2_g", "ln2_b", "ca_wq", "ca_bq", "ca_wkv", "ca_bkv",
                  "ca_wo", "ca_bo", "ln3_g", "ln3_b", "w1", "b1", "w2", "b2")


def make_params(key, depth, n_heads, embed_dim, out_dim, mlp_ratio=4.0):
    assert depth >= 1 and embed_dim % n_heads == 0
    D, H = embed_dim, n_heads
    dh = D // H
    hidden = int(D * mlp_ratio)
    Dp, dhp = _round_up(D, LANE), _round_up(dh, LANE)
    hidp, outp = _round_up(hidden, LANE), _round_up(out_dim, LANE)
    scale = dh ** (-0.5)                    # folded into Wq / bq at pack time
    keys = jax.random.split(key, 2 * depth + 1)

    def ln():
        return (_pad_to(jnp.ones((1, D), jnp.float32), (1, Dp)),
                jnp.zeros((1, Dp), jnp.float32))

    def pack_self(k):
        a = _init_attn(k, D)
        wqkv = jnp.concatenate(
            [_pack_head_cols(a["wq"] * scale, H, dh, dhp, Dp),
             _pack_head_cols(a["wk"], H, dh, dhp, Dp),
             _pack_head_cols(a["wv"], H, dh, dhp, Dp)], axis=1).astype(jnp.bfloat16)
        bqkv = jnp.concatenate(
            [_pack_head_cols(a["bq"] * scale, H, dh, dhp, 1),
             _pack_head_cols(a["bk"], H, dh, dhp, 1),
             _pack_head_cols(a["bv"], H, dh, dhp, 1)], axis=1)
        wo = _pack_head_rows(a["wo"], H, dh, dhp, Dp).astype(jnp.bfloat16)
        bo = _pad_to(a["bo"], (1, Dp))
        return wqkv, bqkv, wo, bo

    def pack_cross(k):
        a = _init_attn(k, D)
        wq = _pack_head_cols(a["wq"] * scale, H, dh, dhp, Dp).astype(jnp.bfloat16)
        bq = _pack_head_cols(a["bq"] * scale, H, dh, dhp, 1)
        wkv = jnp.concatenate(
            [_pack_head_cols(a["wk"], H, dh, dhp, Dp),
             _pack_head_cols(a["wv"], H, dh, dhp, Dp)], axis=1).astype(jnp.bfloat16)
        bkv = jnp.concatenate(
            [_pack_head_cols(a["bk"], H, dh, dhp, 1),
             _pack_head_cols(a["bv"], H, dh, dhp, 1)], axis=1)
        wo = _pack_head_rows(a["wo"], H, dh, dhp, Dp).astype(jnp.bfloat16)
        bo = _pad_to(a["bo"], (1, Dp))
        return wq, bq, wkv, bkv, wo, bo

    def pack_mlp(k1, k2):
        w1, b1 = _init_linear(k1, D, hidden)
        w2, b2 = _init_linear(k2, hidden, D)
        return (_pad_to(w1, (Dp, hidp)).astype(jnp.bfloat16), _pad_to(b1, (1, hidp)),
                _pad_to(w2, (hidp, Dp)).astype(jnp.bfloat16), _pad_to(b2, (1, Dp)))

    enc_layers, dec_layers = [], []
    for i in range(depth):
        ka, k1, k2 = jax.random.split(keys[i], 3)
        g1, bb1 = ln()
        g2, bb2 = ln()
        wqkv, bqkv, wo, bo = pack_self(ka)
        mw1, mb1, mw2, mb2 = pack_mlp(k1, k2)
        enc_layers.append(dict(ln1_g=g1, ln1_b=bb1, wqkv=wqkv, bqkv=bqkv, wo=wo, bo=bo,
                               ln2_g=g2, ln2_b=bb2, w1=mw1, b1=mb1, w2=mw2, b2=mb2))
    for i in range(depth):
        ks_, kc_, k1, k2 = jax.random.split(keys[depth + i], 4)
        g1, bb1 = ln()
        g2, bb2 = ln()
        g3, bb3 = ln()
        s_wqkv, s_bqkv, s_wo, s_bo = pack_self(ks_)
        c_wq, c_bq, c_wkv, c_bkv, c_wo, c_bo = pack_cross(kc_)
        mw1, mb1, mw2, mb2 = pack_mlp(k1, k2)
        dec_layers.append(dict(ln1_g=g1, ln1_b=bb1,
                               sa_wqkv=s_wqkv, sa_bqkv=s_bqkv, sa_wo=s_wo, sa_bo=s_bo,
                               ln2_g=g2, ln2_b=bb2,
                               ca_wq=c_wq, ca_bq=c_bq, ca_wkv=c_wkv, ca_bkv=c_bkv,
                               ca_wo=c_wo, ca_bo=c_bo,
                               ln3_g=g3, ln3_b=bb3,
                               w1=mw1, b1=mb1, w2=mw2, b2=mb2))

    enc_stacked = tuple(jnp.stack([lyr[k] for lyr in enc_layers], axis=0)
                        for k in ENC_LAYER_KEYS)
    dec_stacked = tuple(jnp.stack([lyr[k] for lyr in dec_layers], axis=0)
                        for k in DEC_LAYER_KEYS)

    enc_ng, enc_nb = ln()
    dec_ng, dec_nb = ln()
    head_w, head_b = _init_linear(keys[-1], D, out_dim)
    head_w = _pad_to(head_w, (Dp, outp)).astype(jnp.bfloat16)
    head_b = _pad_to(head_b, (1, outp))

    cfg = dict(n_heads=H, d_true=D, d_pad=Dp, dh_pad=dhp, hidden_pad=hidp,
               out_dim=out_dim, out_pad=outp, depth=depth)
    return dict(cfg=cfg,
                enc_layers=enc_stacked, enc_final=(enc_ng, enc_nb),
                dec_layers=dec_stacked, dec_final=(dec_ng, dec_nb, head_w, head_b))


def positional_encoding(seq_len, d):
    pos = jnp.arange(seq_len, dtype=jnp.float32)[:, None]
    div = jnp.exp(jnp.arange(0, d, 2, dtype=jnp.float32) * (-math.log(10000.0) / d))
    args = pos * div
    pe = jnp.zeros((seq_len, d), jnp.float32)
    pe = pe.at[:, 0::2].set(jnp.sin(args)[:, :(d + 1) // 2])
    pe = pe.at[:, 1::2].set(jnp.cos(args)[:, :d // 2])
    return pe


def _pad_last(x, dp):
    d = x.shape[-1]
    if d == dp:
        return x
    return jnp.pad(x, ((0, 0), (0, 0), (0, dp - d)))


def transformer_forward(params, src_embed, tgt):
    cfg = params["cfg"]
    B, s_in, D = src_embed.shape
    Dp = cfg["d_pad"]

    # ---- Encoder ----
    cls = jnp.zeros((B, 1, D), jnp.float32)
    x = jnp.concatenate([cls, src_embed.astype(jnp.float32)], axis=1)
    x = x + positional_encoding(s_in + 1, D)[None]      # dropout == identity (eval)
    x = _pad_last(x, Dp)                                 # pad columns are zero
    enc_out = encoder_stack(x, params)                   # (B, s_in+1, Dp) f32

    # drop cls token; bf16 memory so the decoder's K/V matmul DMAs half the bytes
    enc_mem = enc_out[:, 1:, :].astype(jnp.bfloat16)

    # ---- Decoder ----
    y = tgt.astype(jnp.float32) + positional_encoding(tgt.shape[1], D)[None]
    y = _pad_last(y, Dp)
    out = decoder_stack(y, enc_mem, params)              # (B, T, out_pad) f32
    return out[:, :, :cfg["out_dim"]]


if __name__ == "__main__":
    B = 2
    num_input_tokens = 8
    num_output_tokens = 8
    embed_dim = 32
    out_dim = 16
    depth = 2
    n_heads = 4

    key = jax.random.PRNGKey(0)
    kp, ksrc, ktgt = jax.random.split(key, 3)
    params = make_params(kp, depth, n_heads, embed_dim, out_dim)

    src_embed = jax.random.normal(ksrc, (B, num_input_tokens, embed_dim), jnp.float32)
    tgt = jax.random.normal(ktgt, (B, num_output_tokens, embed_dim), jnp.float32)

    out = transformer_forward(params, src_embed, tgt)
    out = jax.block_until_ready(out)
    assert out.shape == (B, num_output_tokens, out_dim)
    assert bool(jnp.all(jnp.isfinite(out)))
    print("KERNEL_OK")
</pallas_src>

<mosaic_0001>
module attributes {stable_mosaic.version = 11 : i64} {
  func.func @_encoder_stack_kernel(%arg0: i32, %arg1: i32, %arg2: memref<1x9x128xf32, #tpu.memory_space<vmem>>, %arg3: memref<1x1x128xf32, #tpu.memory_space<vmem>>, %arg4: memref<1x1x128xf32, #tpu.memory_space<vmem>>, %arg5: memref<1x128x1536xbf16, #tpu.memory_space<vmem>>, %arg6: memref<1x1x1536xf32, #tpu.memory_space<vmem>>, %arg7: memref<1x512x128xbf16, #tpu.memory_space<vmem>>, %arg8: memref<1x1x128xf32, #tpu.memory_space<vmem>>, %arg9: memref<1x1x128xf32, #tpu.memory_space<vmem>>, %arg10: memref<1x1x128xf32, #tpu.memory_space<vmem>>, %arg11: memref<1x128x128xbf16, #tpu.memory_space<vmem>>, %arg12: memref<1x1x128xf32, #tpu.memory_space<vmem>>, %arg13: memref<1x128x128xbf16, #tpu.memory_space<vmem>>, %arg14: memref<1x1x128xf32, #tpu.memory_space<vmem>>, %arg15: memref<1x128xf32, #tpu.memory_space<vmem>>, %arg16: memref<1x128xf32, #tpu.memory_space<vmem>>, %arg17: memref<1x9x128xf32, #tpu.memory_space<vmem>>, %arg18: memref<9x128xf32, #tpu.memory_space<vmem>>) attributes {dimension_semantics = [#tpu.dimension_semantics<parallel>, #tpu.dimension_semantics<arbitrary>], iteration_bounds = array<i64: 2, 2>, scalar_prefetch = 0 : i64, scratch_operands = 1 : i64, tpu.core_type = #tpu.core_type<tc>, window_params = [{transform_indices = @transform_0, window_bounds = array<i64: 1, 9, 128>}, {transform_indices = @transform_1, window_bounds = array<i64: 1, 1, 128>}, {transform_indices = @transform_2, window_bounds = array<i64: 1, 1, 128>}, {transform_indices = @transform_3, window_bounds = array<i64: 1, 128, 1536>}, {transform_indices = @transform_4, window_bounds = array<i64: 1, 1, 1536>}, {transform_indices = @transform_5, window_bounds = array<i64: 1, 512, 128>}, {transform_indices = @transform_6, window_bounds = array<i64: 1, 1, 128>}, {transform_indices = @transform_7, window_bounds = array<i64: 1, 1, 128>}, {transform_indices = @transform_8, window_bounds = array<i64: 1, 1, 128>}, {transform_indices = @transform_9, window_bounds = array<i64: 1, 128, 128>}, {transform_indices = @transform_10, window_bounds = array<i64: 1, 1, 128>}, {transform_indices = @transform_11, window_bounds = array<i64: 1, 128, 128>}, {transform_indices = @transform_12, window_bounds = array<i64: 1, 1, 128>}, {pipeline_mode = #tpu.pipeline_mode<synchronous>, transform_indices = @transform_13, window_bounds = array<i64: 1, 128>}, {pipeline_mode = #tpu.pipeline_mode<synchronous>, transform_indices = @transform_14, window_bounds = array<i64: 1, 128>}, {transform_indices = @transform_15, window_bounds = array<i64: 1, 9, 128>}]} {
    %c0_i32 = arith.constant 0 : i32
    %0 = arith.cmpi eq, %arg1, %c0_i32 : i32
    %1 = arith.extui %0 : i1 to i32
    %c0_i32_0 = arith.constant 0 : i32
    %2 = arith.cmpi ne, %1, %c0_i32_0 : i32
    scf.if %2 {
      %c0_77 = arith.constant 0 : index
      %c0_78 = arith.constant 0 : index
      %c0_79 = arith.constant 0 : index
      %195 = vector.load %arg2[%c0_77, %c0_78, %c0_79] : memref<1x9x128xf32, #tpu.memory_space<vmem>>, vector<1x9x128xf32>
      %196 = vector.shape_cast %195 : vector<1x9x128xf32> to vector<9x128xf32>
      %c0_80 = arith.constant 0 : index
      %c0_81 = arith.constant 0 : index
      %197 = vector.load %arg18[%c0_80, %c0_81] : memref<9x128xf32, #tpu.memory_space<vmem>>, vector<9x128xf32>
      tpu.vector_store %arg18[%c0_80, %c0_81], %196 {strides = array<i32>} : memref<9x128xf32, #tpu.memory_space<vmem>>, vector<9x128xf32>,
    } else {
    }
    %c0 = arith.constant 0 : index
    %c0_1 = arith.constant 0 : index
    %3 = vector.load %arg18[%c0, %c0_1] : memref<9x128xf32, #tpu.memory_space<vmem>>, vector<9x128xf32>
    %c0_2 = arith.constant 0 : index
    %c0_3 = arith.constant 0 : index
    %c0_4 = arith.constant 0 : index
    %4 = vector.load %arg3[%c0_2, %c0_3, %c0_4] : memref<1x1x128xf32, #tpu.memory_space<vmem>>, vector<1x1x128xf32>
    %5 = vector.shape_cast %4 : vector<1x1x128xf32> to vector<1x128xf32>
    %c0_5 = arith.constant 0 : index
    %c0_6 = arith.constant 0 : index
    %c0_7 = arith.constant 0 : index
    %6 = vector.load %arg4[%c0_5, %c0_6, %c0_7] : memref<1x1x128xf32, #tpu.memory_space<vmem>>, vector<1x1x128xf32>
    %7 = vector.shape_cast %6 : vector<1x1x128xf32> to vector<1x128xf32>
    %cst = arith.constant dense<0.000000e+00> : vector<9xf32>
    %8 = vector.multi_reduction <add>, %3, %cst [1] : vector<9x128xf32> to vector<9xf32>
    %9 = vector.shape_cast %8 : vector<9xf32> to vector<9x1xf32>
    %cst_8 = arith.constant 3.125000e-02 : f32
    %10 = vector.broadcast %cst_8 : f32 to vector<9x1xf32>
    %11 = arith.mulf %9, %10 : vector<9x1xf32>
    %12 = arith.mulf %3, %3 : vector<9x128xf32>
    %cst_9 = arith.constant dense<0.000000e+00> : vector<9xf32>
    %13 = vector.multi_reduction <add>, %12, %cst_9 [1] : vector<9x128xf32> to vector<9xf32>
    %14 = vector.shape_cast %13 : vector<9xf32> to vector<9x1xf32>
    %cst_10 = arith.constant 3.125000e-02 : f32
    %15 = vector.broadcast %cst_10 : f32 to vector<9x1xf32>
    %16 = arith.mulf %14, %15 : vector<9x1xf32>
    %17 = arith.mulf %11, %11 : vector<9x1xf32>
    %18 = arith.subf %16, %17 : vector<9x1xf32>
    %cst_11 = arith.constant 0.000000e+00 : f32
    %19 = vector.broadcast %cst_11 : f32 to vector<9x1xf32>
    %20 = arith.maximumf %18, %19 : vector<9x1xf32>
    %21 = vector.broadcast %11 : vector<9x1xf32> to vector<9x128xf32>
    %22 = arith.subf %3, %21 : vector<9x128xf32>
    %cst_12 = arith.constant 9.99999997E-7 : f32
    %23 = vector.broadcast %cst_12 : f32 to vector<9x1xf32>
    %24 = arith.addf %20, %23 : vector<9x1xf32>
    %25 = math.rsqrt %24 : vector<9x1xf32>
    %26 = vector.broadcast %25 : vector<9x1xf32> to vector<9x128xf32>
    %27 = arith.mulf %22, %26 : vector<9x128xf32>
    %28 = vector.broadcast %5 : vector<1x128xf32> to vector<9x128xf32>
    %29 = arith.mulf %27, %28 : vector<9x128xf32>
    %30 = vector.broadcast %7 : vector<1x128xf32> to vector<9x128xf32>
    %31 = arith.addf %29, %30 : vector<9x128xf32>
    %c0_13 = arith.constant 0 : index
    %c0_14 = arith.constant 0 : index
    %c0_15 = arith.constant 0 : index
    %32 = vector.load %arg5[%c0_13, %c0_14, %c0_15] : memref<1x128x1536xbf16, #tpu.memory_space<vmem>>, vector<1x128x1536xbf16>
    %33 = vector.shape_cast %32 : vector<1x128x1536xbf16> to vector<128x1536xbf16>
    %c0_16 = arith.constant 0 : index
    %c0_17 = arith.constant 0 : index
    %c0_18 = arith.constant 0 : index
    %34 = vector.load %arg6[%c0_16, %c0_17, %c0_18] : memref<1x1x1536xf32, #tpu.memory_space<vmem>>, vector<1x1x1536xf32>
    %35 = vector.shape_cast %34 : vector<1x1x1536xf32> to vector<1x1536xf32>
    %c0_19 = arith.constant 0 : index
    %c0_20 = arith.constant 0 : index
    %c0_21 = arith.constant 0 : index
    %36 = vector.load %arg7[%c0_19, %c0_20, %c0_21] : memref<1x512x128xbf16, #tpu.memory_space<vmem>>, vector<1x512x128xbf16>
    %37 = vector.shape_cast %36 : vector<1x512x128xbf16> to vector<512x128xbf16>
    %c0_22 = arith.constant 0 : index
    %c0_23 = arith.constant 0 : index
    %c0_24 = arith.constant 0 : index
    %38 = vector.load %arg8[%c0_22, %c0_23, %c0_24] : memref<1x1x128xf32, #tpu.memory_space<vmem>>, vector<1x1x128xf32>
    %39 = vector.shape_cast %38 : vector<1x1x128xf32> to vector<1x128xf32>
    %40 = arith.truncf %31 : vector<9x128xf32> to vector<9x128xbf16>
    %cst_25 = arith.constant dense<0.000000e+00> : vector<9x1536xf32>
    %41 = tpu.matmul %40, %33, %cst_25 {dimension_numbers = #tpu.dot_dimension_numbers<[1], [0], [0], [1], [0, 0, 1, 1], [], []>} : vector<9x128xbf16>, vector<128x1536xbf16>, vector<9x1536xf32> -> vector<9x1536xf32>
    %42 = vector.broadcast %35 : vector<1x1536xf32> to vector<9x1536xf32>
    %43 = arith.addf %41, %42 : vector<9x1536xf32>
    %44 = arith.truncf %43 : vector<9x1536xf32> to vector<9x1536xbf16>
    %45 = vector.extract_strided_slice %44 {offsets = [0, 0], sizes = [9, 128], strides = [1, 1]} : vector<9x1536xbf16> to vector<9x128xbf16>
    %46 = vector.extract_strided_slice %44 {offsets = [0, 128], sizes = [9, 128], strides = [1, 1]} : vector<9x1536xbf16> to vector<9x128xbf16>
    %47 = vector.extract_strided_slice %44 {offsets = [0, 256], sizes = [9, 128], strides = [1, 1]} : vector<9x1536xbf16> to vector<9x128xbf16>
    %48 = vector.extract_strided_slice %44 {offsets = [0, 384], sizes = [9, 128], strides = [1, 1]} : vector<9x1536xbf16> to vector<9x128xbf16>
    %49 = vector.shape_cast %45 : vector<9x128xbf16> to vector<1x9x128xbf16>
    %50 = vector.shape_cast %46 : vector<9x128xbf16> to vector<1x9x128xbf16>
    %51 = vector.shape_cast %47 : vector<9x128xbf16> to vector<1x9x128xbf16>
    %52 = vector.shape_cast %48 : vector<9x128xbf16> to vector<1x9x128xbf16>
    %53 = tpu.concatenate %49, %50, %51, %52 in 0 : vector<1x9x128xbf16>, vector<1x9x128xbf16>, vector<1x9x128xbf16>, vector<1x9x128xbf16> -> vector<4x9x128xbf16>
    %54 = vector.extract_strided_slice %44 {offsets = [0, 512], sizes = [9, 128], strides = [1, 1]} : vector<9x1536xbf16> to vector<9x128xbf16>
    %55 = vector.extract_strided_slice %44 {offsets = [0, 640], sizes = [9, 128], strides = [1, 1]} : vector<9x1536xbf16> to vector<9x128xbf16>
    %56 = vector.extract_strided_slice %44 {offsets = [0, 768], sizes = [9, 128], strides = [1, 1]} : vector<9x1536xbf16> to vector<9x128xbf16>
    %57 = vector.extract_strided_slice %44 {offsets = [0, 896], sizes = [9, 128], strides = [1, 1]} : vector<9x1536xbf16> to vector<9x128xbf16>
    %58 = vector.shape_cast %54 : vector<9x128xbf16> to vector<1x9x128xbf16>
    %59 = vector.shape_cast %55 : vector<9x128xbf16> to vector<1x9x128xbf16>
    %60 = vector.shape_cast %56 : vector<9x128xbf16> to vector<1x9x128xbf16>
    %61 = vector.shape_cast %57 : vector<9x128xbf16> to vector<1x9x128xbf16>
    %62 = tpu.concatenate %58, %59, %60, %61 in 0 : vector<1x9x128xbf16>, vector<1x9x128xbf16>, vector<1x9x128xbf16>, vector<1x9x128xbf16> -> vector<4x9x128xbf16>
    %63 = vector.extract_strided_slice %44 {offsets = [0, 1024], sizes = [9, 128], strides = [1, 1]} : vector<9x1536xbf16> to vector<9x128xbf16>
    %64 = vector.extract_strided_slice %44 {offsets = [0, 1152], sizes = [9, 128], strides = [1, 1]} : vector<9x1536xbf16> to vector<9x128xbf16>
    %65 = vector.extract_strided_slice %44 {offsets = [0, 1280], sizes = [9, 128], strides = [1, 1]} : vector<9x1536xbf16> to vector<9x128xbf16>
    %66 = vector.extract_strided_slice %44 {offsets = [0, 1408], sizes = [9, 128], strides = [1, 1]} : vector<9x1536xbf16> to vector<9x128xbf16>
    %67 = vector.shape_cast %63 : vector<9x128xbf16> to vector<1x9x128xbf16>
    %68 = vector.shape_cast %64 : vector<9x128xbf16> to vector<1x9x128xbf16>
    %69 = vector.shape_cast %65 : vector<9x128xbf16> to vector<1x9x128xbf16>
    %70 = vector.shape_cast %66 : vector<9x128xbf16> to vector<1x9x128xbf16>
    %71 = tpu.concatenate %67, %68, %69, %70 in 0 : vector<1x9x128xbf16>, vector<1x9x128xbf16>, vector<1x9x128xbf16>, vector<1x9x128xbf16> -> vector<4x9x128xbf16>
    "tpu.trace_start"() <{level = 10 : i32, message = "hqe,hke->hqk"}> : () -> ()
    %cst_26 = arith.constant dense<0.000000e+00> : vector<4x9x9xf32>
    %72 = tpu.matmul %53, %62, %cst_26 {dimension_numbers = #tpu.dot_dimension_numbers<[2], [2], [1], [1], [0, 0, 0, 1, 1, 1], [0], [0]>} : vector<4x9x128xbf16>, vector<4x9x128xbf16>, vector<4x9x9xf32> -> vector<4x9x9xf32>
    "tpu.trace_stop"() : () -> ()
    %cst_27 = arith.constant dense<0xFF800000> : vector<4x9xf32>
    %73 = vector.multi_reduction <maximumf>, %72, %cst_27 [2] : vector<4x9x9xf32> to vector<4x9xf32>
    %74 = vector.shape_cast %73 : vector<4x9xf32> to vector<4x9x1xf32>
    %75 = vector.broadcast %74 : vector<4x9x1xf32> to vector<4x9x9xf32>
    %76 = arith.subf %72, %75 : vector<4x9x9xf32>
    %77 = math.exp %76 : vector<4x9x9xf32>
    %cst_28 = arith.constant dense<0.000000e+00> : vector<4x9xf32>
    %78 = vector.multi_reduction <add>, %77, %cst_28 [2] : vector<4x9x9xf32> to vector<4x9xf32>
    %79 = vector.shape_cast %78 : vector<4x9xf32> to vector<4x9x1xf32>
    %80 = tpu.reciprocal %79 {approx = true} : vector<4x9x1xf32> -> vector<4x9x1xf32>
    %81 = vector.broadcast %80 : vector<4x9x1xf32> to vector<4x9x9xf32>
    %82 = arith.mulf %77, %81 : vector<4x9x9xf32>
    %83 = arith.truncf %82 : vector<4x9x9xf32> to vector<4x9x9xbf16>
    "tpu.trace_start"() <{level = 10 : i32, message = "hqk,hke->hqe"}> : () -> ()
    %cst_29 = arith.constant dense<0.000000e+00> : vector<4x9x128xf32>
    %84 = tpu.matmul %83, %71, %cst_29 {dimension_numbers = #tpu.dot_dimension_numbers<[2], [1], [1], [2], [0, 0, 0, 1, 1, 2], [0], [0]>} : vector<4x9x9xbf16>, vector<4x9x128xbf16>, vector<4x9x128xf32> -> vector<4x9x128xf32>
    "tpu.trace_stop"() : () -> ()
    %85 = arith.truncf %84 : vector<4x9x128xf32> to vector<4x9x128xbf16>
    %86 = vector.extract_strided_slice %85 {offsets = [0, 0, 0], sizes = [1, 9, 128], strides = [1, 1, 1]} : vector<4x9x128xbf16> to vector<1x9x128xbf16>
    %87 = vector.shape_cast %86 : vector<1x9x128xbf16> to vector<9x128xbf16>
    %88 = vector.extract_strided_slice %85 {offsets = [1, 0, 0], sizes = [1, 9, 128], strides = [1, 1, 1]} : vector<4x9x128xbf16> to vector<1x9x128xbf16>
    %89 = vector.shape_cast %88 : vector<1x9x128xbf16> to vector<9x128xbf16>
    %90 = vector.extract_strided_slice %85 {offsets = [2, 0, 0], sizes = [1, 9, 128], strides = [1, 1, 1]} : vector<4x9x128xbf16> to vector<1x9x128xbf16>
    %91 = vector.shape_cast %90 : vector<1x9x128xbf16> to vector<9x128xbf16>
    %92 = vector.extract_strided_slice %85 {offsets = [3, 0, 0], sizes = [1, 9, 128], strides = [1, 1, 1]} : vector<4x9x128xbf16> to vector<1x9x128xbf16>
    %93 = vector.shape_cast %92 : vector<1x9x128xbf16> to vector<9x128xbf16>
    %94 = tpu.concatenate %87, %89, %91, %93 in 1 : vector<9x128xbf16>, vector<9x128xbf16>, vector<9x128xbf16>, vector<9x128xbf16> -> vector<9x512xbf16>
    %cst_30 = arith.constant dense<0.000000e+00> : vector<9x128xf32>
    %95 = tpu.matmul %94, %37, %cst_30 {dimension_numbers = #tpu.dot_dimension_numbers<[1], [0], [0], [1], [0, 0, 1, 1], [], []>} : vector<9x512xbf16>, vector<512x128xbf16>, vector<9x128xf32> -> vector<9x128xf32>
    %96 = vector.broadcast %39 : vector<1x128xf32> to vector<9x128xf32>
    %97 = arith.addf %95, %96 : vector<9x128xf32>
    %98 = arith.addf %3, %97 : vector<9x128xf32>
    %c0_31 = arith.constant 0 : index
    %c0_32 = arith.constant 0 : index
    %c0_33 = arith.constant 0 : index
    %99 = vector.load %arg9[%c0_31, %c0_32, %c0_33] : memref<1x1x128xf32, #tpu.memory_space<vmem>>, vector<1x1x128xf32>
    %100 = vector.shape_cast %99 : vector<1x1x128xf32> to vector<1x128xf32>
    %c0_34 = arith.constant 0 : index
    %c0_35 = arith.constant 0 : index
    %c0_36 = arith.constant 0 : index
    %101 = vector.load %arg10[%c0_34, %c0_35, %c0_36] : memref<1x1x128xf32, #tpu.memory_space<vmem>>, vector<1x1x128xf32>
    %102 = vector.shape_cast %101 : vector<1x1x128xf32> to vector<1x128xf32>
    %cst_37 = arith.constant dense<0.000000e+00> : vector<9xf32>
    %103 = vector.multi_reduction <add>, %98, %cst_37 [1] : vector<9x128xf32> to vector<9xf32>
    %104 = vector.shape_cast %103 : vector<9xf32> to vector<9x1xf32>
    %cst_38 = arith.constant 3.125000e-02 : f32
    %105 = vector.broadcast %cst_38 : f32 to vector<9x1xf32>
    %106 = arith.mulf %104, %105 : vector<9x1xf32>
    %107 = arith.mulf %98, %98 : vector<9x128xf32>
    %cst_39 = arith.constant dense<0.000000e+00> : vector<9xf32>
    %108 = vector.multi_reduction <add>, %107, %cst_39 [1] : vector<9x128xf32> to vector<9xf32>
    %109 = vector.shape_cast %108 : vector<9xf32> to vector<9x1xf32>
    %cst_40 = arith.constant 3.125000e-02 : f32
    %110 = vector.broadcast %cst_40 : f32 to vector<9x1xf32>
    %111 = arith.mulf %109, %110 : vector<9x1xf32>
    %112 = arith.mulf %106, %106 : vector<9x1xf32>
    %113 = arith.subf %111, %112 : vector<9x1xf32>
    %cst_41 = arith.constant 0.000000e+00 : f32
    %114 = vector.broadcast %cst_41 : f32 to vector<9x1xf32>
    %115 = arith.maximumf %113, %114 : vector<9x1xf32>
    %116 = vector.broadcast %106 : vector<9x1xf32> to vector<9x128xf32>
    %117 = arith.subf %98, %116 : vector<9x128xf32>
    %cst_42 = arith.constant 9.99999997E-7 : f32
    %118 = vector.broadcast %cst_42 : f32 to vector<9x1xf32>
    %119 = arith.addf %115, %118 : vector<9x1xf32>
    %120 = math.rsqrt %119 : vector<9x1xf32>
    %121 = vector.broadcast %120 : vector<9x1xf32> to vector<9x128xf32>
    %122 = arith.mulf %117, %121 : vector<9x128xf32>
    %123 = vector.broadcast %100 : vector<1x128xf32> to vector<9x128xf32>
    %124 = arith.mulf %122, %123 : vector<9x128xf32>
    %125 = vector.broadcast %102 : vector<1x128xf32> to vector<9x128xf32>
    %126 = arith.addf %124, %125 : vector<9x128xf32>
    %c0_43 = arith.constant 0 : index
    %c0_44 = arith.constant 0 : index
    %c0_45 = arith.constant 0 : index
    %127 = vector.load %arg11[%c0_43, %c0_44, %c0_45] : memref<1x128x128xbf16, #tpu.memory_space<vmem>>, vector<1x128x128xbf16>
    %128 = vector.shape_cast %127 : vector<1x128x128xbf16> to vector<128x128xbf16>
    %c0_46 = arith.constant 0 : index
    %c0_47 = arith.constant 0 : index
    %c0_48 = arith.constant 0 : index
    %129 = vector.load %arg12[%c0_46, %c0_47, %c0_48] : memref<1x1x128xf32, #tpu.memory_space<vmem>>, vector<1x1x128xf32>
    %130 = vector.shape_cast %129 : vector<1x1x128xf32> to vector<1x128xf32>
    %c0_49 = arith.constant 0 : index
    %c0_50 = arith.constant 0 : index
    %c0_51 = arith.constant 0 : index
    %131 = vector.load %arg13[%c0_49, %c0_50, %c0_51] : memref<1x128x128xbf16, #tpu.memory_space<vmem>>, vector<1x128x128xbf16>
    %132 = vector.shape_cast %131 : vector<1x128x128xbf16> to vector<128x128xbf16>
    %c0_52 = arith.constant 0 : index
    %c0_53 = arith.constant 0 : index
    %c0_54 = arith.constant 0 : index
    %133 = vector.load %arg14[%c0_52, %c0_53, %c0_54] : memref<1x1x128xf32, #tpu.memory_space<vmem>>, vector<1x1x128xf32>
    %134 = vector.shape_cast %133 : vector<1x1x128xf32> to vector<1x128xf32>
    %135 = arith.truncf %126 : vector<9x128xf32> to vector<9x128xbf16>
    %cst_55 = arith.constant dense<0.000000e+00> : vector<9x128xf32>
    %136 = tpu.matmul %135, %128, %cst_55 {dimension_numbers = #tpu.dot_dimension_numbers<[1], [0], [0], [1], [0, 0, 1, 1], [], []>} : vector<9x128xbf16>, vector<128x128xbf16>, vector<9x128xf32> -> vector<9x128xf32>
    %137 = vector.broadcast %130 : vector<1x128xf32> to vector<9x128xf32>
    %138 = arith.addf %136, %137 : vector<9x128xf32>
    %cst_56 = arith.constant 5.000000e-01 : f32
    %139 = vector.broadcast %cst_56 : f32 to vector<9x128xf32>
    %140 = arith.mulf %139, %138 : vector<9x128xf32>
    %cst_57 = arith.constant 0.707106769 : f32
    %141 = vector.broadcast %cst_57 : f32 to vector<9x128xf32>
    %142 = arith.mulf %138, %141 : vector<9x128xf32>
    %cst_58 = arith.constant -4.000000e+00 : f32
    %cst_59 = arith.constant 4.000000e+00 : f32
    %143 = vector.broadcast %cst_58 : f32 to vector<9x128xf32>
    %144 = arith.maximumf %143, %142 : vector<9x128xf32>
    %145 = vector.broadcast %cst_59 : f32 to vector<9x128xf32>
    %146 = arith.minimumf %145, %144 : vector<9x128xf32>
    %147 = arith.mulf %146, %146 : vector<9x128xf32>
    %cst_60 = arith.constant 2.29050653E-4 : f32
    %148 = vector.broadcast %cst_60 : f32 to vector<9x128xf32>
    %149 = arith.mulf %148, %147 : vector<9x128xf32>
    %cst_61 = arith.constant 0.00340829091 : f32
    %150 = vector.broadcast %cst_61 : f32 to vector<9x128xf32>
    %151 = arith.addf %149, %150 : vector<9x128xf32>
    %152 = arith.mulf %151, %147 : vector<9x128xf32>
    %cst_62 = arith.constant 0.0509556942 : f32
    %153 = vector.broadcast %cst_62 : f32 to vector<9x128xf32>
    %154 = arith.addf %152, %153 : vector<9x128xf32>
    %155 = arith.mulf %154, %147 : vector<9x128xf32>
    %cst_63 = arith.constant 0.185208321 : f32
    %156 = vector.broadcast %cst_63 : f32 to vector<9x128xf32>
    %157 = arith.addf %155, %156 : vector<9x128xf32>
    %158 = arith.mulf %157, %147 : vector<9x128xf32>
    %cst_64 = arith.constant 1.12837911 : f32
    %159 = vector.broadcast %cst_64 : f32 to vector<9x128xf32>
    %160 = arith.addf %158, %159 : vector<9x128xf32>
    %161 = arith.mulf %146, %160 : vector<9x128xf32>
    %cst_65 = arith.constant -1.17916031E-7 : f32
    %162 = vector.broadcast %cst_65 : f32 to vector<9x128xf32>
    %163 = arith.mulf %162, %147 : vector<9x128xf32>
    %cst_66 = arith.constant 2.35479656E-5 : f32
    %164 = vector.broadcast %cst_66 : f32 to vector<9x128xf32>
    %165 = arith.addf %163, %164 : vector<9x128xf32>
    %166 = arith.mulf %165, %147 : vector<9x128xf32>
    %cst_67 = arith.constant 0.00101796258 : f32
    %167 = vector.broadcast %cst_67 : f32 to vector<9x128xf32>
    %168 = arith.addf %166, %167 : vector<9x128xf32>
    %169 = arith.mulf %168, %147 : vector<9x128xf32>
    %cst_68 = arith.constant 0.0140704699 : f32
    %170 = vector.broadcast %cst_68 : f32 to vector<9x128xf32>
    %171 = arith.addf %169, %170 : vector<9x128xf32>
    %172 = arith.mulf %171, %147 : vector<9x128xf32>
    %cst_69 = arith.constant 0.110985048 : f32
    %173 = vector.broadcast %cst_69 : f32 to vector<9x128xf32>
    %174 = arith.addf %172, %173 : vector<9x128xf32>
    %175 = arith.mulf %174, %147 : vector<9x128xf32>
    %cst_70 = arith.constant 0.497469246 : f32
    %176 = vector.broadcast %cst_70 : f32 to vector<9x128xf32>
    %177 = arith.addf %175, %176 : vector<9x128xf32>
    %178 = arith.mulf %177, %147 : vector<9x128xf32>
    %cst_71 = arith.constant 1.000000e+00 : f32
    %179 = vector.broadcast %cst_71 : f32 to vector<9x128xf32>
    %180 = arith.addf %178, %179 : vector<9x128xf32>
    %181 = tpu.reciprocal %180 {approx = true} : vector<9x128xf32> -> vector<9x128xf32>
    %182 = arith.mulf %161, %181 : vector<9x128xf32>
    %cst_72 = arith.constant 1.000000e+00 : f32
    %183 = vector.broadcast %cst_72 : f32 to vector<9x128xf32>
    %184 = arith.addf %183, %182 : vector<9x128xf32>
    %185 = arith.mulf %140, %184 : vector<9x128xf32>
    %186 = arith.truncf %185 : vector<9x128xf32> to vector<9x128xbf16>
    %cst_73 = arith.constant dense<0.000000e+00> : vector<9x128xf32>
    %187 = tpu.matmul %186, %132, %cst_73 {dimension_numbers = #tpu.dot_dimension_numbers<[1], [0], [0], [1], [0, 0, 1, 1], [], []>} : vector<9x128xbf16>, vector<128x128xbf16>, vector<9x128xf32> -> vector<9x128xf32>
    %188 = vector.broadcast %134 : vector<1x128xf32> to vector<9x128xf32>
    %189 = arith.addf %187, %188 : vector<9x128xf32>
    %190 = arith.addf %98, %189 : vector<9x128xf32>
    %c0_74 = arith.constant 0 : index
    %c0_75 = arith.constant 0 : index
    %191 = vector.load %arg18[%c0_74, %c0_75] : memref<9x128xf32, #tpu.memory_space<vmem>>, vector<9x128xf32>
    tpu.vector_store %arg18[%c0_74, %c0_75], %190 {strides = array<i32>} : memref<9x128xf32, #tpu.memory_space<vmem>>, vector<9x128xf32>,
    %c1_i32 = arith.constant 1 : i32
    %192 = arith.cmpi eq, %arg1, %c1_i32 : i32
    %193 = arith.extui %192 : i1 to i32
    %c0_i32_76 = arith.constant 0 : i32
    %194 = arith.cmpi ne, %193, %c0_i32_76 : i32
    scf.if %194 {
      %c0_77 = arith.constant 0 : index
      %c0_78 = arith.constant 0 : index
      %195 = vector.load %arg15[%c0_77, %c0_78] : memref<1x128xf32, #tpu.memory_space<vmem>>, vector<1x128xf32>
      %c0_79 = arith.constant 0 : index
      %c0_80 = arith.constant 0 : index
      %196 = vector.load %arg16[%c0_79, %c0_80] : memref<1x128xf32, #tpu.memory_space<vmem>>, vector<1x128xf32>
      %cst_81 = arith.constant dense<0.000000e+00> : vector<9xf32>
      %197 = vector.multi_reduction <add>, %190, %cst_81 [1] : vector<9x128xf32> to vector<9xf32>
      %198 = vector.shape_cast %197 : vector<9xf32> to vector<9x1xf32>
      %cst_82 = arith.constant 3.125000e-02 : f32
      %199 = vector.broadcast %cst_82 : f32 to vector<9x1xf32>
      %200 = arith.mulf %198, %199 : vector<9x1xf32>
      %201 = arith.mulf %190, %190 : vector<9x128xf32>
      %cst_83 = arith.constant dense<0.000000e+00> : vector<9xf32>
      %202 = vector.multi_reduction <add>, %201, %cst_83 [1] : vector<9x128xf32> to vector<9xf32>
      %203 = vector.shape_cast %202 : vector<9xf32> to vector<9x1xf32>
      %cst_84 = arith.constant 3.125000e-02 : f32
      %204 = vector.broadcast %cst_84 : f32 to vector<9x1xf32>
      %205 = arith.mulf %203, %204 : vector<9x1xf32>
      %206 = arith.mulf %200, %200 : vector<9x1xf32>
      %207 = arith.subf %205, %206 : vector<9x1xf32>
      %cst_85 = arith.constant 0.000000e+00 : f32
      %208 = vector.broadcast %cst_85 : f32 to vector<9x1xf32>
      %209 = arith.maximumf %207, %208 : vector<9x1xf32>
      %210 = vector.broadcast %200 : vector<9x1xf32> to vector<9x128xf32>
      %211 = arith.subf %190, %210 : vector<9x128xf32>
      %cst_86 = arith.constant 9.99999997E-7 : f32
      %212 = vector.broadcast %cst_86 : f32 to vector<9x1xf32>
      %213 = arith.addf %209, %212 : vector<9x1xf32>
      %214 = math.rsqrt %213 : vector<9x1xf32>
      %215 = vector.broadcast %214 : vector<9x1xf32> to vector<9x128xf32>
      %216 = arith.mulf %211, %215 : vector<9x128xf32>
      %217 = vector.broadcast %195 : vector<1x128xf32> to vector<9x128xf32>
      %218 = arith.mulf %216, %217 : vector<9x128xf32>
      %219 = vector.broadcast %196 : vector<1x128xf32> to vector<9x128xf32>
      %220 = arith.addf %218, %219 : vector<9x128xf32>
      %c0_87 = arith.constant 0 : index
      %c0_88 = arith.constant 0 : index
      %c0_89 = arith.constant 0 : index
      %221 = vector.load %arg17[%c0_87, %c0_88, %c0_89] : memref<1x9x128xf32, #tpu.memory_space<vmem>>, vector<1x9x128xf32>
      %222 = vector.shape_cast %221 : vector<1x9x128xf32> to vector<9x128xf32>
      %223 = vector.shape_cast %220 : vector<9x128xf32> to vector<1x9x128xf32>
      tpu.vector_store %arg17[%c0_87, %c0_88, %c0_89], %223 {strides = array<i32>} : memref<1x9x128xf32, #tpu.memory_space<vmem>>, vector<1x9x128xf32>,
    } else {
    }
    return
  }
  func.func @transform_0(%arg0: i32, %arg1: i32) -> (i32, i32, i32) {
    %c0_i32 = arith.constant 0 : i32
    %c0_i32_0 = arith.constant 0 : i32
    %c0_i32_1 = arith.constant 0 : i32
    return %arg0, %c0_i32, %c0_i32_0 : i32, i32, i32
  }
  func.func @transform_1(%arg0: i32, %arg1: i32) -> (i32, i32, i32) {
    %c0_i32 = arith.constant 0 : i32
    %c0_i32_0 = arith.constant 0 : i32
    %c0_i32_1 = arith.constant 0 : i32
    return %arg1, %c0_i32, %c0_i32_0 : i32, i32, i32
  }
  func.func @transform_2(%arg0: i32, %arg1: i32) -> (i32, i32, i32) {
    %c0_i32 = arith.constant 0 : i32
    %c0_i32_0 = arith.constant 0 : i32
    %c0_i32_1 = arith.constant 0 : i32
    return %arg1, %c0_i32, %c0_i32_0 : i32, i32, i32
  }
  func.func @transform_3(%arg0: i32, %arg1: i32) -> (i32, i32, i32) {
    %c0_i32 = arith.constant 0 : i32
    %c0_i32_0 = arith.constant 0 : i32
    %c0_i32_1 = arith.constant 0 : i32
    return %arg1, %c0_i32, %c0_i32_0 : i32, i32, i32
  }
  func.func @transform_4(%arg0: i32, %arg1: i32) -> (i32, i32, i32) {
    %c0_i32 = arith.constant 0 : i32
    %c0_i32_0 = arith.constant 0 : i32
    %c0_i32_1 = arith.constant 0 : i32
    return %arg1, %c0_i32, %c0_i32_0 : i32, i32, i32
  }
  func.func @transform_5(%arg0: i32, %arg1: i32) -> (i32, i32, i32) {
    %c0_i32 = arith.constant 0 : i32
    %c0_i32_0 = arith.constant 0 : i32
    %c0_i32_1 = arith.constant 0 : i32
    return %arg1, %c0_i32, %c0_i32_0 : i32, i32, i32
  }
  func.func @transform_6(%arg0: i32, %arg1: i32) -> (i32, i32, i32) {
    %c0_i32 = arith.constant 0 : i32
    %c0_i32_0 = arith.constant 0 : i32
    %c0_i32_1 = arith.constant 0 : i32
    return %arg1, %c0_i32, %c0_i32_0 : i32, i32, i32
  }
  func.func @transform_7(%arg0: i32, %arg1: i32) -> (i32, i32, i32) {
    %c0_i32 = arith.constant 0 : i32
    %c0_i32_0 = arith.constant 0 : i32
    %c0_i32_1 = arith.constant 0 : i32
    return %arg1, %c0_i32, %c0_i32_0 : i32, i32, i32
  }
  func.func @transform_8(%arg0: i32, %arg1: i32) -> (i32, i32, i32) {
    %c0_i32 = arith.constant 0 : i32
    %c0_i32_0 = arith.constant 0 : i32
    %c0_i32_1 = arith.constant 0 : i32
    return %arg1, %c0_i32, %c0_i32_0 : i32, i32, i32
  }
  func.func @transform_9(%arg0: i32, %arg1: i32) -> (i32, i32, i32) {
    %c0_i32 = arith.constant 0 : i32
    %c0_i32_0 = arith.constant 0 : i32
    %c0_i32_1 = arith.constant 0 : i32
    return %arg1, %c0_i32, %c0_i32_0 : i32, i32, i32
  }
  func.func @transform_10(%arg0: i32, %arg1: i32) -> (i32, i32, i32) {
    %c0_i32 = arith.constant 0 : i32
    %c0_i32_0 = arith.constant 0 : i32
    %c0_i32_1 = arith.constant 0 : i32
    return %arg1, %c0_i32, %c0_i32_0 : i32, i32, i32
  }
  func.func @transform_11(%arg0: i32, %arg1: i32) -> (i32, i32, i32) {
    %c0_i32 = arith.constant 0 : i32
    %c0_i32_0 = arith.constant 0 : i32
    %c0_i32_1 = arith.constant 0 : i32
    return %arg1, %c0_i32, %c0_i32_0 : i32, i32, i32
  }
  func.func @transform_12(%arg0: i32, %arg1: i32) -> (i32, i32, i32) {
    %c0_i32 = arith.constant 0 : i32
    %c0_i32_0 = arith.constant 0 : i32
    %c0_i32_1 = arith.constant 0 : i32
    return %arg1, %c0_i32, %c0_i32_0 : i32, i32, i32
  }
  func.func @transform_13(%arg0: i32, %arg1: i32) -> (i32, i32) {
    %c0_i32 = arith.constant 0 : i32
    %c0_i32_0 = arith.constant 0 : i32
    %c0_i32_1 = arith.constant 0 : i32
    return %c0_i32, %c0_i32_0 : i32, i32
  }
  func.func @transform_14(%arg0: i32, %arg1: i32) -> (i32, i32) {
    %c0_i32 = arith.constant 0 : i32
    %c0_i32_0 = arith.constant 0 : i32
    %c0_i32_1 = arith.constant 0 : i32
    return %c0_i32, %c0_i32_0 : i32, i32
  }
  func.func @transform_15(%arg0: i32, %arg1: i32) -> (i32, i32, i32) {
    %c0_i32 = arith.constant 0 : i32
    %c0_i32_0 = arith.constant 0 : i32
    %c0_i32_1 = arith.constant 0 : i32
    return %arg0, %c0_i32, %c0_i32_0 : i32, i32, i32
  }
}

module attributes {stable_mosaic.version = 11 : i64} {
  func.func @_encoder_stack_kernel(%arg0: i32, %arg1: i32, %arg2: memref<1x9x128xf32, #tpu.memory_space<vmem>>, %arg3: memref<1x1x128xf32, #tpu.memory_space<vmem>>, %arg4: memref<1x1x128xf32, #tpu.memory_space<vmem>>, %arg5: memref<1x128x1536xbf16, #tpu.memory_space<vmem>>, %arg6: memref<1x1x1536xf32, #tpu.memory_space<vmem>>, %arg7: memref<1x512x128xbf16, #tpu.memory_space<vmem>>, %arg8: memref<1x1x128xf32, #tpu.memory_space<vmem>>, %arg9: memref<1x1x128xf32, #tpu.memory_space<vmem>>, %arg10: memref<1x1x128xf32, #tpu.memory_space<vmem>>, %arg11: memref<1x128x128xbf16, #tpu.memory_space<vmem>>, %arg12: memref<1x1x128xf32, #tpu.memory_space<vmem>>, %arg13: memref<1x128x128xbf16, #tpu.memory_space<vmem>>, %arg14: memref<1x1x128xf32, #tpu.memory_space<vmem>>, %arg15: memref<1x128xf32, #tpu.memory_space<vmem>>, %arg16: memref<1x128xf32, #tpu.memory_space<vmem>>, %arg17: memref<1x9x128xf32, #tpu.memory_space<vmem>>, %arg18: memref<9x128xf32, #tpu.memory_space<vmem>>) attributes {dimension_semantics = [#tpu.dimension_semantics<parallel>, #tpu.dimension_semantics<arbitrary>], iteration_bounds = array<i64: 2, 2>, scalar_prefetch = 0 : i64, scratch_operands = 1 : i64, tpu.core_type = #tpu.core_type<tc>, window_params = [{transform_indices = @transform_0, window_bounds = array<i64: 1, 9, 128>}, {transform_indices = @transform_1, window_bounds = array<i64: 1, 1, 128>}, {transform_indices = @transform_2, window_bounds = array<i64: 1, 1, 128>}, {transform_indices = @transform_3, window_bounds = array<i64: 1, 128, 1536>}, {transform_indices = @transform_4, window_bounds = array<i64: 1, 1, 1536>}, {transform_indices = @transform_5, window_bounds = array<i64: 1, 512, 128>}, {transform_indices = @transform_6, window_bounds = array<i64: 1, 1, 128>}, {transform_indices = @transform_7, window_bounds = array<i64: 1, 1, 128>}, {transform_indices = @transform_8, window_bounds = array<i64: 1, 1, 128>}, {transform_indices = @transform_9, window_bounds = array<i64: 1, 128, 128>}, {transform_indices = @transform_10, window_bounds = array<i64: 1, 1, 128>}, {transform_indices = @transform_11, window_bounds = array<i64: 1, 128, 128>}, {transform_indices = @transform_12, window_bounds = array<i64: 1, 1, 128>}, {pipeline_mode = #tpu.pipeline_mode<synchronous>, transform_indices = @transform_13, window_bounds = array<i64: 1, 128>}, {pipeline_mode = #tpu.pipeline_mode<synchronous>, transform_indices = @transform_14, window_bounds = array<i64: 1, 128>}, {transform_indices = @transform_15, window_bounds = array<i64: 1, 9, 128>}]} {
    %c0_i32 = arith.constant 0 : i32
    %0 = arith.cmpi eq, %arg1, %c0_i32 : i32
    %1 = arith.extui %0 : i1 to i32
    %c0_i32_0 = arith.constant 0 : i32
    %2 = arith.cmpi ne, %1, %c0_i32_0 : i32
    scf.if %2 {
      %c0_77 = arith.constant 0 : index
      %c0_78 = arith.constant 0 : index
      %c0_79 = arith.constant 0 : index
      %195 = vector.load %arg2[%c0_77, %c0_78, %c0_79] : memref<1x9x128xf32, #tpu.memory_space<vmem>>, vector<1x9x128xf32>
      %196 = vector.shape_cast %195 : vector<1x9x128xf32> to vector<9x128xf32>
      %c0_80 = arith.constant 0 : index
      %c0_81 = arith.constant 0 : index
      %197 = vector.load %arg18[%c0_80, %c0_81] : memref<9x128xf32, #tpu.memory_space<vmem>>, vector<9x128xf32>
      tpu.vector_store %arg18[%c0_80, %c0_81], %196 {strides = array<i32>} : memref<9x128xf32, #tpu.memory_space<vmem>>, vector<9x128xf32>,
    } else {
    }
    %c0 = arith.constant 0 : index
    %c0_1 = arith.constant 0 : index
    %3 = vector.load %arg18[%c0, %c0_1] : memref<9x128xf32, #tpu.memory_space<vmem>>, vector<9x128xf32>
    %c0_2 = arith.constant 0 : index
    %c0_3 = arith.constant 0 : index
    %c0_4 = arith.constant 0 : index
    %4 = vector.load %arg3[%c0_2, %c0_3, %c0_4] : memref<1x1x128xf32, #tpu.memory_space<vmem>>, vector<1x1x128xf32>
    %5 = vector.shape_cast %4 : vector<1x1x128xf32> to vector<1x128xf32>
    %c0_5 = arith.constant 0 : index
    %c0_6 = arith.constant 0 : index
    %c0_7 = arith.constant 0 : index
    %6 = vector.load %arg4[%c0_5, %c0_6, %c0_7] : memref<1x1x128xf32, #tpu.memory_space<vmem>>, vector<1x1x128xf32>
    %7 = vector.shape_cast %6 : vector<1x1x128xf32> to vector<1x128xf32>
    %cst = arith.constant dense<0.000000e+00> : vector<9xf32>
    %8 = vector.multi_reduction <add>, %3, %cst [1] : vector<9x128xf32> to vector<9xf32>
    %9 = vector.shape_cast %8 : vector<9xf32> to vector<9x1xf32>
    %cst_8 = arith.constant 3.125000e-02 : f32
    %10 = vector.broadcast %cst_8 : f32 to vector<9x1xf32>
    %11 = arith.mulf %9, %10 : vector<9x1xf32>
    %12 = arith.mulf %3, %3 : vector<9x128xf32>
    %cst_9 = arith.constant dense<0.000000e+00> : vector<9xf32>
    %13 = vector.multi_reduction <add>, %12, %cst_9 [1] : vector<9x128xf32> to vector<9xf32>
    %14 = vector.shape_cast %13 : vector<9xf32> to vector<9x1xf32>
    %cst_10 = arith.constant 3.125000e-02 : f32
    %15 = vector.broadcast %cst_10 : f32 to vector<9x1xf32>
    %16 = arith.mulf %14, %15 : vector<9x1xf32>
    %17 = arith.mulf %11, %11 : vector<9x1xf32>
    %18 = arith.subf %16, %17 : vector<9x1xf32>
    %cst_11 = arith.constant 0.000000e+00 : f32
    %19 = vector.broadcast %cst_11 : f32 to vector<9x1xf32>
    %20 = arith.maximumf %18, %19 : vector<9x1xf32>
    %21 = vector.broadcast %11 : vector<9x1xf32> to vector<9x128xf32>
    %22 = arith.subf %3, %21 : vector<9x128xf32>
    %cst_12 = arith.constant 9.99999997E-7 : f32
    %23 = vector.broadcast %cst_12 : f32 to vector<9x1xf32>
    %24 = arith.addf %20, %23 : vector<9x1xf32>
    %25 = math.rsqrt %24 : vector<9x1xf32>
    %26 = vector.broadcast %25 : vector<9x1xf32> to vector<9x128xf32>
    %27 = arith.mulf %22, %26 : vector<9x128xf32>
    %28 = vector.broadcast %5 : vector<1x128xf32> to vector<9x128xf32>
    %29 = arith.mulf %27, %28 : vector<9x128xf32>
    %30 = vector.broadcast %7 : vector<1x128xf32> to vector<9x128xf32>
    %31 = arith.addf %29, %30 : vector<9x128xf32>
    %c0_13 = arith.constant 0 : index
    %c0_14 = arith.constant 0 : index
    %c0_15 = arith.constant 0 : index
    %32 = vector.load %arg5[%c0_13, %c0_14, %c0_15] : memref<1x128x1536xbf16, #tpu.memory_space<vmem>>, vector<1x128x1536xbf16>
    %33 = vector.shape_cast %32 : vector<1x128x1536xbf16> to vector<128x1536xbf16>
    %c0_16 = arith.constant 0 : index
    %c0_17 = arith.constant 0 : index
    %c0_18 = arith.constant 0 : index
    %34 = vector.load %arg6[%c0_16, %c0_17, %c0_18] : memref<1x1x1536xf32, #tpu.memory_space<vmem>>, vector<1x1x1536xf32>
    %35 = vector.shape_cast %34 : vector<1x1x1536xf32> to vector<1x1536xf32>
    %c0_19 = arith.constant 0 : index
    %c0_20 = arith.constant 0 : index
    %c0_21 = arith.constant 0 : index
    %36 = vector.load %arg7[%c0_19, %c0_20, %c0_21] : memref<1x512x128xbf16, #tpu.memory_space<vmem>>, vector<1x512x128xbf16>
    %37 = vector.shape_cast %36 : vector<1x512x128xbf16> to vector<512x128xbf16>
    %c0_22 = arith.constant 0 : index
    %c0_23 = arith.constant 0 : index
    %c0_24 = arith.constant 0 : index
    %38 = vector.load %arg8[%c0_22, %c0_23, %c0_24] : memref<1x1x128xf32, #tpu.memory_space<vmem>>, vector<1x1x128xf32>
    %39 = vector.shape_cast %38 : vector<1x1x128xf32> to vector<1x128xf32>
    %40 = arith.truncf %31 : vector<9x128xf32> to vector<9x128xbf16>
    %cst_25 = arith.constant dense<0.000000e+00> : vector<9x1536xf32>
    %41 = tpu.matmul %40, %33, %cst_25 {dimension_numbers = #tpu.dot_dimension_numbers<[1], [0], [0], [1], [0, 0, 1, 1], [], []>} : vector<9x128xbf16>, vector<128x1536xbf16>, vector<9x1536xf32> -> vector<9x1536xf32>
    %42 = vector.broadcast %35 : vector<1x1536xf32> to vector<9x1536xf32>
    %43 = arith.addf %41, %42 : vector<9x1536xf32>
    %44 = arith.truncf %43 : vector<9x1536xf32> to vector<9x1536xbf16>
    %45 = vector.extract_strided_slice %44 {offsets = [0, 0], sizes = [9, 128], strides = [1, 1]} : vector<9x1536xbf16> to vector<9x128xbf16>
    %46 = vector.extract_strided_slice %44 {offsets = [0, 128], sizes = [9, 128], strides = [1, 1]} : vector<9x1536xbf16> to vector<9x128xbf16>
    %47 = vector.extract_strided_slice %44 {offsets = [0, 256], sizes = [9, 128], strides = [1, 1]} : vector<9x1536xbf16> to vector<9x128xbf16>
    %48 = vector.extract_strided_slice %44 {offsets = [0, 384], sizes = [9, 128], strides = [1, 1]} : vector<9x1536xbf16> to vector<9x128xbf16>
    %49 = vector.shape_cast %45 : vector<9x128xbf16> to vector<1x9x128xbf16>
    %50 = vector.shape_cast %46 : vector<9x128xbf16> to vector<1x9x128xbf16>
    %51 = vector.shape_cast %47 : vector<9x128xbf16> to vector<1x9x128xbf16>
    %52 = vector.shape_cast %48 : vector<9x128xbf16> to vector<1x9x128xbf16>
    %53 = tpu.concatenate %49, %50, %51, %52 in 0 : vector<1x9x128xbf16>, vector<1x9x128xbf16>, vector<1x9x128xbf16>, vector<1x9x128xbf16> -> vector<4x9x128xbf16>
    %54 = vector.extract_strided_slice %44 {offsets = [0, 512], sizes = [9, 128], strides = [1, 1]} : vector<9x1536xbf16> to vector<9x128xbf16>
    %55 = vector.extract_strided_slice %44 {offsets = [0, 640], sizes = [9, 128], strides = [1, 1]} : vector<9x1536xbf16> to vector<9x128xbf16>
    %56 = vector.extract_strided_slice %44 {offsets = [0, 768], sizes = [9, 128], strides = [1, 1]} : vector<9x1536xbf16> to vector<9x128xbf16>
    %57 = vector.extract_strided_slice %44 {offsets = [0, 896], sizes = [9, 128], strides = [1, 1]} : vector<9x1536xbf16> to vector<9x128xbf16>
    %58 = vector.shape_cast %54 : vector<9x128xbf16> to vector<1x9x128xbf16>
    %59 = vector.shape_cast %55 : vector<9x128xbf16> to vector<1x9x128xbf16>
    %60 = vector.shape_cast %56 : vector<9x128xbf16> to vector<1x9x128xbf16>
    %61 = vector.shape_cast %57 : vector<9x128xbf16> to vector<1x9x128xbf16>
    %62 = tpu.concatenate %58, %59, %60, %61 in 0 : vector<1x9x128xbf16>, vector<1x9x128xbf16>, vector<1x9x128xbf16>, vector<1x9x128xbf16> -> vector<4x9x128xbf16>
    %63 = vector.extract_strided_slice %44 {offsets = [0, 1024], sizes = [9, 128], strides = [1, 1]} : vector<9x1536xbf16> to vector<9x128xbf16>
    %64 = vector.extract_strided_slice %44 {offsets = [0, 1152], sizes = [9, 128], strides = [1, 1]} : vector<9x1536xbf16> to vector<9x128xbf16>
    %65 = vector.extract_strided_slice %44 {offsets = [0, 1280], sizes = [9, 128], strides = [1, 1]} : vector<9x1536xbf16> to vector<9x128xbf16>
    %66 = vector.extract_strided_slice %44 {offsets = [0, 1408], sizes = [9, 128], strides = [1, 1]} : vector<9x1536xbf16> to vector<9x128xbf16>
    %67 = vector.shape_cast %63 : vector<9x128xbf16> to vector<1x9x128xbf16>
    %68 = vector.shape_cast %64 : vector<9x128xbf16> to vector<1x9x128xbf16>
    %69 = vector.shape_cast %65 : vector<9x128xbf16> to vector<1x9x128xbf16>
    %70 = vector.shape_cast %66 : vector<9x128xbf16> to vector<1x9x128xbf16>
    %71 = tpu.concatenate %67, %68, %69, %70 in 0 : vector<1x9x128xbf16>, vector<1x9x128xbf16>, vector<1x9x128xbf16>, vector<1x9x128xbf16> -> vector<4x9x128xbf16>
    "tpu.trace_start"() <{level = 10 : i32, message = "hqe,hke->hqk"}> : () -> ()
    %cst_26 = arith.constant dense<0.000000e+00> : vector<4x9x9xf32>
    %72 = tpu.matmul %53, %62, %cst_26 {dimension_numbers = #tpu.dot_dimension_numbers<[2], [2], [1], [1], [0, 0, 0, 1, 1, 1], [0], [0]>} : vector<4x9x128xbf16>, vector<4x9x128xbf16>, vector<4x9x9xf32> -> vector<4x9x9xf32>
    "tpu.trace_stop"() : () -> ()
    %cst_27 = arith.constant dense<0xFF800000> : vector<4x9xf32>
    %73 = vector.multi_reduction <maximumf>, %72, %cst_27 [2] : vector<4x9x9xf32> to vector<4x9xf32>
    %74 = vector.shape_cast %73 : vector<4x9xf32> to vector<4x9x1xf32>
    %75 = vector.broadcast %74 : vector<4x9x1xf32> to vector<4x9x9xf32>
    %76 = arith.subf %72, %75 : vector<4x9x9xf32>
    %77 = math.exp %76 : vector<4x9x9xf32>
    %cst_28 = arith.constant dense<0.000000e+00> : vector<4x9xf32>
    %78 = vector.multi_reduction <add>, %77, %cst_28 [2] : vector<4x9x9xf32> to vector<4x9xf32>
    %79 = vector.shape_cast %78 : vector<4x9xf32> to vector<4x9x1xf32>
    %80 = tpu.reciprocal %79 {approx = true} : vector<4x9x1xf32> -> vector<4x9x1xf32>
    %81 = vector.broadcast %80 : vector<4x9x1xf32> to vector<4x9x9xf32>
    %82 = arith.mulf %77, %81 : vector<4x9x9xf32>
    %83 = arith.truncf %82 : vector<4x9x9xf32> to vector<4x9x9xbf16>
    "tpu.trace_start"() <{level = 10 : i32, message = "hqk,hke->hqe"}> : () -> ()
    %cst_29 = arith.constant dense<0.000000e+00> : vector<4x9x128xf32>
    %84 = tpu.matmul %83, %71, %cst_29 {dimension_numbers = #tpu.dot_dimension_numbers<[2], [1], [1], [2], [0, 0, 0, 1, 1, 2], [0], [0]>} : vector<4x9x9xbf16>, vector<4x9x128xbf16>, vector<4x9x128xf32> -> vector<4x9x128xf32>
    "tpu.trace_stop"() : () -> ()
    %85 = arith.truncf %84 : vector<4x9x128xf32> to vector<4x9x128xbf16>
    %86 = vector.extract_strided_slice %85 {offsets = [0, 0, 0], sizes = [1, 9, 128], strides = [1, 1, 1]} : vector<4x9x128xbf16> to vector<1x9x128xbf16>
    %87 = vector.shape_cast %86 : vector<1x9x128xbf16> to vector<9x128xbf16>
    %88 = vector.extract_strided_slice %85 {offsets = [1, 0, 0], sizes = [1, 9, 128], strides = [1, 1, 1]} : vector<4x9x128xbf16> to vector<1x9x128xbf16>
    %89 = vector.shape_cast %88 : vector<1x9x128xbf16> to vector<9x128xbf16>
    %90 = vector.extract_strided_slice %85 {offsets = [2, 0, 0], sizes = [1, 9, 128], strides = [1, 1, 1]} : vector<4x9x128xbf16> to vector<1x9x128xbf16>
    %91 = vector.shape_cast %90 : vector<1x9x128xbf16> to vector<9x128xbf16>
    %92 = vector.extract_strided_slice %85 {offsets = [3, 0, 0], sizes = [1, 9, 128], strides = [1, 1, 1]} : vector<4x9x128xbf16> to vector<1x9x128xbf16>
    %93 = vector.shape_cast %92 : vector<1x9x128xbf16> to vector<9x128xbf16>
    %94 = tpu.concatenate %87, %89, %91, %93 in 1 : vector<9x128xbf16>, vector<9x128xbf16>, vector<9x128xbf16>, vector<9x128xbf16> -> vector<9x512xbf16>
    %cst_30 = arith.constant dense<0.000000e+00> : vector<9x128xf32>
    %95 = tpu.matmul %94, %37, %cst_30 {dimension_numbers = #tpu.dot_dimension_numbers<[1], [0], [0], [1], [0, 0, 1, 1], [], []>} : vector<9x512xbf16>, vector<512x128xbf16>, vector<9x128xf32> -> vector<9x128xf32>
    %96 = vector.broadcast %39 : vector<1x128xf32> to vector<9x128xf32>
    %97 = arith.addf %95, %96 : vector<9x128xf32>
    %98 = arith.addf %3, %97 : vector<9x128xf32>
    %c0_31 = arith.constant 0 : index
    %c0_32 = arith.constant 0 : index
    %c0_33 = arith.constant 0 : index
    %99 = vector.load %arg9[%c0_31, %c0_32, %c0_33] : memref<1x1x128xf32, #tpu.memory_space<vmem>>, vector<1x1x128xf32>
    %100 = vector.shape_cast %99 : vector<1x1x128xf32> to vector<1x128xf32>
    %c0_34 = arith.constant 0 : index
    %c0_35 = arith.constant 0 : index
    %c0_36 = arith.constant 0 : index
    %101 = vector.load %arg10[%c0_34, %c0_35, %c0_36] : memref<1x1x128xf32, #tpu.memory_space<vmem>>, vector<1x1x128xf32>
    %102 = vector.shape_cast %101 : vector<1x1x128xf32> to vector<1x128xf32>
    %cst_37 = arith.constant dense<0.000000e+00> : vector<9xf32>
    %103 = vector.multi_reduction <add>, %98, %cst_37 [1] : vector<9x128xf32> to vector<9xf32>
    %104 = vector.shape_cast %103 : vector<9xf32> to vector<9x1xf32>
    %cst_38 = arith.constant 3.125000e-02 : f32
    %105 = vector.broadcast %cst_38 : f32 to vector<9x1xf32>
    %106 = arith.mulf %104, %105 : vector<9x1xf32>
    %107 = arith.mulf %98, %98 : vector<9x128xf32>
    %cst_39 = arith.constant dense<0.000000e+00> : vector<9xf32>
    %108 = vector.multi_reduction <add>, %107, %cst_39 [1] : vector<9x128xf32> to vector<9xf32>
    %109 = vector.shape_cast %108 : vector<9xf32> to vector<9x1xf32>
    %cst_40 = arith.constant 3.125000e-02 : f32
    %110 = vector.broadcast %cst_40 : f32 to vector<9x1xf32>
    %111 = arith.mulf %109, %110 : vector<9x1xf32>
    %112 = arith.mulf %106, %106 : vector<9x1xf32>
    %113 = arith.subf %111, %112 : vector<9x1xf32>
    %cst_41 = arith.constant 0.000000e+00 : f32
    %114 = vector.broadcast %cst_41 : f32 to vector<9x1xf32>
    %115 = arith.maximumf %113, %114 : vector<9x1xf32>
    %116 = vector.broadcast %106 : vector<9x1xf32> to vector<9x128xf32>
    %117 = arith.subf %98, %116 : vector<9x128xf32>
    %cst_42 = arith.constant 9.99999997E-7 : f32
    %118 = vector.broadcast %cst_42 : f32 to vector<9x1xf32>
    %119 = arith.addf %115, %118 : vector<9x1xf32>
    %120 = math.rsqrt %119 : vector<9x1xf32>
    %121 = vector.broadcast %120 : vector<9x1xf32> to vector<9x128xf32>
    %122 = arith.mulf %117, %121 : vector<9x128xf32>
    %123 = vector.broadcast %100 : vector<1x128xf32> to vector<9x128xf32>
    %124 = arith.mulf %122, %123 : vector<9x128xf32>
    %125 = vector.broadcast %102 : vector<1x128xf32> to vector<9x128xf32>
    %126 = arith.addf %124, %125 : vector<9x128xf32>
    %c0_43 = arith.constant 0 : index
    %c0_44 = arith.constant 0 : index
    %c0_45 = arith.constant 0 : index
    %127 = vector.load %arg11[%c0_43, %c0_44, %c0_45] : memref<1x128x128xbf16, #tpu.memory_space<vmem>>, vector<1x128x128xbf16>
    %128 = vector.shape_cast %127 : vector<1x128x128xbf16> to vector<128x128xbf16>
    %c0_46 = arith.constant 0 : index
    %c0_47 = arith.constant 0 : index
    %c0_48 = arith.constant 0 : index
    %129 = vector.load %arg12[%c0_46, %c0_47, %c0_48] : memref<1x1x128xf32, #tpu.memory_space<vmem>>, vector<1x1x128xf32>
    %130 = vector.shape_cast %129 : vector<1x1x128xf32> to vector<1x128xf32>
    %c0_49 = arith.constant 0 : index
    %c0_50 = arith.constant 0 : index
    %c0_51 = arith.constant 0 : index
    %131 = vector.load %arg13[%c0_49, %c0_50, %c0_51] : memref<1x128x128xbf16, #tpu.memory_space<vmem>>, vector<1x128x128xbf16>
    %132 = vector.shape_cast %131 : vector<1x128x128xbf16> to vector<128x128xbf16>
    %c0_52 = arith.constant 0 : index
    %c0_53 = arith.constant 0 : index
    %c0_54 = arith.constant 0 : index
    %133 = vector.load %arg14[%c0_52, %c0_53, %c0_54] : memref<1x1x128xf32, #tpu.memory_space<vmem>>, vector<1x1x128xf32>
    %134 = vector.shape_cast %133 : vector<1x1x128xf32> to vector<1x128xf32>
    %135 = arith.truncf %126 : vector<9x128xf32> to vector<9x128xbf16>
    %cst_55 = arith.constant dense<0.000000e+00> : vector<9x128xf32>
    %136 = tpu.matmul %135, %128, %cst_55 {dimension_numbers = #tpu.dot_dimension_numbers<[1], [0], [0], [1], [0, 0, 1, 1], [], []>} : vector<9x128xbf16>, vector<128x128xbf16>, vector<9x128xf32> -> vector<9x128xf32>
    %137 = vector.broadcast %130 : vector<1x128xf32> to vector<9x128xf32>
    %138 = arith.addf %136, %137 : vector<9x128xf32>
    %cst_56 = arith.constant 5.000000e-01 : f32
    %139 = vector.broadcast %cst_56 : f32 to vector<9x128xf32>
    %140 = arith.mulf %139, %138 : vector<9x128xf32>
    %cst_57 = arith.constant 0.707106769 : f32
    %141 = vector.broadcast %cst_57 : f32 to vector<9x128xf32>
    %142 = arith.mulf %138, %141 : vector<9x128xf32>
    %cst_58 = arith.constant -4.000000e+00 : f32
    %cst_59 = arith.constant 4.000000e+00 : f32
    %143 = vector.broadcast %cst_58 : f32 to vector<9x128xf32>
    %144 = arith.maximumf %143, %142 : vector<9x128xf32>
    %145 = vector.broadcast %cst_59 : f32 to vector<9x128xf32>
    %146 = arith.minimumf %145, %144 : vector<9x128xf32>
    %147 = arith.mulf %146, %146 : vector<9x128xf32>
    %cst_60 = arith.constant 2.29050653E-4 : f32
    %148 = vector.broadcast %cst_60 : f32 to vector<9x128xf32>
    %149 = arith.mulf %148, %147 : vector<9x128xf32>
    %cst_61 = arith.constant 0.00340829091 : f32
    %150 = vector.broadcast %cst_61 : f32 to vector<9x128xf32>
    %151 = arith.addf %149, %150 : vector<9x128xf32>
    %152 = arith.mulf %151, %147 : vector<9x128xf32>
    %cst_62 = arith.constant 0.0509556942 : f32
    %153 = vector.broadcast %cst_62 : f32 to vector<9x128xf32>
    %154 = arith.addf %152, %153 : vector<9x128xf32>
    %155 = arith.mulf %154, %147 : vector<9x128xf32>
    %cst_63 = arith.constant 0.185208321 : f32
    %156 = vector.broadcast %cst_63 : f32 to vector<9x128xf32>
    %157 = arith.addf %155, %156 : vector<9x128xf32>
    %158 = arith.mulf %157, %147 : vector<9x128xf32>
    %cst_64 = arith.constant 1.12837911 : f32
    %159 = vector.broadcast %cst_64 : f32 to vector<9x128xf32>
    %160 = arith.addf %158, %159 : vector<9x128xf32>
    %161 = arith.mulf %146, %160 : vector<9x128xf32>
    %cst_65 = arith.constant -1.17916031E-7 : f32
    %162 = vector.broadcast %cst_65 : f32 to vector<9x128xf32>
    %163 = arith.mulf %162, %147 : vector<9x128xf32>
    %cst_66 = arith.constant 2.35479656E-5 : f32
    %164 = vector.broadcast %cst_66 : f32 to vector<9x128xf32>
    %165 = arith.addf %163, %164 : vector<9x128xf32>
    %166 = arith.mulf %165, %147 : vector<9x128xf32>
    %cst_67 = arith.constant 0.00101796258 : f32
    %167 = vector.broadcast %cst_67 : f32 to vector<9x128xf32>
    %168 = arith.addf %166, %167 : vector<9x128xf32>
    %169 = arith.mulf %168, %147 : vector<9x128xf32>
    %cst_68 = arith.constant 0.0140704699 : f32
    %170 = vector.broadcast %cst_68 : f32 to vector<9x128xf32>
    %171 = arith.addf %169, %170 : vector<9x128xf32>
    %172 = arith.mulf %171, %147 : vector<9x128xf32>
    %cst_69 = arith.constant 0.110985048 : f32
    %173 = vector.broadcast %cst_69 : f32 to vector<9x128xf32>
    %174 = arith.addf %172, %173 : vector<9x128xf32>
    %175 = arith.mulf %174, %147 : vector<9x128xf32>
    %cst_70 = arith.constant 0.497469246 : f32
    %176 = vector.broadcast %cst_70 : f32 to vector<9x128xf32>
    %177 = arith.addf %175, %176 : vector<9x128xf32>
    %178 = arith.mulf %177, %147 : vector<9x128xf32>
    %cst_71 = arith.constant 1.000000e+00 : f32
    %179 = vector.broadcast %cst_71 : f32 to vector<9x128xf32>
    %180 = arith.addf %178, %179 : vector<9x128xf32>
    %181 = tpu.reciprocal %180 {approx = true} : vector<9x128xf32> -> vector<9x128xf32>
    %182 = arith.mulf %161, %181 : vector<9x128xf32>
    %cst_72 = arith.constant 1.000000e+00 : f32
    %183 = vector.broadcast %cst_72 : f32 to vector<9x128xf32>
    %184 = arith.addf %183, %182 : vector<9x128xf32>
    %185 = arith.mulf %140, %184 : vector<9x128xf32>
    %186 = arith.truncf %185 : vector<9x128xf32> to vector<9x128xbf16>
    %cst_73 = arith.constant dense<0.000000e+00> : vector<9x128xf32>
    %187 = tpu.matmul %186, %132, %cst_73 {dimension_numbers = #tpu.dot_dimension_numbers<[1], [0], [0], [1], [0, 0, 1, 1], [], []>} : vector<9x128xbf16>, vector<128x128xbf16>, vector<9x128xf32> -> vector<9x128xf32>
    %188 = vector.broadcast %134 : vector<1x128xf32> to vector<9x128xf32>
    %189 = arith.addf %187, %188 : vector<9x128xf32>
    %190 = arith.addf %98, %189 : vector<9x128xf32>
    %c0_74 = arith.constant 0 : index
    %c0_75 = arith.constant 0 : index
    %191 = vector.load %arg18[%c0_74, %c0_75] : memref<9x128xf32, #tpu.memory_space<vmem>>, vector<9x128xf32>
    tpu.vector_store %arg18[%c0_74, %c0_75], %190 {strides = array<i32>} : memref<9x128xf32, #tpu.memory_space<vmem>>, vector<9x128xf32>,
    %c1_i32 = arith.constant 1 : i32
    %192 = arith.cmpi eq, %arg1, %c1_i32 : i32
    %193 = arith.extui %192 : i1 to i32
    %c0_i32_76 = arith.constant 0 : i32
    %194 = arith.cmpi ne, %193, %c0_i32_76 : i32
    scf.if %194 {
      %c0_77 = arith.constant 0 : index
      %c0_78 = arith.constant 0 : index
      %195 = vector.load %arg15[%c0_77, %c0_78] : memref<1x128xf32, #tpu.memory_space<vmem>>, vector<1x128xf32>
      %c0_79 = arith.constant 0 : index
      %c0_80 = arith.constant 0 : index
      %196 = vector.load %arg16[%c0_79, %c0_80] : memref<1x128xf32, #tpu.memory_space<vmem>>, vector<1x128xf32>
      %cst_81 = arith.constant dense<0.000000e+00> : vector<9xf32>
      %197 = vector.multi_reduction <add>, %190, %cst_81 [1] : vector<9x128xf32> to vector<9xf32>
      %198 = vector.shape_cast %197 : vector<9xf32> to vector<9x1xf32>
      %cst_82 = arith.constant 3.125000e-02 : f32
      %199 = vector.broadcast %cst_82 : f32 to vector<9x1xf32>
      %200 = arith.mulf %198, %199 : vector<9x1xf32>
      %201 = arith.mulf %190, %190 : vector<9x128xf32>
      %cst_83 = arith.constant dense<0.000000e+00> : vector<9xf32>
      %202 = vector.multi_reduction <add>, %201, %cst_83 [1] : vector<9x128xf32> to vector<9xf32>
      %203 = vector.shape_cast %202 : vector<9xf32> to vector<9x1xf32>
      %cst_84 = arith.constant 3.125000e-02 : f32
      %204 = vector.broadcast %cst_84 : f32 to vector<9x1xf32>
      %205 = arith.mulf %203, %204 : vector<9x1xf32>
      %206 = arith.mulf %200, %200 : vector<9x1xf32>
      %207 = arith.subf %205, %206 : vector<9x1xf32>
      %cst_85 = arith.constant 0.000000e+00 : f32
      %208 = vector.broadcast %cst_85 : f32 to vector<9x1xf32>
      %209 = arith.maximumf %207, %208 : vector<9x1xf32>
      %210 = vector.broadcast %200 : vector<9x1xf32> to vector<9x128xf32>
      %211 = arith.subf %190, %210 : vector<9x128xf32>
      %cst_86 = arith.constant 9.99999997E-7 : f32
      %212 = vector.broadcast %cst_86 : f32 to vector<9x1xf32>
      %213 = arith.addf %209, %212 : vector<9x1xf32>
      %214 = math.rsqrt %213 : vector<9x1xf32>
      %215 = vector.broadcast %214 : vector<9x1xf32> to vector<9x128xf32>
      %216 = arith.mulf %211, %215 : vector<9x128xf32>
      %217 = vector.broadcast %195 : vector<1x128xf32> to vector<9x128xf32>
      %218 = arith.mulf %216, %217 : vector<9x128xf32>
      %219 = vector.broadcast %196 : vector<1x128xf32> to vector<9x128xf32>
      %220 = arith.addf %218, %219 : vector<9x128xf32>
      %c0_87 = arith.constant 0 : index
      %c0_88 = arith.constant 0 : index
      %c0_89 = arith.constant 0 : index
      %221 = vector.load %arg17[%c0_87, %c0_88, %c0_89] : memref<1x9x128xf32, #tpu.memory_space<vmem>>, vector<1x9x128xf32>
      %222 = vector.shape_cast %221 : vector<1x9x128xf32> to vector<9x128xf32>
      %223 = vector.shape_cast %220 : vector<9x128xf32> to vector<1x9x128xf32>
      tpu.vector_store %arg17[%c0_87, %c0_88, %c0_89], %223 {strides = array<i32>} : memref<1x9x128xf32, #tpu.memory_space<vmem>>, vector<1x9x128xf32>,
    } else {
    }
    return
  }
  func.func @transform_0(%arg0: i32, %arg1: i32) -> (i32, i32, i32) {
    %c0_i32 = arith.constant 0 : i32
    %c0_i32_0 = arith.constant 0 : i32
    %c0_i32_1 = arith.constant 0 : i32
    return %arg0, %c0_i32, %c0_i32_0 : i32, i32, i32
  }
  func.func @transform_1(%arg0: i32, %arg1: i32) -> (i32, i32, i32) {
    %c0_i32 = arith.constant 0 : i32
    %c0_i32_0 = arith.constant 0 : i32
    %c0_i32_1 = arith.constant 0 : i32
    return %arg1, %c0_i32, %c0_i32_0 : i32, i32, i32
  }
  func.func @transform_2(%arg0: i32, %arg1: i32) -> (i32, i32, i32) {
    %c0_i32 = arith.constant 0 : i32
    %c0_i32_0 = arith.constant 0 : i32
    %c0_i32_1 = arith.constant 0 : i32
    return %arg1, %c0_i32, %c0_i32_0 : i32, i32, i32
  }
  func.func @transform_3(%arg0: i32, %arg1: i32) -> (i32, i32, i32) {
    %c0_i32 = arith.constant 0 : i32
    %c0_i32_0 = arith.constant 0 : i32
    %c0_i32_1 = arith.constant 0 : i32
    return %arg1, %c0_i32, %c0_i32_0 : i32, i32, i32
  }
  func.func @transform_4(%arg0: i32, %arg1: i32) -> (i32, i32, i32) {
    %c0_i32 = arith.constant 0 : i32
    %c0_i32_0 = arith.constant 0 : i32
    %c0_i32_1 = arith.constant 0 : i32
    return %arg1, %c0_i32, %c0_i32_0 : i32, i32, i32
  }
  func.func @transform_5(%arg0: i32, %arg1: i32) -> (i32, i32, i32) {
    %c0_i32 = arith.constant 0 : i32
    %c0_i32_0 = arith.constant 0 : i32
    %c0_i32_1 = arith.constant 0 : i32
    return %arg1, %c0_i32, %c0_i32_0 : i32, i32, i32
  }
  func.func @transform_6(%arg0: i32, %arg1: i32) -> (i32, i32, i32) {
    %c0_i32 = arith.constant 0 : i32
    %c0_i32_0 = arith.constant 0 : i32
    %c0_i32_1 = arith.constant 0 : i32
    return %arg1, %c0_i32, %c0_i32_0 : i32, i32, i32
  }
  func.func @transform_7(%arg0: i32, %arg1: i32) -> (i32, i32, i32) {
    %c0_i32 = arith.constant 0 : i32
    %c0_i32_0 = arith.constant 0 : i32
    %c0_i32_1 = arith.constant 0 : i32
    return %arg1, %c0_i32, %c0_i32_0 : i32, i32, i32
  }
  func.func @transform_8(%arg0: i32, %arg1: i32) -> (i32, i32, i32) {
    %c0_i32 = arith.constant 0 : i32
    %c0_i32_0 = arith.constant 0 : i32
    %c0_i32_1 = arith.constant 0 : i32
    return %arg1, %c0_i32, %c0_i32_0 : i32, i32, i32
  }
  func.func @transform_9(%arg0: i32, %arg1: i32) -> (i32, i32, i32) {
    %c0_i32 = arith.constant 0 : i32
    %c0_i32_0 = arith.constant 0 : i32
    %c0_i32_1 = arith.constant 0 : i32
    return %arg1, %c0_i32, %c0_i32_0 : i32, i32, i32
  }
  func.func @transform_10(%arg0: i32, %arg1: i32) -> (i32, i32, i32) {
    %c0_i32 = arith.constant 0 : i32
    %c0_i32_0 = arith.constant 0 : i32
    %c0_i32_1 = arith.constant 0 : i32
    return %arg1, %c0_i32, %c0_i32_0 : i32, i32, i32
  }
  func.func @transform_11(%arg0: i32, %arg1: i32) -> (i32, i32, i32) {
    %c0_i32 = arith.constant 0 : i32
    %c0_i32_0 = arith.constant 0 : i32
    %c0_i32_1 = arith.constant 0 : i32
    return %arg1, %c0_i32, %c0_i32_0 : i32, i32, i32
  }
  func.func @transform_12(%arg0: i32, %arg1: i32) -> (i32, i32, i32) {
    %c0_i32 = arith.constant 0 : i32
    %c0_i32_0 = arith.constant 0 : i32
    %c0_i32_1 = arith.constant 0 : i32
    return %arg1, %c0_i32, %c0_i32_0 : i32, i32, i32
  }
  func.func @transform_13(%arg0: i32, %arg1: i32) -> (i32, i32) {
    %c0_i32 = arith.constant 0 : i32
    %c0_i32_0 = arith.constant 0 : i32
    %c0_i32_1 = arith.constant 0 : i32
    return %c0_i32, %c0_i32_0 : i32, i32
  }
  func.func @transform_14(%arg0: i32, %arg1: i32) -> (i32, i32) {
    %c0_i32 = arith.constant 0 : i32
    %c0_i32_0 = arith.constant 0 : i32
    %c0_i32_1 = arith.constant 0 : i32
    return %c0_i32, %c0_i32_0 : i32, i32
  }
  func.func @transform_15(%arg0: i32, %arg1: i32) -> (i32, i32, i32) {
    %c0_i32 = arith.constant 0 : i32
    %c0_i32_0 = arith.constant 0 : i32
    %c0_i32_1 = arith.constant 0 : i32
    return %arg0, %c0_i32, %c0_i32_0 : i32, i32, i32
  }
}

</mosaic_0001>

<llo_original>
// kernel: tpu_custom_call.1
$region0: #{tpu_custom_call.1}
  #allocation0 [shape = 'u32[]', space=smem, size = 0x4, offset = 0x4, fixed_abs, tag = 'smem constant byte address 0x4 - core index']
  #allocation1 [shape = 'u32[144,128]{1,0:T(1,128)}', space=vmem, size = 0x12000, scoped, tag = 'internal scratch']
  #allocation2 [shape = 'f32[9,128]{1,0:T(8,128)}', space=vmem, size = 0x2000, scoped, tag = 'scratch operand']
  %s0 = inlined_call_operand.vmem [shape: f32[2,9,128], index: 0, kind: input, shape index: {}]
  %s1 = inlined_call_operand.vmem [shape: f32[2,1,128], index: 1, kind: input, shape index: {}]
  %s2 = inlined_call_operand.vmem [shape: f32[2,1,128], index: 2, kind: input, shape index: {}]
  %s3 = inlined_call_operand.hbm [shape: bf16[2,128,1536], index: 3, kind: input, shape index: {}]
  %s4 = inlined_call_operand.vmem [shape: f32[2,1,1536], index: 4, kind: input, shape index: {}]
  %s5 = inlined_call_operand.hbm [shape: bf16[2,512,128], index: 5, kind: input, shape index: {}]
  %s6 = inlined_call_operand.vmem [shape: f32[2,1,128], index: 6, kind: input, shape index: {}]
  %s7 = inlined_call_operand.vmem [shape: f32[2,1,128], index: 7, kind: input, shape index: {}]
  %s8 = inlined_call_operand.vmem [shape: f32[2,1,128], index: 8, kind: input, shape index: {}]
  %s9 = inlined_call_operand.hbm [shape: bf16[2,128,128], index: 9, kind: input, shape index: {}]
  %s10 = inlined_call_operand.vmem [shape: f32[2,1,128], index: 10, kind: input, shape index: {}]
  %s11 = inlined_call_operand.hbm [shape: bf16[2,128,128], index: 11, kind: input, shape index: {}]
  %s12 = inlined_call_operand.vmem [shape: f32[2,1,128], index: 12, kind: input, shape index: {}]
  %s13 = inlined_call_operand.vmem [shape: f32[1,128], index: 13, kind: input, shape index: {}]
  %s14 = inlined_call_operand.vmem [shape: f32[1,128], index: 14, kind: input, shape index: {}]
  %s15 = inlined_call_operand.vmem [shape: f32[2,9,128], index: 15, kind: output, shape index: {}]
  %s16 = sld [smem:[#allocation0]]
  $region117: #{tpu_custom_call.1} parent=0
    _
  %s18 = ssub.s32 1, %s16
  %s19 = scalar_select 0, %s18, %s16
  $region1: #{tpu_custom_call.1} parent=0
    #allocation3 [shape = 'u8[786432]{0}', space=vmem, size = 0xc0000, scoped, tag = 'input window, operand 3']
    #allocation4 [shape = 's32[2]{0}', space=sflag, size = 0x8, scoped, tag = 'scoped memory for tpu_custom_call.1']
    #allocation5 [shape = 'u8[262144]{0}', space=vmem, size = 0x40000, scoped, tag = 'input window, operand 5']
    #allocation6 [shape = 's32[2]{0}', space=sflag, size = 0x8, scoped, tag = 'scoped memory for tpu_custom_call.1']
    #allocation7 [shape = 'u8[65536]{0}', space=vmem, size = 0x10000, scoped, tag = 'input window, operand 9']
    #allocation8 [shape = 'u8[65536]{0}', space=vmem, size = 0x10000, scoped, tag = 'input window, operand 11']
    #allocation9 [shape = 's32[2]{0}', space=sflag, size = 0x8, scoped, tag = 'scoped memory for tpu_custom_call.1']
    %20 = vsyncpa [#allocation4], 0
    %s21 = scalar_lea.sflag [#allocation4], 1
    %22 = vsyncpa %s21, 0
    %23 = vsyncpa [#allocation6], 0
    %s24 = scalar_lea.sflag [#allocation6], 1
    %25 = vsyncpa %s24, 0
    %26 = vsyncpa [#allocation9], 0
    %s27 = scalar_lea.sflag [#allocation9], 1
    %28 = vsyncpa %s27, 0
    loop: start=0, step=1, limit=6
    $region2: #{tpu_custom_call.1} parent=1 // loop_pre_header
      _
    $region3: #{tpu_custom_call.1} parent=1 // loop_header
      %s30 = sphi 0, %s34
      %p31 = scmp.ge.s32.totalorder %s30, 6
      %s37 = sphi 0, %s49
      %s38 = sphi 0, %s45
      %s39 = sphi 0, %s37
      %s40 = sphi 0, %s38
      %s41 = sphi 0, %s39
      %s42 = sphi 0, %s40
      %s52 = sphi 0, %s54
      %s55 = sphi 0, %s52
      %s56 = sphi 0, %s55
      %s72 = sphi 0, %s56
      %s78 = sphi 0, %s80
      %s81 = sphi 0, %s78
      %s82 = sphi 0, %s81
      %s98 = sphi 0, %s82
      %s104 = sphi 0, %s106
      %s107 = sphi 0, %s104
      %s108 = sphi 0, %s107
      %s124 = sphi 0, %s108
      %s130 = sphi 0, %s132
      %s133 = sphi 0, %s130
      %s134 = sphi 0, %s133
      %s150 = sphi 0, %s134
      %s156 = sphi 0, %s158
      %s159 = sphi 0, %s156
      %s160 = sphi 0, %s159
      %s176 = sphi 0, %s160
      %s182 = sphi 0, %s184
      %s185 = sphi 0, %s182
      %s186 = sphi 0, %s185
      %s202 = sphi 0, %s186
      %s208 = sphi 0, %s210
      %s211 = sphi 0, %s208
      %s212 = sphi 0, %s211
      %s228 = sphi 0, %s212
      %s234 = sphi 0, %s236
      %s237 = sphi 0, %s234
      %s238 = sphi 0, %s237
      %s254 = sphi 0, %s238
      %s260 = sphi 0, %s262
      %s263 = sphi 0, %s260
      %s264 = sphi 0, %s263
      %s280 = sphi 0, %s264
      %s286 = sphi 0, %s288
      %s289 = sphi 0, %s286
      %s290 = sphi 0, %s289
      %s306 = sphi 0, %s290
      %s312 = sphi 0, %s314
      %s315 = sphi 0, %s312
      %s316 = sphi 0, %s315
      %s332 = sphi 0, %s316
      %s338 = sphi 0, %s340
      %s341 = sphi 0, %s338
      %s342 = sphi 0, %s341
      %s358 = sphi 0, %s342
      %s364 = sphi 0, %s366
      %s367 = sphi 0, %s364
      %s368 = sphi 0, %s367
      %s384 = sphi 0, %s368
      %s388 = sphi 0, %s388
      %s390 = sphi 0, %s388
      %s391 = sphi 0, %s390
      %s405 = sphi 0, %s391
      %s409 = sphi 0, %s409
      %s411 = sphi 0, %s409
      %s412 = sphi 0, %s411
      %s426 = sphi 0, %s412
      %s432 = sphi 0, %s434
      %s435 = sphi 0, %s432
      %s436 = sphi 0, %s435
      %s452 = sphi 0, %s436
    $region4: #{tpu_custom_call.1} parent=1 // loop_header_branch
      %33 = sbr.rel (%p31) target = $region8
    $region5: #{tpu_custom_call.1} parent=1 // loop_body
      %s35 = ssub.s32 %s30, 1
      %s36 = ssub.s32 %s30, 2
      %s43 = sadd.s32 1, %s38
      %p44 = scmp.ge.s32.totalorder %s43, 2
      %s45 = scalar_select %p44, 0, %s43
      %s46 = sadd.s32 1, %s37
      %s47 = scalar_select %p44, %s46, %s37
      %p48 = scmp.ge.s32.totalorder %s47, 2
      %s49 = scalar_select %p48, 0, %s47
      %s50 = ssub.s32 %s37, %s49
      %p51 = scmp.eq.s32.totalorder %s50, 0
      %s53 = sadd.s32 %s52, 1
      %s54 = scalar_select %p51, %s52, %s53
      %p57 = pneg %p51
      %p58 = scmp.eq.s32.totalorder %s30, 3
      %p59 = por %p57, %p58
      %p60 = scmp.ne.s32.totalorder %s52, %s55
      %p61 = scmp.eq.s32.totalorder %s30, 0
      %p62 = por %p60, %p61
      %p63 = scmp.ne.s32.totalorder %s52, %s55
      %p64 = scmp.eq.s32.totalorder %s35, 3
      %p65 = por %p63, %p64
      %p66 = scmp.ne.s32.totalorder %s55, %s56
      %p67 = scmp.eq.s32.totalorder %s35, 0
      %p68 = por %p66, %p67
      %p69 = scmp.ne.s32.totalorder %s55, %s56
      %p70 = scmp.eq.s32.totalorder %s36, 3
      %p71 = por %p69, %p70
      %p73 = scmp.ne.s32.totalorder %s56, %s72
      %p74 = scmp.eq.s32.totalorder %s36, 0
      %p75 = por %p73, %p74
      %s76 = ssub.s32 %s38, %s45
      %p77 = scmp.eq.s32.totalorder %s76, 0
      %s79 = sadd.s32 %s78, 1
      %s80 = scalar_select %p77, %s78, %s79
      %p83 = pneg %p77
      %p84 = scmp.eq.s32.totalorder %s30, 3
      %p85 = por %p83, %p84
      %p86 = scmp.ne.s32.totalorder %s78, %s81
      %p87 = scmp.eq.s32.totalorder %s30, 0
      %p88 = por %p86, %p87
      %p89 = scmp.ne.s32.totalorder %s78, %s81
      %p90 = scmp.eq.s32.totalorder %s35, 3
      %p91 = por %p89, %p90
      %p92 = scmp.ne.s32.totalorder %s81, %s82
      %p93 = scmp.eq.s32.totalorder %s35, 0
      %p94 = por %p92, %p93
      %p95 = scmp.ne.s32.totalorder %s81, %s82
      %p96 = scmp.eq.s32.totalorder %s36, 3
      %p97 = por %p95, %p96
      %p99 = scmp.ne.s32.totalorder %s82, %s98
      %p100 = scmp.eq.s32.totalorder %s36, 0
      %p101 = por %p99, %p100
      %s102 = ssub.s32 %s38, %s45
      %p103 = scmp.eq.s32.totalorder %s102, 0
      %s105 = sadd.s32 %s104, 1
      %s106 = scalar_select %p103, %s104, %s105
      %p109 = pneg %p103
      %p110 = scmp.eq.s32.totalorder %s30, 3
      %p111 = por %p109, %p110
      %p112 = scmp.ne.s32.totalorder %s104, %s107
      %p113 = scmp.eq.s32.totalorder %s30, 0
      %p114 = por %p112, %p113
      %p115 = scmp.ne.s32.totalorder %s104, %s107
      %p116 = scmp.eq.s32.totalorder %s35, 3
      %p117 = por %p115, %p116
      %p118 = scmp.ne.s32.totalorder %s107, %s108
      %p119 = scmp.eq.s32.totalorder %s35, 0
      %p120 = por %p118, %p119
      %p121 = scmp.ne.s32.totalorder %s107, %s108
      %p122 = scmp.eq.s32.totalorder %s36, 3
      %p123 = por %p121, %p122
      %p125 = scmp.ne.s32.totalorder %s108, %s124
      %p126 = scmp.eq.s32.totalorder %s36, 0
      %p127 = por %p125, %p126
      %s128 = ssub.s32 %s38, %s45
      %p129 = scmp.eq.s32.totalorder %s128, 0
      %s131 = sadd.s32 %s130, 1
      %s132 = scalar_select %p129, %s130, %s131
      %p135 = pneg %p129
      %p136 = scmp.eq.s32.totalorder %s30, 3
      %p137 = por %p135, %p136
      %p138 = scmp.ne.s32.totalorder %s130, %s133
      %p139 = scmp.eq.s32.totalorder %s30, 0
      %p140 = por %p138, %p139
      %p141 = scmp.ne.s32.totalorder %s130, %s133
      %p142 = scmp.eq.s32.totalorder %s35, 3
      %p143 = por %p141, %p142
      %p144 = scmp.ne.s32.totalorder %s133, %s134
      %p145 = scmp.eq.s32.totalorder %s35, 0
      %p146 = por %p144, %p145
      %p147 = scmp.ne.s32.totalorder %s133, %s134
      %p148 = scmp.eq.s32.totalorder %s36, 3
      %p149 = por %p147, %p148
      %p151 = scmp.ne.s32.totalorder %s134, %s150
      %p152 = scmp.eq.s32.totalorder %s36, 0
      %p153 = por %p151, %p152
      %s154 = ssub.s32 %s38, %s45
      %p155 = scmp.eq.s32.totalorder %s154, 0
      %s157 = sadd.s32 %s156, 1
      %s158 = scalar_select %p155, %s156, %s157
      %p161 = pneg %p155
      %p162 = scmp.eq.s32.totalorder %s30, 3
      %p163 = por %p161, %p162
      %p164 = scmp.ne.s32.totalorder %s156, %s159
      %p165 = scmp.eq.s32.totalorder %s30, 0
      %p166 = por %p164, %p165
      %p167 = scmp.ne.s32.totalorder %s156, %s159
      %p168 = scmp.eq.s32.totalorder %s35, 3
      %p169 = por %p167, %p168
      %p170 = scmp.ne.s32.totalorder %s159, %s160
      %p171 = scmp.eq.s32.totalorder %s35, 0
      %p172 = por %p170, %p171
      %p173 = scmp.ne.s32.totalorder %s159, %s160
      %p174 = scmp.eq.s32.totalorder %s36, 3
      %p175 = por %p173, %p174
      %p177 = scmp.ne.s32.totalorder %s160, %s176
      %p178 = scmp.eq.s32.totalorder %s36, 0
      %p179 = por %p177, %p178
      %s180 = ssub.s32 %s38, %s45
      %p181 = scmp.eq.s32.totalorder %s180, 0
      %s183 = sadd.s32 %s182, 1
      %s184 = scalar_select %p181, %s182, %s183
      %p187 = pneg %p181
      %p188 = scmp.eq.s32.totalorder %s30, 3
      %p189 = por %p187, %p188
      %p190 = scmp.ne.s32.totalorder %s182, %s185
      %p191 = scmp.eq.s32.totalorder %s30, 0
      %p192 = por %p190, %p191
      %p193 = scmp.ne.s32.totalorder %s182, %s185
      %p194 = scmp.eq.s32.totalorder %s35, 3
      %p195 = por %p193, %p194
      %p196 = scmp.ne.s32.totalorder %s185, %s186
      %p197 = scmp.eq.s32.totalorder %s35, 0
      %p198 = por %p196, %p197
      %p199 = scmp.ne.s32.totalorder %s185, %s186
      %p200 = scmp.eq.s32.totalorder %s36, 3
      %p201 = por %p199, %p200
      %p203 = scmp.ne.s32.totalorder %s186, %s202
      %p204 = scmp.eq.s32.totalorder %s36, 0
      %p205 = por %p203, %p204
      %s206 = ssub.s32 %s38, %s45
      %p207 = scmp.eq.s32.totalorder %s206, 0
      %s209 = sadd.s32 %s208, 1
      %s210 = scalar_select %p207, %s208, %s209
      %p213 = pneg %p207
      %p214 = scmp.eq.s32.totalorder %s30, 3
      %p215 = por %p213, %p214
      %p216 = scmp.ne.s32.totalorder %s208, %s211
      %p217 = scmp.eq.s32.totalorder %s30, 0
      %p218 = por %p216, %p217
      %p219 = scmp.ne.s32.totalorder %s208, %s211
      %p220 = scmp.eq.s32.totalorder %s35, 3
      %p221 = por %p219, %p220
      %p222 = scmp.ne.s32.totalorder %s211, %s212
      %p223 = scmp.eq.s32.totalorder %s35, 0
      %p224 = por %p222, %p223
      %p225 = scmp.ne.s32.totalorder %s211, %s212
      %p226 = scmp.eq.s32.totalorder %s36, 3
      %p227 = por %p225, %p226
      %p229 = scmp.ne.s32.totalorder %s212, %s228
      %p230 = scmp.eq.s32.totalorder %s36, 0
      %p231 = por %p229, %p230
      %s232 = ssub.s32 %s38, %s45
      %p233 = scmp.eq.s32.totalorder %s232, 0
      %s235 = sadd.s32 %s234, 1
      %s236 = scalar_select %p233, %s234, %s235
      %p239 = pneg %p233
      %p240 = scmp.eq.s32.totalorder %s30, 3
      %p241 = por %p239, %p240
      %p242 = scmp.ne.s32.totalorder %s234, %s237
      %p243 = scmp.eq.s32.totalorder %s30, 0
      %p244 = por %p242, %p243
      %p245 = scmp.ne.s32.totalorder %s234, %s237
      %p246 = scmp.eq.s32.totalorder %s35, 3
      %p247 = por %p245, %p246
      %p248 = scmp.ne.s32.totalorder %s237, %s238
      %p249 = scmp.eq.s32.totalorder %s35, 0
      %p250 = por %p248, %p249
      %p251 = scmp.ne.s32.totalorder %s237, %s238
      %p252 = scmp.eq.s32.totalorder %s36, 3
      %p253 = por %p251, %p252
      %p255 = scmp.ne.s32.totalorder %s238, %s254
      %p256 = scmp.eq.s32.totalorder %s36, 0
      %p257 = por %p255, %p256
      %s258 = ssub.s32 %s38, %s45
      %p259 = scmp.eq.s32.totalorder %s258, 0
      %s261 = sadd.s32 %s260, 1
      %s262 = scalar_select %p259, %s260, %s261
      %p265 = pneg %p259
      %p266 = scmp.eq.s32.totalorder %s30, 3
      %p267 = por %p265, %p266
      %p268 = scmp.ne.s32.totalorder %s260, %s263
      %p269 = scmp.eq.s32.totalorder %s30, 0
      %p270 = por %p268, %p269
      %p271 = scmp.ne.s32.totalorder %s260, %s263
      %p272 = scmp.eq.s32.totalorder %s35, 3
      %p273 = por %p271, %p272
      %p274 = scmp.ne.s32.totalorder %s263, %s264
      %p275 = scmp.eq.s32.totalorder %s35, 0
      %p276 = por %p274, %p275
      %p277 = scmp.ne.s32.totalorder %s263, %s264
      %p278 = scmp.eq.s32.totalorder %s36, 3
      %p279 = por %p277, %p278
      %p281 = scmp.ne.s32.totalorder %s264, %s280
      %p282 = scmp.eq.s32.totalorder %s36, 0
      %p283 = por %p281, %p282
      %s284 = ssub.s32 %s38, %s45
      %p285 = scmp.eq.s32.totalorder %s284, 0
      %s287 = sadd.s32 %s286, 1
      %s288 = scalar_select %p285, %s286, %s287
      %p291 = pneg %p285
      %p292 = scmp.eq.s32.totalorder %s30, 3
      %p293 = por %p291, %p292
      %p294 = scmp.ne.s32.totalorder %s286, %s289
      %p295 = scmp.eq.s32.totalorder %s30, 0
      %p296 = por %p294, %p295
      %p297 = scmp.ne.s32.totalorder %s286, %s289
      %p298 = scmp.eq.s32.totalorder %s35, 3
      %p299 = por %p297, %p298
      %p300 = scmp.ne.s32.totalorder %s289, %s290
      %p301 = scmp.eq.s32.totalorder %s35, 0
      %p302 = por %p300, %p301
      %p303 = scmp.ne.s32.totalorder %s289, %s290
      %p304 = scmp.eq.s32.totalorder %s36, 3
      %p305 = por %p303, %p304
      %p307 = scmp.ne.s32.totalorder %s290, %s306
      %p308 = scmp.eq.s32.totalorder %s36, 0
      %p309 = por %p307, %p308
      %s310 = ssub.s32 %s38, %s45
      %p311 = scmp.eq.s32.totalorder %s310, 0
      %s313 = sadd.s32 %s312, 1
      %s314 = scalar_select %p311, %s312, %s313
      %p317 = pneg %p311
      %p318 = scmp.eq.s32.totalorder %s30, 3
      %p319 = por %p317, %p318
      %p320 = scmp.ne.s32.totalorder %s312, %s315
      %p321 = scmp.eq.s32.totalorder %s30, 0
      %p322 = por %p320, %p321
      %p323 = scmp.ne.s32.totalorder %s312, %s315
      %p324 = scmp.eq.s32.totalorder %s35, 3
      %p325 = por %p323, %p324
      %p326 = scmp.ne.s32.totalorder %s315, %s316
      %p327 = scmp.eq.s32.totalorder %s35, 0
      %p328 = por %p326, %p327
      %p329 = scmp.ne.s32.totalorder %s315, %s316
      %p330 = scmp.eq.s32.totalorder %s36, 3
      %p331 = por %p329, %p330
      %p333 = scmp.ne.s32.totalorder %s316, %s332
      %p334 = scmp.eq.s32.totalorder %s36, 0
      %p335 = por %p333, %p334
      %s336 = ssub.s32 %s38, %s45
      %p337 = scmp.eq.s32.totalorder %s336, 0
      %s339 = sadd.s32 %s338, 1
      %s340 = scalar_select %p337, %s338, %s339
      %p343 = pneg %p337
      %p344 = scmp.eq.s32.totalorder %s30, 3
      %p345 = por %p343, %p344
      %p346 = scmp.ne.s32.totalorder %s338, %s341
      %p347 = scmp.eq.s32.totalorder %s30, 0
      %p348 = por %p346, %p347
      %p349 = scmp.ne.s32.totalorder %s338, %s341
      %p350 = scmp.eq.s32.totalorder %s35, 3
      %p351 = por %p349, %p350
      %p352 = scmp.ne.s32.totalorder %s341, %s342
      %p353 = scmp.eq.s32.totalorder %s35, 0
      %p354 = por %p352, %p353
      %p355 = scmp.ne.s32.totalorder %s341, %s342
      %p356 = scmp.eq.s32.totalorder %s36, 3
      %p357 = por %p355, %p356
      %p359 = scmp.ne.s32.totalorder %s342, %s358
      %p360 = scmp.eq.s32.totalorder %s36, 0
      %p361 = por %p359, %p360
      %s362 = ssub.s32 %s38, %s45
      %p363 = scmp.eq.s32.totalorder %s362, 0
      %s365 = sadd.s32 %s364, 1
      %s366 = scalar_select %p363, %s364, %s365
      %p369 = pneg %p363
      %p370 = scmp.eq.s32.totalorder %s30, 3
      %p371 = por %p369, %p370
      %p372 = scmp.ne.s32.totalorder %s364, %s367
      %p373 = scmp.eq.s32.totalorder %s30, 0
      %p374 = por %p372, %p373
      %p375 = scmp.ne.s32.totalorder %s364, %s367
      %p376 = scmp.eq.s32.totalorder %s35, 3
      %p377 = por %p375, %p376
      %p378 = scmp.ne.s32.totalorder %s367, %s368
      %p379 = scmp.eq.s32.totalorder %s35, 0
      %p380 = por %p378, %p379
      %p381 = scmp.ne.s32.totalorder %s367, %s368
      %p382 = scmp.eq.s32.totalorder %s36, 3
      %p383 = por %p381, %p382
      %p385 = scmp.ne.s32.totalorder %s368, %s384
      %p386 = scmp.eq.s32.totalorder %s36, 0
      %p387 = por %p385, %p386
      %s389 = sadd.s32 %s388, 1
      %p392 = scmp.eq.s32.totalorder %s30, 3
      %p393 = scmp.ne.s32.totalorder %s388, %s390
      %p394 = scmp.eq.s32.totalorder %s30, 0
      %p395 = por %p393, %p394
      %p396 = scmp.ne.s32.totalorder %s388, %s390
      %p397 = scmp.eq.s32.totalorder %s35, 3
      %p398 = por %p396, %p397
      %p399 = scmp.ne.s32.totalorder %s390, %s391
      %p400 = scmp.eq.s32.totalorder %s35, 0
      %p401 = por %p399, %p400
      %p402 = scmp.ne.s32.totalorder %s390, %s391
      %p403 = scmp.eq.s32.totalorder %s36, 3
      %p404 = por %p402, %p403
      %p406 = scmp.ne.s32.totalorder %s391, %s405
      %p407 = scmp.eq.s32.totalorder %s36, 0
      %p408 = por %p406, %p407
      %s410 = sadd.s32 %s409, 1
      %p413 = scmp.eq.s32.totalorder %s30, 3
      %p414 = scmp.ne.s32.totalorder %s409, %s411
      %p415 = scmp.eq.s32.totalorder %s30, 0
      %p416 = por %p414, %p415
      %p417 = scmp.ne.s32.totalorder %s409, %s411
      %p418 = scmp.eq.s32.totalorder %s35, 3
      %p419 = por %p417, %p418
      %p420 = scmp.ne.s32.totalorder %s411, %s412
      %p421 = scmp.eq.s32.totalorder %s35, 0
      %p422 = por %p420, %p421
      %p423 = scmp.ne.s32.totalorder %s411, %s412
      %p424 = scmp.eq.s32.totalorder %s36, 3
      %p425 = por %p423, %p424
      %p427 = scmp.ne.s32.totalorder %s412, %s426
      %p428 = scmp.eq.s32.totalorder %s36, 0
      %p429 = por %p427, %p428
      %s430 = ssub.s32 %s37, %s49
      %p431 = scmp.eq.s32.totalorder %s430, 0
      %s433 = sadd.s32 %s432, 1
      %s434 = scalar_select %p431, %s432, %s433
      %p437 = pneg %p431
      %p438 = scmp.eq.s32.totalorder %s30, 3
      %p439 = por %p437, %p438
      %p440 = scmp.ne.s32.totalorder %s432, %s435
      %p441 = scmp.eq.s32.totalorder %s30, 0
      %p442 = por %p440, %p441
      %p443 = scmp.ne.s32.totalorder %s432, %s435
      %p444 = scmp.eq.s32.totalorder %s35, 3
      %p445 = por %p443, %p444
      %p446 = scmp.ne.s32.totalorder %s435, %s436
      %p447 = scmp.eq.s32.totalorder %s35, 0
      %p448 = por %p446, %p447
      %p449 = scmp.ne.s32.totalorder %s435, %s436
      %p450 = scmp.eq.s32.totalorder %s36, 3
      %p451 = por %p449, %p450
      %p453 = scmp.ne.s32.totalorder %s436, %s452
      %p454 = scmp.eq.s32.totalorder %s36, 0
      %p455 = por %p453, %p454
      %p456 = scmp.le.s32.totalorder 1, %s30
      %p457 = scmp.lt.s32.totalorder %s30, 5
      %p458 = pnand %p456, %p457
      %p459 = pneg %p458
      // Predicated region
      $region9: #{tpu_custom_call.1} parent=5 // pred_check
        _
      $region10: #{tpu_custom_call.1} parent=5 // pred_check_branch
        %461 = sbr.rel (%p458) target = $region12
      $region11: #{tpu_custom_call.1} parent=5 // pred_region
        %s462 = ssub.s32 %s30, 1
        // Predicated region
        $region13: #{tpu_custom_call.1} parent=11 // pred_check
          %p463 = pneg %p401
        $region14: #{tpu_custom_call.1} parent=11 // pred_check_branch
          %465 = sbr.rel (%p463) target = $region16
        $region15: #{tpu_custom_call.1} parent=11 // pred_region
          _
        $region16: #{tpu_custom_call.1} parent=11 // pred_fallthru
          _
        // Predicated region
        $region17: #{tpu_custom_call.1} parent=11 // pred_check
          %p466 = pneg %p422
        $region18: #{tpu_custom_call.1} parent=11 // pred_check_branch
          %468 = sbr.rel (%p466) target = $region20
        $region19: #{tpu_custom_call.1} parent=11 // pred_region
          _
        $region20: #{tpu_custom_call.1} parent=11 // pred_fallthru
          _
      $region12: #{tpu_custom_call.1} parent=5 // pred_fallthru
        _
      %p469 = scmp.lt.s32.totalorder %s30, 4
      // Predicated region
      $region21: #{tpu_custom_call.1} parent=5 // pred_check
        %p470 = pneg %p469
      $region22: #{tpu_custom_call.1} parent=5 // pred_check_branch
        %472 = sbr.rel (%p470) target = $region24
      $region23: #{tpu_custom_call.1} parent=5 // pred_region
        // Predicated region
        $region25: #{tpu_custom_call.1} parent=23 // pred_check
          %p473 = pneg %p62
        $region26: #{tpu_custom_call.1} parent=23 // pred_check_branch
          %475 = sbr.rel (%p473) target = $region28
        $region27: #{tpu_custom_call.1} parent=23 // pred_region
          %p476 = scmp.lt.s32.totalorder %s37, 1
          %s477 = scalar_select %p476, %s37, 1
          %s478 = smul.addr %s477, 2
          %s479 = smul.addr %s478, 8
          %s480 = scalar_lea.vmem %s0, %s479
        $region28: #{tpu_custom_call.1} parent=23 // pred_fallthru
          _
        // Predicated region
        $region29: #{tpu_custom_call.1} parent=23 // pred_check
          %p481 = pneg %p88
        $region30: #{tpu_custom_call.1} parent=23 // pred_check_branch
          %483 = sbr.rel (%p481) target = $region32
        $region31: #{tpu_custom_call.1} parent=23 // pred_region
          %p484 = scmp.lt.s32.totalorder %s38, 1
          %s485 = scalar_select %p484, %s38, 1
          %s486 = scalar_lea.vmem %s1, %s485
        $region32: #{tpu_custom_call.1} parent=23 // pred_fallthru
          _
        // Predicated region
        $region33: #{tpu_custom_call.1} parent=23 // pred_check
          %p487 = pneg %p114
        $region34: #{tpu_custom_call.1} parent=23 // pred_check_branch
          %489 = sbr.rel (%p487) target = $region36
        $region35: #{tpu_custom_call.1} parent=23 // pred_region
          %p490 = scmp.lt.s32.totalorder %s38, 1
          %s491 = scalar_select %p490, %s38, 1
          %s492 = scalar_lea.vmem %s2, %s491
        $region36: #{tpu_custom_call.1} parent=23 // pred_fallthru
          _
        // Predicated region
        $region37: #{tpu_custom_call.1} parent=23 // pred_check
          %p493 = pneg %p140
        $region38: #{tpu_custom_call.1} parent=23 // pred_check_branch
          %495 = sbr.rel (%p493) target = $region40
        $region39: #{tpu_custom_call.1} parent=23 // pred_region
          %s496 = sand.u32 %s130, 1
          %s497 = scalar_lea.sflag [#allocation4], %s496
          %s498 = sand.u32 %s130, 1
          %s499 = smul.addr %s498, 768
          %s500 = scalar_lea.vmem [#allocation3], %s499
          %s502 = ssub.s32 12288, 12288
          %503 = vsyncadd %s497, %s502
          %s504 = smul.addr %s38, 192
          %s505 = smul.addr %s504, 64
          %s506 = scalar_lea.hbm %s3, %s505
          %s507 = sshll.u32 %s500, 4
          %s508 = int_to_ptr.vmem [resolvable:$true] %s507
          %513 = dma.hbm_to_vmem [thread:$0]  %s506, 12288, %s508, %s497, 768, 768, 48
        $region40: #{tpu_custom_call.1} parent=23 // pred_fallthru
          _
        // Predicated region
        $region41: #{tpu_custom_call.1} parent=23 // pred_check
          %p514 = pneg %p166
        $region42: #{tpu_custom_call.1} parent=23 // pred_check_branch
          %516 = sbr.rel (%p514) target = $region44
        $region43: #{tpu_custom_call.1} parent=23 // pred_region
          %p517 = scmp.lt.s32.totalorder %s38, 1
          %s518 = scalar_select %p517, %s38, 1
          %s519 = smul.addr %s518, 12
          %s520 = scalar_lea.vmem %s4, %s519
        $region44: #{tpu_custom_call.1} parent=23 // pred_fallthru
          _
        // Predicated region
        $region45: #{tpu_custom_call.1} parent=23 // pred_check
          %p521 = pneg %p192
        $region46: #{tpu_custom_call.1} parent=23 // pred_check_branch
          %523 = sbr.rel (%p521) target = $region48
        $region47: #{tpu_custom_call.1} parent=23 // pred_region
          %s524 = sand.u32 %s30, 1
          %s525 = scalar_lea.sflag [#allocation6], %s524
          %s526 = sand.u32 %s182, 1
          %s527 = smul.addr %s526, 256
          %s528 = scalar_lea.vmem [#allocation5], %s527
          %s530 = ssub.s32 4096, 4096
          %531 = vsyncadd %s525, %s530
          %s532 = smul.addr %s38, 64
          %s533 = smul.addr %s532, 64
          %s534 = scalar_lea.hbm %s5, %s533
          %s535 = sshll.u32 %s528, 4
          %s536 = int_to_ptr.vmem [resolvable:$true] %s535
          %541 = dma.hbm_to_vmem [thread:$0]  %s534, 4096, %s536, %s525, 64, 64, 4
        $region48: #{tpu_custom_call.1} parent=23 // pred_fallthru
          _
        // Predicated region
        $region49: #{tpu_custom_call.1} parent=23 // pred_check
          %p542 = pneg %p218
        $region50: #{tpu_custom_call.1} parent=23 // pred_check_branch
          %544 = sbr.rel (%p542) target = $region52
        $region51: #{tpu_custom_call.1} parent=23 // pred_region
          %p545 = scmp.lt.s32.totalorder %s38, 1
          %s546 = scalar_select %p545, %s38, 1
          %s547 = scalar_lea.vmem %s6, %s546
        $region52: #{tpu_custom_call.1} parent=23 // pred_fallthru
          _
        // Predicated region
        $region53: #{tpu_custom_call.1} parent=23 // pred_check
          %p548 = pneg %p244
        $region54: #{tpu_custom_call.1} parent=23 // pred_check_branch
          %550 = sbr.rel (%p548) target = $region56
        $region55: #{tpu_custom_call.1} parent=23 // pred_region
          %p551 = scmp.lt.s32.totalorder %s38, 1
          %s552 = scalar_select %p551, %s38, 1
          %s553 = scalar_lea.vmem %s7, %s552
        $region56: #{tpu_custom_call.1} parent=23 // pred_fallthru
          _
        // Predicated region
        $region57: #{tpu_custom_call.1} parent=23 // pred_check
          %p554 = pneg %p270
        $region58: #{tpu_custom_call.1} parent=23 // pred_check_branch
          %556 = sbr.rel (%p554) target = $region60
        $region59: #{tpu_custom_call.1} parent=23 // pred_region
          %p557 = scmp.lt.s32.totalorder %s38, 1
          %s558 = scalar_select %p557, %s38, 1
          %s559 = scalar_lea.vmem %s8, %s558
        $region60: #{tpu_custom_call.1} parent=23 // pred_fallthru
          _
        // Predicated region
        $region61: #{tpu_custom_call.1} parent=23 // pred_check
          %p560 = pneg %p296
        $region62: #{tpu_custom_call.1} parent=23 // pred_check_branch
          %562 = sbr.rel (%p560) target = $region64
        $region63: #{tpu_custom_call.1} parent=23 // pred_region
          %s563 = sand.u32 %s30, 1
          %s564 = scalar_lea.sflag [#allocation6], %s563
          %s565 = sand.u32 %s286, 1
          %s566 = smul.addr %s565, 64
          %s567 = scalar_lea.vmem [#allocation7], %s566
          %s569 = ssub.s32 1024, 1024
          %570 = vsyncadd %s564, %s569
          %s571 = smul.addr %s38, 16
          %s572 = smul.addr %s571, 64
          %s573 = scalar_lea.hbm %s9, %s572
          %s574 = sshll.u32 %s567, 4
          %s575 = int_to_ptr.vmem [resolvable:$true] %s574
          %580 = dma.hbm_to_vmem [thread:$0]  %s573, 1024, %s575, %s564, 64, 64, 4
        $region64: #{tpu_custom_call.1} parent=23 // pred_fallthru
          _
        // Predicated region
        $region65: #{tpu_custom_call.1} parent=23 // pred_check
          %p581 = pneg %p322
        $region66: #{tpu_custom_call.1} parent=23 // pred_check_branch
          %583 = sbr.rel (%p581) target = $region68
        $region67: #{tpu_custom_call.1} parent=23 // pred_region
          %p584 = scmp.lt.s32.totalorder %s38, 1
          %s585 = scalar_select %p584, %s38, 1
          %s586 = scalar_lea.vmem %s10, %s585
        $region68: #{tpu_custom_call.1} parent=23 // pred_fallthru
          _
        // Predicated region
        $region69: #{tpu_custom_call.1} parent=23 // pred_check
          %p587 = pneg %p348
        $region70: #{tpu_custom_call.1} parent=23 // pred_check_branch
          %589 = sbr.rel (%p587) target = $region72
        $region71: #{tpu_custom_call.1} parent=23 // pred_region
          %s590 = sand.u32 %s338, 1
          %s591 = scalar_lea.sflag [#allocation9], %s590
          %s592 = sand.u32 %s338, 1
          %s593 = smul.addr %s592, 64
          %s594 = scalar_lea.vmem [#allocation8], %s593
          %s596 = ssub.s32 1024, 1024
          %597 = vsyncadd %s591, %s596
          %s598 = smul.addr %s38, 16
          %s599 = smul.addr %s598, 64
          %s600 = scalar_lea.hbm %s11, %s599
          %s601 = sshll.u32 %s594, 4
          %s602 = int_to_ptr.vmem [resolvable:$true] %s601
          %607 = dma.hbm_to_vmem [thread:$0]  %s600, 1024, %s602, %s591, 64, 64, 4
        $region72: #{tpu_custom_call.1} parent=23 // pred_fallthru
          _
        // Predicated region
        $region73: #{tpu_custom_call.1} parent=23 // pred_check
          %p608 = pneg %p374
        $region74: #{tpu_custom_call.1} parent=23 // pred_check_branch
          %610 = sbr.rel (%p608) target = $region76
        $region75: #{tpu_custom_call.1} parent=23 // pred_region
          %p611 = scmp.lt.s32.totalorder %s38, 1
          %s612 = scalar_select %p611, %s38, 1
          %s613 = scalar_lea.vmem %s12, %s612
        $region76: #{tpu_custom_call.1} parent=23 // pred_fallthru
          _
      $region24: #{tpu_custom_call.1} parent=5 // pred_fallthru
        _
      %p614 = scmp.le.s32.totalorder 1, %s30
      %p615 = scmp.lt.s32.totalorder %s30, 5
      %p616 = pnand %p614, %p615
      %p617 = pneg %p616
      // Predicated region
      $region77: #{tpu_custom_call.1} parent=5 // pred_check
        _
      $region78: #{tpu_custom_call.1} parent=5 // pred_check_branch
        %619 = sbr.rel (%p616) target = $region80
      $region79: #{tpu_custom_call.1} parent=5 // pred_region
        %s620 = ssub.s32 %s30, 1
        %s621 = sand.u32 %s133, 1
        %s622 = scalar_lea.sflag [#allocation4], %s621
        %s623 = sand.u32 %s133, 1
        %s624 = smul.addr %s623, 768
        %s625 = scalar_lea.vmem [#allocation3], %s624
        // Predicated region
        $region81: #{tpu_custom_call.1} parent=79 // pred_check
          %p626 = pneg %p146
        $region82: #{tpu_custom_call.1} parent=79 // pred_check_branch
          %628 = sbr.rel (%p626) target = $region84
        $region83: #{tpu_custom_call.1} parent=79 // pred_region
          %629 = dma.done %s622, 12288
        $region84: #{tpu_custom_call.1} parent=79 // pred_fallthru
          _
        %s630 = sand.u32 %s35, 1
        %s631 = scalar_lea.sflag [#allocation6], %s630
        %s632 = sand.u32 %s185, 1
        %s633 = smul.addr %s632, 256
        %s634 = scalar_lea.vmem [#allocation5], %s633
        // Predicated region
        $region85: #{tpu_custom_call.1} parent=79 // pred_check
          %p635 = pneg %p198
        $region86: #{tpu_custom_call.1} parent=79 // pred_check_branch
          %637 = sbr.rel (%p635) target = $region88
        $region87: #{tpu_custom_call.1} parent=79 // pred_region
          %638 = dma.done %s631, 4096
        $region88: #{tpu_custom_call.1} parent=79 // pred_fallthru
          _
        %s639 = sand.u32 %s35, 1
        %s640 = scalar_lea.sflag [#allocation6], %s639
        %s641 = sand.u32 %s289, 1
        %s642 = smul.addr %s641, 64
        %s643 = scalar_lea.vmem [#allocation7], %s642
        // Predicated region
        $region89: #{tpu_custom_call.1} parent=79 // pred_check
          %p644 = pneg %p302
        $region90: #{tpu_custom_call.1} parent=79 // pred_check_branch
          %646 = sbr.rel (%p644) target = $region92
        $region91: #{tpu_custom_call.1} parent=79 // pred_region
          %647 = dma.done %s640, 1024
        $region92: #{tpu_custom_call.1} parent=79 // pred_fallthru
          _
        %s648 = sand.u32 %s341, 1
        %s649 = scalar_lea.sflag [#allocation9], %s648
        %s650 = sand.u32 %s341, 1
        %s651 = smul.addr %s650, 64
        %s652 = scalar_lea.vmem [#allocation8], %s651
        // Predicated region
        $region93: #{tpu_custom_call.1} parent=79 // pred_check
          %p653 = pneg %p354
        $region94: #{tpu_custom_call.1} parent=79 // pred_check_branch
          %655 = sbr.rel (%p653) target = $region96
        $region95: #{tpu_custom_call.1} parent=79 // pred_region
          %656 = dma.done %s649, 1024
        $region96: #{tpu_custom_call.1} parent=79 // pred_fallthru
          _
        %p657 = scmp.lt.s32.totalorder %s39, 1
        %s658 = scalar_select %p657, %s39, 1
        %s659 = smul.addr %s658, 2
        %s660 = smul.addr %s659, 8
        %s661 = scalar_lea.vmem %s0, %s660
        %p662 = pneg %p68
        %p663 = pneg %p65
        %p664 = scmp.lt.s32.totalorder %s40, 1
        %s665 = scalar_select %p664, %s40, 1
        %s666 = scalar_lea.vmem %s1, %s665
        %p667 = pneg %p94
        %p668 = pneg %p91
        %p669 = scmp.lt.s32.totalorder %s40, 1
        %s670 = scalar_select %p669, %s40, 1
        %s671 = scalar_lea.vmem %s2, %s670
        %p672 = pneg %p120
        %p673 = pneg %p117
        %s674 = sand.u32 %s133, 1
        %s675 = scalar_lea.sflag [#allocation4], %s674
        %s676 = sand.u32 %s133, 1
        %s677 = smul.addr %s676, 768
        %s678 = scalar_lea.vmem [#allocation3], %s677
        %p679 = pneg %p146
        %p680 = pneg %p143
        %p681 = scmp.lt.s32.totalorder %s40, 1
        %s682 = scalar_select %p681, %s40, 1
        %s683 = smul.addr %s682, 12
        %s684 = scalar_lea.vmem %s4, %s683
        %p685 = pneg %p172
        %p686 = pneg %p169
        %s687 = sand.u32 %s35, 1
        %s688 = scalar_lea.sflag [#allocation6], %s687
        %s689 = sand.u32 %s185, 1
        %s690 = smul.addr %s689, 256
        %s691 = scalar_lea.vmem [#allocation5], %s690
        %p692 = pneg %p198
        %p693 = pneg %p195
        %p694 = scmp.lt.s32.totalorder %s40, 1
        %s695 = scalar_select %p694, %s40, 1
        %s696 = scalar_lea.vmem %s6, %s695
        %p697 = pneg %p224
        %p698 = pneg %p221
        %p699 = scmp.lt.s32.totalorder %s40, 1
        %s700 = scalar_select %p699, %s40, 1
        %s701 = scalar_lea.vmem %s7, %s700
        %p702 = pneg %p250
        %p703 = pneg %p247
        %p704 = scmp.lt.s32.totalorder %s40, 1
        %s705 = scalar_select %p704, %s40, 1
        %s706 = scalar_lea.vmem %s8, %s705
        %p707 = pneg %p276
        %p708 = pneg %p273
        %s709 = sand.u32 %s35, 1
        %s710 = scalar_lea.sflag [#allocation6], %s709
        %s711 = sand.u32 %s289, 1
        %s712 = smul.addr %s711, 64
        %s713 = scalar_lea.vmem [#allocation7], %s712
        %p714 = pneg %p302
        %p715 = pneg %p299
        %p716 = scmp.lt.s32.totalorder %s40, 1
        %s717 = scalar_select %p716, %s40, 1
        %s718 = scalar_lea.vmem %s10, %s717
        %p719 = pneg %p328
        %p720 = pneg %p325
        %s721 = sand.u32 %s341, 1
        %s722 = scalar_lea.sflag [#allocation9], %s721
        %s723 = sand.u32 %s341, 1
        %s724 = smul.addr %s723, 64
        %s725 = scalar_lea.vmem [#allocation8], %s724
        %p726 = pneg %p354
        %p727 = pneg %p351
        %p728 = scmp.lt.s32.totalorder %s40, 1
        %s729 = scalar_select %p728, %s40, 1
        %s730 = scalar_lea.vmem %s12, %s729
        %p731 = pneg %p380
        %p732 = pneg %p377
        %p733 = pneg %p401
        %p734 = pneg %p398
        %p735 = pneg %p422
        %p736 = pneg %p419
        %p737 = pneg %p448
        %p738 = pneg %p445
        %p739 = scmp.lt.s32.totalorder %s39, 1
        %s740 = scalar_select %p739, %s39, 1
        %s741 = smul.addr %s740, 2
        %s742 = smul.addr %s741, 8
        %s743 = scalar_lea.vmem %s15, %s742
        %p744 = scmp.lt.s32.totalorder %s39, 1
        %s745 = scalar_select %p744, %s39, 1
        %s746 = smul.addr %s745, 2
        %s747 = smul.addr %s746, 8
        %s748 = scalar_lea.vmem %s0, %s747
        %p749 = scmp.lt.s32.totalorder %s40, 1
        %s750 = scalar_select %p749, %s40, 1
        %s751 = scalar_lea.vmem %s1, %s750
        %p752 = scmp.lt.s32.totalorder %s40, 1
        %s753 = scalar_select %p752, %s40, 1
        %s754 = scalar_lea.vmem %s2, %s753
        %p755 = scmp.lt.s32.totalorder %s40, 1
        %s756 = scalar_select %p755, %s40, 1
        %s757 = smul.addr %s756, 12
        %s758 = scalar_lea.vmem %s4, %s757
        %p759 = scmp.lt.s32.totalorder %s40, 1
        %s760 = scalar_select %p759, %s40, 1
        %s761 = scalar_lea.vmem %s6, %s760
        %p762 = scmp.lt.s32.totalorder %s40, 1
        %s763 = scalar_select %p762, %s40, 1
        %s764 = scalar_lea.vmem %s7, %s763
        %p765 = scmp.lt.s32.totalorder %s40, 1
        %s766 = scalar_select %p765, %s40, 1
        %s767 = scalar_lea.vmem %s8, %s766
        %p768 = scmp.lt.s32.totalorder %s40, 1
        %s769 = scalar_select %p768, %s40, 1
        %s770 = scalar_lea.vmem %s10, %s769
        %p771 = scmp.lt.s32.totalorder %s40, 1
        %s772 = scalar_select %p771, %s40, 1
        %s773 = scalar_lea.vmem %s12, %s772
        %p774 = scmp.lt.s32.totalorder %s39, 1
        %s775 = scalar_select %p774, %s39, 1
        %s776 = smul.addr %s775, 2
        %s777 = smul.addr %s776, 8
        %s778 = scalar_lea.vmem %s15, %s777
        %p780 = scmp.eq.s32.totalorder %s40, 0
        // Predicated region
        $region97: #{tpu_custom_call.1} parent=79 // pred_check
          %p781 = pneg %p780
        $region98: #{tpu_custom_call.1} parent=79 // pred_check_branch
          %783 = sbr.rel (%p781) target = $region100
        $region99: #{tpu_custom_call.1} parent=79 // pred_region
          %v784 = vld [vmem:[%s748] sm:$0xff]
          %v785 = vld [vmem:[%s748 + $0x8] sm:$0x1]
          %786 = vst [vmem:[#allocation2] sm:$0xff] %v784
          %787 = vst [vmem:[#allocation2 + $0x8] sm:$0x1] %v785
        $region100: #{tpu_custom_call.1} parent=79 // pred_fallthru
          _
        %v788 = vld [vmem:[#allocation2] sm:$0xff]
        %v789 = vld [vmem:[#allocation2 + $0x8] sm:$0x1]
        %v790 = vld [vmem:[%s751] sm:$0x1]
        %v791 = vld [vmem:[%s754] sm:$0x1]
        %792 = vadd.xlane.f32.xlu0 %v788
        %v793 = vpop.xlane.xlu0 %792
        %vm794 = vcmask 1040384
        %v795 = vsel %vm794, %v789, 0.0
        %796 = vadd.xlane.f32.xlu0 %v795
        %v797 = vpop.xlane.xlu0 %796
        %v798 = vmul.f32 %v793, 0.03125
        %v799 = vmul.f32 %v797, 0.03125
        %v800 = vmul.f32 %v788, %v788
        %v801 = vmul.f32 %v789, %v789
        %802 = vadd.xlane.f32.xlu0 %v800
        %v803 = vpop.xlane.xlu0 %802
        %v804 = vsel %vm794, %v801, 0.0
        %805 = vadd.xlane.f32.xlu0 %v804
        %v806 = vpop.xlane.xlu0 %805
        %v807 = vmul.f32 %v803, 0.03125
        %v808 = vmul.f32 %v806, 0.03125
        %v809 = vmul.f32 %v798, %v798
        %v810 = vmul.f32 %v799, %v799
        %v811 = vsub.f32 %v807, %v809
        %v812 = vsub.f32 %v808, %v810
        %v813 = vmax.f32 %v811, 0.0
        %v814 = vmax.f32 %v812, 0.0
        %v815 = vsub.f32 %v788, %v798
        %v816 = vsub.f32 %v789, %v799
        %v817 = vadd.f32 %v813, 1e-06
        %v818 = vadd.f32 %v814, 1e-06
        %v819 = vrsqrt.pop %v817
        %v820 = vrsqrt.pop %v818
        %v821 = vmul.f32 %v815, %v819
        %v822 = vmul.f32 %v816, %v820
        %v824 = vlaneseq
        %v825 = vshrl.u32 %v824, 7
        %v826 = vsub.s32 0, %v825
        %v827 = vrot.slane %v790, %v826
        %v829 = vmul.f32 %v821, %v827
        %v830 = vmul.f32 %v822, %v827
        %v832 = vlaneseq
        %v833 = vshrl.u32 %v832, 7
        %v834 = vsub.s32 0, %v833
        %v835 = vrot.slane %v791, %v834
        %v837 = vadd.f32 %v829, %v835
        %v838 = vadd.f32 %v830, %v835
        %v839 = vld [vmem:[%s625] sm:$0xff]
        %v840 = vld [vmem:[%s625 + $0x8] sm:$0xff]
        %v841 = vld [vmem:[%s625 + $0x10] sm:$0xff]
        %v842 = vld [vmem:[%s625 + $0x18] sm:$0xff]
        %v843 = vld [vmem:[%s625 + $0x20] sm:$0xff]
        %v844 = vld [vmem:[%s625 + $0x28] sm:$0xff]
        %v845 = vld [vmem:[%s625 + $0x30] sm:$0xff]
        %v846 = vld [vmem:[%s625 + $0x38] sm:$0xff]
        %v847 = vld [vmem:[%s625 + $0x40] sm:$0xff]
        %v848 = vld [vmem:[%s625 + $0x48] sm:$0xff]
        %v849 = vld [vmem:[%s625 + $0x50] sm:$0xff]
        %v850 = vld [vmem:[%s625 + $0x58] sm:$0xff]
        %v851 = vld [vmem:[%s625 + $0x60] sm:$0xff]
        %v852 = vld [vmem:[%s625 + $0x68] sm:$0xff]
        %v853 = vld [vmem:[%s625 + $0x70] sm:$0xff]
        %v854 = vld [vmem:[%s625 + $0x78] sm:$0xff]
        %v855 = vld [vmem:[%s625 + $0x80] sm:$0xff]
        %v856 = vld [vmem:[%s625 + $0x88] sm:$0xff]
        %v857 = vld [vmem:[%s625 + $0x90] sm:$0xff]
        %v858 = vld [vmem:[%s625 + $0x98] sm:$0xff]
        %v859 = vld [vmem:[%s625 + $0xa0] sm:$0xff]
        %v860 = vld [vmem:[%s625 + $0xa8] sm:$0xff]
        %v861 = vld [vmem:[%s625 + $0xb0] sm:$0xff]
        %v862 = vld [vmem:[%s625 + $0xb8] sm:$0xff]
        %v863 = vld [vmem:[%s625 + $0xc0] sm:$0xff]
        %v864 = vld [vmem:[%s625 + $0xc8] sm:$0xff]
        %v865 = vld [vmem:[%s625 + $0xd0] sm:$0xff]
        %v866 = vld [vmem:[%s625 + $0xd8] sm:$0xff]
        %v867 = vld [vmem:[%s625 + $0xe0] sm:$0xff]
        %v868 = vld [vmem:[%s625 + $0xe8] sm:$0xff]
        %v869 = vld [vmem:[%s625 + $0xf0] sm:$0xff]
        %v870 = vld [vmem:[%s625 + $0xf8] sm:$0xff]
        %v871 = vld [vmem:[%s625 + $0x100] sm:$0xff]
        %v872 = vld [vmem:[%s625 + $0x108] sm:$0xff]
        %v873 = vld [vmem:[%s625 + $0x110] sm:$0xff]
        %v874 = vld [vmem:[%s625 + $0x118] sm:$0xff]
        %v875 = vld [vmem:[%s625 + $0x120] sm:$0xff]
        %v876 = vld [vmem:[%s625 + $0x128] sm:$0xff]
        %v877 = vld [vmem:[%s625 + $0x130] sm:$0xff]
        %v878 = vld [vmem:[%s625 + $0x138] sm:$0xff]
        %v879 = vld [vmem:[%s625 + $0x140] sm:$0xff]
        %v880 = vld [vmem:[%s625 + $0x148] sm:$0xff]
        %v881 = vld [vmem:[%s625 + $0x150] sm:$0xff]
        %v882 = vld [vmem:[%s625 + $0x158] sm:$0xff]
        %v883 = vld [vmem:[%s625 + $0x160] sm:$0xff]
        %v884 = vld [vmem:[%s625 + $0x168] sm:$0xff]
        %v885 = vld [vmem:[%s625 + $0x170] sm:$0xff]
        %v886 = vld [vmem:[%s625 + $0x178] sm:$0xff]
        %v887 = vld [vmem:[%s625 + $0x180] sm:$0xff]
        %v888 = vld [vmem:[%s625 + $0x188] sm:$0xff]
        %v889 = vld [vmem:[%s625 + $0x190] sm:$0xff]
        %v890 = vld [vmem:[%s625 + $0x198] sm:$0xff]
        %v891 = vld [vmem:[%s625 + $0x1a0] sm:$0xff]
        %v892 = vld [vmem:[%s625 + $0x1a8] sm:$0xff]
        %v893 = vld [vmem:[%s625 + $0x1b0] sm:$0xff]
        %v894 = vld [vmem:[%s625 + $0x1b8] sm:$0xff]
        %v895 = vld [vmem:[%s625 + $0x1c0] sm:$0xff]
        %v896 = vld [vmem:[%s625 + $0x1c8] sm:$0xff]
        %v897 = vld [vmem:[%s625 + $0x1d0] sm:$0xff]
        %v898 = vld [vmem:[%s625 + $0x1d8] sm:$0xff]
        %v899 = vld [vmem:[%s625 + $0x1e0] sm:$0xff]
        %v900 = vld [vmem:[%s625 + $0x1e8] sm:$0xff]
        %v901 = vld [vmem:[%s625 + $0x1f0] sm:$0xff]
        %v902 = vld [vmem:[%s625 + $0x1f8] sm:$0xff]
        %v903 = vld [vmem:[%s625 + $0x200] sm:$0xff]
        %v904 = vld [vmem:[%s625 + $0x208] sm:$0xff]
        %v905 = vld [vmem:[%s625 + $0x210] sm:$0xff]
        %v906 = vld [vmem:[%s625 + $0x218] sm:$0xff]
        %v907 = vld [vmem:[%s625 + $0x220] sm:$0xff]
        %v908 = vld [vmem:[%s625 + $0x228] sm:$0xff]
        %v909 = vld [vmem:[%s625 + $0x230] sm:$0xff]
        %v910 = vld [vmem:[%s625 + $0x238] sm:$0xff]
        %v911 = vld [vmem:[%s625 + $0x240] sm:$0xff]
        %v912 = vld [vmem:[%s625 + $0x248] sm:$0xff]
        %v913 = vld [vmem:[%s625 + $0x250] sm:$0xff]
        %v914 = vld [vmem:[%s625 + $0x258] sm:$0xff]
        %v915 = vld [vmem:[%s625 + $0x260] sm:$0xff]
        %v916 = vld [vmem:[%s625 + $0x268] sm:$0xff]
        %v917 = vld [vmem:[%s625 + $0x270] sm:$0xff]
        %v918 = vld [vmem:[%s625 + $0x278] sm:$0xff]
        %v919 = vld [vmem:[%s625 + $0x280] sm:$0xff]
        %v920 = vld [vmem:[%s625 + $0x288] sm:$0xff]
        %v921 = vld [vmem:[%s625 + $0x290] sm:$0xff]
        %v922 = vld [vmem:[%s625 + $0x298] sm:$0xff]
        %v923 = vld [vmem:[%s625 + $0x2a0] sm:$0xff]
        %v924 = vld [vmem:[%s625 + $0x2a8] sm:$0xff]
        %v925 = vld [vmem:[%s625 + $0x2b0] sm:$0xff]
        %v926 = vld [vmem:[%s625 + $0x2b8] sm:$0xff]
        %v927 = vld [vmem:[%s625 + $0x2c0] sm:$0xff]
        %v928 = vld [vmem:[%s625 + $0x2c8] sm:$0xff]
        %v929 = vld [vmem:[%s625 + $0x2d0] sm:$0xff]
        %v930 = vld [vmem:[%s625 + $0x2d8] sm:$0xff]
        %v931 = vld [vmem:[%s625 + $0x2e0] sm:$0xff]
        %v932 = vld [vmem:[%s625 + $0x2e8] sm:$0xff]
        %v933 = vld [vmem:[%s625 + $0x2f0] sm:$0xff]
        %v934 = vld [vmem:[%s625 + $0x2f8] sm:$0xff]
        %v935 = vld [vmem:[%s758] sm:$0xff]
        %v936 = vld [vmem:[%s758 + $0x8] sm:$0xf]
        %v937 = vld [vmem:[%s634] sm:$0xf]
        %v938 = vld [vmem:[%s634 + $0x4] sm:$0xf]
        %v939 = vld [vmem:[%s634 + $0x8] sm:$0xf]
        %v940 = vld [vmem:[%s634 + $0xc] sm:$0xf]
        %v941 = vld [vmem:[%s634 + $0x10] sm:$0xf]
        %v942 = vld [vmem:[%s634 + $0x14] sm:$0xf]
        %v943 = vld [vmem:[%s634 + $0x18] sm:$0xf]
        %v944 = vld [vmem:[%s634 + $0x1c] sm:$0xf]
        %v945 = vld [vmem:[%s634 + $0x20] sm:$0xf]
        %v946 = vld [vmem:[%s634 + $0x24] sm:$0xf]
        %v947 = vld [vmem:[%s634 + $0x28] sm:$0xf]
        %v948 = vld [vmem:[%s634 + $0x2c] sm:$0xf]
        %v949 = vld [vmem:[%s634 + $0x30] sm:$0xf]
        %v950 = vld [vmem:[%s634 + $0x34] sm:$0xf]
        %v951 = vld [vmem:[%s634 + $0x38] sm:$0xf]
        %v952 = vld [vmem:[%s634 + $0x3c] sm:$0xf]
        %v953 = vld [vmem:[%s634 + $0x40] sm:$0xf]
        %v954 = vld [vmem:[%s634 + $0x44] sm:$0xf]
        %v955 = vld [vmem:[%s634 + $0x48] sm:$0xf]
        %v956 = vld [vmem:[%s634 + $0x4c] sm:$0xf]
        %v957 = vld [vmem:[%s634 + $0x50] sm:$0xf]
        %v958 = vld [vmem:[%s634 + $0x54] sm:$0xf]
        %v959 = vld [vmem:[%s634 + $0x58] sm:$0xf]
        %v960 = vld [vmem:[%s634 + $0x5c] sm:$0xf]
        %v961 = vld [vmem:[%s634 + $0x60] sm:$0xf]
        %v962 = vld [vmem:[%s634 + $0x64] sm:$0xf]
        %v963 = vld [vmem:[%s634 + $0x68] sm:$0xf]
        %v964 = vld [vmem:[%s634 + $0x6c] sm:$0xf]
        %v965 = vld [vmem:[%s634 + $0x70] sm:$0xf]
        %v966 = vld [vmem:[%s634 + $0x74] sm:$0xf]
        %v967 = vld [vmem:[%s634 + $0x78] sm:$0xf]
        %v968 = vld [vmem:[%s634 + $0x7c] sm:$0xf]
        %v969 = vld [vmem:[%s634 + $0x80] sm:$0xf]
        %v970 = vld [vmem:[%s634 + $0x84] sm:$0xf]
        %v971 = vld [vmem:[%s634 + $0x88] sm:$0xf]
        %v972 = vld [vmem:[%s634 + $0x8c] sm:$0xf]
        %v973 = vld [vmem:[%s634 + $0x90] sm:$0xf]
        %v974 = vld [vmem:[%s634 + $0x94] sm:$0xf]
        %v975 = vld [vmem:[%s634 + $0x98] sm:$0xf]
        %v976 = vld [vmem:[%s634 + $0x9c] sm:$0xf]
        %v977 = vld [vmem:[%s634 + $0xa0] sm:$0xf]
        %v978 = vld [vmem:[%s634 + $0xa4] sm:$0xf]
        %v979 = vld [vmem:[%s634 + $0xa8] sm:$0xf]
        %v980 = vld [vmem:[%s634 + $0xac] sm:$0xf]
        %v981 = vld [vmem:[%s634 + $0xb0] sm:$0xf]
        %v982 = vld [vmem:[%s634 + $0xb4] sm:$0xf]
        %v983 = vld [vmem:[%s634 + $0xb8] sm:$0xf]
        %v984 = vld [vmem:[%s634 + $0xbc] sm:$0xf]
        %v985 = vld [vmem:[%s634 + $0xc0] sm:$0xf]
        %v986 = vld [vmem:[%s634 + $0xc4] sm:$0xf]
        %v987 = vld [vmem:[%s634 + $0xc8] sm:$0xf]
        %v988 = vld [vmem:[%s634 + $0xcc] sm:$0xf]
        %v989 = vld [vmem:[%s634 + $0xd0] sm:$0xf]
        %v990 = vld [vmem:[%s634 + $0xd4] sm:$0xf]
        %v991 = vld [vmem:[%s634 + $0xd8] sm:$0xf]
        %v992 = vld [vmem:[%s634 + $0xdc] sm:$0xf]
        %v993 = vld [vmem:[%s634 + $0xe0] sm:$0xf]
        %v994 = vld [vmem:[%s634 + $0xe4] sm:$0xf]
        %v995 = vld [vmem:[%s634 + $0xe8] sm:$0xf]
        %v996 = vld [vmem:[%s634 + $0xec] sm:$0xf]
        %v997 = vld [vmem:[%s634 + $0xf0] sm:$0xf]
        %v998 = vld [vmem:[%s634 + $0xf4] sm:$0xf]
        %v999 = vld [vmem:[%s634 + $0xf8] sm:$0xf]
        %v1000 = vld [vmem:[%s634 + $0xfc] sm:$0xf]
        %v1001 = vld [vmem:[%s761] sm:$0x1]
        %v1002 = vpack.c.bf16 %v838, %v837
        %v1005 = vlaneseq
        %v1006 = vshrl.u32 %v1005, 7
        %v1007 = vsub.s32 0, %v1006
        %v1008 = vrot.slane %v935, %v1007
        %v1009 = vlaneseq
        %v1010 = vshrl.u32 %v1009, 7
        %v1011 = vsub.s32 1, %v1010
        %v1012 = vrot.slane %v935, %v1011
        %v1013 = vlaneseq
        %v1014 = vshrl.u32 %v1013, 7
        %v1015 = vsub.s32 2, %v1014
        %v1016 = vrot.slane %v935, %v1015
        %v1017 = vlaneseq
        %v1018 = vshrl.u32 %v1017, 7
        %v1019 = vsub.s32 3, %v1018
        %v1020 = vrot.slane %v935, %v1019
        %v1021 = vlaneseq
        %v1022 = vshrl.u32 %v1021, 7
        %v1023 = vsub.s32 4, %v1022
        %v1024 = vrot.slane %v935, %v1023
        %v1025 = vlaneseq
        %v1026 = vshrl.u32 %v1025, 7
        %v1027 = vsub.s32 5, %v1026
        %v1028 = vrot.slane %v935, %v1027
        %v1029 = vlaneseq
        %v1030 = vshrl.u32 %v1029, 7
        %v1031 = vsub.s32 6, %v1030
        %v1032 = vrot.slane %v935, %v1031
        %v1033 = vlaneseq
        %v1034 = vshrl.u32 %v1033, 7
        %v1035 = vsub.s32 7, %v1034
        %v1036 = vrot.slane %v935, %v1035
        %v1037 = vlaneseq
        %v1038 = vshrl.u32 %v1037, 7
        %v1039 = vsub.s32 0, %v1038
        %v1040 = vrot.slane %v936, %v1039
        %v1041 = vlaneseq
        %v1042 = vshrl.u32 %v1041, 7
        %v1043 = vsub.s32 1, %v1042
        %v1044 = vrot.slane %v936, %v1043
        %v1045 = vlaneseq
        %v1046 = vshrl.u32 %v1045, 7
        %v1047 = vsub.s32 2, %v1046
        %v1048 = vrot.slane %v936, %v1047
        %v1049 = vlaneseq
        %v1050 = vshrl.u32 %v1049, 7
        %v1051 = vsub.s32 3, %v1050
        %v1052 = vrot.slane %v936, %v1051
        %v1161 = vunpack.c.l.b16 %v839
        %v1162 = vunpack.c.h.b16 %v839
        %v1163 = vunpack.c.l.b16 %v840
        %v1164 = vunpack.c.h.b16 %v840
        %v1165 = vunpack.c.l.b16 %v841
        %v1166 = vunpack.c.h.b16 %v841
        %v1167 = vunpack.c.l.b16 %v842
        %v1168 = vunpack.c.h.b16 %v842
        %v1169 = vunpack.c.l.b16 %v843
        %v1170 = vunpack.c.h.b16 %v843
        %v1171 = vunpack.c.l.b16 %v844
        %v1172 = vunpack.c.h.b16 %v844
        %v1173 = vunpack.c.l.b16 %v845
        %v1174 = vunpack.c.h.b16 %v845
        %v1175 = vunpack.c.l.b16 %v846
        %v1176 = vunpack.c.h.b16 %v846
        %v1177 = vunpack.c.l.b16 %v847
        %v1178 = vunpack.c.h.b16 %v847
        %v1179 = vunpack.c.l.b16 %v848
        %v1180 = vunpack.c.h.b16 %v848
        %v1181 = vunpack.c.l.b16 %v849
        %v1182 = vunpack.c.h.b16 %v849
        %v1183 = vunpack.c.l.b16 %v850
        %v1184 = vunpack.c.h.b16 %v850
        %v1185 = vunpack.c.l.b16 %v851
        %v1186 = vunpack.c.h.b16 %v851
        %v1187 = vunpack.c.l.b16 %v852
        %v1188 = vunpack.c.h.b16 %v852
        %v1189 = vunpack.c.l.b16 %v853
        %v1190 = vunpack.c.h.b16 %v853
        %v1191 = vunpack.c.l.b16 %v854
        %v1192 = vunpack.c.h.b16 %v854
        %v1193 = vunpack.c.l.b16 %v855
        %v1194 = vunpack.c.h.b16 %v855
        %v1195 = vunpack.c.l.b16 %v856
        %v1196 = vunpack.c.h.b16 %v856
        %v1197 = vunpack.c.l.b16 %v857
        %v1198 = vunpack.c.h.b16 %v857
        %v1199 = vunpack.c.l.b16 %v858
        %v1200 = vunpack.c.h.b16 %v858
        %v1201 = vunpack.c.l.b16 %v859
        %v1202 = vunpack.c.h.b16 %v859
        %v1203 = vunpack.c.l.b16 %v860
        %v1204 = vunpack.c.h.b16 %v860
        %v1205 = vunpack.c.l.b16 %v861
        %v1206 = vunpack.c.h.b16 %v861
        %v1207 = vunpack.c.l.b16 %v862
        %v1208 = vunpack.c.h.b16 %v862
        %v1209 = vunpack.c.l.b16 %v863
        %v1210 = vunpack.c.h.b16 %v863
        %v1211 = vunpack.c.l.b16 %v864
        %v1212 = vunpack.c.h.b16 %v864
        %v1213 = vunpack.c.l.b16 %v865
        %v1214 = vunpack.c.h.b16 %v865
        %v1215 = vunpack.c.l.b16 %v866
        %v1216 = vunpack.c.h.b16 %v866
        %v1217 = vunpack.c.l.b16 %v867
        %v1218 = vunpack.c.h.b16 %v867
        %v1219 = vunpack.c.l.b16 %v868
        %v1220 = vunpack.c.h.b16 %v868
        %v1221 = vunpack.c.l.b16 %v869
        %v1222 = vunpack.c.h.b16 %v869
        %v1223 = vunpack.c.l.b16 %v870
        %v1224 = vunpack.c.h.b16 %v870
        %v1225 = vunpack.c.l.b16 %v871
        %v1226 = vunpack.c.h.b16 %v871
        %v1227 = vunpack.c.l.b16 %v872
        %v1228 = vunpack.c.h.b16 %v872
        %v1229 = vunpack.c.l.b16 %v873
        %v1230 = vunpack.c.h.b16 %v873
        %v1231 = vunpack.c.l.b16 %v874
        %v1232 = vunpack.c.h.b16 %v874
        %v1233 = vunpack.c.l.b16 %v875
        %v1234 = vunpack.c.h.b16 %v875
        %v1235 = vunpack.c.l.b16 %v876
        %v1236 = vunpack.c.h.b16 %v876
        %v1237 = vunpack.c.l.b16 %v877
        %v1238 = vunpack.c.h.b16 %v877
        %v1239 = vunpack.c.l.b16 %v878
        %v1240 = vunpack.c.h.b16 %v878
        %v1241 = vunpack.c.l.b16 %v879
        %v1242 = vunpack.c.h.b16 %v879
        %v1243 = vunpack.c.l.b16 %v880
        %v1244 = vunpack.c.h.b16 %v880
        %v1245 = vunpack.c.l.b16 %v881
        %v1246 = vunpack.c.h.b16 %v881
        %v1247 = vunpack.c.l.b16 %v882
        %v1248 = vunpack.c.h.b16 %v882
        %v1249 = vunpack.c.l.b16 %v883
        %v1250 = vunpack.c.h.b16 %v883
        %v1251 = vunpack.c.l.b16 %v884
        %v1252 = vunpack.c.h.b16 %v884
        %v1253 = vunpack.c.l.b16 %v885
        %v1254 = vunpack.c.h.b16 %v885
        %v1255 = vunpack.c.l.b16 %v886
        %v1256 = vunpack.c.h.b16 %v886
        %v1257 = vunpack.c.l.b16 %v887
        %v1258 = vunpack.c.h.b16 %v887
        %v1259 = vunpack.c.l.b16 %v888
        %v1260 = vunpack.c.h.b16 %v888
        %v1261 = vunpack.c.l.b16 %v889
        %v1262 = vunpack.c.h.b16 %v889
        %v1263 = vunpack.c.l.b16 %v890
        %v1264 = vunpack.c.h.b16 %v890
        %v1265 = vunpack.c.l.b16 %v891
        %v1266 = vunpack.c.h.b16 %v891
        %v1267 = vunpack.c.l.b16 %v892
        %v1268 = vunpack.c.h.b16 %v892
        %v1269 = vunpack.c.l.b16 %v893
        %v1270 = vunpack.c.h.b16 %v893
        %v1271 = vunpack.c.l.b16 %v894
        %v1272 = vunpack.c.h.b16 %v894
        %v1273 = vunpack.c.l.b16 %v895
        %v1274 = vunpack.c.h.b16 %v895
        %v1275 = vunpack.c.l.b16 %v896
        %v1276 = vunpack.c.h.b16 %v896
        %v1277 = vunpack.c.l.b16 %v897
        %v1278 = vunpack.c.h.b16 %v897
        %v1279 = vunpack.c.l.b16 %v898
        %v1280 = vunpack.c.h.b16 %v898
        %v1281 = vunpack.c.l.b16 %v899
        %v1282 = vunpack.c.h.b16 %v899
        %v1283 = vunpack.c.l.b16 %v900
        %v1284 = vunpack.c.h.b16 %v900
        %v1285 = vunpack.c.l.b16 %v901
        %v1286 = vunpack.c.h.b16 %v901
        %v1287 = vunpack.c.l.b16 %v902
        %v1288 = vunpack.c.h.b16 %v902
        %v1289 = vunpack.c.l.b16 %v903
        %v1290 = vunpack.c.h.b16 %v903
        %v1291 = vunpack.c.l.b16 %v904
        %v1292 = vunpack.c.h.b16 %v904
        %v1293 = vunpack.c.l.b16 %v905
        %v1294 = vunpack.c.h.b16 %v905
        %v1295 = vunpack.c.l.b16 %v906
        %v1296 = vunpack.c.h.b16 %v906
        %v1297 = vunpack.c.l.b16 %v907
        %v1298 = vunpack.c.h.b16 %v907
        %v1299 = vunpack.c.l.b16 %v908
        %v1300 = vunpack.c.h.b16 %v908
        %v1301 = vunpack.c.l.b16 %v909
        %v1302 = vunpack.c.h.b16 %v909
        %v1303 = vunpack.c.l.b16 %v910
        %v1304 = vunpack.c.h.b16 %v910
        %v1305 = vunpack.c.l.b16 %v911
        %v1306 = vunpack.c.h.b16 %v911
        %v1307 = vunpack.c.l.b16 %v912
        %v1308 = vunpack.c.h.b16 %v912
        %v1309 = vunpack.c.l.b16 %v913
        %v1310 = vunpack.c.h.b16 %v913
        %v1311 = vunpack.c.l.b16 %v914
        %v1312 = vunpack.c.h.b16 %v914
        %v1313 = vunpack.c.l.b16 %v915
        %v1314 = vunpack.c.h.b16 %v915
        %v1315 = vunpack.c.l.b16 %v916
        %v1316 = vunpack.c.h.b16 %v916
        %v1317 = vunpack.c.l.b16 %v917
        %v1318 = vunpack.c.h.b16 %v917
        %v1319 = vunpack.c.l.b16 %v918
        %v1320 = vunpack.c.h.b16 %v918
        %v1321 = vunpack.c.l.b16 %v919
        %v1322 = vunpack.c.h.b16 %v919
        %v1323 = vunpack.c.l.b16 %v920
        %v1324 = vunpack.c.h.b16 %v920
        %v1325 = vunpack.c.l.b16 %v921
        %v1326 = vunpack.c.h.b16 %v921
        %v1327 = vunpack.c.l.b16 %v922
        %v1328 = vunpack.c.h.b16 %v922
        %v1329 = vunpack.c.l.b16 %v923
        %v1330 = vunpack.c.h.b16 %v923
        %v1331 = vunpack.c.l.b16 %v924
        %v1332 = vunpack.c.h.b16 %v924
        %v1333 = vunpack.c.l.b16 %v925
        %v1334 = vunpack.c.h.b16 %v925
        %v1335 = vunpack.c.l.b16 %v926
        %v1336 = vunpack.c.h.b16 %v926
        %v1337 = vunpack.c.l.b16 %v927
        %v1338 = vunpack.c.h.b16 %v927
        %v1339 = vunpack.c.l.b16 %v928
        %v1340 = vunpack.c.h.b16 %v928
        %v1341 = vunpack.c.l.b16 %v929
        %v1342 = vunpack.c.h.b16 %v929
        %v1343 = vunpack.c.l.b16 %v930
        %v1344 = vunpack.c.h.b16 %v930
        %v1345 = vunpack.c.l.b16 %v931
        %v1346 = vunpack.c.h.b16 %v931
        %v1347 = vunpack.c.l.b16 %v932
        %v1348 = vunpack.c.h.b16 %v932
        %v1349 = vunpack.c.l.b16 %v933
        %v1350 = vunpack.c.h.b16 %v933
        %v1351 = vunpack.c.l.b16 %v934
        %v1352 = vunpack.c.h.b16 %v934
        %v1353 = vpack.c.b16 %v1173, %v1161
        %v1354 = vpack.c.b16 %v1174, %v1162
        %v1355 = vpack.c.b16 %v1175, %v1163
        %v1356 = vpack.c.b16 %v1176, %v1164
        %v1357 = vpack.c.b16 %v1177, %v1165
        %v1358 = vpack.c.b16 %v1178, %v1166
        %v1359 = vpack.c.b16 %v1179, %v1167
        %v1360 = vpack.c.b16 %v1180, %v1168
        %v1361 = vpack.c.b16 %v1181, %v1169
        %v1362 = vpack.c.b16 %v1182, %v1170
        %v1363 = vpack.c.b16 %v1183, %v1171
        %v1364 = vpack.c.b16 %v1184, %v1172
        %v1365 = vpack.c.b16 %v1197, %v1185
        %v1366 = vpack.c.b16 %v1198, %v1186
        %v1367 = vpack.c.b16 %v1199, %v1187
        %v1368 = vpack.c.b16 %v1200, %v1188
        %v1369 = vpack.c.b16 %v1201, %v1189
        %v1370 = vpack.c.b16 %v1202, %v1190
        %v1371 = vpack.c.b16 %v1203, %v1191
        %v1372 = vpack.c.b16 %v1204, %v1192
        %v1373 = vpack.c.b16 %v1205, %v1193
        %v1374 = vpack.c.b16 %v1206, %v1194
        %v1375 = vpack.c.b16 %v1207, %v1195
        %v1376 = vpack.c.b16 %v1208, %v1196
        %v1377 = vpack.c.b16 %v1221, %v1209
        %v1378 = vpack.c.b16 %v1222, %v1210
        %v1379 = vpack.c.b16 %v1223, %v1211
        %v1380 = vpack.c.b16 %v1224, %v1212
        %v1381 = vpack.c.b16 %v1225, %v1213
        %v1382 = vpack.c.b16 %v1226, %v1214
        %v1383 = vpack.c.b16 %v1227, %v1215
        %v1384 = vpack.c.b16 %v1228, %v1216
        %v1385 = vpack.c.b16 %v1229, %v1217
        %v1386 = vpack.c.b16 %v1230, %v1218
        %v1387 = vpack.c.b16 %v1231, %v1219
        %v1388 = vpack.c.b16 %v1232, %v1220
        %v1389 = vpack.c.b16 %v1245, %v1233
        %v1390 = vpack.c.b16 %v1246, %v1234
        %v1391 = vpack.c.b16 %v1247, %v1235
        %v1392 = vpack.c.b16 %v1248, %v1236
        %v1393 = vpack.c.b16 %v1249, %v1237
        %v1394 = vpack.c.b16 %v1250, %v1238
        %v1395 = vpack.c.b16 %v1251, %v1239
        %v1396 = vpack.c.b16 %v1252, %v1240
        %v1397 = vpack.c.b16 %v1253, %v1241
        %v1398 = vpack.c.b16 %v1254, %v1242
        %v1399 = vpack.c.b16 %v1255, %v1243
        %v1400 = vpack.c.b16 %v1256, %v1244
        %v1401 = vpack.c.b16 %v1269, %v1257
        %v1402 = vpack.c.b16 %v1270, %v1258
        %v1403 = vpack.c.b16 %v1271, %v1259
        %v1404 = vpack.c.b16 %v1272, %v1260
        %v1405 = vpack.c.b16 %v1273, %v1261
        %v1406 = vpack.c.b16 %v1274, %v1262
        %v1407 = vpack.c.b16 %v1275, %v1263
        %v1408 = vpack.c.b16 %v1276, %v1264
        %v1409 = vpack.c.b16 %v1277, %v1265
        %v1410 = vpack.c.b16 %v1278, %v1266
        %v1411 = vpack.c.b16 %v1279, %v1267
        %v1412 = vpack.c.b16 %v1280, %v1268
        %v1413 = vpack.c.b16 %v1293, %v1281
        %v1414 = vpack.c.b16 %v1294, %v1282
        %v1415 = vpack.c.b16 %v1295, %v1283
        %v1416 = vpack.c.b16 %v1296, %v1284
        %v1417 = vpack.c.b16 %v1297, %v1285
        %v1418 = vpack.c.b16 %v1298, %v1286
        %v1419 = vpack.c.b16 %v1299, %v1287
        %v1420 = vpack.c.b16 %v1300, %v1288
        %v1421 = vpack.c.b16 %v1301, %v1289
        %v1422 = vpack.c.b16 %v1302, %v1290
        %v1423 = vpack.c.b16 %v1303, %v1291
        %v1424 = vpack.c.b16 %v1304, %v1292
        %v1425 = vpack.c.b16 %v1317, %v1305
        %v1426 = vpack.c.b16 %v1318, %v1306
        %v1427 = vpack.c.b16 %v1319, %v1307
        %v1428 = vpack.c.b16 %v1320, %v1308
        %v1429 = vpack.c.b16 %v1321, %v1309
        %v1430 = vpack.c.b16 %v1322, %v1310
        %v1431 = vpack.c.b16 %v1323, %v1311
        %v1432 = vpack.c.b16 %v1324, %v1312
        %v1433 = vpack.c.b16 %v1325, %v1313
        %v1434 = vpack.c.b16 %v1326, %v1314
        %v1435 = vpack.c.b16 %v1327, %v1315
        %v1436 = vpack.c.b16 %v1328, %v1316
        %v1437 = vpack.c.b16 %v1341, %v1329
        %v1438 = vpack.c.b16 %v1342, %v1330
        %v1439 = vpack.c.b16 %v1343, %v1331
        %v1440 = vpack.c.b16 %v1344, %v1332
        %v1441 = vpack.c.b16 %v1345, %v1333
        %v1442 = vpack.c.b16 %v1346, %v1334
        %v1443 = vpack.c.b16 %v1347, %v1335
        %v1444 = vpack.c.b16 %v1348, %v1336
        %v1445 = vpack.c.b16 %v1349, %v1337
        %v1446 = vpack.c.b16 %v1350, %v1338
        %v1447 = vpack.c.b16 %v1351, %v1339
        %v1448 = vpack.c.b16 %v1352, %v1340
        %1545 = vmatprep.subr.bf16.mxu0 %v1354
        %1546 = vmatpush1.bf16.msra.mxu0 %v1353
        %1547 = vmatprep.subr.bf16.mxu0 %v1366
        %1548 = vmatpush1.bf16.msra.mxu0 %v1365
        %1549 = vmatprep.subr.bf16.mxu0 %v1378
        %1550 = vmatpush1.bf16.msra.mxu0 %v1377
        %1551 = vmatprep.subr.bf16.mxu0 %v1390
        %1552 = vmatpush1.bf16.msra.mxu0 %v1389
        %1553 = vmatprep.subr.bf16.mxu0 %v1402
        %1554 = vmatpush1.bf16.msra.mxu0 %v1401
        %1555 = vmatprep.subr.bf16.mxu0 %v1414
        %1556 = vmatpush1.bf16.msra.mxu0 %v1413
        %1557 = vmatprep.subr.bf16.mxu0 %v1426
        %1558 = vmatpush1.bf16.msra.mxu0 %v1425
        %1559 = vmatprep.subr.bf16.mxu0 %v1438
        %1560 = vmatpush1.bf16.msra.mxu0 %v1437
        %1561 = vmatprep.subr.bf16.mxu0 0
        %1562 = vmatpush1.bf16.msra.mxu0 0
        %1563 = vmatprep.subr.bf16.mxu0 0
        %1564 = vmatpush1.bf16.msra.mxu0 0
        %1565 = vmatprep.subr.bf16.mxu0 0
        %1566 = vmatpush1.bf16.msra.mxu0 0
        %1567 = vmatprep.subr.bf16.mxu0 0
        %1568 = vmatpush1.bf16.msra.mxu0 0
        %1569 = vmatprep.subr.bf16.mxu0 0
        %1570 = vmatpush1.bf16.msra.mxu0 0
        %1571 = vmatprep.subr.bf16.mxu0 0
        %1572 = vmatpush1.bf16.msra.mxu0 0
        %1573 = vmatprep.subr.bf16.mxu0 0
        %1574 = vmatpush1.bf16.msra.mxu0 0
        %1575 = vmatprep.subr.bf16.mxu0 0
        %1576 = vmatpush1.bf16.msra.mxu0 0
        %1577 = vmatprep.mubr.bf16.mxu0 0
        %1578 = vmatmul.mubr.bf16.gmra.mrb[0].mxu0 %v1002
        %v1579 = vpop.f32.mrb[0].mxu0
        %v1580 = vadd.f32 %v1008, %v1579
        %v1581 = vpop.f32.mrb[0].mxu0
        %v1582 = vadd.f32 %v1012, %v1581
        %v1583 = vpop.f32.mrb[0].mxu0
        %v1584 = vadd.f32 %v1008, %v1583
        %v1585 = vpop.f32.mrb[0].mxu0
        %v1586 = vadd.f32 %v1012, %v1585
        %1587 = vdwg.mxu0
        %1588 = vmatprep.subr.bf16.mxu0 %v1356
        %1589 = vmatpush1.bf16.msra.mxu0 %v1355
        %1590 = vmatprep.subr.bf16.mxu0 %v1368
        %1591 = vmatpush1.bf16.msra.mxu0 %v1367
        %1592 = vmatprep.subr.bf16.mxu0 %v1380
        %1593 = vmatpush1.bf16.msra.mxu0 %v1379
        %1594 = vmatprep.subr.bf16.mxu0 %v1392
        %1595 = vmatpush1.bf16.msra.mxu0 %v1391
        %1596 = vmatprep.subr.bf16.mxu0 %v1404
        %1597 = vmatpush1.bf16.msra.mxu0 %v1403
        %1598 = vmatprep.subr.bf16.mxu0 %v1416
        %1599 = vmatpush1.bf16.msra.mxu0 %v1415
        %1600 = vmatprep.subr.bf16.mxu0 %v1428
        %1601 = vmatpush1.bf16.msra.mxu0 %v1427
        %1602 = vmatprep.subr.bf16.mxu0 %v1440
        %1603 = vmatpush1.bf16.msra.mxu0 %v1439
        %1604 = vmatprep.subr.bf16.mxu0 0
        %1605 = vmatpush1.bf16.msra.mxu0 0
        %1606 = vmatprep.subr.bf16.mxu0 0
        %1607 = vmatpush1.bf16.msra.mxu0 0
        %1608 = vmatprep.subr.bf16.mxu0 0
        %1609 = vmatpush1.bf16.msra.mxu0 0
        %1610 = vmatprep.subr.bf16.mxu0 0
        %1611 = vmatpush1.bf16.msra.mxu0 0
        %1612 = vmatprep.subr.bf16.mxu0 0
        %1613 = vmatpush1.bf16.msra.mxu0 0
        %1614 = vmatprep.subr.bf16.mxu0 0
        %1615 = vmatpush1.bf16.msra.mxu0 0
        %1616 = vmatprep.subr.bf16.mxu0 0
        %1617 = vmatpush1.bf16.msra.mxu0 0
        %1618 = vmatprep.subr.bf16.mxu0 0
        %1619 = vmatpush1.bf16.msra.mxu0 0
        %1620 = vmatprep.mubr.bf16.mxu0 0
        %1621 = vmatmul.mubr.bf16.gmra.mrb[0].mxu0 %v1002
        %v1622 = vpop.f32.mrb[0].mxu0
        %v1623 = vadd.f32 %v1016, %v1622
        %v1624 = vpop.f32.mrb[0].mxu0
        %v1625 = vadd.f32 %v1020, %v1624
        %v1626 = vpop.f32.mrb[0].mxu0
        %v1627 = vadd.f32 %v1016, %v1626
        %v1628 = vpop.f32.mrb[0].mxu0
        %v1629 = vadd.f32 %v1020, %v1628
        %1630 = vdwg.mxu0
        %1631 = vmatprep.subr.bf16.mxu0 %v1358
        %1632 = vmatpush1.bf16.msra.mxu0 %v1357
        %1633 = vmatprep.subr.bf16.mxu0 %v1370
        %1634 = vmatpush1.bf16.msra.mxu0 %v1369
        %1635 = vmatprep.subr.bf16.mxu0 %v1382
        %1636 = vmatpush1.bf16.msra.mxu0 %v1381
        %1637 = vmatprep.subr.bf16.mxu0 %v1394
        %1638 = vmatpush1.bf16.msra.mxu0 %v1393
        %1639 = vmatprep.subr.bf16.mxu0 %v1406
        %1640 = vmatpush1.bf16.msra.mxu0 %v1405
        %1641 = vmatprep.subr.bf16.mxu0 %v1418
        %1642 = vmatpush1.bf16.msra.mxu0 %v1417
        %1643 = vmatprep.subr.bf16.mxu0 %v1430
        %1644 = vmatpush1.bf16.msra.mxu0 %v1429
        %1645 = vmatprep.subr.bf16.mxu0 %v1442
        %1646 = vmatpush1.bf16.msra.mxu0 %v1441
        %1647 = vmatprep.subr.bf16.mxu0 0
        %1648 = vmatpush1.bf16.msra.mxu0 0
        %1649 = vmatprep.subr.bf16.mxu0 0
        %1650 = vmatpush1.bf16.msra.mxu0 0
        %1651 = vmatprep.subr.bf16.mxu0 0
        %1652 = vmatpush1.bf16.msra.mxu0 0
        %1653 = vmatprep.subr.bf16.mxu0 0
        %1654 = vmatpush1.bf16.msra.mxu0 0
        %1655 = vmatprep.subr.bf16.mxu0 0
        %1656 = vmatpush1.bf16.msra.mxu0 0
        %1657 = vmatprep.subr.bf16.mxu0 0
        %1658 = vmatpush1.bf16.msra.mxu0 0
        %1659 = vmatprep.subr.bf16.mxu0 0
        %1660 = vmatpush1.bf16.msra.mxu0 0
        %1661 = vmatprep.subr.bf16.mxu0 0
        %1662 = vmatpush1.bf16.msra.mxu0 0
        %1663 = vmatprep.mubr.bf16.mxu0 0
        %1664 = vmatmul.mubr.bf16.gmra.mrb[0].mxu0 %v1002
        %v1665 = vpop.f32.mrb[0].mxu0
        %v1666 = vadd.f32 %v1024, %v1665
        %v1667 = vpop.f32.mrb[0].mxu0
        %v1668 = vadd.f32 %v1028, %v1667
        %v1669 = vpop.f32.mrb[0].mxu0
        %v1670 = vadd.f32 %v1024, %v1669
        %v1671 = vpop.f32.mrb[0].mxu0
        %v1672 = vadd.f32 %v1028, %v1671
        %1673 = vdwg.mxu0
        %1674 = vmatprep.subr.bf16.mxu0 %v1360
        %1675 = vmatpush1.bf16.msra.mxu0 %v1359
        %1676 = vmatprep.subr.bf16.mxu0 %v1372
        %1677 = vmatpush1.bf16.msra.mxu0 %v1371
        %1678 = vmatprep.subr.bf16.mxu0 %v1384
        %1679 = vmatpush1.bf16.msra.mxu0 %v1383
        %1680 = vmatprep.subr.bf16.mxu0 %v1396
        %1681 = vmatpush1.bf16.msra.mxu0 %v1395
        %1682 = vmatprep.subr.bf16.mxu0 %v1408
        %1683 = vmatpush1.bf16.msra.mxu0 %v1407
        %1684 = vmatprep.subr.bf16.mxu0 %v1420
        %1685 = vmatpush1.bf16.msra.mxu0 %v1419
        %1686 = vmatprep.subr.bf16.mxu0 %v1432
        %1687 = vmatpush1.bf16.msra.mxu0 %v1431
        %1688 = vmatprep.subr.bf16.mxu0 %v1444
        %1689 = vmatpush1.bf16.msra.mxu0 %v1443
        %1690 = vmatprep.subr.bf16.mxu0 0
        %1691 = vmatpush1.bf16.msra.mxu0 0
        %1692 = vmatprep.subr.bf16.mxu0 0
        %1693 = vmatpush1.bf16.msra.mxu0 0
        %1694 = vmatprep.subr.bf16.mxu0 0
        %1695 = vmatpush1.bf16.msra.mxu0 0
        %1696 = vmatprep.subr.bf16.mxu0 0
        %1697 = vmatpush1.bf16.msra.mxu0 0
        %1698 = vmatprep.subr.bf16.mxu0 0
        %1699 = vmatpush1.bf16.msra.mxu0 0
        %1700 = vmatprep.subr.bf16.mxu0 0
        %1701 = vmatpush1.bf16.msra.mxu0 0
        %1702 = vmatprep.subr.bf16.mxu0 0
        %1703 = vmatpush1.bf16.msra.mxu0 0
        %1704 = vmatprep.subr.bf16.mxu0 0
        %1705 = vmatpush1.bf16.msra.mxu0 0
        %1706 = vmatprep.mubr.bf16.mxu0 0
        %1707 = vmatmul.mubr.bf16.gmra.mrb[0].mxu0 %v1002
        %v1708 = vpop.f32.mrb[0].mxu0
        %v1709 = vadd.f32 %v1032, %v1708
        %v1710 = vpop.f32.mrb[0].mxu0
        %v1711 = vadd.f32 %v1036, %v1710
        %v1712 = vpop.f32.mrb[0].mxu0
        %v1713 = vadd.f32 %v1032, %v1712
        %v1714 = vpop.f32.mrb[0].mxu0
        %v1715 = vadd.f32 %v1036, %v1714
        %1716 = vdwg.mxu0
        %1717 = vmatprep.subr.bf16.mxu0 %v1362
        %1718 = vmatpush1.bf16.msra.mxu0 %v1361
        %1719 = vmatprep.subr.bf16.mxu0 %v1374
        %1720 = vmatpush1.bf16.msra.mxu0 %v1373
        %1721 = vmatprep.subr.bf16.mxu0 %v1386
        %1722 = vmatpush1.bf16.msra.mxu0 %v1385
        %1723 = vmatprep.subr.bf16.mxu0 %v1398
        %1724 = vmatpush1.bf16.msra.mxu0 %v1397
        %1725 = vmatprep.subr.bf16.mxu0 %v1410
        %1726 = vmatpush1.bf16.msra.mxu0 %v1409
        %1727 = vmatprep.subr.bf16.mxu0 %v1422
        %1728 = vmatpush1.bf16.msra.mxu0 %v1421
        %1729 = vmatprep.subr.bf16.mxu0 %v1434
        %1730 = vmatpush1.bf16.msra.mxu0 %v1433
        %1731 = vmatprep.subr.bf16.mxu0 %v1446
        %1732 = vmatpush1.bf16.msra.mxu0 %v1445
        %1733 = vmatprep.subr.bf16.mxu0 0
        %1734 = vmatpush1.bf16.msra.mxu0 0
        %1735 = vmatprep.subr.bf16.mxu0 0
        %1736 = vmatpush1.bf16.msra.mxu0 0
        %1737 = vmatprep.subr.bf16.mxu0 0
        %1738 = vmatpush1.bf16.msra.mxu0 0
        %1739 = vmatprep.subr.bf16.mxu0 0
        %1740 = vmatpush1.bf16.msra.mxu0 0
        %1741 = vmatprep.subr.bf16.mxu0 0
        %1742 = vmatpush1.bf16.msra.mxu0 0
        %1743 = vmatprep.subr.bf16.mxu0 0
        %1744 = vmatpush1.bf16.msra.mxu0 0
        %1745 = vmatprep.subr.bf16.mxu0 0
        %1746 = vmatpush1.bf16.msra.mxu0 0
        %1747 = vmatprep.subr.bf16.mxu0 0
        %1748 = vmatpush1.bf16.msra.mxu0 0
        %1749 = vmatprep.mubr.bf16.mxu0 0
        %1750 = vmatmul.mubr.bf16.gmra.mrb[0].mxu0 %v1002
        %v1751 = vpop.f32.mrb[0].mxu0
        %v1752 = vadd.f32 %v1040, %v1751
        %v1753 = vpop.f32.mrb[0].mxu0
        %v1754 = vadd.f32 %v1044, %v1753
        %v1755 = vpop.f32.mrb[0].mxu0
        %v1756 = vadd.f32 %v1040, %v1755
        %v1757 = vpop.f32.mrb[0].mxu0
        %v1758 = vadd.f32 %v1044, %v1757
        %1759 = vdwg.mxu0
        %1760 = vmatprep.subr.bf16.mxu0 %v1364
        %1761 = vmatpush1.bf16.msra.mxu0 %v1363
        %1762 = vmatprep.subr.bf16.mxu0 %v1376
        %1763 = vmatpush1.bf16.msra.mxu0 %v1375
        %1764 = vmatprep.subr.bf16.mxu0 %v1388
        %1765 = vmatpush1.bf16.msra.mxu0 %v1387
        %1766 = vmatprep.subr.bf16.mxu0 %v1400
        %1767 = vmatpush1.bf16.msra.mxu0 %v1399
        %1768 = vmatprep.subr.bf16.mxu0 %v1412
        %1769 = vmatpush1.bf16.msra.mxu0 %v1411
        %1770 = vmatprep.subr.bf16.mxu0 %v1424
        %1771 = vmatpush1.bf16.msra.mxu0 %v1423
        %1772 = vmatprep.subr.bf16.mxu0 %v1436
        %1773 = vmatpush1.bf16.msra.mxu0 %v1435
        %1774 = vmatprep.subr.bf16.mxu0 %v1448
        %1775 = vmatpush1.bf16.msra.mxu0 %v1447
        %1776 = vmatprep.subr.bf16.mxu0 0
        %1777 = vmatpush1.bf16.msra.mxu0 0
        %1778 = vmatprep.subr.bf16.mxu0 0
        %1779 = vmatpush1.bf16.msra.mxu0 0
        %1780 = vmatprep.subr.bf16.mxu0 0
        %1781 = vmatpush1.bf16.msra.mxu0 0
        %1782 = vmatprep.subr.bf16.mxu0 0
        %1783 = vmatpush1.bf16.msra.mxu0 0
        %1784 = vmatprep.subr.bf16.mxu0 0
        %1785 = vmatpush1.bf16.msra.mxu0 0
        %1786 = vmatprep.subr.bf16.mxu0 0
        %1787 = vmatpush1.bf16.msra.mxu0 0
        %1788 = vmatprep.subr.bf16.mxu0 0
        %1789 = vmatpush1.bf16.msra.mxu0 0
        %1790 = vmatprep.subr.bf16.mxu0 0
        %1791 = vmatpush1.bf16.msra.mxu0 0
        %1792 = vmatprep.mubr.bf16.mxu0 0
        %1793 = vmatmul.mubr.bf16.gmra.mrb[0].mxu0 %v1002
        %v1794 = vpop.f32.mrb[0].mxu0
        %v1795 = vadd.f32 %v1048, %v1794
        %v1796 = vpop.f32.mrb[0].mxu0
        %v1797 = vadd.f32 %v1052, %v1796
        %v1798 = vpop.f32.mrb[0].mxu0
        %v1799 = vadd.f32 %v1048, %v1798
        %v1800 = vpop.f32.mrb[0].mxu0
        %v1801 = vadd.f32 %v1052, %v1800
        %1802 = vdwg.mxu0
        %v1803 = vpack.c.bf16 %v1584, %v1580
        %v1804 = vpack.c.bf16 %v1586, %v1582
        %v1805 = vpack.c.bf16 %v1627, %v1623
        %v1806 = vpack.c.bf16 %v1629, %v1625
        %v1807 = vpack.c.bf16 %v1670, %v1666
        %v1808 = vpack.c.bf16 %v1672, %v1668
        %v1809 = vpack.c.bf16 %v1713, %v1709
        %v1810 = vpack.c.bf16 %v1715, %v1711
        %v1811 = vpack.c.bf16 %v1756, %v1752
        %v1812 = vpack.c.bf16 %v1758, %v1754
        %v1813 = vpack.c.bf16 %v1799, %v1795
        %v1814 = vpack.c.bf16 %v1801, %v1797
        %1815 = vmatprep.subr.bf16.mxu0 0
        %1816 = vmatpush1.bf16.xpose.msra.mxu0 %v1807
        %1817 = vmatprep.subr.bf16.mxu0 0
        %1818 = vmatpush1.bf16.xpose.msra.mxu0 0
        %1819 = vmatprep.subr.bf16.mxu0 0
        %1820 = vmatpush1.bf16.xpose.msra.mxu0 0
        %1821 = vmatprep.subr.bf16.mxu0 0
        %1822 = vmatpush1.bf16.xpose.msra.mxu0 0
        %1823 = vmatprep.subr.bf16.mxu0 0
        %1824 = vmatpush1.bf16.xpose.msra.mxu0 0
        %1825 = vmatprep.subr.bf16.mxu0 0
        %1826 = vmatpush1.bf16.xpose.msra.mxu0 0
        %1827 = vmatprep.subr.bf16.mxu0 0
        %1828 = vmatpush1.bf16.xpose.msra.mxu0 0
        %1829 = vmatprep.subr.bf16.mxu0 0
        %1830 = vmatpush1.bf16.xpose.msra.mxu0 0
        %1831 = vmatprep.subr.bf16.mxu0 0
        %1832 = vmatpush1.bf16.xpose.msra.mxu0 0
        %1833 = vmatprep.subr.bf16.mxu0 0
        %1834 = vmatpush1.bf16.xpose.msra.mxu0 0
        %1835 = vmatprep.subr.bf16.mxu0 0
        %1836 = vmatpush1.bf16.xpose.msra.mxu0 0
        %1837 = vmatprep.subr.bf16.mxu0 0
        %1838 = vmatpush1.bf16.xpose.msra.mxu0 0
        %1839 = vmatprep.subr.bf16.mxu0 0
        %1840 = vmatpush1.bf16.xpose.msra.mxu0 0
        %1841 = vmatprep.subr.bf16.mxu0 0
        %1842 = vmatpush1.bf16.xpose.msra.mxu0 0
        %1843 = vmatprep.subr.bf16.mxu0 0
        %1844 = vmatpush1.bf16.xpose.msra.mxu0 0
        %1845 = vmatprep.subr.bf16.mxu0 0
        %1846 = vmatpush1.bf16.xpose.msra.mxu0 0
        %1847 = vmatprep.mubr.bf16.mxu0 0
        %1848 = vmatmul.mubr.bf16.gmra.mrb[0].mxu0 %v1803
        %v1849 = vpop.f32.mrb[0].mxu0
        %v1850 = vadd.f32 0.0, %v1849
        %v1851 = vpop.f32.mrb[0].mxu0
        %v1852 = vpop.f32.mrb[0].mxu0
        %v1853 = vadd.f32 0.0, %v1852
        %v1854 = vpop.f32.mrb[0].mxu0
        %1855 = vdwg.mxu0
        %1856 = vmatprep.subr.bf16.mxu0 0
        %1857 = vmatpush1.bf16.xpose.msra.mxu0 %v1808
        %1858 = vmatprep.subr.bf16.mxu0 0
        %1859 = vmatpush1.bf16.xpose.msra.mxu0 0
        %1860 = vmatprep.subr.bf16.mxu0 0
        %1861 = vmatpush1.bf16.xpose.msra.mxu0 0
        %1862 = vmatprep.subr.bf16.mxu0 0
        %1863 = vmatpush1.bf16.xpose.msra.mxu0 0
        %1864 = vmatprep.subr.bf16.mxu0 0
        %1865 = vmatpush1.bf16.xpose.msra.mxu0 0
        %1866 = vmatprep.subr.bf16.mxu0 0
        %1867 = vmatpush1.bf16.xpose.msra.mxu0 0
        %1868 = vmatprep.subr.bf16.mxu0 0
        %1869 = vmatpush1.bf16.xpose.msra.mxu0 0
        %1870 = vmatprep.subr.bf16.mxu0 0
        %1871 = vmatpush1.bf16.xpose.msra.mxu0 0
        %1872 = vmatprep.subr.bf16.mxu0 0
        %1873 = vmatpush1.bf16.xpose.msra.mxu0 0
        %1874 = vmatprep.subr.bf16.mxu0 0
        %1875 = vmatpush1.bf16.xpose.msra.mxu0 0
        %1876 = vmatprep.subr.bf16.mxu0 0
        %1877 = vmatpush1.bf16.xpose.msra.mxu0 0
        %1878 = vmatprep.subr.bf16.mxu0 0
        %1879 = vmatpush1.bf16.xpose.msra.mxu0 0
        %1880 = vmatprep.subr.bf16.mxu0 0
        %1881 = vmatpush1.bf16.xpose.msra.mxu0 0
        %1882 = vmatprep.subr.bf16.mxu0 0
        %1883 = vmatpush1.bf16.xpose.msra.mxu0 0
        %1884 = vmatprep.subr.bf16.mxu0 0
        %1885 = vmatpush1.bf16.xpose.msra.mxu0 0
        %1886 = vmatprep.subr.bf16.mxu0 0
        %1887 = vmatpush1.bf16.xpose.msra.mxu0 0
        %1888 = vmatprep.mubr.bf16.mxu0 0
        %1889 = vmatmul.mubr.bf16.gmra.mrb[0].mxu0 %v1804
        %v1890 = vpop.f32.mrb[0].mxu0
        %v1891 = vadd.f32 0.0, %v1890
        %v1892 = vpop.f32.mrb[0].mxu0
        %v1893 = vpop.f32.mrb[0].mxu0
        %v1894 = vadd.f32 0.0, %v1893
        %v1895 = vpop.f32.mrb[0].mxu0
        %1896 = vdwg.mxu0
        %1897 = vmatprep.subr.bf16.mxu0 0
        %1898 = vmatpush1.bf16.xpose.msra.mxu0 %v1809
        %1899 = vmatprep.subr.bf16.mxu0 0
        %1900 = vmatpush1.bf16.xpose.msra.mxu0 0
        %1901 = vmatprep.subr.bf16.mxu0 0
        %1902 = vmatpush1.bf16.xpose.msra.mxu0 0
        %1903 = vmatprep.subr.bf16.mxu0 0
        %1904 = vmatpush1.bf16.xpose.msra.mxu0 0
        %1905 = vmatprep.subr.bf16.mxu0 0
        %1906 = vmatpush1.bf16.xpose.msra.mxu0 0
        %1907 = vmatprep.subr.bf16.mxu0 0
        %1908 = vmatpush1.bf16.xpose.msra.mxu0 0
        %1909 = vmatprep.subr.bf16.mxu0 0
        %1910 = vmatpush1.bf16.xpose.msra.mxu0 0
        %1911 = vmatprep.subr.bf16.mxu0 0
        %1912 = vmatpush1.bf16.xpose.msra.mxu0 0
        %1913 = vmatprep.subr.bf16.mxu0 0
        %1914 = vmatpush1.bf16.xpose.msra.mxu0 0
        %1915 = vmatprep.subr.bf16.mxu0 0
        %1916 = vmatpush1.bf16.xpose.msra.mxu0 0
        %1917 = vmatprep.subr.bf16.mxu0 0
        %1918 = vmatpush1.bf16.xpose.msra.mxu0 0
        %1919 = vmatprep.subr.bf16.mxu0 0
        %1920 = vmatpush1.bf16.xpose.msra.mxu0 0
        %1921 = vmatprep.subr.bf16.mxu0 0
        %1922 = vmatpush1.bf16.xpose.msra.mxu0 0
        %1923 = vmatprep.subr.bf16.mxu0 0
        %1924 = vmatpush1.bf16.xpose.msra.mxu0 0
        %1925 = vmatprep.subr.bf16.mxu0 0
        %1926 = vmatpush1.bf16.xpose.msra.mxu0 0
        %1927 = vmatprep.subr.bf16.mxu0 0
        %1928 = vmatpush1.bf16.xpose.msra.mxu0 0
        %1929 = vmatprep.mubr.bf16.mxu0 0
        %1930 = vmatmul.mubr.bf16.gmra.mrb[0].mxu0 %v1805
        %v1931 = vpop.f32.mrb[0].mxu0
        %v1932 = vadd.f32 0.0, %v1931
        %v1933 = vpop.f32.mrb[0].mxu0
        %v1934 = vpop.f32.mrb[0].mxu0
        %v1935 = vadd.f32 0.0, %v1934
        %v1936 = vpop.f32.mrb[0].mxu0
        %1937 = vdwg.mxu0
        %1938 = vmatprep.subr.bf16.mxu0 0
        %1939 = vmatpush1.bf16.xpose.msra.mxu0 %v1810
        %1940 = vmatprep.subr.bf16.mxu0 0
        %1941 = vmatpush1.bf16.xpose.msra.mxu0 0
        %1942 = vmatprep.subr.bf16.mxu0 0
        %1943 = vmatpush1.bf16.xpose.msra.mxu0 0
        %1944 = vmatprep.subr.bf16.mxu0 0
        %1945 = vmatpush1.bf16.xpose.msra.mxu0 0
        %1946 = vmatprep.subr.bf16.mxu0 0
        %1947 = vmatpush1.bf16.xpose.msra.mxu0 0
        %1948 = vmatprep.subr.bf16.mxu0 0
        %1949 = vmatpush1.bf16.xpose.msra.mxu0 0
        %1950 = vmatprep.subr.bf16.mxu0 0
        %1951 = vmatpush1.bf16.xpose.msra.mxu0 0
        %1952 = vmatprep.subr.bf16.mxu0 0
        %1953 = vmatpush1.bf16.xpose.msra.mxu0 0
        %1954 = vmatprep.subr.bf16.mxu0 0
        %1955 = vmatpush1.bf16.xpose.msra.mxu0 0
        %1956 = vmatprep.subr.bf16.mxu0 0
        %1957 = vmatpush1.bf16.xpose.msra.mxu0 0
        %1958 = vmatprep.subr.bf16.mxu0 0
        %1959 = vmatpush1.bf16.xpose.msra.mxu0 0
        %1960 = vmatprep.subr.bf16.mxu0 0
        %1961 = vmatpush1.bf16.xpose.msra.mxu0 0
        %1962 = vmatprep.subr.bf16.mxu0 0
        %1963 = vmatpush1.bf16.xpose.msra.mxu0 0
        %1964 = vmatprep.subr.bf16.mxu0 0
        %1965 = vmatpush1.bf16.xpose.msra.mxu0 0
        %1966 = vmatprep.subr.bf16.mxu0 0
        %1967 = vmatpush1.bf16.xpose.msra.mxu0 0
        %1968 = vmatprep.subr.bf16.mxu0 0
        %1969 = vmatpush1.bf16.xpose.msra.mxu0 0
        %1970 = vmatprep.mubr.bf16.mxu0 0
        %1971 = vmatmul.mubr.bf16.gmra.mrb[0].mxu0 %v1806
        %v1972 = vpop.f32.mrb[0].mxu0
        %v1973 = vadd.f32 0.0, %v1972
        %v1974 = vpop.f32.mrb[0].mxu0
        %v1975 = vpop.f32.mrb[0].mxu0
        %v1976 = vadd.f32 0.0, %v1975
        %v1977 = vpop.f32.mrb[0].mxu0
        %1978 = vdwg.mxu0
        %vm1979 = vcmask 72704
        %v1980 = vsel %vm1979, %v1850, -inf
        %1981 = vmax.xlane.f32.xlu0 %v1980
        %v1982 = vpop.xlane.xlu0 %1981
        %vm1983 = vcmask 65536
        %v1984 = vsel %vm1983, %v1853, -inf
        %1985 = vmax.xlane.f32.xlu0 %v1984
        %v1986 = vpop.xlane.xlu0 %1985
        %v1987 = vsel %vm1979, %v1891, -inf
        %1988 = vmax.xlane.f32.xlu0 %v1987
        %v1989 = vpop.xlane.xlu0 %1988
        %v1990 = vsel %vm1983, %v1894, -inf
        %1991 = vmax.xlane.f32.xlu0 %v1990
        %v1992 = vpop.xlane.xlu0 %1991
        %v1993 = vsel %vm1979, %v1932, -inf
        %1994 = vmax.xlane.f32.xlu0 %v1993
        %v1995 = vpop.xlane.xlu0 %1994
        %v1996 = vsel %vm1983, %v1935, -inf
        %1997 = vmax.xlane.f32.xlu0 %v1996
        %v1998 = vpop.xlane.xlu0 %1997
        %v1999 = vsel %vm1979, %v1973, -inf
        %2000 = vmax.xlane.f32.xlu0 %v1999
        %v2001 = vpop.xlane.xlu0 %2000
        %v2002 = vsel %vm1983, %v1976, -inf
        %2003 = vmax.xlane.f32.xlu0 %v2002
        %v2004 = vpop.xlane.xlu0 %2003
        %v2005 = vsub.f32 %v1850, %v1982
        %v2006 = vsub.f32 %v1853, %v1986
        %v2007 = vsub.f32 %v1891, %v1989
        %v2008 = vsub.f32 %v1894, %v1992
        %v2009 = vsub.f32 %v1932, %v1995
        %v2010 = vsub.f32 %v1935, %v1998
        %v2011 = vsub.f32 %v1973, %v2001
        %v2012 = vsub.f32 %v1976, %v2004
        %v2013 = vmul.f32 %v2005, 1.442695
        %v2014 = vpow.pop %v2013
        %v2015 = vmul.f32 %v2006, 1.442695
        %v2016 = vpow.pop %v2015
        %v2017 = vmul.f32 %v2007, 1.442695
        %v2018 = vpow.pop %v2017
        %v2019 = vmul.f32 %v2008, 1.442695
        %v2020 = vpow.pop %v2019
        %v2021 = vmul.f32 %v2009, 1.442695
        %v2022 = vpow.pop %v2021
        %v2023 = vmul.f32 %v2010, 1.442695
        %v2024 = vpow.pop %v2023
        %v2025 = vmul.f32 %v2011, 1.442695
        %v2026 = vpow.pop %v2025
        %v2027 = vmul.f32 %v2012, 1.442695
        %v2028 = vpow.pop %v2027
        %v2029 = vsel %vm1979, %v2014, 0.0
        %2030 = vadd.xlane.f32.xlu0 %v2029
        %v2031 = vpop.xlane.xlu0 %2030
        %v2032 = vsel %vm1983, %v2016, 0.0
        %2033 = vadd.xlane.f32.xlu0 %v2032
        %v2034 = vpop.xlane.xlu0 %2033
        %v2035 = vsel %vm1979, %v2018, 0.0
        %2036 = vadd.xlane.f32.xlu0 %v2035
        %v2037 = vpop.xlane.xlu0 %2036
        %v2038 = vsel %vm1983, %v2020, 0.0
        %2039 = vadd.xlane.f32.xlu0 %v2038
        %v2040 = vpop.xlane.xlu0 %2039
        %v2041 = vsel %vm1979, %v2022, 0.0
        %2042 = vadd.xlane.f32.xlu0 %v2041
        %v2043 = vpop.xlane.xlu0 %2042
        %v2044 = vsel %vm1983, %v2024, 0.0
        %2045 = vadd.xlane.f32.xlu0 %v2044
        %v2046 = vpop.xlane.xlu0 %2045
        %v2047 = vsel %vm1979, %v2026, 0.0
        %2048 = vadd.xlane.f32.xlu0 %v2047
        %v2049 = vpop.xlane.xlu0 %2048
        %v2050 = vsel %vm1983, %v2028, 0.0
        %2051 = vadd.xlane.f32.xlu0 %v2050
        %v2052 = vpop.xlane.xlu0 %2051
        %v2053 = vrcp.pop %v2031
        %v2054 = vrcp.pop %v2034
        %v2055 = vrcp.pop %v2037
        %v2056 = vrcp.pop %v2040
        %v2057 = vrcp.pop %v2043
        %v2058 = vrcp.pop %v2046
        %v2059 = vrcp.pop %v2049
        %v2060 = vrcp.pop %v2052
        %v2061 = vmul.f32 %v2014, %v2053
        %v2062 = vmul.f32 %v2016, %v2054
        %v2063 = vmul.f32 %v2018, %v2055
        %v2064 = vmul.f32 %v2020, %v2056
        %v2065 = vmul.f32 %v2022, %v2057
        %v2066 = vmul.f32 %v2024, %v2058
        %v2067 = vmul.f32 %v2026, %v2059
        %v2068 = vmul.f32 %v2028, %v2060
        %v2069 = vpack.c.bf16 %v2062, %v2061
        %v2070 = vpack.c.bf16 %v2064, %v2063
        %v2071 = vpack.c.bf16 %v2066, %v2065
        %v2072 = vpack.c.bf16 %v2068, %v2067
        %v2074 = vsel %vm1979, %v2069, 0
        %vm2076 = vcmask 1043456
        %vm2077 = vcmask 1044480
        %v2078 = vsel %vm2076, 4294967295, 65535
        %v2079 = vsel %vm2077, %v2078, 0
        %v2081 = vand.u32 %v1811, %v2079
        %2083 = vmatprep.subr.bf16.mxu0 0
        %2084 = vmatpush1.bf16.msra.mxu0 %v2081
        %2085 = vmatprep.subr.bf16.mxu0 0
        %2086 = vmatpush1.bf16.msra.mxu0 0
        %2087 = vmatprep.subr.bf16.mxu0 0
        %2088 = vmatpush1.bf16.msra.mxu0 0
        %2089 = vmatprep.subr.bf16.mxu0 0
        %2090 = vmatpush1.bf16.msra.mxu0 0
        %2091 = vmatprep.subr.bf16.mxu0 0
        %2092 = vmatpush1.bf16.msra.mxu0 0
        %2093 = vmatprep.subr.bf16.mxu0 0
        %2094 = vmatpush1.bf16.msra.mxu0 0
        %2095 = vmatprep.subr.bf16.mxu0 0
        %2096 = vmatpush1.bf16.msra.mxu0 0
        %2097 = vmatprep.subr.bf16.mxu0 0
        %2098 = vmatpush1.bf16.msra.mxu0 0
        %2099 = vmatprep.subr.bf16.mxu0 0
        %2100 = vmatpush1.bf16.msra.mxu0 0
        %2101 = vmatprep.subr.bf16.mxu0 0
        %2102 = vmatpush1.bf16.msra.mxu0 0
        %2103 = vmatprep.subr.bf16.mxu0 0
        %2104 = vmatpush1.bf16.msra.mxu0 0
        %2105 = vmatprep.subr.bf16.mxu0 0
        %2106 = vmatpush1.bf16.msra.mxu0 0
        %2107 = vmatprep.subr.bf16.mxu0 0
        %2108 = vmatpush1.bf16.msra.mxu0 0
        %2109 = vmatprep.subr.bf16.mxu0 0
        %2110 = vmatpush1.bf16.msra.mxu0 0
        %2111 = vmatprep.subr.bf16.mxu0 0
        %2112 = vmatpush1.bf16.msra.mxu0 0
        %2113 = vmatprep.subr.bf16.mxu0 0
        %2114 = vmatpush1.bf16.msra.mxu0 0
        %2115 = vmatprep.mubr.bf16.mxu0 0
        %2116 = vmatmul.mubr.bf16.gmra.mrb[0].mxu0 %v2074
        %v2117 = vpop.f32.mrb[0].mxu0
        %v2118 = vadd.f32 0.0, %v2117
        %v2119 = vpop.f32.mrb[0].mxu0
        %v2120 = vpop.f32.mrb[0].mxu0
        %v2121 = vadd.f32 0.0, %v2120
        %v2122 = vpop.f32.mrb[0].mxu0
        %2123 = vdwg.mxu0
        %v2125 = vsel %vm1979, %v2070, 0
        %v2128 = vand.u32 %v1812, %v2079
        %2130 = vmatprep.subr.bf16.mxu0 0
        %2131 = vmatpush1.bf16.msra.mxu0 %v2128
        %2132 = vmatprep.subr.bf16.mxu0 0
        %2133 = vmatpush1.bf16.msra.mxu0 0
        %2134 = vmatprep.subr.bf16.mxu0 0
        %2135 = vmatpush1.bf16.msra.mxu0 0
        %2136 = vmatprep.subr.bf16.mxu0 0
        %2137 = vmatpush1.bf16.msra.mxu0 0
        %2138 = vmatprep.subr.bf16.mxu0 0
        %2139 = vmatpush1.bf16.msra.mxu0 0
        %2140 = vmatprep.subr.bf16.mxu0 0
        %2141 = vmatpush1.bf16.msra.mxu0 0
        %2142 = vmatprep.subr.bf16.mxu0 0
        %2143 = vmatpush1.bf16.msra.mxu0 0
        %2144 = vmatprep.subr.bf16.mxu0 0
        %2145 = vmatpush1.bf16.msra.mxu0 0
        %2146 = vmatprep.subr.bf16.mxu0 0
        %2147 = vmatpush1.bf16.msra.mxu0 0
        %2148 = vmatprep.subr.bf16.mxu0 0
        %2149 = vmatpush1.bf16.msra.mxu0 0
        %2150 = vmatprep.subr.bf16.mxu0 0
        %2151 = vmatpush1.bf16.msra.mxu0 0
        %2152 = vmatprep.subr.bf16.mxu0 0
        %2153 = vmatpush1.bf16.msra.mxu0 0
        %2154 = vmatprep.subr.bf16.mxu0 0
        %2155 = vmatpush1.bf16.msra.mxu0 0
        %2156 = vmatprep.subr.bf16.mxu0 0
        %2157 = vmatpush1.bf16.msra.mxu0 0
        %2158 = vmatprep.subr.bf16.mxu0 0
        %2159 = vmatpush1.bf16.msra.mxu0 0
        %2160 = vmatprep.subr.bf16.mxu0 0
        %2161 = vmatpush1.bf16.msra.mxu0 0
        %2162 = vmatprep.mubr.bf16.mxu0 0
        %2163 = vmatmul.mubr.bf16.gmra.mrb[0].mxu0 %v2125
        %v2164 = vpop.f32.mrb[0].mxu0
        %v2165 = vadd.f32 0.0, %v2164
        %v2166 = vpop.f32.mrb[0].mxu0
        %v2167 = vpop.f32.mrb[0].mxu0
        %v2168 = vadd.f32 0.0, %v2167
        %v2169 = vpop.f32.mrb[0].mxu0
        %2170 = vdwg.mxu0
        %v2172 = vsel %vm1979, %v2071, 0
        %v2175 = vand.u32 %v1813, %v2079
        %2177 = vmatprep.subr.bf16.mxu0 0
        %2178 = vmatpush1.bf16.msra.mxu0 %v2175
        %2179 = vmatprep.subr.bf16.mxu0 0
        %2180 = vmatpush1.bf16.msra.mxu0 0
        %2181 = vmatprep.subr.bf16.mxu0 0
        %2182 = vmatpush1.bf16.msra.mxu0 0
        %2183 = vmatprep.subr.bf16.mxu0 0
        %2184 = vmatpush1.bf16.msra.mxu0 0
        %2185 = vmatprep.subr.bf16.mxu0 0
        %2186 = vmatpush1.bf16.msra.mxu0 0
        %2187 = vmatprep.subr.bf16.mxu0 0
        %2188 = vmatpush1.bf16.msra.mxu0 0
        %2189 = vmatprep.subr.bf16.mxu0 0
        %2190 = vmatpush1.bf16.msra.mxu0 0
        %2191 = vmatprep.subr.bf16.mxu0 0
        %2192 = vmatpush1.bf16.msra.mxu0 0
        %2193 = vmatprep.subr.bf16.mxu0 0
        %2194 = vmatpush1.bf16.msra.mxu0 0
        %2195 = vmatprep.subr.bf16.mxu0 0
        %2196 = vmatpush1.bf16.msra.mxu0 0
        %2197 = vmatprep.subr.bf16.mxu0 0
        %2198 = vmatpush1.bf16.msra.mxu0 0
        %2199 = vmatprep.subr.bf16.mxu0 0
        %2200 = vmatpush1.bf16.msra.mxu0 0
        %2201 = vmatprep.subr.bf16.mxu0 0
        %2202 = vmatpush1.bf16.msra.mxu0 0
        %2203 = vmatprep.subr.bf16.mxu0 0
        %2204 = vmatpush1.bf16.msra.mxu0 0
        %2205 = vmatprep.subr.bf16.mxu0 0
        %2206 = vmatpush1.bf16.msra.mxu0 0
        %2207 = vmatprep.subr.bf16.mxu0 0
        %2208 = vmatpush1.bf16.msra.mxu0 0
        %2209 = vmatprep.mubr.bf16.mxu0 0
        %2210 = vmatmul.mubr.bf16.gmra.mrb[0].mxu0 %v2172
        %v2211 = vpop.f32.mrb[0].mxu0
        %v2212 = vadd.f32 0.0, %v2211
        %v2213 = vpop.f32.mrb[0].mxu0
        %v2214 = vpop.f32.mrb[0].mxu0
        %v2215 = vadd.f32 0.0, %v2214
        %v2216 = vpop.f32.mrb[0].mxu0
        %2217 = vdwg.mxu0
        %v2219 = vsel %vm1979, %v2072, 0
        %v2222 = vand.u32 %v1814, %v2079
        %2224 = vmatprep.subr.bf16.mxu0 0
        %2225 = vmatpush1.bf16.msra.mxu0 %v2222
        %2226 = vmatprep.subr.bf16.mxu0 0
        %2227 = vmatpush1.bf16.msra.mxu0 0
        %2228 = vmatprep.subr.bf16.mxu0 0
        %2229 = vmatpush1.bf16.msra.mxu0 0
        %2230 = vmatprep.subr.bf16.mxu0 0
        %2231 = vmatpush1.bf16.msra.mxu0 0
        %2232 = vmatprep.subr.bf16.mxu0 0
        %2233 = vmatpush1.bf16.msra.mxu0 0
        %2234 = vmatprep.subr.bf16.mxu0 0
        %2235 = vmatpush1.bf16.msra.mxu0 0
        %2236 = vmatprep.subr.bf16.mxu0 0
        %2237 = vmatpush1.bf16.msra.mxu0 0
        %2238 = vmatprep.subr.bf16.mxu0 0
        %2239 = vmatpush1.bf16.msra.mxu0 0
        %2240 = vmatprep.subr.bf16.mxu0 0
        %2241 = vmatpush1.bf16.msra.mxu0 0
        %2242 = vmatprep.subr.bf16.mxu0 0
        %2243 = vmatpush1.bf16.msra.mxu0 0
        %2244 = vmatprep.subr.bf16.mxu0 0
        %2245 = vmatpush1.bf16.msra.mxu0 0
        %2246 = vmatprep.subr.bf16.mxu0 0
        %2247 = vmatpush1.bf16.msra.mxu0 0
        %2248 = vmatprep.subr.bf16.mxu0 0
        %2249 = vmatpush1.bf16.msra.mxu0 0
        %2250 = vmatprep.subr.bf16.mxu0 0
        %2251 = vmatpush1.bf16.msra.mxu0 0
        %2252 = vmatprep.subr.bf16.mxu0 0
        %2253 = vmatpush1.bf16.msra.mxu0 0
        %2254 = vmatprep.subr.bf16.mxu0 0
        %2255 = vmatpush1.bf16.msra.mxu0 0
        %2256 = vmatprep.mubr.bf16.mxu0 0
        %2257 = vmatmul.mubr.bf16.gmra.mrb[0].mxu0 %v2219
        %v2258 = vpop.f32.mrb[0].mxu0
        %v2259 = vadd.f32 0.0, %v2258
        %v2260 = vpop.f32.mrb[0].mxu0
        %v2261 = vpop.f32.mrb[0].mxu0
        %v2262 = vadd.f32 0.0, %v2261
        %v2263 = vpop.f32.mrb[0].mxu0
        %2264 = vdwg.mxu0
        %v2265 = vpack.c.bf16 %v2121, %v2118
        %v2266 = vpack.c.bf16 %v2168, %v2165
        %v2267 = vpack.c.bf16 %v2215, %v2212
        %v2268 = vpack.c.bf16 %v2262, %v2259
        %v2270 = vlaneseq
        %v2271 = vshrl.u32 %v2270, 7
        %v2272 = vsub.s32 0, %v2271
        %v2273 = vrot.slane %v1001, %v2272
        %v2339 = vunpack.c.l.b16 %v937
        %v2340 = vunpack.c.l.b16 %v938
        %v2341 = vunpack.c.l.b16 %v939
        %v2342 = vunpack.c.l.b16 %v940
        %v2343 = vunpack.c.l.b16 %v941
        %v2344 = vunpack.c.l.b16 %v942
        %v2345 = vunpack.c.l.b16 %v943
        %v2346 = vunpack.c.l.b16 %v944
        %v2347 = vunpack.c.l.b16 %v945
        %v2348 = vunpack.c.l.b16 %v946
        %v2349 = vunpack.c.l.b16 %v947
        %v2350 = vunpack.c.l.b16 %v948
        %v2351 = vunpack.c.l.b16 %v949
        %v2352 = vunpack.c.l.b16 %v950
        %v2353 = vunpack.c.l.b16 %v951
        %v2354 = vunpack.c.l.b16 %v952
        %v2355 = vunpack.c.l.b16 %v953
        %v2356 = vunpack.c.l.b16 %v954
        %v2357 = vunpack.c.l.b16 %v955
        %v2358 = vunpack.c.l.b16 %v956
        %v2359 = vunpack.c.l.b16 %v957
        %v2360 = vunpack.c.l.b16 %v958
        %v2361 = vunpack.c.l.b16 %v959
        %v2362 = vunpack.c.l.b16 %v960
        %v2363 = vunpack.c.l.b16 %v961
        %v2364 = vunpack.c.l.b16 %v962
        %v2365 = vunpack.c.l.b16 %v963
        %v2366 = vunpack.c.l.b16 %v964
        %v2367 = vunpack.c.l.b16 %v965
        %v2368 = vunpack.c.l.b16 %v966
        %v2369 = vunpack.c.l.b16 %v967
        %v2370 = vunpack.c.l.b16 %v968
        %v2371 = vunpack.c.l.b16 %v969
        %v2372 = vunpack.c.l.b16 %v970
        %v2373 = vunpack.c.l.b16 %v971
        %v2374 = vunpack.c.l.b16 %v972
        %v2375 = vunpack.c.l.b16 %v973
        %v2376 = vunpack.c.l.b16 %v974
        %v2377 = vunpack.c.l.b16 %v975
        %v2378 = vunpack.c.l.b16 %v976
        %v2379 = vunpack.c.l.b16 %v977
        %v2380 = vunpack.c.l.b16 %v978
        %v2381 = vunpack.c.l.b16 %v979
        %v2382 = vunpack.c.l.b16 %v980
        %v2383 = vunpack.c.l.b16 %v981
        %v2384 = vunpack.c.l.b16 %v982
        %v2385 = vunpack.c.l.b16 %v983
        %v2386 = vunpack.c.l.b16 %v984
        %v2387 = vunpack.c.l.b16 %v985
        %v2388 = vunpack.c.l.b16 %v986
        %v2389 = vunpack.c.l.b16 %v987
        %v2390 = vunpack.c.l.b16 %v988
        %v2391 = vunpack.c.l.b16 %v989
        %v2392 = vunpack.c.l.b16 %v990
        %v2393 = vunpack.c.l.b16 %v991
        %v2394 = vunpack.c.l.b16 %v992
        %v2395 = vunpack.c.l.b16 %v993
        %v2396 = vunpack.c.l.b16 %v994
        %v2397 = vunpack.c.l.b16 %v995
        %v2398 = vunpack.c.l.b16 %v996
        %v2399 = vunpack.c.l.b16 %v997
        %v2400 = vunpack.c.l.b16 %v998
        %v2401 = vunpack.c.l.b16 %v999
        %v2402 = vunpack.c.l.b16 %v1000
        %v2403 = vpack.c.b16 %v2340, %v2339
        %v2404 = vpack.c.b16 %v2342, %v2341
        %v2405 = vpack.c.b16 %v2344, %v2343
        %v2406 = vpack.c.b16 %v2346, %v2345
        %v2407 = vpack.c.b16 %v2348, %v2347
        %v2408 = vpack.c.b16 %v2350, %v2349
        %v2409 = vpack.c.b16 %v2352, %v2351
        %v2410 = vpack.c.b16 %v2354, %v2353
        %v2411 = vpack.c.b16 %v2356, %v2355
        %v2412 = vpack.c.b16 %v2358, %v2357
        %v2413 = vpack.c.b16 %v2360, %v2359
        %v2414 = vpack.c.b16 %v2362, %v2361
        %v2415 = vpack.c.b16 %v2364, %v2363
        %v2416 = vpack.c.b16 %v2366, %v2365
        %v2417 = vpack.c.b16 %v2368, %v2367
        %v2418 = vpack.c.b16 %v2370, %v2369
        %v2419 = vpack.c.b16 %v2372, %v2371
        %v2420 = vpack.c.b16 %v2374, %v2373
        %v2421 = vpack.c.b16 %v2376, %v2375
        %v2422 = vpack.c.b16 %v2378, %v2377
        %v2423 = vpack.c.b16 %v2380, %v2379
        %v2424 = vpack.c.b16 %v2382, %v2381
        %v2425 = vpack.c.b16 %v2384, %v2383
        %v2426 = vpack.c.b16 %v2386, %v2385
        %v2427 = vpack.c.b16 %v2388, %v2387
        %v2428 = vpack.c.b16 %v2390, %v2389
        %v2429 = vpack.c.b16 %v2392, %v2391
        %v2430 = vpack.c.b16 %v2394, %v2393
        %v2431 = vpack.c.b16 %v2396, %v2395
        %v2432 = vpack.c.b16 %v2398, %v2397
        %v2433 = vpack.c.b16 %v2400, %v2399
        %v2434 = vpack.c.b16 %v2402, %v2401
        %2467 = vmatprep.subr.bf16.mxu0 0
        %2468 = vmatpush1.bf16.msra.mxu0 %v2403
        %2469 = vmatprep.subr.bf16.mxu0 0
        %2470 = vmatpush1.bf16.msra.mxu0 %v2404
        %2471 = vmatprep.subr.bf16.mxu0 0
        %2472 = vmatpush1.bf16.msra.mxu0 %v2405
        %2473 = vmatprep.subr.bf16.mxu0 0
        %2474 = vmatpush1.bf16.msra.mxu0 %v2406
        %2475 = vmatprep.subr.bf16.mxu0 0
        %2476 = vmatpush1.bf16.msra.mxu0 %v2407
        %2477 = vmatprep.subr.bf16.mxu0 0
        %2478 = vmatpush1.bf16.msra.mxu0 %v2408
        %2479 = vmatprep.subr.bf16.mxu0 0
        %2480 = vmatpush1.bf16.msra.mxu0 %v2409
        %2481 = vmatprep.subr.bf16.mxu0 0
        %2482 = vmatpush1.bf16.msra.mxu0 %v2410
        %2483 = vmatprep.subr.bf16.mxu0 0
        %2484 = vmatpush1.bf16.msra.mxu0 %v2411
        %2485 = vmatprep.subr.bf16.mxu0 0
        %2486 = vmatpush1.bf16.msra.mxu0 %v2412
        %2487 = vmatprep.subr.bf16.mxu0 0
        %2488 = vmatpush1.bf16.msra.mxu0 %v2413
        %2489 = vmatprep.subr.bf16.mxu0 0
        %2490 = vmatpush1.bf16.msra.mxu0 %v2414
        %2491 = vmatprep.subr.bf16.mxu0 0
        %2492 = vmatpush1.bf16.msra.mxu0 %v2415
        %2493 = vmatprep.subr.bf16.mxu0 0
        %2494 = vmatpush1.bf16.msra.mxu0 %v2416
        %2495 = vmatprep.subr.bf16.mxu0 0
        %2496 = vmatpush1.bf16.msra.mxu0 %v2417
        %2497 = vmatprep.subr.bf16.mxu0 0
        %2498 = vmatpush1.bf16.msra.mxu0 %v2418
        %2499 = vmatprep.mubr.bf16.mxu0 %v2266
        %2500 = vmatmul.mubr.bf16.gmra.mrb[0].mxu0 %v2265
        %v2501 = vpop.f32.mrb[0].mxu0
        %v2502 = vadd.f32 %v2273, %v2501
        %v2503 = vpop.f32.mrb[0].mxu0
        %v2504 = vpop.f32.mrb[0].mxu0
        %v2505 = vadd.f32 %v2273, %v2504
        %v2506 = vpop.f32.mrb[0].mxu0
        %2507 = vdwg.mxu0
        %2508 = vmatprep.subr.bf16.mxu0 0
        %2509 = vmatpush1.bf16.msra.mxu0 %v2419
        %2510 = vmatprep.subr.bf16.mxu0 0
        %2511 = vmatpush1.bf16.msra.mxu0 %v2420
        %2512 = vmatprep.subr.bf16.mxu0 0
        %2513 = vmatpush1.bf16.msra.mxu0 %v2421
        %2514 = vmatprep.subr.bf16.mxu0 0
        %2515 = vmatpush1.bf16.msra.mxu0 %v2422
        %2516 = vmatprep.subr.bf16.mxu0 0
        %2517 = vmatpush1.bf16.msra.mxu0 %v2423
        %2518 = vmatprep.subr.bf16.mxu0 0
        %2519 = vmatpush1.bf16.msra.mxu0 %v2424
        %2520 = vmatprep.subr.bf16.mxu0 0
        %2521 = vmatpush1.bf16.msra.mxu0 %v2425
        %2522 = vmatprep.subr.bf16.mxu0 0
        %2523 = vmatpush1.bf16.msra.mxu0 %v2426
        %2524 = vmatprep.subr.bf16.mxu0 0
        %2525 = vmatpush1.bf16.msra.mxu0 %v2427
        %2526 = vmatprep.subr.bf16.mxu0 0
        %2527 = vmatpush1.bf16.msra.mxu0 %v2428
        %2528 = vmatprep.subr.bf16.mxu0 0
        %2529 = vmatpush1.bf16.msra.mxu0 %v2429
        %2530 = vmatprep.subr.bf16.mxu0 0
        %2531 = vmatpush1.bf16.msra.mxu0 %v2430
        %2532 = vmatprep.subr.bf16.mxu0 0
        %2533 = vmatpush1.bf16.msra.mxu0 %v2431
        %2534 = vmatprep.subr.bf16.mxu0 0
        %2535 = vmatpush1.bf16.msra.mxu0 %v2432
        %2536 = vmatprep.subr.bf16.mxu0 0
        %2537 = vmatpush1.bf16.msra.mxu0 %v2433
        %2538 = vmatprep.subr.bf16.mxu0 0
        %2539 = vmatpush1.bf16.msra.mxu0 %v2434
        %2540 = vmatprep.mubr.bf16.mxu0 %v2268
        %2541 = vmatmul.mubr.bf16.gmra.mrb[0].mxu0 %v2267
        %v2542 = vpop.f32.mrb[0].mxu0
        %v2543 = vadd.f32 %v2502, %v2542
        %v2544 = vpop.f32.mrb[0].mxu0
        %v2545 = vpop.f32.mrb[0].mxu0
        %v2546 = vadd.f32 %v2505, %v2545
        %v2547 = vpop.f32.mrb[0].mxu0
        %2548 = vdwg.mxu0
        %v2549 = vadd.f32 %v788, %v2543
        %v2550 = vadd.f32 %v789, %v2546
        %v2551 = vld [vmem:[%s764] sm:$0x1]
        %v2552 = vld [vmem:[%s767] sm:$0x1]
        %2553 = vadd.xlane.f32.xlu0 %v2549
        %v2554 = vpop.xlane.xlu0 %2553
        %v2555 = vsel %vm794, %v2550, 0.0
        %2556 = vadd.xlane.f32.xlu0 %v2555
        %v2557 = vpop.xlane.xlu0 %2556
        %v2558 = vmul.f32 %v2554, 0.03125
        %v2559 = vmul.f32 %v2557, 0.03125
        %v2560 = vmul.f32 %v2549, %v2549
        %v2561 = vmul.f32 %v2550, %v2550
        %2562 = vadd.xlane.f32.xlu0 %v2560
        %v2563 = vpop.xlane.xlu0 %2562
        %v2564 = vsel %vm794, %v2561, 0.0
        %2565 = vadd.xlane.f32.xlu0 %v2564
        %v2566 = vpop.xlane.xlu0 %2565
        %v2567 = vmul.f32 %v2563, 0.03125
        %v2568 = vmul.f32 %v2566, 0.03125
        %v2569 = vmul.f32 %v2558, %v2558
        %v2570 = vmul.f32 %v2559, %v2559
        %v2571 = vsub.f32 %v2567, %v2569
        %v2572 = vsub.f32 %v2568, %v2570
        %v2573 = vmax.f32 %v2571, 0.0
        %v2574 = vmax.f32 %v2572, 0.0
        %v2575 = vsub.f32 %v2549, %v2558
        %v2576 = vsub.f32 %v2550, %v2559
        %v2577 = vadd.f32 %v2573, 1e-06
        %v2578 = vadd.f32 %v2574, 1e-06
        %v2579 = vrsqrt.pop %v2577
        %v2580 = vrsqrt.pop %v2578
        %v2581 = vmul.f32 %v2575, %v2579
        %v2582 = vmul.f32 %v2576, %v2580
        %v2584 = vlaneseq
        %v2585 = vshrl.u32 %v2584, 7
        %v2586 = vsub.s32 0, %v2585
        %v2587 = vrot.slane %v2551, %v2586
        %v2589 = vmul.f32 %v2581, %v2587
        %v2590 = vmul.f32 %v2582, %v2587
        %v2592 = vlaneseq
        %v2593 = vshrl.u32 %v2592, 7
        %v2594 = vsub.s32 0, %v2593
        %v2595 = vrot.slane %v2552, %v2594
        %v2597 = vadd.f32 %v2589, %v2595
        %v2598 = vadd.f32 %v2590, %v2595
        %v2599 = vld [vmem:[%s643] sm:$0xf]
        %v2600 = vld [vmem:[%s643 + $0x4] sm:$0xf]
        %v2601 = vld [vmem:[%s643 + $0x8] sm:$0xf]
        %v2602 = vld [vmem:[%s643 + $0xc] sm:$0xf]
        %v2603 = vld [vmem:[%s643 + $0x10] sm:$0xf]
        %v2604 = vld [vmem:[%s643 + $0x14] sm:$0xf]
        %v2605 = vld [vmem:[%s643 + $0x18] sm:$0xf]
        %v2606 = vld [vmem:[%s643 + $0x1c] sm:$0xf]
        %v2607 = vld [vmem:[%s643 + $0x20] sm:$0xf]
        %v2608 = vld [vmem:[%s643 + $0x24] sm:$0xf]
        %v2609 = vld [vmem:[%s643 + $0x28] sm:$0xf]
        %v2610 = vld [vmem:[%s643 + $0x2c] sm:$0xf]
        %v2611 = vld [vmem:[%s643 + $0x30] sm:$0xf]
        %v2612 = vld [vmem:[%s643 + $0x34] sm:$0xf]
        %v2613 = vld [vmem:[%s643 + $0x38] sm:$0xf]
        %v2614 = vld [vmem:[%s643 + $0x3c] sm:$0xf]
        %v2615 = vld [vmem:[%s770] sm:$0x1]
        %v2616 = vld [vmem:[%s652] sm:$0xf]
        %v2617 = vld [vmem:[%s652 + $0x4] sm:$0xf]
        %v2618 = vld [vmem:[%s652 + $0x8] sm:$0xf]
        %v2619 = vld [vmem:[%s652 + $0xc] sm:$0xf]
        %v2620 = vld [vmem:[%s652 + $0x10] sm:$0xf]
        %v2621 = vld [vmem:[%s652 + $0x14] sm:$0xf]
        %v2622 = vld [vmem:[%s652 + $0x18] sm:$0xf]
        %v2623 = vld [vmem:[%s652 + $0x1c] sm:$0xf]
        %v2624 = vld [vmem:[%s652 + $0x20] sm:$0xf]
        %v2625 = vld [vmem:[%s652 + $0x24] sm:$0xf]
        %v2626 = vld [vmem:[%s652 + $0x28] sm:$0xf]
        %v2627 = vld [vmem:[%s652 + $0x2c] sm:$0xf]
        %v2628 = vld [vmem:[%s652 + $0x30] sm:$0xf]
        %v2629 = vld [vmem:[%s652 + $0x34] sm:$0xf]
        %v2630 = vld [vmem:[%s652 + $0x38] sm:$0xf]
        %v2631 = vld [vmem:[%s652 + $0x3c] sm:$0xf]
        %v2632 = vld [vmem:[%s773] sm:$0x1]
        %v2633 = vpack.c.bf16 %v2598, %v2597
        %v2635 = vlaneseq
        %v2636 = vshrl.u32 %v2635, 7
        %v2637 = vsub.s32 0, %v2636
        %v2638 = vrot.slane %v2615, %v2637
        %v2656 = vunpack.c.l.b16 %v2599
        %v2657 = vunpack.c.l.b16 %v2600
        %v2658 = vunpack.c.l.b16 %v2601
        %v2659 = vunpack.c.l.b16 %v2602
        %v2660 = vunpack.c.l.b16 %v2603
        %v2661 = vunpack.c.l.b16 %v2604
        %v2662 = vunpack.c.l.b16 %v2605
        %v2663 = vunpack.c.l.b16 %v2606
        %v2664 = vunpack.c.l.b16 %v2607
        %v2665 = vunpack.c.l.b16 %v2608
        %v2666 = vunpack.c.l.b16 %v2609
        %v2667 = vunpack.c.l.b16 %v2610
        %v2668 = vunpack.c.l.b16 %v2611
        %v2669 = vunpack.c.l.b16 %v2612
        %v2670 = vunpack.c.l.b16 %v2613
        %v2671 = vunpack.c.l.b16 %v2614
        %v2672 = vpack.c.b16 %v2657, %v2656
        %v2673 = vpack.c.b16 %v2659, %v2658
        %v2674 = vpack.c.b16 %v2661, %v2660
        %v2675 = vpack.c.b16 %v2663, %v2662
        %v2676 = vpack.c.b16 %v2665, %v2664
        %v2677 = vpack.c.b16 %v2667, %v2666
        %v2678 = vpack.c.b16 %v2669, %v2668
        %v2679 = vpack.c.b16 %v2671, %v2670
        %2688 = vmatprep.subr.bf16.mxu0 0
        %2689 = vmatpush1.bf16.msra.mxu0 %v2672
        %2690 = vmatprep.subr.bf16.mxu0 0
        %2691 = vmatpush1.bf16.msra.mxu0 %v2673
        %2692 = vmatprep.subr.bf16.mxu0 0
        %2693 = vmatpush1.bf16.msra.mxu0 %v2674
        %2694 = vmatprep.subr.bf16.mxu0 0
        %2695 = vmatpush1.bf16.msra.mxu0 %v2675
        %2696 = vmatprep.subr.bf16.mxu0 0
        %2697 = vmatpush1.bf16.msra.mxu0 %v2676
        %2698 = vmatprep.subr.bf16.mxu0 0
        %2699 = vmatpush1.bf16.msra.mxu0 %v2677
        %2700 = vmatprep.subr.bf16.mxu0 0
        %2701 = vmatpush1.bf16.msra.mxu0 %v2678
        %2702 = vmatprep.subr.bf16.mxu0 0
        %2703 = vmatpush1.bf16.msra.mxu0 %v2679
        %2704 = vmatprep.subr.bf16.mxu0 0
        %2705 = vmatpush1.bf16.msra.mxu0 0
        %2706 = vmatprep.subr.bf16.mxu0 0
        %2707 = vmatpush1.bf16.msra.mxu0 0
        %2708 = vmatprep.subr.bf16.mxu0 0
        %2709 = vmatpush1.bf16.msra.mxu0 0
        %2710 = vmatprep.subr.bf16.mxu0 0
        %2711 = vmatpush1.bf16.msra.mxu0 0
        %2712 = vmatprep.subr.bf16.mxu0 0
        %2713 = vmatpush1.bf16.msra.mxu0 0
        %2714 = vmatprep.subr.bf16.mxu0 0
        %2715 = vmatpush1.bf16.msra.mxu0 0
        %2716 = vmatprep.subr.bf16.mxu0 0
        %2717 = vmatpush1.bf16.msra.mxu0 0
        %2718 = vmatprep.subr.bf16.mxu0 0
        %2719 = vmatpush1.bf16.msra.mxu0 0
        %2720 = vmatprep.mubr.bf16.mxu0 0
        %2721 = vmatmul.mubr.bf16.gmra.mrb[0].mxu0 %v2633
        %v2722 = vpop.f32.mrb[0].mxu0
        %v2723 = vadd.f32 %v2638, %v2722
        %v2724 = vpop.f32.mrb[0].mxu0
        %v2725 = vpop.f32.mrb[0].mxu0
        %v2726 = vadd.f32 %v2638, %v2725
        %v2727 = vpop.f32.mrb[0].mxu0
        %2728 = vdwg.mxu0
        %v2729 = vmul.f32 %v2723, 0.5
        %v2730 = vmul.f32 %v2726, 0.5
        %v2731 = vmul.f32 %v2723, 0.70710677
        %v2732 = vmul.f32 %v2726, 0.70710677
        %v2733 = vmax.f32 %v2731, -4.0
        %v2734 = vmax.f32 %v2732, -4.0
        %v2735 = vmin.f32 %v2733, 4.0
        %v2736 = vmin.f32 %v2734, 4.0
        %v2737 = vmul.f32 %v2735, %v2735
        %v2738 = vmul.f32 %v2736, %v2736
        %v2739 = vmul.f32 %v2737, 0.00022905065
        %v2740 = vmul.f32 %v2738, 0.00022905065
        %v2741 = vadd.f32 %v2739, 0.003408291
        %v2742 = vadd.f32 %v2740, 0.003408291
        %v2743 = vmul.f32 %v2741, %v2737
        %v2744 = vmul.f32 %v2742, %v2738
        %v2745 = vadd.f32 %v2743, 0.050955694
        %v2746 = vadd.f32 %v2744, 0.050955694
        %v2747 = vmul.f32 %v2745, %v2737
        %v2748 = vmul.f32 %v2746, %v2738
        %v2749 = vadd.f32 %v2747, 0.18520832
        %v2750 = vadd.f32 %v2748, 0.18520832
        %v2751 = vmul.f32 %v2749, %v2737
        %v2752 = vmul.f32 %v2750, %v2738
        %v2753 = vadd.f32 %v2751, 1.1283791
        %v2754 = vadd.f32 %v2752, 1.1283791
        %v2755 = vmul.f32 %v2735, %v2753
        %v2756 = vmul.f32 %v2736, %v2754
        %v2757 = vmul.f32 %v2737, -1.1791603e-07
        %v2758 = vmul.f32 %v2738, -1.1791603e-07
        %v2759 = vadd.f32 %v2757, 2.3547966e-05
        %v2760 = vadd.f32 %v2758, 2.3547966e-05
        %v2761 = vmul.f32 %v2759, %v2737
        %v2762 = vmul.f32 %v2760, %v2738
        %v2763 = vadd.f32 %v2761, 0.0010179626
        %v2764 = vadd.f32 %v2762, 0.0010179626
        %v2765 = vmul.f32 %v2763, %v2737
        %v2766 = vmul.f32 %v2764, %v2738
        %v2767 = vadd.f32 %v2765, 0.01407047
        %v2768 = vadd.f32 %v2766, 0.01407047
        %v2769 = vmul.f32 %v2767, %v2737
        %v2770 = vmul.f32 %v2768, %v2738
        %v2771 = vadd.f32 %v2769, 0.11098505
        %v2772 = vadd.f32 %v2770, 0.11098505
        %v2773 = vmul.f32 %v2771, %v2737
        %v2774 = vmul.f32 %v2772, %v2738
        %v2775 = vadd.f32 %v2773, 0.49746925
        %v2776 = vadd.f32 %v2774, 0.49746925
        %v2777 = vmul.f32 %v2775, %v2737
        %v2778 = vmul.f32 %v2776, %v2738
        %v2779 = vadd.f32 %v2777, 1.0
        %v2780 = vadd.f32 %v2778, 1.0
        %v2781 = vrcp.pop %v2779
        %v2782 = vrcp.pop %v2780
        %v2783 = vmul.f32 %v2755, %v2781
        %v2784 = vmul.f32 %v2756, %v2782
        %v2785 = vadd.f32 %v2783, 1.0
        %v2786 = vadd.f32 %v2784, 1.0
        %v2787 = vmul.f32 %v2729, %v2785
        %v2788 = vmul.f32 %v2730, %v2786
        %v2789 = vpack.c.bf16 %v2788, %v2787
        %v2791 = vlaneseq
        %v2792 = vshrl.u32 %v2791, 7
        %v2793 = vsub.s32 0, %v2792
        %v2794 = vrot.slane %v2632, %v2793
        %v2812 = vunpack.c.l.b16 %v2616
        %v2813 = vunpack.c.l.b16 %v2617
        %v2814 = vunpack.c.l.b16 %v2618
        %v2815 = vunpack.c.l.b16 %v2619
        %v2816 = vunpack.c.l.b16 %v2620
        %v2817 = vunpack.c.l.b16 %v2621
        %v2818 = vunpack.c.l.b16 %v2622
        %v2819 = vunpack.c.l.b16 %v2623
        %v2820 = vunpack.c.l.b16 %v2624
        %v2821 = vunpack.c.l.b16 %v2625
        %v2822 = vunpack.c.l.b16 %v2626
        %v2823 = vunpack.c.l.b16 %v2627
        %v2824 = vunpack.c.l.b16 %v2628
        %v2825 = vunpack.c.l.b16 %v2629
        %v2826 = vunpack.c.l.b16 %v2630
        %v2827 = vunpack.c.l.b16 %v2631
        %v2828 = vpack.c.b16 %v2813, %v2812
        %v2829 = vpack.c.b16 %v2815, %v2814
        %v2830 = vpack.c.b16 %v2817, %v2816
        %v2831 = vpack.c.b16 %v2819, %v2818
        %v2832 = vpack.c.b16 %v2821, %v2820
        %v2833 = vpack.c.b16 %v2823, %v2822
        %v2834 = vpack.c.b16 %v2825, %v2824
        %v2835 = vpack.c.b16 %v2827, %v2826
        %2844 = vmatprep.subr.bf16.mxu0 0
        %2845 = vmatpush1.bf16.msra.mxu0 %v2828
        %2846 = vmatprep.subr.bf16.mxu0 0
        %2847 = vmatpush1.bf16.msra.mxu0 %v2829
        %2848 = vmatprep.subr.bf16.mxu0 0
        %2849 = vmatpush1.bf16.msra.mxu0 %v2830
        %2850 = vmatprep.subr.bf16.mxu0 0
        %2851 = vmatpush1.bf16.msra.mxu0 %v2831
        %2852 = vmatprep.subr.bf16.mxu0 0
        %2853 = vmatpush1.bf16.msra.mxu0 %v2832
        %2854 = vmatprep.subr.bf16.mxu0 0
        %2855 = vmatpush1.bf16.msra.mxu0 %v2833
        %2856 = vmatprep.subr.bf16.mxu0 0
        %2857 = vmatpush1.bf16.msra.mxu0 %v2834
        %2858 = vmatprep.subr.bf16.mxu0 0
        %2859 = vmatpush1.bf16.msra.mxu0 %v2835
        %2860 = vmatprep.subr.bf16.mxu0 0
        %2861 = vmatpush1.bf16.msra.mxu0 0
        %2862 = vmatprep.subr.bf16.mxu0 0
        %2863 = vmatpush1.bf16.msra.mxu0 0
        %2864 = vmatprep.subr.bf16.mxu0 0
        %2865 = vmatpush1.bf16.msra.mxu0 0
        %2866 = vmatprep.subr.bf16.mxu0 0
        %2867 = vmatpush1.bf16.msra.mxu0 0
        %2868 = vmatprep.subr.bf16.mxu0 0
        %2869 = vmatpush1.bf16.msra.mxu0 0
        %2870 = vmatprep.subr.bf16.mxu0 0
        %2871 = vmatpush1.bf16.msra.mxu0 0
        %2872 = vmatprep.subr.bf16.mxu0 0
        %2873 = vmatpush1.bf16.msra.mxu0 0
        %2874 = vmatprep.subr.bf16.mxu0 0
        %2875 = vmatpush1.bf16.msra.mxu0 0
        %2876 = vmatprep.mubr.bf16.mxu0 0
        %2877 = vmatmul.mubr.bf16.gmra.mrb[0].mxu0 %v2789
        %v2878 = vpop.f32.mrb[0].mxu0
        %v2879 = vadd.f32 %v2794, %v2878
        %v2880 = vpop.f32.mrb[0].mxu0
        %v2881 = vpop.f32.mrb[0].mxu0
        %v2882 = vadd.f32 %v2794, %v2881
        %v2883 = vpop.f32.mrb[0].mxu0
        %2884 = vdwg.mxu0
        %v2885 = vadd.f32 %v2549, %v2879
        %v2886 = vadd.f32 %v2550, %v2882
        %2887 = vst [vmem:[#allocation2] sm:$0xff] %v2885
        %2888 = vst [vmem:[#allocation2 + $0x8] sm:$0x1] %v2886
        %p2889 = scmp.eq.s32.totalorder %s40, 1
        // Predicated region
        $region101: #{tpu_custom_call.1} parent=79 // pred_check
          %p2890 = pneg %p2889
        $region102: #{tpu_custom_call.1} parent=79 // pred_check_branch
          %2892 = sbr.rel (%p2890) target = $region104
        $region103: #{tpu_custom_call.1} parent=79 // pred_region
          %v2893 = vld [vmem:[%s13] sm:$0x1]
          %v2894 = vld [vmem:[%s14] sm:$0x1]
          %2895 = vadd.xlane.f32.xlu0 %v2885
          %v2896 = vpop.xlane.xlu0 %2895
          %v2897 = vsel %vm794, %v2886, 0.0
          %2898 = vadd.xlane.f32.xlu0 %v2897
          %v2899 = vpop.xlane.xlu0 %2898
          %v2900 = vmul.f32 %v2896, 0.03125
          %v2901 = vmul.f32 %v2899, 0.03125
          %v2902 = vmul.f32 %v2885, %v2885
          %v2903 = vmul.f32 %v2886, %v2886
          %2904 = vadd.xlane.f32.xlu0 %v2902
          %v2905 = vpop.xlane.xlu0 %2904
          %v2906 = vsel %vm794, %v2903, 0.0
          %2907 = vadd.xlane.f32.xlu0 %v2906
          %v2908 = vpop.xlane.xlu0 %2907
          %v2909 = vmul.f32 %v2905, 0.03125
          %v2910 = vmul.f32 %v2908, 0.03125
          %v2911 = vmul.f32 %v2900, %v2900
          %v2912 = vmul.f32 %v2901, %v2901
          %v2913 = vsub.f32 %v2909, %v2911
          %v2914 = vsub.f32 %v2910, %v2912
          %v2915 = vmax.f32 %v2913, 0.0
          %v2916 = vmax.f32 %v2914, 0.0
          %v2917 = vsub.f32 %v2885, %v2900
          %v2918 = vsub.f32 %v2886, %v2901
          %v2919 = vadd.f32 %v2915, 1e-06
          %v2920 = vadd.f32 %v2916, 1e-06
          %v2921 = vrsqrt.pop %v2919
          %v2922 = vrsqrt.pop %v2920
          %v2923 = vmul.f32 %v2917, %v2921
          %v2924 = vmul.f32 %v2918, %v2922
          %v2926 = vlaneseq
          %v2927 = vshrl.u32 %v2926, 7
          %v2928 = vsub.s32 0, %v2927
          %v2929 = vrot.slane %v2893, %v2928
          %v2931 = vmul.f32 %v2923, %v2929
          %v2932 = vmul.f32 %v2924, %v2929
          %v2934 = vlaneseq
          %v2935 = vshrl.u32 %v2934, 7
          %v2936 = vsub.s32 0, %v2935
          %v2937 = vrot.slane %v2894, %v2936
          %v2939 = vadd.f32 %v2931, %v2937
          %v2940 = vadd.f32 %v2932, %v2937
          %2941 = vst [vmem:[%s778] sm:$0xff] %v2939
          %2942 = vst [vmem:[%s778 + $0x8] sm:$0x1] %v2940
        $region104: #{tpu_custom_call.1} parent=79 // pred_fallthru
          _
        %p2943 = scmp.lt.s32.totalorder %s39, 1
        %s2944 = scalar_select %p2943, %s39, 1
        %s2945 = smul.addr %s2944, 2
        %s2946 = smul.addr %s2945, 8
        %s2947 = scalar_lea.vmem %s15, %s2946
        // Predicated region
        $region105: #{tpu_custom_call.1} parent=79 // pred_check
          %p2948 = pneg %p445
        $region106: #{tpu_custom_call.1} parent=79 // pred_check_branch
          %2950 = sbr.rel (%p2948) target = $region108
        $region107: #{tpu_custom_call.1} parent=79 // pred_region
          _
        $region108: #{tpu_custom_call.1} parent=79 // pred_fallthru
          _
      $region80: #{tpu_custom_call.1} parent=5 // pred_fallthru
        _
      %p2951 = scmp.le.s32.totalorder 2, %s30
      // Predicated region
      $region109: #{tpu_custom_call.1} parent=5 // pred_check
        %p2952 = pneg %p2951
      $region110: #{tpu_custom_call.1} parent=5 // pred_check_branch
        %2954 = sbr.rel (%p2952) target = $region112
      $region111: #{tpu_custom_call.1} parent=5 // pred_region
        %s2955 = ssub.s32 %s30, 2
        // Predicated region
        $region113: #{tpu_custom_call.1} parent=111 // pred_check
          %p2956 = pneg %p451
        $region114: #{tpu_custom_call.1} parent=111 // pred_check_branch
          %2958 = sbr.rel (%p2956) target = $region116
        $region115: #{tpu_custom_call.1} parent=111 // pred_region
          %p2959 = scmp.lt.s32.totalorder %s41, 1
          %s2960 = scalar_select %p2959, %s41, 1
          %s2961 = smul.addr %s2960, 2
          %s2962 = smul.addr %s2961, 8
          %s2963 = scalar_lea.vmem %s15, %s2962
        $region116: #{tpu_custom_call.1} parent=111 // pred_fallthru
          _
      $region112: #{tpu_custom_call.1} parent=5 // pred_fallthru
        _
    $region6: #{tpu_custom_call.1} parent=1 // loop_footer
      %s34 = sadd.s32 1, %s30
    $region7: #{tpu_custom_call.1} parent=1 // loop_footer_branch
      %29 = sbr.rel target = $region3
    $region8: #{tpu_custom_call.1} parent=1 // loop_exit
      _
    %2964 = vsyncpa [#allocation4], 1
    %s2965 = scalar_lea.sflag [#allocation4], 1
    %2966 = vsyncpa %s2965, 1
    %2967 = vsyncpa [#allocation6], 1
    %s2968 = scalar_lea.sflag [#allocation6], 1
    %2969 = vsyncpa %s2968, 1
    %2970 = vsyncpa [#allocation9], 1
    %s2971 = scalar_lea.sflag [#allocation9], 1
    %2972 = vsyncpa %s2971, 1

// kernel: tpu_custom_call.1
$region0: #{tpu_custom_call.1}
  #allocation0 [shape = 'u32[]', space=smem, size = 0x4, offset = 0x4, fixed_abs, tag = 'smem constant byte address 0x4 - core index']
  #allocation1 [shape = 'u32[144,128]{1,0:T(1,128)}', space=vmem, size = 0x12000, scoped, tag = 'internal scratch']
  #allocation2 [shape = 'f32[9,128]{1,0:T(8,128)}', space=vmem, size = 0x2000, scoped, tag = 'scratch operand']
  %s0 = inlined_call_operand.vmem [shape: f32[2,9,128], index: 0, kind: input, shape index: {}]
  %s1 = inlined_call_operand.vmem [shape: f32[2,1,128], index: 1, kind: input, shape index: {}]
  %s2 = inlined_call_operand.vmem [shape: f32[2,1,128], index: 2, kind: input, shape index: {}]
  %s3 = inlined_call_operand.hbm [shape: bf16[2,128,1536], index: 3, kind: input, shape index: {}]
  %s4 = inlined_call_operand.vmem [shape: f32[2,1,1536], index: 4, kind: input, shape index: {}]
  %s5 = inlined_call_operand.hbm [shape: bf16[2,512,128], index: 5, kind: input, shape index: {}]
  %s6 = inlined_call_operand.vmem [shape: f32[2,1,128], index: 6, kind: input, shape index: {}]
  %s7 = inlined_call_operand.vmem [shape: f32[2,1,128], index: 7, kind: input, shape index: {}]
  %s8 = inlined_call_operand.vmem [shape: f32[2,1,128], index: 8, kind: input, shape index: {}]
  %s9 = inlined_call_operand.hbm [shape: bf16[2,128,128], index: 9, kind: input, shape index: {}]
  %s10 = inlined_call_operand.vmem [shape: f32[2,1,128], index: 10, kind: input, shape index: {}]
  %s11 = inlined_call_operand.hbm [shape: bf16[2,128,128], index: 11, kind: input, shape index: {}]
  %s12 = inlined_call_operand.vmem [shape: f32[2,1,128], index: 12, kind: input, shape index: {}]
  %s13 = inlined_call_operand.vmem [shape: f32[1,128], index: 13, kind: input, shape index: {}]
  %s14 = inlined_call_operand.vmem [shape: f32[1,128], index: 14, kind: input, shape index: {}]
  %s15 = inlined_call_operand.vmem [shape: f32[2,9,128], index: 15, kind: output, shape index: {}]
  %s16 = sld [smem:[#allocation0]]
  $region117: #{tpu_custom_call.1} parent=0
    _
  %s18 = ssub.s32 1, %s16
  %s19 = scalar_select 0, %s18, %s16
  $region1: #{tpu_custom_call.1} parent=0
    #allocation3 [shape = 'u8[786432]{0}', space=vmem, size = 0xc0000, scoped, tag = 'input window, operand 3']
    #allocation4 [shape = 's32[2]{0}', space=sflag, size = 0x8, scoped, tag = 'scoped memory for tpu_custom_call.1']
    #allocation5 [shape = 'u8[262144]{0}', space=vmem, size = 0x40000, scoped, tag = 'input window, operand 5']
    #allocation6 [shape = 's32[2]{0}', space=sflag, size = 0x8, scoped, tag = 'scoped memory for tpu_custom_call.1']
    #allocation7 [shape = 'u8[65536]{0}', space=vmem, size = 0x10000, scoped, tag = 'input window, operand 9']
    #allocation8 [shape = 'u8[65536]{0}', space=vmem, size = 0x10000, scoped, tag = 'input window, operand 11']
    #allocation9 [shape = 's32[2]{0}', space=sflag, size = 0x8, scoped, tag = 'scoped memory for tpu_custom_call.1']
    %20 = vsyncpa [#allocation4], 0
    %s21 = scalar_lea.sflag [#allocation4], 1
    %22 = vsyncpa %s21, 0
    %23 = vsyncpa [#allocation6], 0
    %s24 = scalar_lea.sflag [#allocation6], 1
    %25 = vsyncpa %s24, 0
    %26 = vsyncpa [#allocation9], 0
    %s27 = scalar_lea.sflag [#allocation9], 1
    %28 = vsyncpa %s27, 0
    loop: start=0, step=1, limit=6
    $region2: #{tpu_custom_call.1} parent=1 // loop_pre_header
      _
    $region3: #{tpu_custom_call.1} parent=1 // loop_header
      %s30 = sphi 0, %s34
      %p31 = scmp.ge.s32.totalorder %s30, 6
      %s37 = sphi 0, %s49
      %s38 = sphi 0, %s45
      %s39 = sphi 0, %s37
      %s40 = sphi 0, %s38
      %s41 = sphi 0, %s39
      %s42 = sphi 0, %s40
      %s52 = sphi 0, %s54
      %s55 = sphi 0, %s52
      %s56 = sphi 0, %s55
      %s72 = sphi 0, %s56
      %s78 = sphi 0, %s80
      %s81 = sphi 0, %s78
      %s82 = sphi 0, %s81
      %s98 = sphi 0, %s82
      %s104 = sphi 0, %s106
      %s107 = sphi 0, %s104
      %s108 = sphi 0, %s107
      %s124 = sphi 0, %s108
      %s130 = sphi 0, %s132
      %s133 = sphi 0, %s130
      %s134 = sphi 0, %s133
      %s150 = sphi 0, %s134
      %s156 = sphi 0, %s158
      %s159 = sphi 0, %s156
      %s160 = sphi 0, %s159
      %s176 = sphi 0, %s160
      %s182 = sphi 0, %s184
      %s185 = sphi 0, %s182
      %s186 = sphi 0, %s185
      %s202 = sphi 0, %s186
      %s208 = sphi 0, %s210
      %s211 = sphi 0, %s208
      %s212 = sphi 0, %s211
      %s228 = sphi 0, %s212
      %s234 = sphi 0, %s236
      %s237 = sphi 0, %s234
      %s238 = sphi 0, %s237
      %s254 = sphi 0, %s238
      %s260 = sphi 0, %s262
      %s263 = sphi 0, %s260
      %s264 = sphi 0, %s263
      %s280 = sphi 0, %s264
      %s286 = sphi 0, %s288
      %s289 = sphi 0, %s286
      %s290 = sphi 0, %s289
      %s306 = sphi 0, %s290
      %s312 = sphi 0, %s314
      %s315 = sphi 0, %s312
      %s316 = sphi 0, %s315
      %s332 = sphi 0, %s316
      %s338 = sphi 0, %s340
      %s341 = sphi 0, %s338
      %s342 = sphi 0, %s341
      %s358 = sphi 0, %s342
      %s364 = sphi 0, %s366
      %s367 = sphi 0, %s364
      %s368 = sphi 0, %s367
      %s384 = sphi 0, %s368
      %s388 = sphi 0, %s388
      %s390 = sphi 0, %s388
      %s391 = sphi 0, %s390
      %s405 = sphi 0, %s391
      %s409 = sphi 0, %s409
      %s411 = sphi 0, %s409
      %s412 = sphi 0, %s411
      %s426 = sphi 0, %s412
      %s432 = sphi 0, %s434
      %s435 = sphi 0, %s432
      %s436 = sphi 0, %s435
      %s452 = sphi 0, %s436
    $region4: #{tpu_custom_call.1} parent=1 // loop_header_branch
      %33 = sbr.rel (%p31) target = $region8
    $region5: #{tpu_custom_call.1} parent=1 // loop_body
      %s35 = ssub.s32 %s30, 1
      %s36 = ssub.s32 %s30, 2
      %s43 = sadd.s32 1, %s38
      %p44 = scmp.ge.s32.totalorder %s43, 2
      %s45 = scalar_select %p44, 0, %s43
      %s46 = sadd.s32 1, %s37
      %s47 = scalar_select %p44, %s46, %s37
      %p48 = scmp.ge.s32.totalorder %s47, 2
      %s49 = scalar_select %p48, 0, %s47
      %s50 = ssub.s32 %s37, %s49
      %p51 = scmp.eq.s32.totalorder %s50, 0
      %s53 = sadd.s32 %s52, 1
      %s54 = scalar_select %p51, %s52, %s53
      %p57 = pneg %p51
      %p58 = scmp.eq.s32.totalorder %s30, 3
      %p59 = por %p57, %p58
      %p60 = scmp.ne.s32.totalorder %s52, %s55
      %p61 = scmp.eq.s32.totalorder %s30, 0
      %p62 = por %p60, %p61
      %p63 = scmp.ne.s32.totalorder %s52, %s55
      %p64 = scmp.eq.s32.totalorder %s35, 3
      %p65 = por %p63, %p64
      %p66 = scmp.ne.s32.totalorder %s55, %s56
      %p67 = scmp.eq.s32.totalorder %s35, 0
      %p68 = por %p66, %p67
      %p69 = scmp.ne.s32.totalorder %s55, %s56
      %p70 = scmp.eq.s32.totalorder %s36, 3
      %p71 = por %p69, %p70
      %p73 = scmp.ne.s32.totalorder %s56, %s72
      %p74 = scmp.eq.s32.totalorder %s36, 0
      %p75 = por %p73, %p74
      %s76 = ssub.s32 %s38, %s45
      %p77 = scmp.eq.s32.totalorder %s76, 0
      %s79 = sadd.s32 %s78, 1
      %s80 = scalar_select %p77, %s78, %s79
      %p83 = pneg %p77
      %p84 = scmp.eq.s32.totalorder %s30, 3
      %p85 = por %p83, %p84
      %p86 = scmp.ne.s32.totalorder %s78, %s81
      %p87 = scmp.eq.s32.totalorder %s30, 0
      %p88 = por %p86, %p87
      %p89 = scmp.ne.s32.totalorder %s78, %s81
      %p90 = scmp.eq.s32.totalorder %s35, 3
      %p91 = por %p89, %p90
      %p92 = scmp.ne.s32.totalorder %s81, %s82
      %p93 = scmp.eq.s32.totalorder %s35, 0
      %p94 = por %p92, %p93
      %p95 = scmp.ne.s32.totalorder %s81, %s82
      %p96 = scmp.eq.s32.totalorder %s36, 3
      %p97 = por %p95, %p96
      %p99 = scmp.ne.s32.totalorder %s82, %s98
      %p100 = scmp.eq.s32.totalorder %s36, 0
      %p101 = por %p99, %p100
      %s102 = ssub.s32 %s38, %s45
      %p103 = scmp.eq.s32.totalorder %s102, 0
      %s105 = sadd.s32 %s104, 1
      %s106 = scalar_select %p103, %s104, %s105
      %p109 = pneg %p103
      %p110 = scmp.eq.s32.totalorder %s30, 3
      %p111 = por %p109, %p110
      %p112 = scmp.ne.s32.totalorder %s104, %s107
      %p113 = scmp.eq.s32.totalorder %s30, 0
      %p114 = por %p112, %p113
      %p115 = scmp.ne.s32.totalorder %s104, %s107
      %p116 = scmp.eq.s32.totalorder %s35, 3
      %p117 = por %p115, %p116
      %p118 = scmp.ne.s32.totalorder %s107, %s108
      %p119 = scmp.eq.s32.totalorder %s35, 0
      %p120 = por %p118, %p119
      %p121 = scmp.ne.s32.totalorder %s107, %s108
      %p122 = scmp.eq.s32.totalorder %s36, 3
      %p123 = por %p121, %p122
      %p125 = scmp.ne.s32.totalorder %s108, %s124
      %p126 = scmp.eq.s32.totalorder %s36, 0
      %p127 = por %p125, %p126
      %s128 = ssub.s32 %s38, %s45
      %p129 = scmp.eq.s32.totalorder %s128, 0
      %s131 = sadd.s32 %s130, 1
      %s132 = scalar_select %p129, %s130, %s131
      %p135 = pneg %p129
      %p136 = scmp.eq.s32.totalorder %s30, 3
      %p137 = por %p135, %p136
      %p138 = scmp.ne.s32.totalorder %s130, %s133
      %p139 = scmp.eq.s32.totalorder %s30, 0
      %p140 = por %p138, %p139
      %p141 = scmp.ne.s32.totalorder %s130, %s133
      %p142 = scmp.eq.s32.totalorder %s35, 3
      %p143 = por %p141, %p142
      %p144 = scmp.ne.s32.totalorder %s133, %s134
      %p145 = scmp.eq.s32.totalorder %s35, 0
      %p146 = por %p144, %p145
      %p147 = scmp.ne.s32.totalorder %s133, %s134
      %p148 = scmp.eq.s32.totalorder %s36, 3
      %p149 = por %p147, %p148
      %p151 = scmp.ne.s32.totalorder %s134, %s150
      %p152 = scmp.eq.s32.totalorder %s36, 0
      %p153 = por %p151, %p152
      %s154 = ssub.s32 %s38, %s45
      %p155 = scmp.eq.s32.totalorder %s154, 0
      %s157 = sadd.s32 %s156, 1
      %s158 = scalar_select %p155, %s156, %s157
      %p161 = pneg %p155
      %p162 = scmp.eq.s32.totalorder %s30, 3
      %p163 = por %p161, %p162
      %p164 = scmp.ne.s32.totalorder %s156, %s159
      %p165 = scmp.eq.s32.totalorder %s30, 0
      %p166 = por %p164, %p165
      %p167 = scmp.ne.s32.totalorder %s156, %s159
      %p168 = scmp.eq.s32.totalorder %s35, 3
      %p169 = por %p167, %p168
      %p170 = scmp.ne.s32.totalorder %s159, %s160
      %p171 = scmp.eq.s32.totalorder %s35, 0
      %p172 = por %p170, %p171
      %p173 = scmp.ne.s32.totalorder %s159, %s160
      %p174 = scmp.eq.s32.totalorder %s36, 3
      %p175 = por %p173, %p174
      %p177 = scmp.ne.s32.totalorder %s160, %s176
      %p178 = scmp.eq.s32.totalorder %s36, 0
      %p179 = por %p177, %p178
      %s180 = ssub.s32 %s38, %s45
      %p181 = scmp.eq.s32.totalorder %s180, 0
      %s183 = sadd.s32 %s182, 1
      %s184 = scalar_select %p181, %s182, %s183
      %p187 = pneg %p181
      %p188 = scmp.eq.s32.totalorder %s30, 3
      %p189 = por %p187, %p188
      %p190 = scmp.ne.s32.totalorder %s182, %s185
      %p191 = scmp.eq.s32.totalorder %s30, 0
      %p192 = por %p190, %p191
      %p193 = scmp.ne.s32.totalorder %s182, %s185
      %p194 = scmp.eq.s32.totalorder %s35, 3
      %p195 = por %p193, %p194
      %p196 = scmp.ne.s32.totalorder %s185, %s186
      %p197 = scmp.eq.s32.totalorder %s35, 0
      %p198 = por %p196, %p197
      %p199 = scmp.ne.s32.totalorder %s185, %s186
      %p200 = scmp.eq.s32.totalorder %s36, 3
      %p201 = por %p199, %p200
      %p203 = scmp.ne.s32.totalorder %s186, %s202
      %p204 = scmp.eq.s32.totalorder %s36, 0
      %p205 = por %p203, %p204
      %s206 = ssub.s32 %s38, %s45
      %p207 = scmp.eq.s32.totalorder %s206, 0
      %s209 = sadd.s32 %s208, 1
      %s210 = scalar_select %p207, %s208, %s209
      %p213 = pneg %p207
      %p214 = scmp.eq.s32.totalorder %s30, 3
      %p215 = por %p213, %p214
      %p216 = scmp.ne.s32.totalorder %s208, %s211
      %p217 = scmp.eq.s32.totalorder %s30, 0
      %p218 = por %p216, %p217
      %p219 = scmp.ne.s32.totalorder %s208, %s211
      %p220 = scmp.eq.s32.totalorder %s35, 3
      %p221 = por %p219, %p220
      %p222 = scmp.ne.s32.totalorder %s211, %s212
      %p223 = scmp.eq.s32.totalorder %s35, 0
      %p224 = por %p222, %p223
      %p225 = scmp.ne.s32.totalorder %s211, %s212
      %p226 = scmp.eq.s32.totalorder %s36, 3
      %p227 = por %p225, %p226
      %p229 = scmp.ne.s32.totalorder %s212, %s228
      %p230 = scmp.eq.s32.totalorder %s36, 0
      %p231 = por %p229, %p230
      %s232 = ssub.s32 %s38, %s45
      %p233 = scmp.eq.s32.totalorder %s232, 0
      %s235 = sadd.s32 %s234, 1
      %s236 = scalar_select %p233, %s234, %s235
      %p239 = pneg %p233
      %p240 = scmp.eq.s32.totalorder %s30, 3
      %p241 = por %p239, %p240
      %p242 = scmp.ne.s32.totalorder %s234, %s237
      %p243 = scmp.eq.s32.totalorder %s30, 0
      %p244 = por %p242, %p243
      %p245 = scmp.ne.s32.totalorder %s234, %s237
      %p246 = scmp.eq.s32.totalorder %s35, 3
      %p247 = por %p245, %p246
      %p248 = scmp.ne.s32.totalorder %s237, %s238
      %p249 = scmp.eq.s32.totalorder %s35, 0
      %p250 = por %p248, %p249
      %p251 = scmp.ne.s32.totalorder %s237, %s238
      %p252 = scmp.eq.s32.totalorder %s36, 3
      %p253 = por %p251, %p252
      %p255 = scmp.ne.s32.totalorder %s238, %s254
      %p256 = scmp.eq.s32.totalorder %s36, 0
      %p257 = por %p255, %p256
      %s258 = ssub.s32 %s38, %s45
      %p259 = scmp.eq.s32.totalorder %s258, 0
      %s261 = sadd.s32 %s260, 1
      %s262 = scalar_select %p259, %s260, %s261
      %p265 = pneg %p259
      %p266 = scmp.eq.s32.totalorder %s30, 3
      %p267 = por %p265, %p266
      %p268 = scmp.ne.s32.totalorder %s260, %s263
      %p269 = scmp.eq.s32.totalorder %s30, 0
      %p270 = por %p268, %p269
      %p271 = scmp.ne.s32.totalorder %s260, %s263
      %p272 = scmp.eq.s32.totalorder %s35, 3
      %p273 = por %p271, %p272
      %p274 = scmp.ne.s32.totalorder %s263, %s264
      %p275 = scmp.eq.s32.totalorder %s35, 0
      %p276 = por %p274, %p275
      %p277 = scmp.ne.s32.totalorder %s263, %s264
      %p278 = scmp.eq.s32.totalorder %s36, 3
      %p279 = por %p277, %p278
      %p281 = scmp.ne.s32.totalorder %s264, %s280
      %p282 = scmp.eq.s32.totalorder %s36, 0
      %p283 = por %p281, %p282
      %s284 = ssub.s32 %s38, %s45
      %p285 = scmp.eq.s32.totalorder %s284, 0
      %s287 = sadd.s32 %s286, 1
      %s288 = scalar_select %p285, %s286, %s287
      %p291 = pneg %p285
      %p292 = scmp.eq.s32.totalorder %s30, 3
      %p293 = por %p291, %p292
      %p294 = scmp.ne.s32.totalorder %s286, %s289
      %p295 = scmp.eq.s32.totalorder %s30, 0
      %p296 = por %p294, %p295
      %p297 = scmp.ne.s32.totalorder %s286, %s289
      %p298 = scmp.eq.s32.totalorder %s35, 3
      %p299 = por %p297, %p298
      %p300 = scmp.ne.s32.totalorder %s289, %s290
      %p301 = scmp.eq.s32.totalorder %s35, 0
      %p302 = por %p300, %p301
      %p303 = scmp.ne.s32.totalorder %s289, %s290
      %p304 = scmp.eq.s32.totalorder %s36, 3
      %p305 = por %p303, %p304
      %p307 = scmp.ne.s32.totalorder %s290, %s306
      %p308 = scmp.eq.s32.totalorder %s36, 0
      %p309 = por %p307, %p308
      %s310 = ssub.s32 %s38, %s45
      %p311 = scmp.eq.s32.totalorder %s310, 0
      %s313 = sadd.s32 %s312, 1
      %s314 = scalar_select %p311, %s312, %s313
      %p317 = pneg %p311
      %p318 = scmp.eq.s32.totalorder %s30, 3
      %p319 = por %p317, %p318
      %p320 = scmp.ne.s32.totalorder %s312, %s315
      %p321 = scmp.eq.s32.totalorder %s30, 0
      %p322 = por %p320, %p321
      %p323 = scmp.ne.s32.totalorder %s312, %s315
      %p324 = scmp.eq.s32.totalorder %s35, 3
      %p325 = por %p323, %p324
      %p326 = scmp.ne.s32.totalorder %s315, %s316
      %p327 = scmp.eq.s32.totalorder %s35, 0
      %p328 = por %p326, %p327
      %p329 = scmp.ne.s32.totalorder %s315, %s316
      %p330 = scmp.eq.s32.totalorder %s36, 3
      %p331 = por %p329, %p330
      %p333 = scmp.ne.s32.totalorder %s316, %s332
      %p334 = scmp.eq.s32.totalorder %s36, 0
      %p335 = por %p333, %p334
      %s336 = ssub.s32 %s38, %s45
      %p337 = scmp.eq.s32.totalorder %s336, 0
      %s339 = sadd.s32 %s338, 1
      %s340 = scalar_select %p337, %s338, %s339
      %p343 = pneg %p337
      %p344 = scmp.eq.s32.totalorder %s30, 3
      %p345 = por %p343, %p344
      %p346 = scmp.ne.s32.totalorder %s338, %s341
      %p347 = scmp.eq.s32.totalorder %s30, 0
      %p348 = por %p346, %p347
      %p349 = scmp.ne.s32.totalorder %s338, %s341
      %p350 = scmp.eq.s32.totalorder %s35, 3
      %p351 = por %p349, %p350
      %p352 = scmp.ne.s32.totalorder %s341, %s342
      %p353 = scmp.eq.s32.totalorder %s35, 0
      %p354 = por %p352, %p353
      %p355 = scmp.ne.s32.totalorder %s341, %s342
      %p356 = scmp.eq.s32.totalorder %s36, 3
      %p357 = por %p355, %p356
      %p359 = scmp.ne.s32.totalorder %s342, %s358
      %p360 = scmp.eq.s32.totalorder %s36, 0
      %p361 = por %p359, %p360
      %s362 = ssub.s32 %s38, %s45
      %p363 = scmp.eq.s32.totalorder %s362, 0
      %s365 = sadd.s32 %s364, 1
      %s366 = scalar_select %p363, %s364, %s365
      %p369 = pneg %p363
      %p370 = scmp.eq.s32.totalorder %s30, 3
      %p371 = por %p369, %p370
      %p372 = scmp.ne.s32.totalorder %s364, %s367
      %p373 = scmp.eq.s32.totalorder %s30, 0
      %p374 = por %p372, %p373
      %p375 = scmp.ne.s32.totalorder %s364, %s367
      %p376 = scmp.eq.s32.totalorder %s35, 3
      %p377 = por %p375, %p376
      %p378 = scmp.ne.s32.totalorder %s367, %s368
      %p379 = scmp.eq.s32.totalorder %s35, 0
      %p380 = por %p378, %p379
      %p381 = scmp.ne.s32.totalorder %s367, %s368
      %p382 = scmp.eq.s32.totalorder %s36, 3
      %p383 = por %p381, %p382
      %p385 = scmp.ne.s32.totalorder %s368, %s384
      %p386 = scmp.eq.s32.totalorder %s36, 0
      %p387 = por %p385, %p386
      %s389 = sadd.s32 %s388, 1
      %p392 = scmp.eq.s32.totalorder %s30, 3
      %p393 = scmp.ne.s32.totalorder %s388, %s390
      %p394 = scmp.eq.s32.totalorder %s30, 0
      %p395 = por %p393, %p394
      %p396 = scmp.ne.s32.totalorder %s388, %s390
      %p397 = scmp.eq.s32.totalorder %s35, 3
      %p398 = por %p396, %p397
      %p399 = scmp.ne.s32.totalorder %s390, %s391
      %p400 = scmp.eq.s32.totalorder %s35, 0
      %p401 = por %p399, %p400
      %p402 = scmp.ne.s32.totalorder %s390, %s391
      %p403 = scmp.eq.s32.totalorder %s36, 3
      %p404 = por %p402, %p403
      %p406 = scmp.ne.s32.totalorder %s391, %s405
      %p407 = scmp.eq.s32.totalorder %s36, 0
      %p408 = por %p406, %p407
      %s410 = sadd.s32 %s409, 1
      %p413 = scmp.eq.s32.totalorder %s30, 3
      %p414 = scmp.ne.s32.totalorder %s409, %s411
      %p415 = scmp.eq.s32.totalorder %s30, 0
      %p416 = por %p414, %p415
      %p417 = scmp.ne.s32.totalorder %s409, %s411
      %p418 = scmp.eq.s32.totalorder %s35, 3
      %p419 = por %p417, %p418
      %p420 = scmp.ne.s32.totalorder %s411, %s412
      %p421 = scmp.eq.s32.totalorder %s35, 0
      %p422 = por %p420, %p421
      %p423 = scmp.ne.s32.totalorder %s411, %s412
      %p424 = scmp.eq.s32.totalorder %s36, 3
      %p425 = por %p423, %p424
      %p427 = scmp.ne.s32.totalorder %s412, %s426
      %p428 = scmp.eq.s32.totalorder %s36, 0
      %p429 = por %p427, %p428
      %s430 = ssub.s32 %s37, %s49
      %p431 = scmp.eq.s32.totalorder %s430, 0
      %s433 = sadd.s32 %s432, 1
      %s434 = scalar_select %p431, %s432, %s433
      %p437 = pneg %p431
      %p438 = scmp.eq.s32.totalorder %s30, 3
      %p439 = por %p437, %p438
      %p440 = scmp.ne.s32.totalorder %s432, %s435
      %p441 = scmp.eq.s32.totalorder %s30, 0
      %p442 = por %p440, %p441
      %p443 = scmp.ne.s32.totalorder %s432, %s435
      %p444 = scmp.eq.s32.totalorder %s35, 3
      %p445 = por %p443, %p444
      %p446 = scmp.ne.s32.totalorder %s435, %s436
      %p447 = scmp.eq.s32.totalorder %s35, 0
      %p448 = por %p446, %p447
      %p449 = scmp.ne.s32.totalorder %s435, %s436
      %p450 = scmp.eq.s32.totalorder %s36, 3
      %p451 = por %p449, %p450
      %p453 = scmp.ne.s32.totalorder %s436, %s452
      %p454 = scmp.eq.s32.totalorder %s36, 0
      %p455 = por %p453, %p454
      %p456 = scmp.le.s32.totalorder 1, %s30
      %p457 = scmp.lt.s32.totalorder %s30, 5
      %p458 = pnand %p456, %p457
      %p459 = pneg %p458
      // Predicated region
      $region9: #{tpu_custom_call.1} parent=5 // pred_check
        _
      $region10: #{tpu_custom_call.1} parent=5 // pred_check_branch
        %461 = sbr.rel (%p458) target = $region12
      $region11: #{tpu_custom_call.1} parent=5 // pred_region
        %s462 = ssub.s32 %s30, 1
        // Predicated region
        $region13: #{tpu_custom_call.1} parent=11 // pred_check
          %p463 = pneg %p401
        $region14: #{tpu_custom_call.1} parent=11 // pred_check_branch
          %465 = sbr.rel (%p463) target = $region16
        $region15: #{tpu_custom_call.1} parent=11 // pred_region
          _
        $region16: #{tpu_custom_call.1} parent=11 // pred_fallthru
          _
        // Predicated region
        $region17: #{tpu_custom_call.1} parent=11 // pred_check
          %p466 = pneg %p422
        $region18: #{tpu_custom_call.1} parent=11 // pred_check_branch
          %468 = sbr.rel (%p466) target = $region20
        $region19: #{tpu_custom_call.1} parent=11 // pred_region
          _
        $region20: #{tpu_custom_call.1} parent=11 // pred_fallthru
          _
      $region12: #{tpu_custom_call.1} parent=5 // pred_fallthru
        _
      %p469 = scmp.lt.s32.totalorder %s30, 4
      // Predicated region
      $region21: #{tpu_custom_call.1} parent=5 // pred_check
        %p470 = pneg %p469
      $region22: #{tpu_custom_call.1} parent=5 // pred_check_branch
        %472 = sbr.rel (%p470) target = $region24
      $region23: #{tpu_custom_call.1} parent=5 // pred_region
        // Predicated region
        $region25: #{tpu_custom_call.1} parent=23 // pred_check
          %p473 = pneg %p62
        $region26: #{tpu_custom_call.1} parent=23 // pred_check_branch
          %475 = sbr.rel (%p473) target = $region28
        $region27: #{tpu_custom_call.1} parent=23 // pred_region
          %p476 = scmp.lt.s32.totalorder %s37, 1
          %s477 = scalar_select %p476, %s37, 1
          %s478 = smul.addr %s477, 2
          %s479 = smul.addr %s478, 8
          %s480 = scalar_lea.vmem %s0, %s479
        $region28: #{tpu_custom_call.1} parent=23 // pred_fallthru
          _
        // Predicated region
        $region29: #{tpu_custom_call.1} parent=23 // pred_check
          %p481 = pneg %p88
        $region30: #{tpu_custom_call.1} parent=23 // pred_check_branch
          %483 = sbr.rel (%p481) target = $region32
        $region31: #{tpu_custom_call.1} parent=23 // pred_region
          %p484 = scmp.lt.s32.totalorder %s38, 1
          %s485 = scalar_select %p484, %s38, 1
          %s486 = scalar_lea.vmem %s1, %s485
        $region32: #{tpu_custom_call.1} parent=23 // pred_fallthru
          _
        // Predicated region
        $region33: #{tpu_custom_call.1} parent=23 // pred_check
          %p487 = pneg %p114
        $region34: #{tpu_custom_call.1} parent=23 // pred_check_branch
          %489 = sbr.rel (%p487) target = $region36
        $region35: #{tpu_custom_call.1} parent=23 // pred_region
          %p490 = scmp.lt.s32.totalorder %s38, 1
          %s491 = scalar_select %p490, %s38, 1
          %s492 = scalar_lea.vmem %s2, %s491
        $region36: #{tpu_custom_call.1} parent=23 // pred_fallthru
          _
        // Predicated region
        $region37: #{tpu_custom_call.1} parent=23 // pred_check
          %p493 = pneg %p140
        $region38: #{tpu_custom_call.1} parent=23 // pred_check_branch
          %495 = sbr.rel (%p493) target = $region40
        $region39: #{tpu_custom_call.1} parent=23 // pred_region
          %s496 = sand.u32 %s130, 1
          %s497 = scalar_lea.sflag [#allocation4], %s496
          %s498 = sand.u32 %s130, 1
          %s499 = smul.addr %s498, 768
          %s500 = scalar_lea.vmem [#allocation3], %s499
          %s502 = ssub.s32 12288, 12288
          %503 = vsyncadd %s497, %s502
          %s504 = smul.addr %s38, 192
          %s505 = smul.addr %s504, 64
          %s506 = scalar_lea.hbm %s3, %s505
          %s507 = sshll.u32 %s500, 4
          %s508 = int_to_ptr.vmem [resolvable:$true] %s507
          %513 = dma.hbm_to_vmem [thread:$0]  %s506, 12288, %s508, %s497, 768, 768, 48
        $region40: #{tpu_custom_call.1} parent=23 // pred_fallthru
          _
        // Predicated region
        $region41: #{tpu_custom_call.1} parent=23 // pred_check
          %p514 = pneg %p166
        $region42: #{tpu_custom_call.1} parent=23 // pred_check_branch
          %516 = sbr.rel (%p514) target = $region44
        $region43: #{tpu_custom_call.1} parent=23 // pred_region
          %p517 = scmp.lt.s32.totalorder %s38, 1
          %s518 = scalar_select %p517, %s38, 1
          %s519 = smul.addr %s518, 12
          %s520 = scalar_lea.vmem %s4, %s519
        $region44: #{tpu_custom_call.1} parent=23 // pred_fallthru
          _
        // Predicated region
        $region45: #{tpu_custom_call.1} parent=23 // pred_check
          %p521 = pneg %p192
        $region46: #{tpu_custom_call.1} parent=23 // pred_check_branch
          %523 = sbr.rel (%p521) target = $region48
        $region47: #{tpu_custom_call.1} parent=23 // pred_region
          %s524 = sand.u32 %s30, 1
          %s525 = scalar_lea.sflag [#allocation6], %s524
          %s526 = sand.u32 %s182, 1
          %s527 = smul.addr %s526, 256
          %s528 = scalar_lea.vmem [#allocation5], %s527
          %s530 = ssub.s32 4096, 4096
          %531 = vsyncadd %s525, %s530
          %s532 = smul.addr %s38, 64
          %s533 = smul.addr %s532, 64
          %s534 = scalar_lea.hbm %s5, %s533
          %s535 = sshll.u32 %s528, 4
          %s536 = int_to_ptr.vmem [resolvable:$true] %s535
          %541 = dma.hbm_to_vmem [thread:$0]  %s534, 4096, %s536, %s525, 64, 64, 4
        $region48: #{tpu_custom_call.1} parent=23 // pred_fallthru
          _
        // Predicated region
        $region49: #{tpu_custom_call.1} parent=23 // pred_check
          %p542 = pneg %p218
        $region50: #{tpu_custom_call.1} parent=23 // pred_check_branch
          %544 = sbr.rel (%p542) target = $region52
        $region51: #{tpu_custom_call.1} parent=23 // pred_region
          %p545 = scmp.lt.s32.totalorder %s38, 1
          %s546 = scalar_select %p545, %s38, 1
          %s547 = scalar_lea.vmem %s6, %s546
        $region52: #{tpu_custom_call.1} parent=23 // pred_fallthru
          _
        // Predicated region
        $region53: #{tpu_custom_call.1} parent=23 // pred_check
          %p548 = pneg %p244
        $region54: #{tpu_custom_call.1} parent=23 // pred_check_branch
          %550 = sbr.rel (%p548) target = $region56
        $region55: #{tpu_custom_call.1} parent=23 // pred_region
          %p551 = scmp.lt.s32.totalorder %s38, 1
          %s552 = scalar_select %p551, %s38, 1
          %s553 = scalar_lea.vmem %s7, %s552
        $region56: #{tpu_custom_call.1} parent=23 // pred_fallthru
          _
        // Predicated region
        $region57: #{tpu_custom_call.1} parent=23 // pred_check
          %p554 = pneg %p270
        $region58: #{tpu_custom_call.1} parent=23 // pred_check_branch
          %556 = sbr.rel (%p554) target = $region60
        $region59: #{tpu_custom_call.1} parent=23 // pred_region
          %p557 = scmp.lt.s32.totalorder %s38, 1
          %s558 = scalar_select %p557, %s38, 1
          %s559 = scalar_lea.vmem %s8, %s558
        $region60: #{tpu_custom_call.1} parent=23 // pred_fallthru
          _
        // Predicated region
        $region61: #{tpu_custom_call.1} parent=23 // pred_check
          %p560 = pneg %p296
        $region62: #{tpu_custom_call.1} parent=23 // pred_check_branch
          %562 = sbr.rel (%p560) target = $region64
        $region63: #{tpu_custom_call.1} parent=23 // pred_region
          %s563 = sand.u32 %s30, 1
          %s564 = scalar_lea.sflag [#allocation6], %s563
          %s565 = sand.u32 %s286, 1
          %s566 = smul.addr %s565, 64
          %s567 = scalar_lea.vmem [#allocation7], %s566
          %s569 = ssub.s32 1024, 1024
          %570 = vsyncadd %s564, %s569
          %s571 = smul.addr %s38, 16
          %s572 = smul.addr %s571, 64
          %s573 = scalar_lea.hbm %s9, %s572
          %s574 = sshll.u32 %s567, 4
          %s575 = int_to_ptr.vmem [resolvable:$true] %s574
          %580 = dma.hbm_to_vmem [thread:$0]  %s573, 1024, %s575, %s564, 64, 64, 4
        $region64: #{tpu_custom_call.1} parent=23 // pred_fallthru
          _
        // Predicated region
        $region65: #{tpu_custom_call.1} parent=23 // pred_check
          %p581 = pneg %p322
        $region66: #{tpu_custom_call.1} parent=23 // pred_check_branch
          %583 = sbr.rel (%p581) target = $region68
        $region67: #{tpu_custom_call.1} parent=23 // pred_region
          %p584 = scmp.lt.s32.totalorder %s38, 1
          %s585 = scalar_select %p584, %s38, 1
          %s586 = scalar_lea.vmem %s10, %s585
        $region68: #{tpu_custom_call.1} parent=23 // pred_fallthru
          _
        // Predicated region
        $region69: #{tpu_custom_call.1} parent=23 // pred_check
          %p587 = pneg %p348
        $region70: #{tpu_custom_call.1} parent=23 // pred_check_branch
          %589 = sbr.rel (%p587) target = $region72
        $region71: #{tpu_custom_call.1} parent=23 // pred_region
          %s590 = sand.u32 %s338, 1
          %s591 = scalar_lea.sflag [#allocation9], %s590
          %s592 = sand.u32 %s338, 1
          %s593 = smul.addr %s592, 64
          %s594 = scalar_lea.vmem [#allocation8], %s593
          %s596 = ssub.s32 1024, 1024
          %597 = vsyncadd %s591, %s596
          %s598 = smul.addr %s38, 16
          %s599 = smul.addr %s598, 64
          %s600 = scalar_lea.hbm %s11, %s599
          %s601 = sshll.u32 %s594, 4
          %s602 = int_to_ptr.vmem [resolvable:$true] %s601
          %607 = dma.hbm_to_vmem [thread:$0]  %s600, 1024, %s602, %s591, 64, 64, 4
        $region72: #{tpu_custom_call.1} parent=23 // pred_fallthru
          _
        // Predicated region
        $region73: #{tpu_custom_call.1} parent=23 // pred_check
          %p608 = pneg %p374
        $region74: #{tpu_custom_call.1} parent=23 // pred_check_branch
          %610 = sbr.rel (%p608) target = $region76
        $region75: #{tpu_custom_call.1} parent=23 // pred_region
          %p611 = scmp.lt.s32.totalorder %s38, 1
          %s612 = scalar_select %p611, %s38, 1
          %s613 = scalar_lea.vmem %s12, %s612
        $region76: #{tpu_custom_call.1} parent=23 // pred_fallthru
          _
      $region24: #{tpu_custom_call.1} parent=5 // pred_fallthru
        _
      %p614 = scmp.le.s32.totalorder 1, %s30
      %p615 = scmp.lt.s32.totalorder %s30, 5
      %p616 = pnand %p614, %p615
      %p617 = pneg %p616
      // Predicated region
      $region77: #{tpu_custom_call.1} parent=5 // pred_check
        _
      $region78: #{tpu_custom_call.1} parent=5 // pred_check_branch
        %619 = sbr.rel (%p616) target = $region80
      $region79: #{tpu_custom_call.1} parent=5 // pred_region
        %s620 = ssub.s32 %s30, 1
        %s621 = sand.u32 %s133, 1
        %s622 = scalar_lea.sflag [#allocation4], %s621
        %s623 = sand.u32 %s133, 1
        %s624 = smul.addr %s623, 768
        %s625 = scalar_lea.vmem [#allocation3], %s624
        // Predicated region
        $region81: #{tpu_custom_call.1} parent=79 // pred_check
          %p626 = pneg %p146
        $region82: #{tpu_custom_call.1} parent=79 // pred_check_branch
          %628 = sbr.rel (%p626) target = $region84
        $region83: #{tpu_custom_call.1} parent=79 // pred_region
          %629 = dma.done %s622, 12288
        $region84: #{tpu_custom_call.1} parent=79 // pred_fallthru
          _
        %s630 = sand.u32 %s35, 1
        %s631 = scalar_lea.sflag [#allocation6], %s630
        %s632 = sand.u32 %s185, 1
        %s633 = smul.addr %s632, 256
        %s634 = scalar_lea.vmem [#allocation5], %s633
        // Predicated region
        $region85: #{tpu_custom_call.1} parent=79 // pred_check
          %p635 = pneg %p198
        $region86: #{tpu_custom_call.1} parent=79 // pred_check_branch
          %637 = sbr.rel (%p635) target = $region88
        $region87: #{tpu_custom_call.1} parent=79 // pred_region
          %638 = dma.done %s631, 4096
        $region88: #{tpu_custom_call.1} parent=79 // pred_fallthru
          _
        %s639 = sand.u32 %s35, 1
        %s640 = scalar_lea.sflag [#allocation6], %s639
        %s641 = sand.u32 %s289, 1
        %s642 = smul.addr %s641, 64
        %s643 = scalar_lea.vmem [#allocation7], %s642
        // Predicated region
        $region89: #{tpu_custom_call.1} parent=79 // pred_check
          %p644 = pneg %p302
        $region90: #{tpu_custom_call.1} parent=79 // pred_check_branch
          %646 = sbr.rel (%p644) target = $region92
        $region91: #{tpu_custom_call.1} parent=79 // pred_region
          %647 = dma.done %s640, 1024
        $region92: #{tpu_custom_call.1} parent=79 // pred_fallthru
          _
        %s648 = sand.u32 %s341, 1
        %s649 = scalar_lea.sflag [#allocation9], %s648
        %s650 = sand.u32 %s341, 1
        %s651 = smul.addr %s650, 64
        %s652 = scalar_lea.vmem [#allocation8], %s651
        // Predicated region
        $region93: #{tpu_custom_call.1} parent=79 // pred_check
          %p653 = pneg %p354
        $region94: #{tpu_custom_call.1} parent=79 // pred_check_branch
          %655 = sbr.rel (%p653) target = $region96
        $region95: #{tpu_custom_call.1} parent=79 // pred_region
          %656 = dma.done %s649, 1024
        $region96: #{tpu_custom_call.1} parent=79 // pred_fallthru
          _
        %p657 = scmp.lt.s32.totalorder %s39, 1
        %s658 = scalar_select %p657, %s39, 1
        %s659 = smul.addr %s658, 2
        %s660 = smul.addr %s659, 8
        %s661 = scalar_lea.vmem %s0, %s660
        %p662 = pneg %p68
        %p663 = pneg %p65
        %p664 = scmp.lt.s32.totalorder %s40, 1
        %s665 = scalar_select %p664, %s40, 1
        %s666 = scalar_lea.vmem %s1, %s665
        %p667 = pneg %p94
        %p668 = pneg %p91
        %p669 = scmp.lt.s32.totalorder %s40, 1
        %s670 = scalar_select %p669, %s40, 1
        %s671 = scalar_lea.vmem %s2, %s670
        %p672 = pneg %p120
        %p673 = pneg %p117
        %s674 = sand.u32 %s133, 1
        %s675 = scalar_lea.sflag [#allocation4], %s674
        %s676 = sand.u32 %s133, 1
        %s677 = smul.addr %s676, 768
        %s678 = scalar_lea.vmem [#allocation3], %s677
        %p679 = pneg %p146
        %p680 = pneg %p143
        %p681 = scmp.lt.s32.totalorder %s40, 1
        %s682 = scalar_select %p681, %s40, 1
        %s683 = smul.addr %s682, 12
        %s684 = scalar_lea.vmem %s4, %s683
        %p685 = pneg %p172
        %p686 = pneg %p169
        %s687 = sand.u32 %s35, 1
        %s688 = scalar_lea.sflag [#allocation6], %s687
        %s689 = sand.u32 %s185, 1
        %s690 = smul.addr %s689, 256
        %s691 = scalar_lea.vmem [#allocation5], %s690
        %p692 = pneg %p198
        %p693 = pneg %p195
        %p694 = scmp.lt.s32.totalorder %s40, 1
        %s695 = scalar_select %p694, %s40, 1
        %s696 = scalar_lea.vmem %s6, %s695
        %p697 = pneg %p224
        %p698 = pneg %p221
        %p699 = scmp.lt.s32.totalorder %s40, 1
        %s700 = scalar_select %p699, %s40, 1
        %s701 = scalar_lea.vmem %s7, %s700
        %p702 = pneg %p250
        %p703 = pneg %p247
        %p704 = scmp.lt.s32.totalorder %s40, 1
        %s705 = scalar_select %p704, %s40, 1
        %s706 = scalar_lea.vmem %s8, %s705
        %p707 = pneg %p276
        %p708 = pneg %p273
        %s709 = sand.u32 %s35, 1
        %s710 = scalar_lea.sflag [#allocation6], %s709
        %s711 = sand.u32 %s289, 1
        %s712 = smul.addr %s711, 64
        %s713 = scalar_lea.vmem [#allocation7], %s712
        %p714 = pneg %p302
        %p715 = pneg %p299
        %p716 = scmp.lt.s32.totalorder %s40, 1
        %s717 = scalar_select %p716, %s40, 1
        %s718 = scalar_lea.vmem %s10, %s717
        %p719 = pneg %p328
        %p720 = pneg %p325
        %s721 = sand.u32 %s341, 1
        %s722 = scalar_lea.sflag [#allocation9], %s721
        %s723 = sand.u32 %s341, 1
        %s724 = smul.addr %s723, 64
        %s725 = scalar_lea.vmem [#allocation8], %s724
        %p726 = pneg %p354
        %p727 = pneg %p351
        %p728 = scmp.lt.s32.totalorder %s40, 1
        %s729 = scalar_select %p728, %s40, 1
        %s730 = scalar_lea.vmem %s12, %s729
        %p731 = pneg %p380
        %p732 = pneg %p377
        %p733 = pneg %p401
        %p734 = pneg %p398
        %p735 = pneg %p422
        %p736 = pneg %p419
        %p737 = pneg %p448
        %p738 = pneg %p445
        %p739 = scmp.lt.s32.totalorder %s39, 1
        %s740 = scalar_select %p739, %s39, 1
        %s741 = smul.addr %s740, 2
        %s742 = smul.addr %s741, 8
        %s743 = scalar_lea.vmem %s15, %s742
        %p744 = scmp.lt.s32.totalorder %s39, 1
        %s745 = scalar_select %p744, %s39, 1
        %s746 = smul.addr %s745, 2
        %s747 = smul.addr %s746, 8
        %s748 = scalar_lea.vmem %s0, %s747
        %p749 = scmp.lt.s32.totalorder %s40, 1
        %s750 = scalar_select %p749, %s40, 1
        %s751 = scalar_lea.vmem %s1, %s750
        %p752 = scmp.lt.s32.totalorder %s40, 1
        %s753 = scalar_select %p752, %s40, 1
        %s754 = scalar_lea.vmem %s2, %s753
        %p755 = scmp.lt.s32.totalorder %s40, 1
        %s756 = scalar_select %p755, %s40, 1
        %s757 = smul.addr %s756, 12
        %s758 = scalar_lea.vmem %s4, %s757
        %p759 = scmp.lt.s32.totalorder %s40, 1
        %s760 = scalar_select %p759, %s40, 1
        %s761 = scalar_lea.vmem %s6, %s760
        %p762 = scmp.lt.s32.totalorder %s40, 1
        %s763 = scalar_select %p762, %s40, 1
        %s764 = scalar_lea.vmem %s7, %s763
        %p765 = scmp.lt.s32.totalorder %s40, 1
        %s766 = scalar_select %p765, %s40, 1
        %s767 = scalar_lea.vmem %s8, %s766
        %p768 = scmp.lt.s32.totalorder %s40, 1
        %s769 = scalar_select %p768, %s40, 1
        %s770 = scalar_lea.vmem %s10, %s769
        %p771 = scmp.lt.s32.totalorder %s40, 1
        %s772 = scalar_select %p771, %s40, 1
        %s773 = scalar_lea.vmem %s12, %s772
        %p774 = scmp.lt.s32.totalorder %s39, 1
        %s775 = scalar_select %p774, %s39, 1
        %s776 = smul.addr %s775, 2
        %s777 = smul.addr %s776, 8
        %s778 = scalar_lea.vmem %s15, %s777
        %p780 = scmp.eq.s32.totalorder %s40, 0
        // Predicated region
        $region97: #{tpu_custom_call.1} parent=79 // pred_check
          %p781 = pneg %p780
        $region98: #{tpu_custom_call.1} parent=79 // pred_check_branch
          %783 = sbr.rel (%p781) target = $region100
        $region99: #{tpu_custom_call.1} parent=79 // pred_region
          %v784 = vld [vmem:[%s748] sm:$0xff]
          %v785 = vld [vmem:[%s748 + $0x8] sm:$0x1]
          %786 = vst [vmem:[#allocation2] sm:$0xff] %v784
          %787 = vst [vmem:[#allocation2 + $0x8] sm:$0x1] %v785
        $region100: #{tpu_custom_call.1} parent=79 // pred_fallthru
          _
        %v788 = vld [vmem:[#allocation2] sm:$0xff]
        %v789 = vld [vmem:[#allocation2 + $0x8] sm:$0x1]
        %v790 = vld [vmem:[%s751] sm:$0x1]
        %v791 = vld [vmem:[%s754] sm:$0x1]
        %792 = vadd.xlane.f32.xlu0 %v788
        %v793 = vpop.xlane.xlu0 %792
        %vm794 = vcmask 1040384
        %v795 = vsel %vm794, %v789, 0.0
        %796 = vadd.xlane.f32.xlu0 %v795
        %v797 = vpop.xlane.xlu0 %796
        %v798 = vmul.f32 %v793, 0.03125
        %v799 = vmul.f32 %v797, 0.03125
        %v800 = vmul.f32 %v788, %v788
        %v801 = vmul.f32 %v789, %v789
        %802 = vadd.xlane.f32.xlu0 %v800
        %v803 = vpop.xlane.xlu0 %802
        %v804 = vsel %vm794, %v801, 0.0
        %805 = vadd.xlane.f32.xlu0 %v804
        %v806 = vpop.xlane.xlu0 %805
        %v807 = vmul.f32 %v803, 0.03125
        %v808 = vmul.f32 %v806, 0.03125
        %v809 = vmul.f32 %v798, %v798
        %v810 = vmul.f32 %v799, %v799
        %v811 = vsub.f32 %v807, %v809
        %v812 = vsub.f32 %v808, %v810
        %v813 = vmax.f32 %v811, 0.0
        %v814 = vmax.f32 %v812, 0.0
        %v815 = vsub.f32 %v788, %v798
        %v816 = vsub.f32 %v789, %v799
        %v817 = vadd.f32 %v813, 1e-06
        %v818 = vadd.f32 %v814, 1e-06
        %v819 = vrsqrt.pop %v817
        %v820 = vrsqrt.pop %v818
        %v821 = vmul.f32 %v815, %v819
        %v822 = vmul.f32 %v816, %v820
        %v824 = vlaneseq
        %v825 = vshrl.u32 %v824, 7
        %v826 = vsub.s32 0, %v825
        %v827 = vrot.slane %v790, %v826
        %v829 = vmul.f32 %v821, %v827
        %v830 = vmul.f32 %v822, %v827
        %v832 = vlaneseq
        %v833 = vshrl.u32 %v832, 7
        %v834 = vsub.s32 0, %v833
        %v835 = vrot.slane %v791, %v834
        %v837 = vadd.f32 %v829, %v835
        %v838 = vadd.f32 %v830, %v835
        %v839 = vld [vmem:[%s625] sm:$0xff]
        %v840 = vld [vmem:[%s625 + $0x8] sm:$0xff]
        %v841 = vld [vmem:[%s625 + $0x10] sm:$0xff]
        %v842 = vld [vmem:[%s625 + $0x18] sm:$0xff]
        %v843 = vld [vmem:[%s625 + $0x20] sm:$0xff]
        %v844 = vld [vmem:[%s625 + $0x28] sm:$0xff]
        %v845 = vld [vmem:[%s625 + $0x30] sm:$0xff]
        %v846 = vld [vmem:[%s625 + $0x38] sm:$0xff]
        %v847 = vld [vmem:[%s625 + $0x40] sm:$0xff]
        %v848 = vld [vmem:[%s625 + $0x48] sm:$0xff]
        %v849 = vld [vmem:[%s625 + $0x50] sm:$0xff]
        %v850 = vld [vmem:[%s625 + $0x58] sm:$0xff]
        %v851 = vld [vmem:[%s625 + $0x60] sm:$0xff]
        %v852 = vld [vmem:[%s625 + $0x68] sm:$0xff]
        %v853 = vld [vmem:[%s625 + $0x70] sm:$0xff]
        %v854 = vld [vmem:[%s625 + $0x78] sm:$0xff]
        %v855 = vld [vmem:[%s625 + $0x80] sm:$0xff]
        %v856 = vld [vmem:[%s625 + $0x88] sm:$0xff]
        %v857 = vld [vmem:[%s625 + $0x90] sm:$0xff]
        %v858 = vld [vmem:[%s625 + $0x98] sm:$0xff]
        %v859 = vld [vmem:[%s625 + $0xa0] sm:$0xff]
        %v860 = vld [vmem:[%s625 + $0xa8] sm:$0xff]
        %v861 = vld [vmem:[%s625 + $0xb0] sm:$0xff]
        %v862 = vld [vmem:[%s625 + $0xb8] sm:$0xff]
        %v863 = vld [vmem:[%s625 + $0xc0] sm:$0xff]
        %v864 = vld [vmem:[%s625 + $0xc8] sm:$0xff]
        %v865 = vld [vmem:[%s625 + $0xd0] sm:$0xff]
        %v866 = vld [vmem:[%s625 + $0xd8] sm:$0xff]
        %v867 = vld [vmem:[%s625 + $0xe0] sm:$0xff]
        %v868 = vld [vmem:[%s625 + $0xe8] sm:$0xff]
        %v869 = vld [vmem:[%s625 + $0xf0] sm:$0xff]
        %v870 = vld [vmem:[%s625 + $0xf8] sm:$0xff]
        %v871 = vld [vmem:[%s625 + $0x100] sm:$0xff]
        %v872 = vld [vmem:[%s625 + $0x108] sm:$0xff]
        %v873 = vld [vmem:[%s625 + $0x110] sm:$0xff]
        %v874 = vld [vmem:[%s625 + $0x118] sm:$0xff]
        %v875 = vld [vmem:[%s625 + $0x120] sm:$0xff]
        %v876 = vld [vmem:[%s625 + $0x128] sm:$0xff]
        %v877 = vld [vmem:[%s625 + $0x130] sm:$0xff]
        %v878 = vld [vmem:[%s625 + $0x138] sm:$0xff]
        %v879 = vld [vmem:[%s625 + $0x140] sm:$0xff]
        %v880 = vld [vmem:[%s625 + $0x148] sm:$0xff]
        %v881 = vld [vmem:[%s625 + $0x150] sm:$0xff]
        %v882 = vld [vmem:[%s625 + $0x158] sm:$0xff]
        %v883 = vld [vmem:[%s625 + $0x160] sm:$0xff]
        %v884 = vld [vmem:[%s625 + $0x168] sm:$0xff]
        %v885 = vld [vmem:[%s625 + $0x170] sm:$0xff]
        %v886 = vld [vmem:[%s625 + $0x178] sm:$0xff]
        %v887 = vld [vmem:[%s625 + $0x180] sm:$0xff]
        %v888 = vld [vmem:[%s625 + $0x188] sm:$0xff]
        %v889 = vld [vmem:[%s625 + $0x190] sm:$0xff]
        %v890 = vld [vmem:[%s625 + $0x198] sm:$0xff]
        %v891 = vld [vmem:[%s625 + $0x1a0] sm:$0xff]
        %v892 = vld [vmem:[%s625 + $0x1a8] sm:$0xff]
        %v893 = vld [vmem:[%s625 + $0x1b0] sm:$0xff]
        %v894 = vld [vmem:[%s625 + $0x1b8] sm:$0xff]
        %v895 = vld [vmem:[%s625 + $0x1c0] sm:$0xff]
        %v896 = vld [vmem:[%s625 + $0x1c8] sm:$0xff]
        %v897 = vld [vmem:[%s625 + $0x1d0] sm:$0xff]
        %v898 = vld [vmem:[%s625 + $0x1d8] sm:$0xff]
        %v899 = vld [vmem:[%s625 + $0x1e0] sm:$0xff]
        %v900 = vld [vmem:[%s625 + $0x1e8] sm:$0xff]
        %v901 = vld [vmem:[%s625 + $0x1f0] sm:$0xff]
        %v902 = vld [vmem:[%s625 + $0x1f8] sm:$0xff]
        %v903 = vld [vmem:[%s625 + $0x200] sm:$0xff]
        %v904 = vld [vmem:[%s625 + $0x208] sm:$0xff]
        %v905 = vld [vmem:[%s625 + $0x210] sm:$0xff]
        %v906 = vld [vmem:[%s625 + $0x218] sm:$0xff]
        %v907 = vld [vmem:[%s625 + $0x220] sm:$0xff]
        %v908 = vld [vmem:[%s625 + $0x228] sm:$0xff]
        %v909 = vld [vmem:[%s625 + $0x230] sm:$0xff]
        %v910 = vld [vmem:[%s625 + $0x238] sm:$0xff]
        %v911 = vld [vmem:[%s625 + $0x240] sm:$0xff]
        %v912 = vld [vmem:[%s625 + $0x248] sm:$0xff]
        %v913 = vld [vmem:[%s625 + $0x250] sm:$0xff]
        %v914 = vld [vmem:[%s625 + $0x258] sm:$0xff]
        %v915 = vld [vmem:[%s625 + $0x260] sm:$0xff]
        %v916 = vld [vmem:[%s625 + $0x268] sm:$0xff]
        %v917 = vld [vmem:[%s625 + $0x270] sm:$0xff]
        %v918 = vld [vmem:[%s625 + $0x278] sm:$0xff]
        %v919 = vld [vmem:[%s625 + $0x280] sm:$0xff]
        %v920 = vld [vmem:[%s625 + $0x288] sm:$0xff]
        %v921 = vld [vmem:[%s625 + $0x290] sm:$0xff]
        %v922 = vld [vmem:[%s625 + $0x298] sm:$0xff]
        %v923 = vld [vmem:[%s625 + $0x2a0] sm:$0xff]
        %v924 = vld [vmem:[%s625 + $0x2a8] sm:$0xff]
        %v925 = vld [vmem:[%s625 + $0x2b0] sm:$0xff]
        %v926 = vld [vmem:[%s625 + $0x2b8] sm:$0xff]
        %v927 = vld [vmem:[%s625 + $0x2c0] sm:$0xff]
        %v928 = vld [vmem:[%s625 + $0x2c8] sm:$0xff]
        %v929 = vld [vmem:[%s625 + $0x2d0] sm:$0xff]
        %v930 = vld [vmem:[%s625 + $0x2d8] sm:$0xff]
        %v931 = vld [vmem:[%s625 + $0x2e0] sm:$0xff]
        %v932 = vld [vmem:[%s625 + $0x2e8] sm:$0xff]
        %v933 = vld [vmem:[%s625 + $0x2f0] sm:$0xff]
        %v934 = vld [vmem:[%s625 + $0x2f8] sm:$0xff]
        %v935 = vld [vmem:[%s758] sm:$0xff]
        %v936 = vld [vmem:[%s758 + $0x8] sm:$0xf]
        %v937 = vld [vmem:[%s634] sm:$0xf]
        %v938 = vld [vmem:[%s634 + $0x4] sm:$0xf]
        %v939 = vld [vmem:[%s634 + $0x8] sm:$0xf]
        %v940 = vld [vmem:[%s634 + $0xc] sm:$0xf]
        %v941 = vld [vmem:[%s634 + $0x10] sm:$0xf]
        %v942 = vld [vmem:[%s634 + $0x14] sm:$0xf]
        %v943 = vld [vmem:[%s634 + $0x18] sm:$0xf]
        %v944 = vld [vmem:[%s634 + $0x1c] sm:$0xf]
        %v945 = vld [vmem:[%s634 + $0x20] sm:$0xf]
        %v946 = vld [vmem:[%s634 + $0x24] sm:$0xf]
        %v947 = vld [vmem:[%s634 + $0x28] sm:$0xf]
        %v948 = vld [vmem:[%s634 + $0x2c] sm:$0xf]
        %v949 = vld [vmem:[%s634 + $0x30] sm:$0xf]
        %v950 = vld [vmem:[%s634 + $0x34] sm:$0xf]
        %v951 = vld [vmem:[%s634 + $0x38] sm:$0xf]
        %v952 = vld [vmem:[%s634 + $0x3c] sm:$0xf]
        %v953 = vld [vmem:[%s634 + $0x40] sm:$0xf]
        %v954 = vld [vmem:[%s634 + $0x44] sm:$0xf]
        %v955 = vld [vmem:[%s634 + $0x48] sm:$0xf]
        %v956 = vld [vmem:[%s634 + $0x4c] sm:$0xf]
        %v957 = vld [vmem:[%s634 + $0x50] sm:$0xf]
        %v958 = vld [vmem:[%s634 + $0x54] sm:$0xf]
        %v959 = vld [vmem:[%s634 + $0x58] sm:$0xf]
        %v960 = vld [vmem:[%s634 + $0x5c] sm:$0xf]
        %v961 = vld [vmem:[%s634 + $0x60] sm:$0xf]
        %v962 = vld [vmem:[%s634 + $0x64] sm:$0xf]
        %v963 = vld [vmem:[%s634 + $0x68] sm:$0xf]
        %v964 = vld [vmem:[%s634 + $0x6c] sm:$0xf]
        %v965 = vld [vmem:[%s634 + $0x70] sm:$0xf]
        %v966 = vld [vmem:[%s634 + $0x74] sm:$0xf]
        %v967 = vld [vmem:[%s634 + $0x78] sm:$0xf]
        %v968 = vld [vmem:[%s634 + $0x7c] sm:$0xf]
        %v969 = vld [vmem:[%s634 + $0x80] sm:$0xf]
        %v970 = vld [vmem:[%s634 + $0x84] sm:$0xf]
        %v971 = vld [vmem:[%s634 + $0x88] sm:$0xf]
        %v972 = vld [vmem:[%s634 + $0x8c] sm:$0xf]
        %v973 = vld [vmem:[%s634 + $0x90] sm:$0xf]
        %v974 = vld [vmem:[%s634 + $0x94] sm:$0xf]
        %v975 = vld [vmem:[%s634 + $0x98] sm:$0xf]
        %v976 = vld [vmem:[%s634 + $0x9c] sm:$0xf]
        %v977 = vld [vmem:[%s634 + $0xa0] sm:$0xf]
        %v978 = vld [vmem:[%s634 + $0xa4] sm:$0xf]
        %v979 = vld [vmem:[%s634 + $0xa8] sm:$0xf]
        %v980 = vld [vmem:[%s634 + $0xac] sm:$0xf]
        %v981 = vld [vmem:[%s634 + $0xb0] sm:$0xf]
        %v982 = vld [vmem:[%s634 + $0xb4] sm:$0xf]
        %v983 = vld [vmem:[%s634 + $0xb8] sm:$0xf]
        %v984 = vld [vmem:[%s634 + $0xbc] sm:$0xf]
        %v985 = vld [vmem:[%s634 + $0xc0] sm:$0xf]
        %v986 = vld [vmem:[%s634 + $0xc4] sm:$0xf]
        %v987 = vld [vmem:[%s634 + $0xc8] sm:$0xf]
        %v988 = vld [vmem:[%s634 + $0xcc] sm:$0xf]
        %v989 = vld [vmem:[%s634 + $0xd0] sm:$0xf]
        %v990 = vld [vmem:[%s634 + $0xd4] sm:$0xf]
        %v991 = vld [vmem:[%s634 + $0xd8] sm:$0xf]
        %v992 = vld [vmem:[%s634 + $0xdc] sm:$0xf]
        %v993 = vld [vmem:[%s634 + $0xe0] sm:$0xf]
        %v994 = vld [vmem:[%s634 + $0xe4] sm:$0xf]
        %v995 = vld [vmem:[%s634 + $0xe8] sm:$0xf]
        %v996 = vld [vmem:[%s634 + $0xec] sm:$0xf]
        %v997 = vld [vmem:[%s634 + $0xf0] sm:$0xf]
        %v998 = vld [vmem:[%s634 + $0xf4] sm:$0xf]
        %v999 = vld [vmem:[%s634 + $0xf8] sm:$0xf]
        %v1000 = vld [vmem:[%s634 + $0xfc] sm:$0xf]
        %v1001 = vld [vmem:[%s761] sm:$0x1]
        %v1002 = vpack.c.bf16 %v838, %v837
        %v1005 = vlaneseq
        %v1006 = vshrl.u32 %v1005, 7
        %v1007 = vsub.s32 0, %v1006
        %v1008 = vrot.slane %v935, %v1007
        %v1009 = vlaneseq
        %v1010 = vshrl.u32 %v1009, 7
        %v1011 = vsub.s32 1, %v1010
        %v1012 = vrot.slane %v935, %v1011
        %v1013 = vlaneseq
        %v1014 = vshrl.u32 %v1013, 7
        %v1015 = vsub.s32 2, %v1014
        %v1016 = vrot.slane %v935, %v1015
        %v1017 = vlaneseq
        %v1018 = vshrl.u32 %v1017, 7
        %v1019 = vsub.s32 3, %v1018
        %v1020 = vrot.slane %v935, %v1019
        %v1021 = vlaneseq
        %v1022 = vshrl.u32 %v1021, 7
        %v1023 = vsub.s32 4, %v1022
        %v1024 = vrot.slane %v935, %v1023
        %v1025 = vlaneseq
        %v1026 = vshrl.u32 %v1025, 7
        %v1027 = vsub.s32 5, %v1026
        %v1028 = vrot.slane %v935, %v1027
        %v1029 = vlaneseq
        %v1030 = vshrl.u32 %v1029, 7
        %v1031 = vsub.s32 6, %v1030
        %v1032 = vrot.slane %v935, %v1031
        %v1033 = vlaneseq
        %v1034 = vshrl.u32 %v1033, 7
        %v1035 = vsub.s32 7, %v1034
        %v1036 = vrot.slane %v935, %v1035
        %v1037 = vlaneseq
        %v1038 = vshrl.u32 %v1037, 7
        %v1039 = vsub.s32 0, %v1038
        %v1040 = vrot.slane %v936, %v1039
        %v1041 = vlaneseq
        %v1042 = vshrl.u32 %v1041, 7
        %v1043 = vsub.s32 1, %v1042
        %v1044 = vrot.slane %v936, %v1043
        %v1045 = vlaneseq
        %v1046 = vshrl.u32 %v1045, 7
        %v1047 = vsub.s32 2, %v1046
        %v1048 = vrot.slane %v936, %v1047
        %v1049 = vlaneseq
        %v1050 = vshrl.u32 %v1049, 7
        %v1051 = vsub.s32 3, %v1050
        %v1052 = vrot.slane %v936, %v1051
        %v1161 = vunpack.c.l.b16 %v839
        %v1162 = vunpack.c.h.b16 %v839
        %v1163 = vunpack.c.l.b16 %v840
        %v1164 = vunpack.c.h.b16 %v840
        %v1165 = vunpack.c.l.b16 %v841
        %v1166 = vunpack.c.h.b16 %v841
        %v1167 = vunpack.c.l.b16 %v842
        %v1168 = vunpack.c.h.b16 %v842
        %v1169 = vunpack.c.l.b16 %v843
        %v1170 = vunpack.c.h.b16 %v843
        %v1171 = vunpack.c.l.b16 %v844
        %v1172 = vunpack.c.h.b16 %v844
        %v1173 = vunpack.c.l.b16 %v845
        %v1174 = vunpack.c.h.b16 %v845
        %v1175 = vunpack.c.l.b16 %v846
        %v1176 = vunpack.c.h.b16 %v846
        %v1177 = vunpack.c.l.b16 %v847
        %v1178 = vunpack.c.h.b16 %v847
        %v1179 = vunpack.c.l.b16 %v848
        %v1180 = vunpack.c.h.b16 %v848
        %v1181 = vunpack.c.l.b16 %v849
        %v1182 = vunpack.c.h.b16 %v849
        %v1183 = vunpack.c.l.b16 %v850
        %v1184 = vunpack.c.h.b16 %v850
        %v1185 = vunpack.c.l.b16 %v851
        %v1186 = vunpack.c.h.b16 %v851
        %v1187 = vunpack.c.l.b16 %v852
        %v1188 = vunpack.c.h.b16 %v852
        %v1189 = vunpack.c.l.b16 %v853
        %v1190 = vunpack.c.h.b16 %v853
        %v1191 = vunpack.c.l.b16 %v854
        %v1192 = vunpack.c.h.b16 %v854
        %v1193 = vunpack.c.l.b16 %v855
        %v1194 = vunpack.c.h.b16 %v855
        %v1195 = vunpack.c.l.b16 %v856
        %v1196 = vunpack.c.h.b16 %v856
        %v1197 = vunpack.c.l.b16 %v857
        %v1198 = vunpack.c.h.b16 %v857
        %v1199 = vunpack.c.l.b16 %v858
        %v1200 = vunpack.c.h.b16 %v858
        %v1201 = vunpack.c.l.b16 %v859
        %v1202 = vunpack.c.h.b16 %v859
        %v1203 = vunpack.c.l.b16 %v860
        %v1204 = vunpack.c.h.b16 %v860
        %v1205 = vunpack.c.l.b16 %v861
        %v1206 = vunpack.c.h.b16 %v861
        %v1207 = vunpack.c.l.b16 %v862
        %v1208 = vunpack.c.h.b16 %v862
        %v1209 = vunpack.c.l.b16 %v863
        %v1210 = vunpack.c.h.b16 %v863
        %v1211 = vunpack.c.l.b16 %v864
        %v1212 = vunpack.c.h.b16 %v864
        %v1213 = vunpack.c.l.b16 %v865
        %v1214 = vunpack.c.h.b16 %v865
        %v1215 = vunpack.c.l.b16 %v866
        %v1216 = vunpack.c.h.b16 %v866
        %v1217 = vunpack.c.l.b16 %v867
        %v1218 = vunpack.c.h.b16 %v867
        %v1219 = vunpack.c.l.b16 %v868
        %v1220 = vunpack.c.h.b16 %v868
        %v1221 = vunpack.c.l.b16 %v869
        %v1222 = vunpack.c.h.b16 %v869
        %v1223 = vunpack.c.l.b16 %v870
        %v1224 = vunpack.c.h.b16 %v870
        %v1225 = vunpack.c.l.b16 %v871
        %v1226 = vunpack.c.h.b16 %v871
        %v1227 = vunpack.c.l.b16 %v872
        %v1228 = vunpack.c.h.b16 %v872
        %v1229 = vunpack.c.l.b16 %v873
        %v1230 = vunpack.c.h.b16 %v873
        %v1231 = vunpack.c.l.b16 %v874
        %v1232 = vunpack.c.h.b16 %v874
        %v1233 = vunpack.c.l.b16 %v875
        %v1234 = vunpack.c.h.b16 %v875
        %v1235 = vunpack.c.l.b16 %v876
        %v1236 = vunpack.c.h.b16 %v876
        %v1237 = vunpack.c.l.b16 %v877
        %v1238 = vunpack.c.h.b16 %v877
        %v1239 = vunpack.c.l.b16 %v878
        %v1240 = vunpack.c.h.b16 %v878
        %v1241 = vunpack.c.l.b16 %v879
        %v1242 = vunpack.c.h.b16 %v879
        %v1243 = vunpack.c.l.b16 %v880
        %v1244 = vunpack.c.h.b16 %v880
        %v1245 = vunpack.c.l.b16 %v881
        %v1246 = vunpack.c.h.b16 %v881
        %v1247 = vunpack.c.l.b16 %v882
        %v1248 = vunpack.c.h.b16 %v882
        %v1249 = vunpack.c.l.b16 %v883
        %v1250 = vunpack.c.h.b16 %v883
        %v1251 = vunpack.c.l.b16 %v884
        %v1252 = vunpack.c.h.b16 %v884
        %v1253 = vunpack.c.l.b16 %v885
        %v1254 = vunpack.c.h.b16 %v885
        %v1255 = vunpack.c.l.b16 %v886
        %v1256 = vunpack.c.h.b16 %v886
        %v1257 = vunpack.c.l.b16 %v887
        %v1258 = vunpack.c.h.b16 %v887
        %v1259 = vunpack.c.l.b16 %v888
        %v1260 = vunpack.c.h.b16 %v888
        %v1261 = vunpack.c.l.b16 %v889
        %v1262 = vunpack.c.h.b16 %v889
        %v1263 = vunpack.c.l.b16 %v890
        %v1264 = vunpack.c.h.b16 %v890
        %v1265 = vunpack.c.l.b16 %v891
        %v1266 = vunpack.c.h.b16 %v891
        %v1267 = vunpack.c.l.b16 %v892
        %v1268 = vunpack.c.h.b16 %v892
        %v1269 = vunpack.c.l.b16 %v893
        %v1270 = vunpack.c.h.b16 %v893
        %v1271 = vunpack.c.l.b16 %v894
        %v1272 = vunpack.c.h.b16 %v894
        %v1273 = vunpack.c.l.b16 %v895
        %v1274 = vunpack.c.h.b16 %v895
        %v1275 = vunpack.c.l.b16 %v896
        %v1276 = vunpack.c.h.b16 %v896
        %v1277 = vunpack.c.l.b16 %v897
        %v1278 = vunpack.c.h.b16 %v897
        %v1279 = vunpack.c.l.b16 %v898
        %v1280 = vunpack.c.h.b16 %v898
        %v1281 = vunpack.c.l.b16 %v899
        %v1282 = vunpack.c.h.b16 %v899
        %v1283 = vunpack.c.l.b16 %v900
        %v1284 = vunpack.c.h.b16 %v900
        %v1285 = vunpack.c.l.b16 %v901
        %v1286 = vunpack.c.h.b16 %v901
        %v1287 = vunpack.c.l.b16 %v902
        %v1288 = vunpack.c.h.b16 %v902
        %v1289 = vunpack.c.l.b16 %v903
        %v1290 = vunpack.c.h.b16 %v903
        %v1291 = vunpack.c.l.b16 %v904
        %v1292 = vunpack.c.h.b16 %v904
        %v1293 = vunpack.c.l.b16 %v905
        %v1294 = vunpack.c.h.b16 %v905
        %v1295 = vunpack.c.l.b16 %v906
        %v1296 = vunpack.c.h.b16 %v906
        %v1297 = vunpack.c.l.b16 %v907
        %v1298 = vunpack.c.h.b16 %v907
        %v1299 = vunpack.c.l.b16 %v908
        %v1300 = vunpack.c.h.b16 %v908
        %v1301 = vunpack.c.l.b16 %v909
        %v1302 = vunpack.c.h.b16 %v909
        %v1303 = vunpack.c.l.b16 %v910
        %v1304 = vunpack.c.h.b16 %v910
        %v1305 = vunpack.c.l.b16 %v911
        %v1306 = vunpack.c.h.b16 %v911
        %v1307 = vunpack.c.l.b16 %v912
        %v1308 = vunpack.c.h.b16 %v912
        %v1309 = vunpack.c.l.b16 %v913
        %v1310 = vunpack.c.h.b16 %v913
        %v1311 = vunpack.c.l.b16 %v914
        %v1312 = vunpack.c.h.b16 %v914
        %v1313 = vunpack.c.l.b16 %v915
        %v1314 = vunpack.c.h.b16 %v915
        %v1315 = vunpack.c.l.b16 %v916
        %v1316 = vunpack.c.h.b16 %v916
        %v1317 = vunpack.c.l.b16 %v917
        %v1318 = vunpack.c.h.b16 %v917
        %v1319 = vunpack.c.l.b16 %v918
        %v1320 = vunpack.c.h.b16 %v918
        %v1321 = vunpack.c.l.b16 %v919
        %v1322 = vunpack.c.h.b16 %v919
        %v1323 = vunpack.c.l.b16 %v920
        %v1324 = vunpack.c.h.b16 %v920
        %v1325 = vunpack.c.l.b16 %v921
        %v1326 = vunpack.c.h.b16 %v921
        %v1327 = vunpack.c.l.b16 %v922
        %v1328 = vunpack.c.h.b16 %v922
        %v1329 = vunpack.c.l.b16 %v923
        %v1330 = vunpack.c.h.b16 %v923
        %v1331 = vunpack.c.l.b16 %v924
        %v1332 = vunpack.c.h.b16 %v924
        %v1333 = vunpack.c.l.b16 %v925
        %v1334 = vunpack.c.h.b16 %v925
        %v1335 = vunpack.c.l.b16 %v926
        %v1336 = vunpack.c.h.b16 %v926
        %v1337 = vunpack.c.l.b16 %v927
        %v1338 = vunpack.c.h.b16 %v927
        %v1339 = vunpack.c.l.b16 %v928
        %v1340 = vunpack.c.h.b16 %v928
        %v1341 = vunpack.c.l.b16 %v929
        %v1342 = vunpack.c.h.b16 %v929
        %v1343 = vunpack.c.l.b16 %v930
        %v1344 = vunpack.c.h.b16 %v930
        %v1345 = vunpack.c.l.b16 %v931
        %v1346 = vunpack.c.h.b16 %v931
        %v1347 = vunpack.c.l.b16 %v932
        %v1348 = vunpack.c.h.b16 %v932
        %v1349 = vunpack.c.l.b16 %v933
        %v1350 = vunpack.c.h.b16 %v933
        %v1351 = vunpack.c.l.b16 %v934
        %v1352 = vunpack.c.h.b16 %v934
        %v1353 = vpack.c.b16 %v1173, %v1161
        %v1354 = vpack.c.b16 %v1174, %v1162
        %v1355 = vpack.c.b16 %v1175, %v1163
        %v1356 = vpack.c.b16 %v1176, %v1164
        %v1357 = vpack.c.b16 %v1177, %v1165
        %v1358 = vpack.c.b16 %v1178, %v1166
        %v1359 = vpack.c.b16 %v1179, %v1167
        %v1360 = vpack.c.b16 %v1180, %v1168
        %v1361 = vpack.c.b16 %v1181, %v1169
        %v1362 = vpack.c.b16 %v1182, %v1170
        %v1363 = vpack.c.b16 %v1183, %v1171
        %v1364 = vpack.c.b16 %v1184, %v1172
        %v1365 = vpack.c.b16 %v1197, %v1185
        %v1366 = vpack.c.b16 %v1198, %v1186
        %v1367 = vpack.c.b16 %v1199, %v1187
        %v1368 = vpack.c.b16 %v1200, %v1188
        %v1369 = vpack.c.b16 %v1201, %v1189
        %v1370 = vpack.c.b16 %v1202, %v1190
        %v1371 = vpack.c.b16 %v1203, %v1191
        %v1372 = vpack.c.b16 %v1204, %v1192
        %v1373 = vpack.c.b16 %v1205, %v1193
        %v1374 = vpack.c.b16 %v1206, %v1194
        %v1375 = vpack.c.b16 %v1207, %v1195
        %v1376 = vpack.c.b16 %v1208, %v1196
        %v1377 = vpack.c.b16 %v1221, %v1209
        %v1378 = vpack.c.b16 %v1222, %v1210
        %v1379 = vpack.c.b16 %v1223, %v1211
        %v1380 = vpack.c.b16 %v1224, %v1212
        %v1381 = vpack.c.b16 %v1225, %v1213
        %v1382 = vpack.c.b16 %v1226, %v1214
        %v1383 = vpack.c.b16 %v1227, %v1215
        %v1384 = vpack.c.b16 %v1228, %v1216
        %v1385 = vpack.c.b16 %v1229, %v1217
        %v1386 = vpack.c.b16 %v1230, %v1218
        %v1387 = vpack.c.b16 %v1231, %v1219
        %v1388 = vpack.c.b16 %v1232, %v1220
        %v1389 = vpack.c.b16 %v1245, %v1233
        %v1390 = vpack.c.b16 %v1246, %v1234
        %v1391 = vpack.c.b16 %v1247, %v1235
        %v1392 = vpack.c.b16 %v1248, %v1236
        %v1393 = vpack.c.b16 %v1249, %v1237
        %v1394 = vpack.c.b16 %v1250, %v1238
        %v1395 = vpack.c.b16 %v1251, %v1239
        %v1396 = vpack.c.b16 %v1252, %v1240
        %v1397 = vpack.c.b16 %v1253, %v1241
        %v1398 = vpack.c.b16 %v1254, %v1242
        %v1399 = vpack.c.b16 %v1255, %v1243
        %v1400 = vpack.c.b16 %v1256, %v1244
        %v1401 = vpack.c.b16 %v1269, %v1257
        %v1402 = vpack.c.b16 %v1270, %v1258
        %v1403 = vpack.c.b16 %v1271, %v1259
        %v1404 = vpack.c.b16 %v1272, %v1260
        %v1405 = vpack.c.b16 %v1273, %v1261
        %v1406 = vpack.c.b16 %v1274, %v1262
        %v1407 = vpack.c.b16 %v1275, %v1263
        %v1408 = vpack.c.b16 %v1276, %v1264
        %v1409 = vpack.c.b16 %v1277, %v1265
        %v1410 = vpack.c.b16 %v1278, %v1266
        %v1411 = vpack.c.b16 %v1279, %v1267
        %v1412 = vpack.c.b16 %v1280, %v1268
        %v1413 = vpack.c.b16 %v1293, %v1281
        %v1414 = vpack.c.b16 %v1294, %v1282
        %v1415 = vpack.c.b16 %v1295, %v1283
        %v1416 = vpack.c.b16 %v1296, %v1284
        %v1417 = vpack.c.b16 %v1297, %v1285
        %v1418 = vpack.c.b16 %v1298, %v1286
        %v1419 = vpack.c.b16 %v1299, %v1287
        %v1420 = vpack.c.b16 %v1300, %v1288
        %v1421 = vpack.c.b16 %v1301, %v1289
        %v1422 = vpack.c.b16 %v1302, %v1290
        %v1423 = vpack.c.b16 %v1303, %v1291
        %v1424 = vpack.c.b16 %v1304, %v1292
        %v1425 = vpack.c.b16 %v1317, %v1305
        %v1426 = vpack.c.b16 %v1318, %v1306
        %v1427 = vpack.c.b16 %v1319, %v1307
        %v1428 = vpack.c.b16 %v1320, %v1308
        %v1429 = vpack.c.b16 %v1321, %v1309
        %v1430 = vpack.c.b16 %v1322, %v1310
        %v1431 = vpack.c.b16 %v1323, %v1311
        %v1432 = vpack.c.b16 %v1324, %v1312
        %v1433 = vpack.c.b16 %v1325, %v1313
        %v1434 = vpack.c.b16 %v1326, %v1314
        %v1435 = vpack.c.b16 %v1327, %v1315
        %v1436 = vpack.c.b16 %v1328, %v1316
        %v1437 = vpack.c.b16 %v1341, %v1329
        %v1438 = vpack.c.b16 %v1342, %v1330
        %v1439 = vpack.c.b16 %v1343, %v1331
        %v1440 = vpack.c.b16 %v1344, %v1332
        %v1441 = vpack.c.b16 %v1345, %v1333
        %v1442 = vpack.c.b16 %v1346, %v1334
        %v1443 = vpack.c.b16 %v1347, %v1335
        %v1444 = vpack.c.b16 %v1348, %v1336
        %v1445 = vpack.c.b16 %v1349, %v1337
        %v1446 = vpack.c.b16 %v1350, %v1338
        %v1447 = vpack.c.b16 %v1351, %v1339
        %v1448 = vpack.c.b16 %v1352, %v1340
        %1545 = vmatprep.subr.bf16.mxu0 %v1354
        %1546 = vmatpush1.bf16.msra.mxu0 %v1353
        %1547 = vmatprep.subr.bf16.mxu0 %v1366
        %1548 = vmatpush1.bf16.msra.mxu0 %v1365
        %1549 = vmatprep.subr.bf16.mxu0 %v1378
        %1550 = vmatpush1.bf16.msra.mxu0 %v1377
        %1551 = vmatprep.subr.bf16.mxu0 %v1390
        %1552 = vmatpush1.bf16.msra.mxu0 %v1389
        %1553 = vmatprep.subr.bf16.mxu0 %v1402
        %1554 = vmatpush1.bf16.msra.mxu0 %v1401
        %1555 = vmatprep.subr.bf16.mxu0 %v1414
        %1556 = vmatpush1.bf16.msra.mxu0 %v1413
        %1557 = vmatprep.subr.bf16.mxu0 %v1426
        %1558 = vmatpush1.bf16.msra.mxu0 %v1425
        %1559 = vmatprep.subr.bf16.mxu0 %v1438
        %1560 = vmatpush1.bf16.msra.mxu0 %v1437
        %1561 = vmatprep.subr.bf16.mxu0 0
        %1562 = vmatpush1.bf16.msra.mxu0 0
        %1563 = vmatprep.subr.bf16.mxu0 0
        %1564 = vmatpush1.bf16.msra.mxu0 0
        %1565 = vmatprep.subr.bf16.mxu0 0
        %1566 = vmatpush1.bf16.msra.mxu0 0
        %1567 = vmatprep.subr.bf16.mxu0 0
        %1568 = vmatpush1.bf16.msra.mxu0 0
        %1569 = vmatprep.subr.bf16.mxu0 0
        %1570 = vmatpush1.bf16.msra.mxu0 0
        %1571 = vmatprep.subr.bf16.mxu0 0
        %1572 = vmatpush1.bf16.msra.mxu0 0
        %1573 = vmatprep.subr.bf16.mxu0 0
        %1574 = vmatpush1.bf16.msra.mxu0 0
        %1575 = vmatprep.subr.bf16.mxu0 0
        %1576 = vmatpush1.bf16.msra.mxu0 0
        %1577 = vmatprep.mubr.bf16.mxu0 0
        %1578 = vmatmul.mubr.bf16.gmra.mrb[0].mxu0 %v1002
        %v1579 = vpop.f32.mrb[0].mxu0
        %v1580 = vadd.f32 %v1008, %v1579
        %v1581 = vpop.f32.mrb[0].mxu0
        %v1582 = vadd.f32 %v1012, %v1581
        %v1583 = vpop.f32.mrb[0].mxu0
        %v1584 = vadd.f32 %v1008, %v1583
        %v1585 = vpop.f32.mrb[0].mxu0
        %v1586 = vadd.f32 %v1012, %v1585
        %1587 = vdwg.mxu0
        %1588 = vmatprep.subr.bf16.mxu0 %v1356
        %1589 = vmatpush1.bf16.msra.mxu0 %v1355
        %1590 = vmatprep.subr.bf16.mxu0 %v1368
        %1591 = vmatpush1.bf16.msra.mxu0 %v1367
        %1592 = vmatprep.subr.bf16.mxu0 %v1380
        %1593 = vmatpush1.bf16.msra.mxu0 %v1379
        %1594 = vmatprep.subr.bf16.mxu0 %v1392
        %1595 = vmatpush1.bf16.msra.mxu0 %v1391
        %1596 = vmatprep.subr.bf16.mxu0 %v1404
        %1597 = vmatpush1.bf16.msra.mxu0 %v1403
        %1598 = vmatprep.subr.bf16.mxu0 %v1416
        %1599 = vmatpush1.bf16.msra.mxu0 %v1415
        %1600 = vmatprep.subr.bf16.mxu0 %v1428
        %1601 = vmatpush1.bf16.msra.mxu0 %v1427
        %1602 = vmatprep.subr.bf16.mxu0 %v1440
        %1603 = vmatpush1.bf16.msra.mxu0 %v1439
        %1604 = vmatprep.subr.bf16.mxu0 0
        %1605 = vmatpush1.bf16.msra.mxu0 0
        %1606 = vmatprep.subr.bf16.mxu0 0
        %1607 = vmatpush1.bf16.msra.mxu0 0
        %1608 = vmatprep.subr.bf16.mxu0 0
        %1609 = vmatpush1.bf16.msra.mxu0 0
        %1610 = vmatprep.subr.bf16.mxu0 0
        %1611 = vmatpush1.bf16.msra.mxu0 0
        %1612 = vmatprep.subr.bf16.mxu0 0
        %1613 = vmatpush1.bf16.msra.mxu0 0
        %1614 = vmatprep.subr.bf16.mxu0 0
        %1615 = vmatpush1.bf16.msra.mxu0 0
        %1616 = vmatprep.subr.bf16.mxu0 0
        %1617 = vmatpush1.bf16.msra.mxu0 0
        %1618 = vmatprep.subr.bf16.mxu0 0
        %1619 = vmatpush1.bf16.msra.mxu0 0
        %1620 = vmatprep.mubr.bf16.mxu0 0
        %1621 = vmatmul.mubr.bf16.gmra.mrb[0].mxu0 %v1002
        %v1622 = vpop.f32.mrb[0].mxu0
        %v1623 = vadd.f32 %v1016, %v1622
        %v1624 = vpop.f32.mrb[0].mxu0
        %v1625 = vadd.f32 %v1020, %v1624
        %v1626 = vpop.f32.mrb[0].mxu0
        %v1627 = vadd.f32 %v1016, %v1626
        %v1628 = vpop.f32.mrb[0].mxu0
        %v1629 = vadd.f32 %v1020, %v1628
        %1630 = vdwg.mxu0
        %1631 = vmatprep.subr.bf16.mxu0 %v1358
        %1632 = vmatpush1.bf16.msra.mxu0 %v1357
        %1633 = vmatprep.subr.bf16.mxu0 %v1370
        %1634 = vmatpush1.bf16.msra.mxu0 %v1369
        %1635 = vmatprep.subr.bf16.mxu0 %v1382
        %1636 = vmatpush1.bf16.msra.mxu0 %v1381
        %1637 = vmatprep.subr.bf16.mxu0 %v1394
        %1638 = vmatpush1.bf16.msra.mxu0 %v1393
        %1639 = vmatprep.subr.bf16.mxu0 %v1406
        %1640 = vmatpush1.bf16.msra.mxu0 %v1405
        %1641 = vmatprep.subr.bf16.mxu0 %v1418
        %1642 = vmatpush1.bf16.msra.mxu0 %v1417
        %1643 = vmatprep.subr.bf16.mxu0 %v1430
        %1644 = vmatpush1.bf16.msra.mxu0 %v1429
        %1645 = vmatprep.subr.bf16.mxu0 %v1442
        %1646 = vmatpush1.bf16.msra.mxu0 %v1441
        %1647 = vmatprep.subr.bf16.mxu0 0
        %1648 = vmatpush1.bf16.msra.mxu0 0
        %1649 = vmatprep.subr.bf16.mxu0 0
        %1650 = vmatpush1.bf16.msra.mxu0 0
        %1651 = vmatprep.subr.bf16.mxu0 0
        %1652 = vmatpush1.bf16.msra.mxu0 0
        %1653 = vmatprep.subr.bf16.mxu0 0
        %1654 = vmatpush1.bf16.msra.mxu0 0
        %1655 = vmatprep.subr.bf16.mxu0 0
        %1656 = vmatpush1.bf16.msra.mxu0 0
        %1657 = vmatprep.subr.bf16.mxu0 0
        %1658 = vmatpush1.bf16.msra.mxu0 0
        %1659 = vmatprep.subr.bf16.mxu0 0
        %1660 = vmatpush1.bf16.msra.mxu0 0
        %1661 = vmatprep.subr.bf16.mxu0 0
        %1662 = vmatpush1.bf16.msra.mxu0 0
        %1663 = vmatprep.mubr.bf16.mxu0 0
        %1664 = vmatmul.mubr.bf16.gmra.mrb[0].mxu0 %v1002
        %v1665 = vpop.f32.mrb[0].mxu0
        %v1666 = vadd.f32 %v1024, %v1665
        %v1667 = vpop.f32.mrb[0].mxu0
        %v1668 = vadd.f32 %v1028, %v1667
        %v1669 = vpop.f32.mrb[0].mxu0
        %v1670 = vadd.f32 %v1024, %v1669
        %v1671 = vpop.f32.mrb[0].mxu0
        %v1672 = vadd.f32 %v1028, %v1671
        %1673 = vdwg.mxu0
        %1674 = vmatprep.subr.bf16.mxu0 %v1360
        %1675 = vmatpush1.bf16.msra.mxu0 %v1359
        %1676 = vmatprep.subr.bf16.mxu0 %v1372
        %1677 = vmatpush1.bf16.msra.mxu0 %v1371
        %1678 = vmatprep.subr.bf16.mxu0 %v1384
        %1679 = vmatpush1.bf16.msra.mxu0 %v1383
        %1680 = vmatprep.subr.bf16.mxu0 %v1396
        %1681 = vmatpush1.bf16.msra.mxu0 %v1395
        %1682 = vmatprep.subr.bf16.mxu0 %v1408
        %1683 = vmatpush1.bf16.msra.mxu0 %v1407
        %1684 = vmatprep.subr.bf16.mxu0 %v1420
        %1685 = vmatpush1.bf16.msra.mxu0 %v1419
        %1686 = vmatprep.subr.bf16.mxu0 %v1432
        %1687 = vmatpush1.bf16.msra.mxu0 %v1431
        %1688 = vmatprep.subr.bf16.mxu0 %v1444
        %1689 = vmatpush1.bf16.msra.mxu0 %v1443
        %1690 = vmatprep.subr.bf16.mxu0 0
        %1691 = vmatpush1.bf16.msra.mxu0 0
        %1692 = vmatprep.subr.bf16.mxu0 0
        %1693 = vmatpush1.bf16.msra.mxu0 0
        %1694 = vmatprep.subr.bf16.mxu0 0
        %1695 = vmatpush1.bf16.msra.mxu0 0
        %1696 = vmatprep.subr.bf16.mxu0 0
        %1697 = vmatpush1.bf16.msra.mxu0 0
        %1698 = vmatprep.subr.bf16.mxu0 0
        %1699 = vmatpush1.bf16.msra.mxu0 0
        %1700 = vmatprep.subr.bf16.mxu0 0
        %1701 = vmatpush1.bf16.msra.mxu0 0
        %1702 = vmatprep.subr.bf16.mxu0 0
        %1703 = vmatpush1.bf16.msra.mxu0 0
        %1704 = vmatprep.subr.bf16.mxu0 0
        %1705 = vmatpush1.bf16.msra.mxu0 0
        %1706 = vmatprep.mubr.bf16.mxu0 0
        %1707 = vmatmul.mubr.bf16.gmra.mrb[0].mxu0 %v1002
        %v1708 = vpop.f32.mrb[0].mxu0
        %v1709 = vadd.f32 %v1032, %v1708
        %v1710 = vpop.f32.mrb[0].mxu0
        %v1711 = vadd.f32 %v1036, %v1710
        %v1712 = vpop.f32.mrb[0].mxu0
        %v1713 = vadd.f32 %v1032, %v1712
        %v1714 = vpop.f32.mrb[0].mxu0
        %v1715 = vadd.f32 %v1036, %v1714
        %1716 = vdwg.mxu0
        %1717 = vmatprep.subr.bf16.mxu0 %v1362
        %1718 = vmatpush1.bf16.msra.mxu0 %v1361
        %1719 = vmatprep.subr.bf16.mxu0 %v1374
        %1720 = vmatpush1.bf16.msra.mxu0 %v1373
        %1721 = vmatprep.subr.bf16.mxu0 %v1386
        %1722 = vmatpush1.bf16.msra.mxu0 %v1385
        %1723 = vmatprep.subr.bf16.mxu0 %v1398
        %1724 = vmatpush1.bf16.msra.mxu0 %v1397
        %1725 = vmatprep.subr.bf16.mxu0 %v1410
        %1726 = vmatpush1.bf16.msra.mxu0 %v1409
        %1727 = vmatprep.subr.bf16.mxu0 %v1422
        %1728 = vmatpush1.bf16.msra.mxu0 %v1421
        %1729 = vmatprep.subr.bf16.mxu0 %v1434
        %1730 = vmatpush1.bf16.msra.mxu0 %v1433
        %1731 = vmatprep.subr.bf16.mxu0 %v1446
        %1732 = vmatpush1.bf16.msra.mxu0 %v1445
        %1733 = vmatprep.subr.bf16.mxu0 0
        %1734 = vmatpush1.bf16.msra.mxu0 0
        %1735 = vmatprep.subr.bf16.mxu0 0
        %1736 = vmatpush1.bf16.msra.mxu0 0
        %1737 = vmatprep.subr.bf16.mxu0 0
        %1738 = vmatpush1.bf16.msra.mxu0 0
        %1739 = vmatprep.subr.bf16.mxu0 0
        %1740 = vmatpush1.bf16.msra.mxu0 0
        %1741 = vmatprep.subr.bf16.mxu0 0
        %1742 = vmatpush1.bf16.msra.mxu0 0
        %1743 = vmatprep.subr.bf16.mxu0 0
        %1744 = vmatpush1.bf16.msra.mxu0 0
        %1745 = vmatprep.subr.bf16.mxu0 0
        %1746 = vmatpush1.bf16.msra.mxu0 0
        %1747 = vmatprep.subr.bf16.mxu0 0
        %1748 = vmatpush1.bf16.msra.mxu0 0
        %1749 = vmatprep.mubr.bf16.mxu0 0
        %1750 = vmatmul.mubr.bf16.gmra.mrb[0].mxu0 %v1002
        %v1751 = vpop.f32.mrb[0].mxu0
        %v1752 = vadd.f32 %v1040, %v1751
        %v1753 = vpop.f32.mrb[0].mxu0
        %v1754 = vadd.f32 %v1044, %v1753
        %v1755 = vpop.f32.mrb[0].mxu0
        %v1756 = vadd.f32 %v1040, %v1755
        %v1757 = vpop.f32.mrb[0].mxu0
        %v1758 = vadd.f32 %v1044, %v1757
        %1759 = vdwg.mxu0
        %1760 = vmatprep.subr.bf16.mxu0 %v1364
        %1761 = vmatpush1.bf16.msra.mxu0 %v1363
        %1762 = vmatprep.subr.bf16.mxu0 %v1376
        %1763 = vmatpush1.bf16.msra.mxu0 %v1375
        %1764 = vmatprep.subr.bf16.mxu0 %v1388
        %1765 = vmatpush1.bf16.msra.mxu0 %v1387
        %1766 = vmatprep.subr.bf16.mxu0 %v1400
        %1767 = vmatpush1.bf16.msra.mxu0 %v1399
        %1768 = vmatprep.subr.bf16.mxu0 %v1412
        %1769 = vmatpush1.bf16.msra.mxu0 %v1411
        %1770 = vmatprep.subr.bf16.mxu0 %v1424
        %1771 = vmatpush1.bf16.msra.mxu0 %v1423
        %1772 = vmatprep.subr.bf16.mxu0 %v1436
        %1773 = vmatpush1.bf16.msra.mxu0 %v1435
        %1774 = vmatprep.subr.bf16.mxu0 %v1448
        %1775 = vmatpush1.bf16.msra.mxu0 %v1447
        %1776 = vmatprep.subr.bf16.mxu0 0
        %1777 = vmatpush1.bf16.msra.mxu0 0
        %1778 = vmatprep.subr.bf16.mxu0 0
        %1779 = vmatpush1.bf16.msra.mxu0 0
        %1780 = vmatprep.subr.bf16.mxu0 0
        %1781 = vmatpush1.bf16.msra.mxu0 0
        %1782 = vmatprep.subr.bf16.mxu0 0
        %1783 = vmatpush1.bf16.msra.mxu0 0
        %1784 = vmatprep.subr.bf16.mxu0 0
        %1785 = vmatpush1.bf16.msra.mxu0 0
        %1786 = vmatprep.subr.bf16.mxu0 0
        %1787 = vmatpush1.bf16.msra.mxu0 0
        %1788 = vmatprep.subr.bf16.mxu0 0
        %1789 = vmatpush1.bf16.msra.mxu0 0
        %1790 = vmatprep.subr.bf16.mxu0 0
        %1791 = vmatpush1.bf16.msra.mxu0 0
        %1792 = vmatprep.mubr.bf16.mxu0 0
        %1793 = vmatmul.mubr.bf16.gmra.mrb[0].mxu0 %v1002
        %v1794 = vpop.f32.mrb[0].mxu0
        %v1795 = vadd.f32 %v1048, %v1794
        %v1796 = vpop.f32.mrb[0].mxu0
        %v1797 = vadd.f32 %v1052, %v1796
        %v1798 = vpop.f32.mrb[0].mxu0
        %v1799 = vadd.f32 %v1048, %v1798
        %v1800 = vpop.f32.mrb[0].mxu0
        %v1801 = vadd.f32 %v1052, %v1800
        %1802 = vdwg.mxu0
        %v1803 = vpack.c.bf16 %v1584, %v1580
        %v1804 = vpack.c.bf16 %v1586, %v1582
        %v1805 = vpack.c.bf16 %v1627, %v1623
        %v1806 = vpack.c.bf16 %v1629, %v1625
        %v1807 = vpack.c.bf16 %v1670, %v1666
        %v1808 = vpack.c.bf16 %v1672, %v1668
        %v1809 = vpack.c.bf16 %v1713, %v1709
        %v1810 = vpack.c.bf16 %v1715, %v1711
        %v1811 = vpack.c.bf16 %v1756, %v1752
        %v1812 = vpack.c.bf16 %v1758, %v1754
        %v1813 = vpack.c.bf16 %v1799, %v1795
        %v1814 = vpack.c.bf16 %v1801, %v1797
        %1815 = vmatprep.subr.bf16.mxu0 0
        %1816 = vmatpush1.bf16.xpose.msra.mxu0 %v1807
        %1817 = vmatprep.subr.bf16.mxu0 0
        %1818 = vmatpush1.bf16.xpose.msra.mxu0 0
        %1819 = vmatprep.subr.bf16.mxu0 0
        %1820 = vmatpush1.bf16.xpose.msra.mxu0 0
        %1821 = vmatprep.subr.bf16.mxu0 0
        %1822 = vmatpush1.bf16.xpose.msra.mxu0 0
        %1823 = vmatprep.subr.bf16.mxu0 0
        %1824 = vmatpush1.bf16.xpose.msra.mxu0 0
        %1825 = vmatprep.subr.bf16.mxu0 0
        %1826 = vmatpush1.bf16.xpose.msra.mxu0 0
        %1827 = vmatprep.subr.bf16.mxu0 0
        %1828 = vmatpush1.bf16.xpose.msra.mxu0 0
        %1829 = vmatprep.subr.bf16.mxu0 0
        %1830 = vmatpush1.bf16.xpose.msra.mxu0 0
        %1831 = vmatprep.subr.bf16.mxu0 0
        %1832 = vmatpush1.bf16.xpose.msra.mxu0 0
        %1833 = vmatprep.subr.bf16.mxu0 0
        %1834 = vmatpush1.bf16.xpose.msra.mxu0 0
        %1835 = vmatprep.subr.bf16.mxu0 0
        %1836 = vmatpush1.bf16.xpose.msra.mxu0 0
        %1837 = vmatprep.subr.bf16.mxu0 0
        %1838 = vmatpush1.bf16.xpose.msra.mxu0 0
        %1839 = vmatprep.subr.bf16.mxu0 0
        %1840 = vmatpush1.bf16.xpose.msra.mxu0 0
        %1841 = vmatprep.subr.bf16.mxu0 0
        %1842 = vmatpush1.bf16.xpose.msra.mxu0 0
        %1843 = vmatprep.subr.bf16.mxu0 0
        %1844 = vmatpush1.bf16.xpose.msra.mxu0 0
        %1845 = vmatprep.subr.bf16.mxu0 0
        %1846 = vmatpush1.bf16.xpose.msra.mxu0 0
        %1847 = vmatprep.mubr.bf16.mxu0 0
        %1848 = vmatmul.mubr.bf16.gmra.mrb[0].mxu0 %v1803
        %v1849 = vpop.f32.mrb[0].mxu0
        %v1850 = vadd.f32 0.0, %v1849
        %v1851 = vpop.f32.mrb[0].mxu0
        %v1852 = vpop.f32.mrb[0].mxu0
        %v1853 = vadd.f32 0.0, %v1852
        %v1854 = vpop.f32.mrb[0].mxu0
        %1855 = vdwg.mxu0
        %1856 = vmatprep.subr.bf16.mxu0 0
        %1857 = vmatpush1.bf16.xpose.msra.mxu0 %v1808
        %1858 = vmatprep.subr.bf16.mxu0 0
        %1859 = vmatpush1.bf16.xpose.msra.mxu0 0
        %1860 = vmatprep.subr.bf16.mxu0 0
        %1861 = vmatpush1.bf16.xpose.msra.mxu0 0
        %1862 = vmatprep.subr.bf16.mxu0 0
        %1863 = vmatpush1.bf16.xpose.msra.mxu0 0
        %1864 = vmatprep.subr.bf16.mxu0 0
        %1865 = vmatpush1.bf16.xpose.msra.mxu0 0
        %1866 = vmatprep.subr.bf16.mxu0 0
        %1867 = vmatpush1.bf16.xpose.msra.mxu0 0
        %1868 = vmatprep.subr.bf16.mxu0 0
        %1869 = vmatpush1.bf16.xpose.msra.mxu0 0
        %1870 = vmatprep.subr.bf16.mxu0 0
        %1871 = vmatpush1.bf16.xpose.msra.mxu0 0
        %1872 = vmatprep.subr.bf16.mxu0 0
        %1873 = vmatpush1.bf16.xpose.msra.mxu0 0
        %1874 = vmatprep.subr.bf16.mxu0 0
        %1875 = vmatpush1.bf16.xpose.msra.mxu0 0
        %1876 = vmatprep.subr.bf16.mxu0 0
        %1877 = vmatpush1.bf16.xpose.msra.mxu0 0
        %1878 = vmatprep.subr.bf16.mxu0 0
        %1879 = vmatpush1.bf16.xpose.msra.mxu0 0
        %1880 = vmatprep.subr.bf16.mxu0 0
        %1881 = vmatpush1.bf16.xpose.msra.mxu0 0
        %1882 = vmatprep.subr.bf16.mxu0 0
        %1883 = vmatpush1.bf16.xpose.msra.mxu0 0
        %1884 = vmatprep.subr.bf16.mxu0 0
        %1885 = vmatpush1.bf16.xpose.msra.mxu0 0
        %1886 = vmatprep.subr.bf16.mxu0 0
        %1887 = vmatpush1.bf16.xpose.msra.mxu0 0
        %1888 = vmatprep.mubr.bf16.mxu0 0
        %1889 = vmatmul.mubr.bf16.gmra.mrb[0].mxu0 %v1804
        %v1890 = vpop.f32.mrb[0].mxu0
        %v1891 = vadd.f32 0.0, %v1890
        %v1892 = vpop.f32.mrb[0].mxu0
        %v1893 = vpop.f32.mrb[0].mxu0
        %v1894 = vadd.f32 0.0, %v1893
        %v1895 = vpop.f32.mrb[0].mxu0
        %1896 = vdwg.mxu0
        %1897 = vmatprep.subr.bf16.mxu0 0
        %1898 = vmatpush1.bf16.xpose.msra.mxu0 %v1809
        %1899 = vmatprep.subr.bf16.mxu0 0
        %1900 = vmatpush1.bf16.xpose.msra.mxu0 0
        %1901 = vmatprep.subr.bf16.mxu0 0
        %1902 = vmatpush1.bf16.xpose.msra.mxu0 0
        %1903 = vmatprep.subr.bf16.mxu0 0
        %1904 = vmatpush1.bf16.xpose.msra.mxu0 0
        %1905 = vmatprep.subr.bf16.mxu0 0
        %1906 = vmatpush1.bf16.xpose.msra.mxu0 0
        %1907 = vmatprep.subr.bf16.mxu0 0
        %1908 = vmatpush1.bf16.xpose.msra.mxu0 0
        %1909 = vmatprep.subr.bf16.mxu0 0
        %1910 = vmatpush1.bf16.xpose.msra.mxu0 0
        %1911 = vmatprep.subr.bf16.mxu0 0
        %1912 = vmatpush1.bf16.xpose.msra.mxu0 0
        %1913 = vmatprep.subr.bf16.mxu0 0
        %1914 = vmatpush1.bf16.xpose.msra.mxu0 0
        %1915 = vmatprep.subr.bf16.mxu0 0
        %1916 = vmatpush1.bf16.xpose.msra.mxu0 0
        %1917 = vmatprep.subr.bf16.mxu0 0
        %1918 = vmatpush1.bf16.xpose.msra.mxu0 0
        %1919 = vmatprep.subr.bf16.mxu0 0
        %1920 = vmatpush1.bf16.xpose.msra.mxu0 0
        %1921 = vmatprep.subr.bf16.mxu0 0
        %1922 = vmatpush1.bf16.xpose.msra.mxu0 0
        %1923 = vmatprep.subr.bf16.mxu0 0
        %1924 = vmatpush1.bf16.xpose.msra.mxu0 0
        %1925 = vmatprep.subr.bf16.mxu0 0
        %1926 = vmatpush1.bf16.xpose.msra.mxu0 0
        %1927 = vmatprep.subr.bf16.mxu0 0
        %1928 = vmatpush1.bf16.xpose.msra.mxu0 0
        %1929 = vmatprep.mubr.bf16.mxu0 0
        %1930 = vmatmul.mubr.bf16.gmra.mrb[0].mxu0 %v1805
        %v1931 = vpop.f32.mrb[0].mxu0
        %v1932 = vadd.f32 0.0, %v1931
        %v1933 = vpop.f32.mrb[0].mxu0
        %v1934 = vpop.f32.mrb[0].mxu0
        %v1935 = vadd.f32 0.0, %v1934
        %v1936 = vpop.f32.mrb[0].mxu0
        %1937 = vdwg.mxu0
        %1938 = vmatprep.subr.bf16.mxu0 0
        %1939 = vmatpush1.bf16.xpose.msra.mxu0 %v1810
        %1940 = vmatprep.subr.bf16.mxu0 0
        %1941 = vmatpush1.bf16.xpose.msra.mxu0 0
        %1942 = vmatprep.subr.bf16.mxu0 0
        %1943 = vmatpush1.bf16.xpose.msra.mxu0 0
        %1944 = vmatprep.subr.bf16.mxu0 0
        %1945 = vmatpush1.bf16.xpose.msra.mxu0 0
        %1946 = vmatprep.subr.bf16.mxu0 0
        %1947 = vmatpush1.bf16.xpose.msra.mxu0 0
        %1948 = vmatprep.subr.bf16.mxu0 0
        %1949 = vmatpush1.bf16.xpose.msra.mxu0 0
        %1950 = vmatprep.subr.bf16.mxu0 0
        %1951 = vmatpush1.bf16.xpose.msra.mxu0 0
        %1952 = vmatprep.subr.bf16.mxu0 0
        %1953 = vmatpush1.bf16.xpose.msra.mxu0 0
        %1954 = vmatprep.subr.bf16.mxu0 0
        %1955 = vmatpush1.bf16.xpose.msra.mxu0 0
        %1956 = vmatprep.subr.bf16.mxu0 0
        %1957 = vmatpush1.bf16.xpose.msra.mxu0 0
        %1958 = vmatprep.subr.bf16.mxu0 0
        %1959 = vmatpush1.bf16.xpose.msra.mxu0 0
        %1960 = vmatprep.subr.bf16.mxu0 0
        %1961 = vmatpush1.bf16.xpose.msra.mxu0 0
        %1962 = vmatprep.subr.bf16.mxu0 0
        %1963 = vmatpush1.bf16.xpose.msra.mxu0 0
        %1964 = vmatprep.subr.bf16.mxu0 0
        %1965 = vmatpush1.bf16.xpose.msra.mxu0 0
        %1966 = vmatprep.subr.bf16.mxu0 0
        %1967 = vmatpush1.bf16.xpose.msra.mxu0 0
        %1968 = vmatprep.subr.bf16.mxu0 0
        %1969 = vmatpush1.bf16.xpose.msra.mxu0 0
        %1970 = vmatprep.mubr.bf16.mxu0 0
        %1971 = vmatmul.mubr.bf16.gmra.mrb[0].mxu0 %v1806
        %v1972 = vpop.f32.mrb[0].mxu0
        %v1973 = vadd.f32 0.0, %v1972
        %v1974 = vpop.f32.mrb[0].mxu0
        %v1975 = vpop.f32.mrb[0].mxu0
        %v1976 = vadd.f32 0.0, %v1975
        %v1977 = vpop.f32.mrb[0].mxu0
        %1978 = vdwg.mxu0
        %vm1979 = vcmask 72704
        %v1980 = vsel %vm1979, %v1850, -inf
        %1981 = vmax.xlane.f32.xlu0 %v1980
        %v1982 = vpop.xlane.xlu0 %1981
        %vm1983 = vcmask 65536
        %v1984 = vsel %vm1983, %v1853, -inf
        %1985 = vmax.xlane.f32.xlu0 %v1984
        %v1986 = vpop.xlane.xlu0 %1985
        %v1987 = vsel %vm1979, %v1891, -inf
        %1988 = vmax.xlane.f32.xlu0 %v1987
        %v1989 = vpop.xlane.xlu0 %1988
        %v1990 = vsel %vm1983, %v1894, -inf
        %1991 = vmax.xlane.f32.xlu0 %v1990
        %v1992 = vpop.xlane.xlu0 %1991
        %v1993 = vsel %vm1979, %v1932, -inf
        %1994 = vmax.xlane.f32.xlu0 %v1993
        %v1995 = vpop.xlane.xlu0 %1994
        %v1996 = vsel %vm1983, %v1935, -inf
        %1997 = vmax.xlane.f32.xlu0 %v1996
        %v1998 = vpop.xlane.xlu0 %1997
        %v1999 = vsel %vm1979, %v1973, -inf
        %2000 = vmax.xlane.f32.xlu0 %v1999
        %v2001 = vpop.xlane.xlu0 %2000
        %v2002 = vsel %vm1983, %v1976, -inf
        %2003 = vmax.xlane.f32.xlu0 %v2002
        %v2004 = vpop.xlane.xlu0 %2003
        %v2005 = vsub.f32 %v1850, %v1982
        %v2006 = vsub.f32 %v1853, %v1986
        %v2007 = vsub.f32 %v1891, %v1989
        %v2008 = vsub.f32 %v1894, %v1992
        %v2009 = vsub.f32 %v1932, %v1995
        %v2010 = vsub.f32 %v1935, %v1998
        %v2011 = vsub.f32 %v1973, %v2001
        %v2012 = vsub.f32 %v1976, %v2004
        %v2013 = vmul.f32 %v2005, 1.442695
        %v2014 = vpow.pop %v2013
        %v2015 = vmul.f32 %v2006, 1.442695
        %v2016 = vpow.pop %v2015
        %v2017 = vmul.f32 %v2007, 1.442695
        %v2018 = vpow.pop %v2017
        %v2019 = vmul.f32 %v2008, 1.442695
        %v2020 = vpow.pop %v2019
        %v2021 = vmul.f32 %v2009, 1.442695
        %v2022 = vpow.pop %v2021
        %v2023 = vmul.f32 %v2010, 1.442695
        %v2024 = vpow.pop %v2023
        %v2025 = vmul.f32 %v2011, 1.442695
        %v2026 = vpow.pop %v2025
        %v2027 = vmul.f32 %v2012, 1.442695
        %v2028 = vpow.pop %v2027
        %v2029 = vsel %vm1979, %v2014, 0.0
        %2030 = vadd.xlane.f32.xlu0 %v2029
        %v2031 = vpop.xlane.xlu0 %2030
        %v2032 = vsel %vm1983, %v2016, 0.0
        %2033 = vadd.xlane.f32.xlu0 %v2032
        %v2034 = vpop.xlane.xlu0 %2033
        %v2035 = vsel %vm1979, %v2018, 0.0
        %2036 = vadd.xlane.f32.xlu0 %v2035
        %v2037 = vpop.xlane.xlu0 %2036
        %v2038 = vsel %vm1983, %v2020, 0.0
        %2039 = vadd.xlane.f32.xlu0 %v2038
        %v2040 = vpop.xlane.xlu0 %2039
        %v2041 = vsel %vm1979, %v2022, 0.0
        %2042 = vadd.xlane.f32.xlu0 %v2041
        %v2043 = vpop.xlane.xlu0 %2042
        %v2044 = vsel %vm1983, %v2024, 0.0
        %2045 = vadd.xlane.f32.xlu0 %v2044
        %v2046 = vpop.xlane.xlu0 %2045
        %v2047 = vsel %vm1979, %v2026, 0.0
        %2048 = vadd.xlane.f32.xlu0 %v2047
        %v2049 = vpop.xlane.xlu0 %2048
        %v2050 = vsel %vm1983, %v2028, 0.0
        %2051 = vadd.xlane.f32.xlu0 %v2050
        %v2052 = vpop.xlane.xlu0 %2051
        %v2053 = vrcp.pop %v2031
        %v2054 = vrcp.pop %v2034
        %v2055 = vrcp.pop %v2037
        %v2056 = vrcp.pop %v2040
        %v2057 = vrcp.pop %v2043
        %v2058 = vrcp.pop %v2046
        %v2059 = vrcp.pop %v2049
        %v2060 = vrcp.pop %v2052
        %v2061 = vmul.f32 %v2014, %v2053
        %v2062 = vmul.f32 %v2016, %v2054
        %v2063 = vmul.f32 %v2018, %v2055
        %v2064 = vmul.f32 %v2020, %v2056
        %v2065 = vmul.f32 %v2022, %v2057
        %v2066 = vmul.f32 %v2024, %v2058
        %v2067 = vmul.f32 %v2026, %v2059
        %v2068 = vmul.f32 %v2028, %v2060
        %v2069 = vpack.c.bf16 %v2062, %v2061
        %v2070 = vpack.c.bf16 %v2064, %v2063
        %v2071 = vpack.c.bf16 %v2066, %v2065
        %v2072 = vpack.c.bf16 %v2068, %v2067
        %v2074 = vsel %vm1979, %v2069, 0
        %vm2076 = vcmask 1043456
        %vm2077 = vcmask 1044480
        %v2078 = vsel %vm2076, 4294967295, 65535
        %v2079 = vsel %vm2077, %v2078, 0
        %v2081 = vand.u32 %v1811, %v2079
        %2083 = vmatprep.subr.bf16.mxu0 0
        %2084 = vmatpush1.bf16.msra.mxu0 %v2081
        %2085 = vmatprep.subr.bf16.mxu0 0
        %2086 = vmatpush1.bf16.msra.mxu0 0
        %2087 = vmatprep.subr.bf16.mxu0 0
        %2088 = vmatpush1.bf16.msra.mxu0 0
        %2089 = vmatprep.subr.bf16.mxu0 0
        %2090 = vmatpush1.bf16.msra.mxu0 0
        %2091 = vmatprep.subr.bf16.mxu0 0
        %2092 = vmatpush1.bf16.msra.mxu0 0
        %2093 = vmatprep.subr.bf16.mxu0 0
        %2094 = vmatpush1.bf16.msra.mxu0 0
        %2095 = vmatprep.subr.bf16.mxu0 0
        %2096 = vmatpush1.bf16.msra.mxu0 0
        %2097 = vmatprep.subr.bf16.mxu0 0
        %2098 = vmatpush1.bf16.msra.mxu0 0
        %2099 = vmatprep.subr.bf16.mxu0 0
        %2100 = vmatpush1.bf16.msra.mxu0 0
        %2101 = vmatprep.subr.bf16.mxu0 0
        %2102 = vmatpush1.bf16.msra.mxu0 0
        %2103 = vmatprep.subr.bf16.mxu0 0
        %2104 = vmatpush1.bf16.msra.mxu0 0
        %2105 = vmatprep.subr.bf16.mxu0 0
        %2106 = vmatpush1.bf16.msra.mxu0 0
        %2107 = vmatprep.subr.bf16.mxu0 0
        %2108 = vmatpush1.bf16.msra.mxu0 0
        %2109 = vmatprep.subr.bf16.mxu0 0
        %2110 = vmatpush1.bf16.msra.mxu0 0
        %2111 = vmatprep.subr.bf16.mxu0 0
        %2112 = vmatpush1.bf16.msra.mxu0 0
        %2113 = vmatprep.subr.bf16.mxu0 0
        %2114 = vmatpush1.bf16.msra.mxu0 0
        %2115 = vmatprep.mubr.bf16.mxu0 0
        %2116 = vmatmul.mubr.bf16.gmra.mrb[0].mxu0 %v2074
        %v2117 = vpop.f32.mrb[0].mxu0
        %v2118 = vadd.f32 0.0, %v2117
        %v2119 = vpop.f32.mrb[0].mxu0
        %v2120 = vpop.f32.mrb[0].mxu0
        %v2121 = vadd.f32 0.0, %v2120
        %v2122 = vpop.f32.mrb[0].mxu0
        %2123 = vdwg.mxu0
        %v2125 = vsel %vm1979, %v2070, 0
        %v2128 = vand.u32 %v1812, %v2079
        %2130 = vmatprep.subr.bf16.mxu0 0
        %2131 = vmatpush1.bf16.msra.mxu0 %v2128
        %2132 = vmatprep.subr.bf16.mxu0 0
        %2133 = vmatpush1.bf16.msra.mxu0 0
        %2134 = vmatprep.subr.bf16.mxu0 0
        %2135 = vmatpush1.bf16.msra.mxu0 0
        %2136 = vmatprep.subr.bf16.mxu0 0
        %2137 = vmatpush1.bf16.msra.mxu0 0
        %2138 = vmatprep.subr.bf16.mxu0 0
        %2139 = vmatpush1.bf16.msra.mxu0 0
        %2140 = vmatprep.subr.bf16.mxu0 0
        %2141 = vmatpush1.bf16.msra.mxu0 0
        %2142 = vmatprep.subr.bf16.mxu0 0
        %2143 = vmatpush1.bf16.msra.mxu0 0
        %2144 = vmatprep.subr.bf16.mxu0 0
        %2145 = vmatpush1.bf16.msra.mxu0 0
        %2146 = vmatprep.subr.bf16.mxu0 0
        %2147 = vmatpush1.bf16.msra.mxu0 0
        %2148 = vmatprep.subr.bf16.mxu0 0
        %2149 = vmatpush1.bf16.msra.mxu0 0
        %2150 = vmatprep.subr.bf16.mxu0 0
        %2151 = vmatpush1.bf16.msra.mxu0 0
        %2152 = vmatprep.subr.bf16.mxu0 0
        %2153 = vmatpush1.bf16.msra.mxu0 0
        %2154 = vmatprep.subr.bf16.mxu0 0
        %2155 = vmatpush1.bf16.msra.mxu0 0
        %2156 = vmatprep.subr.bf16.mxu0 0
        %2157 = vmatpush1.bf16.msra.mxu0 0
        %2158 = vmatprep.subr.bf16.mxu0 0
        %2159 = vmatpush1.bf16.msra.mxu0 0
        %2160 = vmatprep.subr.bf16.mxu0 0
        %2161 = vmatpush1.bf16.msra.mxu0 0
        %2162 = vmatprep.mubr.bf16.mxu0 0
        %2163 = vmatmul.mubr.bf16.gmra.mrb[0].mxu0 %v2125
        %v2164 = vpop.f32.mrb[0].mxu0
        %v2165 = vadd.f32 0.0, %v2164
        %v2166 = vpop.f32.mrb[0].mxu0
        %v2167 = vpop.f32.mrb[0].mxu0
        %v2168 = vadd.f32 0.0, %v2167
        %v2169 = vpop.f32.mrb[0].mxu0
        %2170 = vdwg.mxu0
        %v2172 = vsel %vm1979, %v2071, 0
        %v2175 = vand.u32 %v1813, %v2079
        %2177 = vmatprep.subr.bf16.mxu0 0
        %2178 = vmatpush1.bf16.msra.mxu0 %v2175
        %2179 = vmatprep.subr.bf16.mxu0 0
        %2180 = vmatpush1.bf16.msra.mxu0 0
        %2181 = vmatprep.subr.bf16.mxu0 0
        %2182 = vmatpush1.bf16.msra.mxu0 0
        %2183 = vmatprep.subr.bf16.mxu0 0
        %2184 = vmatpush1.bf16.msra.mxu0 0
        %2185 = vmatprep.subr.bf16.mxu0 0
        %2186 = vmatpush1.bf16.msra.mxu0 0
        %2187 = vmatprep.subr.bf16.mxu0 0
        %2188 = vmatpush1.bf16.msra.mxu0 0
        %2189 = vmatprep.subr.bf16.mxu0 0
        %2190 = vmatpush1.bf16.msra.mxu0 0
        %2191 = vmatprep.subr.bf16.mxu0 0
        %2192 = vmatpush1.bf16.msra.mxu0 0
        %2193 = vmatprep.subr.bf16.mxu0 0
        %2194 = vmatpush1.bf16.msra.mxu0 0
        %2195 = vmatprep.subr.bf16.mxu0 0
        %2196 = vmatpush1.bf16.msra.mxu0 0
        %2197 = vmatprep.subr.bf16.mxu0 0
        %2198 = vmatpush1.bf16.msra.mxu0 0
        %2199 = vmatprep.subr.bf16.mxu0 0
        %2200 = vmatpush1.bf16.msra.mxu0 0
        %2201 = vmatprep.subr.bf16.mxu0 0
        %2202 = vmatpush1.bf16.msra.mxu0 0
        %2203 = vmatprep.subr.bf16.mxu0 0
        %2204 = vmatpush1.bf16.msra.mxu0 0
        %2205 = vmatprep.subr.bf16.mxu0 0
        %2206 = vmatpush1.bf16.msra.mxu0 0
        %2207 = vmatprep.subr.bf16.mxu0 0
        %2208 = vmatpush1.bf16.msra.mxu0 0
        %2209 = vmatprep.mubr.bf16.mxu0 0
        %2210 = vmatmul.mubr.bf16.gmra.mrb[0].mxu0 %v2172
        %v2211 = vpop.f32.mrb[0].mxu0
        %v2212 = vadd.f32 0.0, %v2211
        %v2213 = vpop.f32.mrb[0].mxu0
        %v2214 = vpop.f32.mrb[0].mxu0
        %v2215 = vadd.f32 0.0, %v2214
        %v2216 = vpop.f32.mrb[0].mxu0
        %2217 = vdwg.mxu0
        %v2219 = vsel %vm1979, %v2072, 0
        %v2222 = vand.u32 %v1814, %v2079
        %2224 = vmatprep.subr.bf16.mxu0 0
        %2225 = vmatpush1.bf16.msra.mxu0 %v2222
        %2226 = vmatprep.subr.bf16.mxu0 0
        %2227 = vmatpush1.bf16.msra.mxu0 0
        %2228 = vmatprep.subr.bf16.mxu0 0
        %2229 = vmatpush1.bf16.msra.mxu0 0
        %2230 = vmatprep.subr.bf16.mxu0 0
        %2231 = vmatpush1.bf16.msra.mxu0 0
        %2232 = vmatprep.subr.bf16.mxu0 0
        %2233 = vmatpush1.bf16.msra.mxu0 0
        %2234 = vmatprep.subr.bf16.mxu0 0
        %2235 = vmatpush1.bf16.msra.mxu0 0
        %2236 = vmatprep.subr.bf16.mxu0 0
        %2237 = vmatpush1.bf16.msra.mxu0 0
        %2238 = vmatprep.subr.bf16.mxu0 0
        %2239 = vmatpush1.bf16.msra.mxu0 0
        %2240 = vmatprep.subr.bf16.mxu0 0
        %2241 = vmatpush1.bf16.msra.mxu0 0
        %2242 = vmatprep.subr.bf16.mxu0 0
        %2243 = vmatpush1.bf16.msra.mxu0 0
        %2244 = vmatprep.subr.bf16.mxu0 0
        %2245 = vmatpush1.bf16.msra.mxu0 0
        %2246 = vmatprep.subr.bf16.mxu0 0
        %2247 = vmatpush1.bf16.msra.mxu0 0
        %2248 = vmatprep.subr.bf16.mxu0 0
        %2249 = vmatpush1.bf16.msra.mxu0 0
        %2250 = vmatprep.subr.bf16.mxu0 0
        %2251 = vmatpush1.bf16.msra.mxu0 0
        %2252 = vmatprep.subr.bf16.mxu0 0
        %2253 = vmatpush1.bf16.msra.mxu0 0
        %2254 = vmatprep.subr.bf16.mxu0 0
        %2255 = vmatpush1.bf16.msra.mxu0 0
        %2256 = vmatprep.mubr.bf16.mxu0 0
        %2257 = vmatmul.mubr.bf16.gmra.mrb[0].mxu0 %v2219
        %v2258 = vpop.f32.mrb[0].mxu0
        %v2259 = vadd.f32 0.0, %v2258
        %v2260 = vpop.f32.mrb[0].mxu0
        %v2261 = vpop.f32.mrb[0].mxu0
        %v2262 = vadd.f32 0.0, %v2261
        %v2263 = vpop.f32.mrb[0].mxu0
        %2264 = vdwg.mxu0
        %v2265 = vpack.c.bf16 %v2121, %v2118
        %v2266 = vpack.c.bf16 %v2168, %v2165
        %v2267 = vpack.c.bf16 %v2215, %v2212
        %v2268 = vpack.c.bf16 %v2262, %v2259
        %v2270 = vlaneseq
        %v2271 = vshrl.u32 %v2270, 7
        %v2272 = vsub.s32 0, %v2271
        %v2273 = vrot.slane %v1001, %v2272
        %v2339 = vunpack.c.l.b16 %v937
        %v2340 = vunpack.c.l.b16 %v938
        %v2341 = vunpack.c.l.b16 %v939
        %v2342 = vunpack.c.l.b16 %v940
        %v2343 = vunpack.c.l.b16 %v941
        %v2344 = vunpack.c.l.b16 %v942
        %v2345 = vunpack.c.l.b16 %v943
        %v2346 = vunpack.c.l.b16 %v944
        %v2347 = vunpack.c.l.b16 %v945
        %v2348 = vunpack.c.l.b16 %v946
        %v2349 = vunpack.c.l.b16 %v947
        %v2350 = vunpack.c.l.b16 %v948
        %v2351 = vunpack.c.l.b16 %v949
        %v2352 = vunpack.c.l.b16 %v950
        %v2353 = vunpack.c.l.b16 %v951
        %v2354 = vunpack.c.l.b16 %v952
        %v2355 = vunpack.c.l.b16 %v953
        %v2356 = vunpack.c.l.b16 %v954
        %v2357 = vunpack.c.l.b16 %v955
        %v2358 = vunpack.c.l.b16 %v956
        %v2359 = vunpack.c.l.b16 %v957
        %v2360 = vunpack.c.l.b16 %v958
        %v2361 = vunpack.c.l.b16 %v959
        %v2362 = vunpack.c.l.b16 %v960
        %v2363 = vunpack.c.l.b16 %v961
        %v2364 = vunpack.c.l.b16 %v962
        %v2365 = vunpack.c.l.b16 %v963
        %v2366 = vunpack.c.l.b16 %v964
        %v2367 = vunpack.c.l.b16 %v965
        %v2368 = vunpack.c.l.b16 %v966
        %v2369 = vunpack.c.l.b16 %v967
        %v2370 = vunpack.c.l.b16 %v968
        %v2371 = vunpack.c.l.b16 %v969
        %v2372 = vunpack.c.l.b16 %v970
        %v2373 = vunpack.c.l.b16 %v971
        %v2374 = vunpack.c.l.b16 %v972
        %v2375 = vunpack.c.l.b16 %v973
        %v2376 = vunpack.c.l.b16 %v974
        %v2377 = vunpack.c.l.b16 %v975
        %v2378 = vunpack.c.l.b16 %v976
        %v2379 = vunpack.c.l.b16 %v977
        %v2380 = vunpack.c.l.b16 %v978
        %v2381 = vunpack.c.l.b16 %v979
        %v2382 = vunpack.c.l.b16 %v980
        %v2383 = vunpack.c.l.b16 %v981
        %v2384 = vunpack.c.l.b16 %v982
        %v2385 = vunpack.c.l.b16 %v983
        %v2386 = vunpack.c.l.b16 %v984
        %v2387 = vunpack.c.l.b16 %v985
        %v2388 = vunpack.c.l.b16 %v986
        %v2389 = vunpack.c.l.b16 %v987
        %v2390 = vunpack.c.l.b16 %v988
        %v2391 = vunpack.c.l.b16 %v989
        %v2392 = vunpack.c.l.b16 %v990
        %v2393 = vunpack.c.l.b16 %v991
        %v2394 = vunpack.c.l.b16 %v992
        %v2395 = vunpack.c.l.b16 %v993
        %v2396 = vunpack.c.l.b16 %v994
        %v2397 = vunpack.c.l.b16 %v995
        %v2398 = vunpack.c.l.b16 %v996
        %v2399 = vunpack.c.l.b16 %v997
        %v2400 = vunpack.c.l.b16 %v998
        %v2401 = vunpack.c.l.b16 %v999
        %v2402 = vunpack.c.l.b16 %v1000
        %v2403 = vpack.c.b16 %v2340, %v2339
        %v2404 = vpack.c.b16 %v2342, %v2341
        %v2405 = vpack.c.b16 %v2344, %v2343
        %v2406 = vpack.c.b16 %v2346, %v2345
        %v2407 = vpack.c.b16 %v2348, %v2347
        %v2408 = vpack.c.b16 %v2350, %v2349
        %v2409 = vpack.c.b16 %v2352, %v2351
        %v2410 = vpack.c.b16 %v2354, %v2353
        %v2411 = vpack.c.b16 %v2356, %v2355
        %v2412 = vpack.c.b16 %v2358, %v2357
        %v2413 = vpack.c.b16 %v2360, %v2359
        %v2414 = vpack.c.b16 %v2362, %v2361
        %v2415 = vpack.c.b16 %v2364, %v2363
        %v2416 = vpack.c.b16 %v2366, %v2365
        %v2417 = vpack.c.b16 %v2368, %v2367
        %v2418 = vpack.c.b16 %v2370, %v2369
        %v2419 = vpack.c.b16 %v2372, %v2371
        %v2420 = vpack.c.b16 %v2374, %v2373
        %v2421 = vpack.c.b16 %v2376, %v2375
        %v2422 = vpack.c.b16 %v2378, %v2377
        %v2423 = vpack.c.b16 %v2380, %v2379
        %v2424 = vpack.c.b16 %v2382, %v2381
        %v2425 = vpack.c.b16 %v2384, %v2383
        %v2426 = vpack.c.b16 %v2386, %v2385
        %v2427 = vpack.c.b16 %v2388, %v2387
        %v2428 = vpack.c.b16 %v2390, %v2389
        %v2429 = vpack.c.b16 %v2392, %v2391
        %v2430 = vpack.c.b16 %v2394, %v2393
        %v2431 = vpack.c.b16 %v2396, %v2395
        %v2432 = vpack.c.b16 %v2398, %v2397
        %v2433 = vpack.c.b16 %v2400, %v2399
        %v2434 = vpack.c.b16 %v2402, %v2401
        %2467 = vmatprep.subr.bf16.mxu0 0
        %2468 = vmatpush1.bf16.msra.mxu0 %v2403
        %2469 = vmatprep.subr.bf16.mxu0 0
        %2470 = vmatpush1.bf16.msra.mxu0 %v2404
        %2471 = vmatprep.subr.bf16.mxu0 0
        %2472 = vmatpush1.bf16.msra.mxu0 %v2405
        %2473 = vmatprep.subr.bf16.mxu0 0
        %2474 = vmatpush1.bf16.msra.mxu0 %v2406
        %2475 = vmatprep.subr.bf16.mxu0 0
        %2476 = vmatpush1.bf16.msra.mxu0 %v2407
        %2477 = vmatprep.subr.bf16.mxu0 0
        %2478 = vmatpush1.bf16.msra.mxu0 %v2408
        %2479 = vmatprep.subr.bf16.mxu0 0
        %2480 = vmatpush1.bf16.msra.mxu0 %v2409
        %2481 = vmatprep.subr.bf16.mxu0 0
        %2482 = vmatpush1.bf16.msra.mxu0 %v2410
        %2483 = vmatprep.subr.bf16.mxu0 0
        %2484 = vmatpush1.bf16.msra.mxu0 %v2411
        %2485 = vmatprep.subr.bf16.mxu0 0
        %2486 = vmatpush1.bf16.msra.mxu0 %v2412
        %2487 = vmatprep.subr.bf16.mxu0 0
        %2488 = vmatpush1.bf16.msra.mxu0 %v2413
        %2489 = vmatprep.subr.bf16.mxu0 0
        %2490 = vmatpush1.bf16.msra.mxu0 %v2414
        %2491 = vmatprep.subr.bf16.mxu0 0
        %2492 = vmatpush1.bf16.msra.mxu0 %v2415
        %2493 = vmatprep.subr.bf16.mxu0 0
        %2494 = vmatpush1.bf16.msra.mxu0 %v2416
        %2495 = vmatprep.subr.bf16.mxu0 0
        %2496 = vmatpush1.bf16.msra.mxu0 %v2417
        %2497 = vmatprep.subr.bf16.mxu0 0
        %2498 = vmatpush1.bf16.msra.mxu0 %v2418
        %2499 = vmatprep.mubr.bf16.mxu0 %v2266
        %2500 = vmatmul.mubr.bf16.gmra.mrb[0].mxu0 %v2265
        %v2501 = vpop.f32.mrb[0].mxu0
        %v2502 = vadd.f32 %v2273, %v2501
        %v2503 = vpop.f32.mrb[0].mxu0
        %v2504 = vpop.f32.mrb[0].mxu0
        %v2505 = vadd.f32 %v2273, %v2504
        %v2506 = vpop.f32.mrb[0].mxu0
        %2507 = vdwg.mxu0
        %2508 = vmatprep.subr.bf16.mxu0 0
        %2509 = vmatpush1.bf16.msra.mxu0 %v2419
        %2510 = vmatprep.subr.bf16.mxu0 0
        %2511 = vmatpush1.bf16.msra.mxu0 %v2420
        %2512 = vmatprep.subr.bf16.mxu0 0
        %2513 = vmatpush1.bf16.msra.mxu0 %v2421
        %2514 = vmatprep.subr.bf16.mxu0 0
        %2515 = vmatpush1.bf16.msra.mxu0 %v2422
        %2516 = vmatprep.subr.bf16.mxu0 0
        %2517 = vmatpush1.bf16.msra.mxu0 %v2423
        %2518 = vmatprep.subr.bf16.mxu0 0
        %2519 = vmatpush1.bf16.msra.mxu0 %v2424
        %2520 = vmatprep.subr.bf16.mxu0 0
        %2521 = vmatpush1.bf16.msra.mxu0 %v2425
        %2522 = vmatprep.subr.bf16.mxu0 0
        %2523 = vmatpush1.bf16.msra.mxu0 %v2426
        %2524 = vmatprep.subr.bf16.mxu0 0
        %2525 = vmatpush1.bf16.msra.mxu0 %v2427
        %2526 = vmatprep.subr.bf16.mxu0 0
        %2527 = vmatpush1.bf16.msra.mxu0 %v2428
        %2528 = vmatprep.subr.bf16.mxu0 0
        %2529 = vmatpush1.bf16.msra.mxu0 %v2429
        %2530 = vmatprep.subr.bf16.mxu0 0
        %2531 = vmatpush1.bf16.msra.mxu0 %v2430
        %2532 = vmatprep.subr.bf16.mxu0 0
        %2533 = vmatpush1.bf16.msra.mxu0 %v2431
        %2534 = vmatprep.subr.bf16.mxu0 0
        %2535 = vmatpush1.bf16.msra.mxu0 %v2432
        %2536 = vmatprep.subr.bf16.mxu0 0
        %2537 = vmatpush1.bf16.msra.mxu0 %v2433
        %2538 = vmatprep.subr.bf16.mxu0 0
        %2539 = vmatpush1.bf16.msra.mxu0 %v2434
        %2540 = vmatprep.mubr.bf16.mxu0 %v2268
        %2541 = vmatmul.mubr.bf16.gmra.mrb[0].mxu0 %v2267
        %v2542 = vpop.f32.mrb[0].mxu0
        %v2543 = vadd.f32 %v2502, %v2542
        %v2544 = vpop.f32.mrb[0].mxu0
        %v2545 = vpop.f32.mrb[0].mxu0
        %v2546 = vadd.f32 %v2505, %v2545
        %v2547 = vpop.f32.mrb[0].mxu0
        %2548 = vdwg.mxu0
        %v2549 = vadd.f32 %v788, %v2543
        %v2550 = vadd.f32 %v789, %v2546
        %v2551 = vld [vmem:[%s764] sm:$0x1]
        %v2552 = vld [vmem:[%s767] sm:$0x1]
        %2553 = vadd.xlane.f32.xlu0 %v2549
        %v2554 = vpop.xlane.xlu0 %2553
        %v2555 = vsel %vm794, %v2550, 0.0
        %2556 = vadd.xlane.f32.xlu0 %v2555
        %v2557 = vpop.xlane.xlu0 %2556
        %v2558 = vmul.f32 %v2554, 0.03125
        %v2559 = vmul.f32 %v2557, 0.03125
        %v2560 = vmul.f32 %v2549, %v2549
        %v2561 = vmul.f32 %v2550, %v2550
        %2562 = vadd.xlane.f32.xlu0 %v2560
        %v2563 = vpop.xlane.xlu0 %2562
        %v2564 = vsel %vm794, %v2561, 0.0
        %2565 = vadd.xlane.f32.xlu0 %v2564
        %v2566 = vpop.xlane.xlu0 %2565
        %v2567 = vmul.f32 %v2563, 0.03125
        %v2568 = vmul.f32 %v2566, 0.03125
        %v2569 = vmul.f32 %v2558, %v2558
        %v2570 = vmul.f32 %v2559, %v2559
        %v2571 = vsub.f32 %v2567, %v2569
        %v2572 = vsub.f32 %v2568, %v2570
        %v2573 = vmax.f32 %v2571, 0.0
        %v2574 = vmax.f32 %v2572, 0.0
        %v2575 = vsub.f32 %v2549, %v2558
        %v2576 = vsub.f32 %v2550, %v2559
        %v2577 = vadd.f32 %v2573, 1e-06
        %v2578 = vadd.f32 %v2574, 1e-06
        %v2579 = vrsqrt.pop %v2577
        %v2580 = vrsqrt.pop %v2578
        %v2581 = vmul.f32 %v2575, %v2579
        %v2582 = vmul.f32 %v2576, %v2580
        %v2584 = vlaneseq
        %v2585 = vshrl.u32 %v2584, 7
        %v2586 = vsub.s32 0, %v2585
        %v2587 = vrot.slane %v2551, %v2586
        %v2589 = vmul.f32 %v2581, %v2587
        %v2590 = vmul.f32 %v2582, %v2587
        %v2592 = vlaneseq
        %v2593 = vshrl.u32 %v2592, 7
        %v2594 = vsub.s32 0, %v2593
        %v2595 = vrot.slane %v2552, %v2594
        %v2597 = vadd.f32 %v2589, %v2595
        %v2598 = vadd.f32 %v2590, %v2595
        %v2599 = vld [vmem:[%s643] sm:$0xf]
        %v2600 = vld [vmem:[%s643 + $0x4] sm:$0xf]
        %v2601 = vld [vmem:[%s643 + $0x8] sm:$0xf]
        %v2602 = vld [vmem:[%s643 + $0xc] sm:$0xf]
        %v2603 = vld [vmem:[%s643 + $0x10] sm:$0xf]
        %v2604 = vld [vmem:[%s643 + $0x14] sm:$0xf]
        %v2605 = vld [vmem:[%s643 + $0x18] sm:$0xf]
        %v2606 = vld [vmem:[%s643 + $0x1c] sm:$0xf]
        %v2607 = vld [vmem:[%s643 + $0x20] sm:$0xf]
        %v2608 = vld [vmem:[%s643 + $0x24] sm:$0xf]
        %v2609 = vld [vmem:[%s643 + $0x28] sm:$0xf]
        %v2610 = vld [vmem:[%s643 + $0x2c] sm:$0xf]
        %v2611 = vld [vmem:[%s643 + $0x30] sm:$0xf]
        %v2612 = vld [vmem:[%s643 + $0x34] sm:$0xf]
        %v2613 = vld [vmem:[%s643 + $0x38] sm:$0xf]
        %v2614 = vld [vmem:[%s643 + $0x3c] sm:$0xf]
        %v2615 = vld [vmem:[%s770] sm:$0x1]
        %v2616 = vld [vmem:[%s652] sm:$0xf]
        %v2617 = vld [vmem:[%s652 + $0x4] sm:$0xf]
        %v2618 = vld [vmem:[%s652 + $0x8] sm:$0xf]
        %v2619 = vld [vmem:[%s652 + $0xc] sm:$0xf]
        %v2620 = vld [vmem:[%s652 + $0x10] sm:$0xf]
        %v2621 = vld [vmem:[%s652 + $0x14] sm:$0xf]
        %v2622 = vld [vmem:[%s652 + $0x18] sm:$0xf]
        %v2623 = vld [vmem:[%s652 + $0x1c] sm:$0xf]
        %v2624 = vld [vmem:[%s652 + $0x20] sm:$0xf]
        %v2625 = vld [vmem:[%s652 + $0x24] sm:$0xf]
        %v2626 = vld [vmem:[%s652 + $0x28] sm:$0xf]
        %v2627 = vld [vmem:[%s652 + $0x2c] sm:$0xf]
        %v2628 = vld [vmem:[%s652 + $0x30] sm:$0xf]
        %v2629 = vld [vmem:[%s652 + $0x34] sm:$0xf]
        %v2630 = vld [vmem:[%s652 + $0x38] sm:$0xf]
        %v2631 = vld [vmem:[%s652 + $0x3c] sm:$0xf]
        %v2632 = vld [vmem:[%s773] sm:$0x1]
        %v2633 = vpack.c.bf16 %v2598, %v2597
        %v2635 = vlaneseq
        %v2636 = vshrl.u32 %v2635, 7
        %v2637 = vsub.s32 0, %v2636
        %v2638 = vrot.slane %v2615, %v2637
        %v2656 = vunpack.c.l.b16 %v2599
        %v2657 = vunpack.c.l.b16 %v2600
        %v2658 = vunpack.c.l.b16 %v2601
        %v2659 = vunpack.c.l.b16 %v2602
        %v2660 = vunpack.c.l.b16 %v2603
        %v2661 = vunpack.c.l.b16 %v2604
        %v2662 = vunpack.c.l.b16 %v2605
        %v2663 = vunpack.c.l.b16 %v2606
        %v2664 = vunpack.c.l.b16 %v2607
        %v2665 = vunpack.c.l.b16 %v2608
        %v2666 = vunpack.c.l.b16 %v2609
        %v2667 = vunpack.c.l.b16 %v2610
        %v2668 = vunpack.c.l.b16 %v2611
        %v2669 = vunpack.c.l.b16 %v2612
        %v2670 = vunpack.c.l.b16 %v2613
        %v2671 = vunpack.c.l.b16 %v2614
        %v2672 = vpack.c.b16 %v2657, %v2656
        %v2673 = vpack.c.b16 %v2659, %v2658
        %v2674 = vpack.c.b16 %v2661, %v2660
        %v2675 = vpack.c.b16 %v2663, %v2662
        %v2676 = vpack.c.b16 %v2665, %v2664
        %v2677 = vpack.c.b16 %v2667, %v2666
        %v2678 = vpack.c.b16 %v2669, %v2668
        %v2679 = vpack.c.b16 %v2671, %v2670
        %2688 = vmatprep.subr.bf16.mxu0 0
        %2689 = vmatpush1.bf16.msra.mxu0 %v2672
        %2690 = vmatprep.subr.bf16.mxu0 0
        %2691 = vmatpush1.bf16.msra.mxu0 %v2673
        %2692 = vmatprep.subr.bf16.mxu0 0
        %2693 = vmatpush1.bf16.msra.mxu0 %v2674
        %2694 = vmatprep.subr.bf16.mxu0 0
        %2695 = vmatpush1.bf16.msra.mxu0 %v2675
        %2696 = vmatprep.subr.bf16.mxu0 0
        %2697 = vmatpush1.bf16.msra.mxu0 %v2676
        %2698 = vmatprep.subr.bf16.mxu0 0
        %2699 = vmatpush1.bf16.msra.mxu0 %v2677
        %2700 = vmatprep.subr.bf16.mxu0 0
        %2701 = vmatpush1.bf16.msra.mxu0 %v2678
        %2702 = vmatprep.subr.bf16.mxu0 0
        %2703 = vmatpush1.bf16.msra.mxu0 %v2679
        %2704 = vmatprep.subr.bf16.mxu0 0
        %2705 = vmatpush1.bf16.msra.mxu0 0
        %2706 = vmatprep.subr.bf16.mxu0 0
        %2707 = vmatpush1.bf16.msra.mxu0 0
        %2708 = vmatprep.subr.bf16.mxu0 0
        %2709 = vmatpush1.bf16.msra.mxu0 0
        %2710 = vmatprep.subr.bf16.mxu0 0
        %2711 = vmatpush1.bf16.msra.mxu0 0
        %2712 = vmatprep.subr.bf16.mxu0 0
        %2713 = vmatpush1.bf16.msra.mxu0 0
        %2714 = vmatprep.subr.bf16.mxu0 0
        %2715 = vmatpush1.bf16.msra.mxu0 0
        %2716 = vmatprep.subr.bf16.mxu0 0
        %2717 = vmatpush1.bf16.msra.mxu0 0
        %2718 = vmatprep.subr.bf16.mxu0 0
        %2719 = vmatpush1.bf16.msra.mxu0 0
        %2720 = vmatprep.mubr.bf16.mxu0 0
        %2721 = vmatmul.mubr.bf16.gmra.mrb[0].mxu0 %v2633
        %v2722 = vpop.f32.mrb[0].mxu0
        %v2723 = vadd.f32 %v2638, %v2722
        %v2724 = vpop.f32.mrb[0].mxu0
        %v2725 = vpop.f32.mrb[0].mxu0
        %v2726 = vadd.f32 %v2638, %v2725
        %v2727 = vpop.f32.mrb[0].mxu0
        %2728 = vdwg.mxu0
        %v2729 = vmul.f32 %v2723, 0.5
        %v2730 = vmul.f32 %v2726, 0.5
        %v2731 = vmul.f32 %v2723, 0.70710677
        %v2732 = vmul.f32 %v2726, 0.70710677
        %v2733 = vmax.f32 %v2731, -4.0
        %v2734 = vmax.f32 %v2732, -4.0
        %v2735 = vmin.f32 %v2733, 4.0
        %v2736 = vmin.f32 %v2734, 4.0
        %v2737 = vmul.f32 %v2735, %v2735
        %v2738 = vmul.f32 %v2736, %v2736
        %v2739 = vmul.f32 %v2737, 0.00022905065
        %v2740 = vmul.f32 %v2738, 0.00022905065
        %v2741 = vadd.f32 %v2739, 0.003408291
        %v2742 = vadd.f32 %v2740, 0.003408291
        %v2743 = vmul.f32 %v2741, %v2737
        %v2744 = vmul.f32 %v2742, %v2738
        %v2745 = vadd.f32 %v2743, 0.050955694
        %v2746 = vadd.f32 %v2744, 0.050955694
        %v2747 = vmul.f32 %v2745, %v2737
        %v2748 = vmul.f32 %v2746, %v2738
        %v2749 = vadd.f32 %v2747, 0.18520832
        %v2750 = vadd.f32 %v2748, 0.18520832
        %v2751 = vmul.f32 %v2749, %v2737
        %v2752 = vmul.f32 %v2750, %v2738
        %v2753 = vadd.f32 %v2751, 1.1283791
        %v2754 = vadd.f32 %v2752, 1.1283791
        %v2755 = vmul.f32 %v2735, %v2753
        %v2756 = vmul.f32 %v2736, %v2754
        %v2757 = vmul.f32 %v2737, -1.1791603e-07
        %v2758 = vmul.f32 %v2738, -1.1791603e-07
        %v2759 = vadd.f32 %v2757, 2.3547966e-05
        %v2760 = vadd.f32 %v2758, 2.3547966e-05
        %v2761 = vmul.f32 %v2759, %v2737
        %v2762 = vmul.f32 %v2760, %v2738
        %v2763 = vadd.f32 %v2761, 0.0010179626
        %v2764 = vadd.f32 %v2762, 0.0010179626
        %v2765 = vmul.f32 %v2763, %v2737
        %v2766 = vmul.f32 %v2764, %v2738
        %v2767 = vadd.f32 %v2765, 0.01407047
        %v2768 = vadd.f32 %v2766, 0.01407047
        %v2769 = vmul.f32 %v2767, %v2737
        %v2770 = vmul.f32 %v2768, %v2738
        %v2771 = vadd.f32 %v2769, 0.11098505
        %v2772 = vadd.f32 %v2770, 0.11098505
        %v2773 = vmul.f32 %v2771, %v2737
        %v2774 = vmul.f32 %v2772, %v2738
        %v2775 = vadd.f32 %v2773, 0.49746925
        %v2776 = vadd.f32 %v2774, 0.49746925
        %v2777 = vmul.f32 %v2775, %v2737
        %v2778 = vmul.f32 %v2776, %v2738
        %v2779 = vadd.f32 %v2777, 1.0
        %v2780 = vadd.f32 %v2778, 1.0
        %v2781 = vrcp.pop %v2779
        %v2782 = vrcp.pop %v2780
        %v2783 = vmul.f32 %v2755, %v2781
        %v2784 = vmul.f32 %v2756, %v2782
        %v2785 = vadd.f32 %v2783, 1.0
        %v2786 = vadd.f32 %v2784, 1.0
        %v2787 = vmul.f32 %v2729, %v2785
        %v2788 = vmul.f32 %v2730, %v2786
        %v2789 = vpack.c.bf16 %v2788, %v2787
        %v2791 = vlaneseq
        %v2792 = vshrl.u32 %v2791, 7
        %v2793 = vsub.s32 0, %v2792
        %v2794 = vrot.slane %v2632, %v2793
        %v2812 = vunpack.c.l.b16 %v2616
        %v2813 = vunpack.c.l.b16 %v2617
        %v2814 = vunpack.c.l.b16 %v2618
        %v2815 = vunpack.c.l.b16 %v2619
        %v2816 = vunpack.c.l.b16 %v2620
        %v2817 = vunpack.c.l.b16 %v2621
        %v2818 = vunpack.c.l.b16 %v2622
        %v2819 = vunpack.c.l.b16 %v2623
        %v2820 = vunpack.c.l.b16 %v2624
        %v2821 = vunpack.c.l.b16 %v2625
        %v2822 = vunpack.c.l.b16 %v2626
        %v2823 = vunpack.c.l.b16 %v2627
        %v2824 = vunpack.c.l.b16 %v2628
        %v2825 = vunpack.c.l.b16 %v2629
        %v2826 = vunpack.c.l.b16 %v2630
        %v2827 = vunpack.c.l.b16 %v2631
        %v2828 = vpack.c.b16 %v2813, %v2812
        %v2829 = vpack.c.b16 %v2815, %v2814
        %v2830 = vpack.c.b16 %v2817, %v2816
        %v2831 = vpack.c.b16 %v2819, %v2818
        %v2832 = vpack.c.b16 %v2821, %v2820
        %v2833 = vpack.c.b16 %v2823, %v2822
        %v2834 = vpack.c.b16 %v2825, %v2824
        %v2835 = vpack.c.b16 %v2827, %v2826
        %2844 = vmatprep.subr.bf16.mxu0 0
        %2845 = vmatpush1.bf16.msra.mxu0 %v2828
        %2846 = vmatprep.subr.bf16.mxu0 0
        %2847 = vmatpush1.bf16.msra.mxu0 %v2829
        %2848 = vmatprep.subr.bf16.mxu0 0
        %2849 = vmatpush1.bf16.msra.mxu0 %v2830
        %2850 = vmatprep.subr.bf16.mxu0 0
        %2851 = vmatpush1.bf16.msra.mxu0 %v2831
        %2852 = vmatprep.subr.bf16.mxu0 0
        %2853 = vmatpush1.bf16.msra.mxu0 %v2832
        %2854 = vmatprep.subr.bf16.mxu0 0
        %2855 = vmatpush1.bf16.msra.mxu0 %v2833
        %2856 = vmatprep.subr.bf16.mxu0 0
        %2857 = vmatpush1.bf16.msra.mxu0 %v2834
        %2858 = vmatprep.subr.bf16.mxu0 0
        %2859 = vmatpush1.bf16.msra.mxu0 %v2835
        %2860 = vmatprep.subr.bf16.mxu0 0
        %2861 = vmatpush1.bf16.msra.mxu0 0
        %2862 = vmatprep.subr.bf16.mxu0 0
        %2863 = vmatpush1.bf16.msra.mxu0 0
        %2864 = vmatprep.subr.bf16.mxu0 0
        %2865 = vmatpush1.bf16.msra.mxu0 0
        %2866 = vmatprep.subr.bf16.mxu0 0
        %2867 = vmatpush1.bf16.msra.mxu0 0
        %2868 = vmatprep.subr.bf16.mxu0 0
        %2869 = vmatpush1.bf16.msra.mxu0 0
        %2870 = vmatprep.subr.bf16.mxu0 0
        %2871 = vmatpush1.bf16.msra.mxu0 0
        %2872 = vmatprep.subr.bf16.mxu0 0
        %2873 = vmatpush1.bf16.msra.mxu0 0
        %2874 = vmatprep.subr.bf16.mxu0 0
        %2875 = vmatpush1.bf16.msra.mxu0 0
        %2876 = vmatprep.mubr.bf16.mxu0 0
        %2877 = vmatmul.mubr.bf16.gmra.mrb[0].mxu0 %v2789
        %v2878 = vpop.f32.mrb[0].mxu0
        %v2879 = vadd.f32 %v2794, %v2878
        %v2880 = vpop.f32.mrb[0].mxu0
        %v2881 = vpop.f32.mrb[0].mxu0
        %v2882 = vadd.f32 %v2794, %v2881
        %v2883 = vpop.f32.mrb[0].mxu0
        %2884 = vdwg.mxu0
        %v2885 = vadd.f32 %v2549, %v2879
        %v2886 = vadd.f32 %v2550, %v2882
        %2887 = vst [vmem:[#allocation2] sm:$0xff] %v2885
        %2888 = vst [vmem:[#allocation2 + $0x8] sm:$0x1] %v2886
        %p2889 = scmp.eq.s32.totalorder %s40, 1
        // Predicated region
        $region101: #{tpu_custom_call.1} parent=79 // pred_check
          %p2890 = pneg %p2889
        $region102: #{tpu_custom_call.1} parent=79 // pred_check_branch
          %2892 = sbr.rel (%p2890) target = $region104
        $region103: #{tpu_custom_call.1} parent=79 // pred_region
          %v2893 = vld [vmem:[%s13] sm:$0x1]
          %v2894 = vld [vmem:[%s14] sm:$0x1]
          %2895 = vadd.xlane.f32.xlu0 %v2885
          %v2896 = vpop.xlane.xlu0 %2895
          %v2897 = vsel %vm794, %v2886, 0.0
          %2898 = vadd.xlane.f32.xlu0 %v2897
          %v2899 = vpop.xlane.xlu0 %2898
          %v2900 = vmul.f32 %v2896, 0.03125
          %v2901 = vmul.f32 %v2899, 0.03125
          %v2902 = vmul.f32 %v2885, %v2885
          %v2903 = vmul.f32 %v2886, %v2886
          %2904 = vadd.xlane.f32.xlu0 %v2902
          %v2905 = vpop.xlane.xlu0 %2904
          %v2906 = vsel %vm794, %v2903, 0.0
          %2907 = vadd.xlane.f32.xlu0 %v2906
          %v2908 = vpop.xlane.xlu0 %2907
          %v2909 = vmul.f32 %v2905, 0.03125
          %v2910 = vmul.f32 %v2908, 0.03125
          %v2911 = vmul.f32 %v2900, %v2900
          %v2912 = vmul.f32 %v2901, %v2901
          %v2913 = vsub.f32 %v2909, %v2911
          %v2914 = vsub.f32 %v2910, %v2912
          %v2915 = vmax.f32 %v2913, 0.0
          %v2916 = vmax.f32 %v2914, 0.0
          %v2917 = vsub.f32 %v2885, %v2900
          %v2918 = vsub.f32 %v2886, %v2901
          %v2919 = vadd.f32 %v2915, 1e-06
          %v2920 = vadd.f32 %v2916, 1e-06
          %v2921 = vrsqrt.pop %v2919
          %v2922 = vrsqrt.pop %v2920
          %v2923 = vmul.f32 %v2917, %v2921
          %v2924 = vmul.f32 %v2918, %v2922
          %v2926 = vlaneseq
          %v2927 = vshrl.u32 %v2926, 7
          %v2928 = vsub.s32 0, %v2927
          %v2929 = vrot.slane %v2893, %v2928
          %v2931 = vmul.f32 %v2923, %v2929
          %v2932 = vmul.f32 %v2924, %v2929
          %v2934 = vlaneseq
          %v2935 = vshrl.u32 %v2934, 7
          %v2936 = vsub.s32 0, %v2935
          %v2937 = vrot.slane %v2894, %v2936
          %v2939 = vadd.f32 %v2931, %v2937
          %v2940 = vadd.f32 %v2932, %v2937
          %2941 = vst [vmem:[%s778] sm:$0xff] %v2939
          %2942 = vst [vmem:[%s778 + $0x8] sm:$0x1] %v2940
        $region104: #{tpu_custom_call.1} parent=79 // pred_fallthru
          _
        %p2943 = scmp.lt.s32.totalorder %s39, 1
        %s2944 = scalar_select %p2943, %s39, 1
        %s2945 = smul.addr %s2944, 2
        %s2946 = smul.addr %s2945, 8
        %s2947 = scalar_lea.vmem %s15, %s2946
        // Predicated region
        $region105: #{tpu_custom_call.1} parent=79 // pred_check
          %p2948 = pneg %p445
        $region106: #{tpu_custom_call.1} parent=79 // pred_check_branch
          %2950 = sbr.rel (%p2948) target = $region108
        $region107: #{tpu_custom_call.1} parent=79 // pred_region
          _
        $region108: #{tpu_custom_call.1} parent=79 // pred_fallthru
          _
      $region80: #{tpu_custom_call.1} parent=5 // pred_fallthru
        _
      %p2951 = scmp.le.s32.totalorder 2, %s30
      // Predicated region
      $region109: #{tpu_custom_call.1} parent=5 // pred_check
        %p2952 = pneg %p2951
      $region110: #{tpu_custom_call.1} parent=5 // pred_check_branch
        %2954 = sbr.rel (%p2952) target = $region112
      $region111: #{tpu_custom_call.1} parent=5 // pred_region
        %s2955 = ssub.s32 %s30, 2
        // Predicated region
        $region113: #{tpu_custom_call.1} parent=111 // pred_check
          %p2956 = pneg %p451
        $region114: #{tpu_custom_call.1} parent=111 // pred_check_branch
          %2958 = sbr.rel (%p2956) target = $region116
        $region115: #{tpu_custom_call.1} parent=111 // pred_region
          %p2959 = scmp.lt.s32.totalorder %s41, 1
          %s2960 = scalar_select %p2959, %s41, 1
          %s2961 = smul.addr %s2960, 2
          %s2962 = smul.addr %s2961, 8
          %s2963 = scalar_lea.vmem %s15, %s2962
        $region116: #{tpu_custom_call.1} parent=111 // pred_fallthru
          _
      $region112: #{tpu_custom_call.1} parent=5 // pred_fallthru
        _
    $region6: #{tpu_custom_call.1} parent=1 // loop_footer
      %s34 = sadd.s32 1, %s30
    $region7: #{tpu_custom_call.1} parent=1 // loop_footer_branch
      %29 = sbr.rel target = $region3
    $region8: #{tpu_custom_call.1} parent=1 // loop_exit
      _
    %2964 = vsyncpa [#allocation4], 1
    %s2965 = scalar_lea.sflag [#allocation4], 1
    %2966 = vsyncpa %s2965, 1
    %2967 = vsyncpa [#allocation6], 1
    %s2968 = scalar_lea.sflag [#allocation6], 1
    %2969 = vsyncpa %s2968, 1
    %2970 = vsyncpa [#allocation9], 1
    %s2971 = scalar_lea.sflag [#allocation9], 1
    %2972 = vsyncpa %s2971, 1

</llo_original>
